<compile_context>
chip_gen: v5e
topology: v5e:2x2
jax: 0.10.0
libtpu: 0.0.40
codegen_flags: <defaults>
</compile_context>

<pallas_src>
import jax
import jax.numpy as jnp
from jax import lax
from jax.experimental import pallas as pl
from jax.experimental.pallas import tpu as pltpu

# ----------------------- small MoETConfig-equivalent ----------------------------
VOCAB = 256
HIDDEN = 32
NUM_HEADS = 4
HEAD_DIM = HIDDEN // NUM_HEADS
FFN_DIM = 4 * HIDDEN
NUM_LAYERS = 6            # num_total_layers
NUM_EARLY = 4             # num_early_layers
NUM_EXPERTS_HASH = 4
NUM_EXPERTS_EARLY = 4
NUM_EXPERTS_LATE = 2
BATCH = 2
SEQ = 8
EPS = 1e-6
GATE_WIDTH = 128          # lane-dense packed router-gate output


# ----------------------------- shared math helpers ------------------------------
def _rms(x):
    return x * lax.rsqrt(jnp.mean(x * x, axis=-1, keepdims=True) + EPS)


def _gelu(x):
    c = 0.7978845608028654  # sqrt(2/pi)
    return 0.5 * x * (1.0 + jnp.tanh(c * (x + 0.044715 * x * x * x)))


# --------------------------------- layer plan ------------------------------------
def layer_plan():
    # (name, ltype, n_exp, parallel_ffn, router)
    plan = [("moe_block_hash0", "moe", NUM_EXPERTS_HASH, False, "hash")]
    for i in range(1, NUM_EARLY):
        if i % 2 == 0:
            plan.append((f"moe_block_early{i}", "moe", NUM_EXPERTS_EARLY, True, "learned"))
        else:
            plan.append((f"transformer_block{i}", "tf", None, False, None))
    for i in range(NUM_EARLY, NUM_LAYERS):
        if i % 2 == 0:
            plan.append((f"moe_block_late{i}", "moe", NUM_EXPERTS_LATE, False, "learned"))
        else:
            plan.append((f"transformer_block{i}", "tf", None, False, None))
    return plan


# ------------------------------ fused forward kernel ------------------------------
def _make_fused_kernel(plan, num_inputs, *, S):
    """plan: list of (name, ltype, parallel, router, n_exp, keys) — static metadata."""
    L = len(plan)
    scale = 1.0 / (HEAD_DIM ** 0.5)

    def kernel(*refs):
        in_refs = refs[:num_inputs]
        logits_ref = refs[num_inputs]
        gates_ref = refs[num_inputs + 1]

        it = iter(in_refs)
        ids_ref = next(it)        # [S, 1] int32
        emb_ref = next(it)        # [V, H] bf16
        embT_ref = next(it)       # [H, V] bf16
        ln_ref = next(it)         # [2L+1, H] f32
        wqkv_ref = next(it)       # [L, H, 3H] bf16
        wo_ref = next(it)         # [L, H, H] bf16

        ids = ids_ref[...]                                              # [S, 1]

        # --- token embedding as a bf16 one-hot matmul (fuses the gather on the MXU) ---
        vocab_iota = lax.broadcasted_iota(jnp.int32, (S, VOCAB), 1)
        onehot = (vocab_iota == ids).astype(jnp.bfloat16)
        x = jnp.dot(onehot, emb_ref[...], preferred_element_type=jnp.float32)   # [S, H] f32

        # --- per-head ALiBi + causal bias (built once from iota, Python-float slopes) ---
        qpos = lax.broadcasted_iota(jnp.int32, (S, S), 0)
        kpos = lax.broadcasted_iota(jnp.int32, (S, S), 1)
        rel = (kpos - qpos).astype(jnp.float32)                         # j - i
        mask_add = jnp.where(kpos <= qpos, 0.0, -1e9)
        head_bias = [
            (2.0 ** (-8.0 * (hh + 1) / NUM_HEADS)) * rel + mask_add
            for hh in range(NUM_HEADS)
        ]

        gate_vals = []   # learned-router gates, packed into one output at the end

        for li, (_name, ltype, parallel, router, n_exp, keys) in enumerate(plan):
            p = {k: next(it) for k in keys}
            ln1 = ln_ref[2 * li:2 * li + 1, :]
            ln2 = ln_ref[2 * li + 1:2 * li + 2, :]

            # ---------------- attention sub-layer (pre-RMSNorm, residual) ----------------
            h = _rms(x) * ln1
            hb = h.astype(jnp.bfloat16)
            qkv = jnp.dot(hb, wqkv_ref[li], preferred_element_type=jnp.float32)  # [S, 3H]

            heads = []
            for hh in range(NUM_HEADS):
                q = qkv[:, hh * HEAD_DIM:(hh + 1) * HEAD_DIM].astype(jnp.bfloat16)
                k = qkv[:, HIDDEN + hh * HEAD_DIM:HIDDEN + (hh + 1) * HEAD_DIM].astype(jnp.bfloat16)
                v = qkv[:, 2 * HIDDEN + hh * HEAD_DIM:2 * HIDDEN + (hh + 1) * HEAD_DIM].astype(jnp.bfloat16)
                s = lax.dot_general(q, k, (((1,), (1,)), ((), ())),
                                    preferred_element_type=jnp.float32)          # q @ k^T
                s = s * scale + head_bias[hh]
                m = jnp.max(s, axis=-1, keepdims=True)
                e = jnp.exp(s - m)
                pa = e * pl.reciprocal(jnp.sum(e, axis=-1, keepdims=True), approx=True)
                heads.append(jnp.dot(pa.astype(jnp.bfloat16), v,
                                     preferred_element_type=jnp.float32))        # [S, hd]
            attn_cat = jnp.concatenate(heads, axis=-1)                            # [S, H]
            x = x + jnp.dot(attn_cat.astype(jnp.bfloat16), wo_ref[li],
                            preferred_element_type=jnp.float32)

            # ---------------- FFN / MoE sub-layer (pre-RMSNorm, residual) ----------------
            h2 = _rms(x) * ln2
            h2b = h2.astype(jnp.bfloat16)
            up = jnp.dot(h2b, p["up_w"][...],
                         preferred_element_type=jnp.float32) + p["up_b"][...]

            if ltype == "tf":
                act = _gelu(up)
                y = jnp.dot(act.astype(jnp.bfloat16), p["down_w"][...],
                            preferred_element_type=jnp.float32) + p["down_b"][...]
            else:
                E = n_exp
                act_w = E * FFN_DIM + (FFN_DIM if parallel else 0)
                act = _gelu(up[:, :act_w])

                if router == "hash":
                    e_iota = lax.broadcasted_iota(jnp.int32, (S, E), 1)
                    if (E & (E - 1)) == 0:
                        hashed = jnp.bitwise_and(ids, E - 1)
                    else:
                        hashed = jnp.mod(ids, E)
                    gates = (hashed == e_iota).astype(jnp.float32)        # gate = 1.0
                else:
                    # learned router: strict top-1 (lowest index wins ties), exact softmax
                    rlog = up[:, act_w:act_w + E]                         # [S, E]
                    m = jnp.max(rlog, axis=-1, keepdims=True)
                    ex = jnp.exp(rlog - m)
                    probs = ex / jnp.sum(ex, axis=-1, keepdims=True)      # exact normalization
                    ef = lax.broadcasted_iota(jnp.int32, (S, E), 1).astype(jnp.float32)
                    sel = jnp.where(rlog == m, ef, float(E))
                    top_idx = jnp.min(sel, axis=-1, keepdims=True)
                    gates = (ef == top_idx).astype(jnp.float32) * probs
                    gate_vals.append(gates)

                blocks = [act[:, ee * FFN_DIM:(ee + 1) * FFN_DIM] * gates[:, ee:ee + 1]
                          for ee in range(E)]
                if parallel:
                    blocks.append(act[:, E * FFN_DIM:act_w])              # ungated parallel FFN
                gated = jnp.concatenate(blocks, axis=-1)                  # [S, E*F(+F)]
                y = jnp.dot(gated.astype(jnp.bfloat16), p["down_w"][...],
                            preferred_element_type=jnp.float32)
                y = y + jnp.dot(gates, p["b2e"][...], preferred_element_type=jnp.float32)
                if parallel:
                    y = y + p["pb2"][...]
            x = x + y

        # ---------------- final RMSNorm + tied unembed ('b s h, v h -> b s v') -----------
        z = _rms(x) * ln_ref[2 * L:2 * L + 1, :]
        logits_ref[...] = jnp.dot(z.astype(jnp.bfloat16), embT_ref[...],
                                  preferred_element_type=jnp.float32)

        # ---------------- packed, lane-dense router-gate cache output --------------------
        used = sum(int(g.shape[-1]) for g in gate_vals)
        pieces = list(gate_vals)
        if used < GATE_WIDTH:
            pieces.append(jnp.zeros((S, GATE_WIDTH - used), jnp.float32))
        gates_ref[...] = jnp.concatenate(pieces, axis=-1)

    return kernel


# ------------------------------ param construction --------------------------------
def init_params(key):
    keys = iter(jax.random.split(key, 256))

    def nrm(shape, scale=0.02):
        return (scale * jax.random.normal(next(keys), shape)).astype(jnp.float32)

    meta = layer_plan()
    L = len(meta)

    wqkv_list, wo_list, layers = [], [], []
    for (name, ltype, n_exp, parallel, router) in meta:
        # fused QKV weight [H, 3H], output projection [H, H]
        wqkv_list.append(jnp.concatenate(
            [nrm((HIDDEN, HIDDEN)), nrm((HIDDEN, HIDDEN)), nrm((HIDDEN, HIDDEN))], axis=1))
        wo_list.append(nrm((HIDDEN, HIDDEN)))

        if ltype == "tf":
            p = {
                "up_w": nrm((HIDDEN, FFN_DIM)).astype(jnp.bfloat16),
                "up_b": jnp.zeros((1, FFN_DIM), jnp.float32),
                "down_w": nrm((FFN_DIM, HIDDEN)).astype(jnp.bfloat16),
                "down_b": jnp.zeros((1, HIDDEN), jnp.float32),
            }
        else:
            E = n_exp
            up_parts = [nrm((HIDDEN, FFN_DIM)) for _ in range(E)]       # expert w1's
            down_parts = [nrm((FFN_DIM, HIDDEN)) for _ in range(E)]     # expert w2's
            if parallel:
                up_parts.append(nrm((HIDDEN, FFN_DIM)))                  # parallel pw1
                down_parts.append(nrm((FFN_DIM, HIDDEN)))                # parallel pw2
            if router == "learned":
                up_parts.append(nrm((HIDDEN, E)))                        # router wg (last cols)
            up_w = jnp.concatenate(up_parts, axis=1)
            down_w = jnp.concatenate(down_parts, axis=0)
            p = {
                "up_w": up_w.astype(jnp.bfloat16),
                "up_b": jnp.zeros((1, up_w.shape[1]), jnp.float32),      # router cols stay 0
                "down_w": down_w.astype(jnp.bfloat16),
                "b2e": jnp.zeros((E, HIDDEN), jnp.float32),              # gated expert biases
            }
            if parallel:
                p["pb2"] = jnp.zeros((1, HIDDEN), jnp.float32)
        layers.append((name, ltype, parallel, router, n_exp, p))

    tok_emb = nrm((VOCAB, HIDDEN))
    return {
        "emb_bf16": tok_emb.astype(jnp.bfloat16),                 # [V, H] lookup (bf16 exact 0/1 matmul)
        "emb_T_bf16": jnp.transpose(tok_emb).astype(jnp.bfloat16),  # [H, V] tied unembed, once at init
        "ln_slab": jnp.ones((2 * L + 1, HIDDEN), jnp.float32),    # all RMSNorm weights, one slab
        "wqkv": jnp.stack(wqkv_list).astype(jnp.bfloat16),        # [L, H, 3H]
        "wo": jnp.stack(wo_list).astype(jnp.bfloat16),            # [L, H, H]
        "layers": layers,
    }


# ---------------------------------- forward ----------------------------------------
def moet_forward(params, input_ids):
    B, S = input_ids.shape
    N = B * S
    ids2d = input_ids.reshape(N, 1).astype(jnp.int32)

    def const_spec(arr):
        zero = (0,) * arr.ndim
        return pl.BlockSpec(arr.shape, lambda b, z=zero: z)

    flat_inputs = [ids2d, params["emb_bf16"], params["emb_T_bf16"],
                   params["ln_slab"], params["wqkv"], params["wo"]]
    in_specs = [pl.BlockSpec((S, 1), lambda b: (b, 0)),
                const_spec(params["emb_bf16"]), const_spec(params["emb_T_bf16"]),
                const_spec(params["ln_slab"]), const_spec(params["wqkv"]),
                const_spec(params["wo"])]

    plan = []
    learned = []
    for (name, ltype, parallel, router, n_exp, p) in params["layers"]:
        if ltype == "tf":
            keys = ("up_w", "up_b", "down_w", "down_b")
        else:
            keys = ("up_w", "up_b", "down_w", "b2e") + (("pb2",) if parallel else ())
            if router == "learned":
                learned.append((name, n_exp))
        plan.append((name, ltype, parallel, router, n_exp, keys))
        for k in keys:
            flat_inputs.append(p[k])
            in_specs.append(const_spec(p[k]))

    assert sum(ne for _, ne in learned) <= GATE_WIDTH

    out_shape = (jax.ShapeDtypeStruct((N, VOCAB), jnp.float32),
                 jax.ShapeDtypeStruct((N, GATE_WIDTH), jnp.float32))
    out_specs = (pl.BlockSpec((S, VOCAB), lambda b: (b, 0)),
                 pl.BlockSpec((S, GATE_WIDTH), lambda b: (b, 0)))

    kernel = _make_fused_kernel(plan, len(flat_inputs), S=S)

    logits_flat, gates_flat = pl.pallas_call(
        kernel,
        grid=(B,),                                   # per-sequence tile; dual-TC on v7x
        in_specs=in_specs,
        out_specs=out_specs,
        out_shape=out_shape,
        compiler_params=pltpu.CompilerParams(dimension_semantics=("parallel",)),
    )(*flat_inputs)

    logits = logits_flat.reshape(B, S, VOCAB)
    cache = {}
    off = 0
    for name, ne in learned:
        cache[name] = gates_flat[:, off:off + ne].reshape(B, S, ne)
        off += ne
    return logits, cache


# ------------------------------------ main ------------------------------------------
if __name__ == "__main__":
    root = jax.random.PRNGKey(0)
    k_params, k_ids = jax.random.split(root)
    params = init_params(k_params)
    input_ids = jax.random.randint(k_ids, (BATCH, SEQ), 0, VOCAB, dtype=jnp.int32)

    logits, cache = moet_forward(params, input_ids)
    jax.block_until_ready(logits)
    assert logits.shape == (BATCH, SEQ, VOCAB)
    assert set(cache.keys()) == {"moe_block_early2", "moe_block_late4"}
    print("KERNEL_OK")
</pallas_src>

<mosaic_0001>
module attributes {stable_mosaic.version = 11 : i64} {
  func.func @kernel(%arg0: i32, %arg1: memref<8x1xi32, #tpu.memory_space<vmem>>, %arg2: memref<256x32xbf16, #tpu.memory_space<vmem>>, %arg3: memref<32x256xbf16, #tpu.memory_space<vmem>>, %arg4: memref<13x32xf32, #tpu.memory_space<vmem>>, %arg5: memref<6x32x96xbf16, #tpu.memory_space<vmem>>, %arg6: memref<6x32x32xbf16, #tpu.memory_space<vmem>>, %arg7: memref<32x512xbf16, #tpu.memory_space<vmem>>, %arg8: memref<1x512xf32, #tpu.memory_space<vmem>>, %arg9: memref<512x32xbf16, #tpu.memory_space<vmem>>, %arg10: memref<4x32xf32, #tpu.memory_space<vmem>>, %arg11: memref<32x128xbf16, #tpu.memory_space<vmem>>, %arg12: memref<1x128xf32, #tpu.memory_space<vmem>>, %arg13: memref<128x32xbf16, #tpu.memory_space<vmem>>, %arg14: memref<1x32xf32, #tpu.memory_space<vmem>>, %arg15: memref<32x644xbf16, #tpu.memory_space<vmem>>, %arg16: memref<1x644xf32, #tpu.memory_space<vmem>>, %arg17: memref<640x32xbf16, #tpu.memory_space<vmem>>, %arg18: memref<4x32xf32, #tpu.memory_space<vmem>>, %arg19: memref<1x32xf32, #tpu.memory_space<vmem>>, %arg20: memref<32x128xbf16, #tpu.memory_space<vmem>>, %arg21: memref<1x128xf32, #tpu.memory_space<vmem>>, %arg22: memref<128x32xbf16, #tpu.memory_space<vmem>>, %arg23: memref<1x32xf32, #tpu.memory_space<vmem>>, %arg24: memref<32x258xbf16, #tpu.memory_space<vmem>>, %arg25: memref<1x258xf32, #tpu.memory_space<vmem>>, %arg26: memref<256x32xbf16, #tpu.memory_space<vmem>>, %arg27: memref<2x32xf32, #tpu.memory_space<vmem>>, %arg28: memref<32x128xbf16, #tpu.memory_space<vmem>>, %arg29: memref<1x128xf32, #tpu.memory_space<vmem>>, %arg30: memref<128x32xbf16, #tpu.memory_space<vmem>>, %arg31: memref<1x32xf32, #tpu.memory_space<vmem>>, %arg32: memref<8x256xf32, #tpu.memory_space<vmem>>, %arg33: memref<8x128xf32, #tpu.memory_space<vmem>>) attributes {dimension_semantics = [#tpu.dimension_semantics<parallel>], iteration_bounds = array<i64: 2>, scalar_prefetch = 0 : i64, scratch_operands = 0 : i64, tpu.core_type = #tpu.core_type<tc>, window_params = [{transform_indices = @transform_0, window_bounds = array<i64: 8, 1>}, {pipeline_mode = #tpu.pipeline_mode<synchronous>, transform_indices = @transform_1, window_bounds = array<i64: 256, 32>}, {pipeline_mode = #tpu.pipeline_mode<synchronous>, transform_indices = @transform_2, window_bounds = array<i64: 32, 256>}, {pipeline_mode = #tpu.pipeline_mode<synchronous>, transform_indices = @transform_3, window_bounds = array<i64: 13, 32>}, {pipeline_mode = #tpu.pipeline_mode<synchronous>, transform_indices = @transform_4, window_bounds = array<i64: 6, 32, 96>}, {pipeline_mode = #tpu.pipeline_mode<synchronous>, transform_indices = @transform_5, window_bounds = array<i64: 6, 32, 32>}, {pipeline_mode = #tpu.pipeline_mode<synchronous>, transform_indices = @transform_6, window_bounds = array<i64: 32, 512>}, {pipeline_mode = #tpu.pipeline_mode<synchronous>, transform_indices = @transform_7, window_bounds = array<i64: 1, 512>}, {pipeline_mode = #tpu.pipeline_mode<synchronous>, transform_indices = @transform_8, window_bounds = array<i64: 512, 32>}, {pipeline_mode = #tpu.pipeline_mode<synchronous>, transform_indices = @transform_9, window_bounds = array<i64: 4, 32>}, {pipeline_mode = #tpu.pipeline_mode<synchronous>, transform_indices = @transform_10, window_bounds = array<i64: 32, 128>}, {pipeline_mode = #tpu.pipeline_mode<synchronous>, transform_indices = @transform_11, window_bounds = array<i64: 1, 128>}, {pipeline_mode = #tpu.pipeline_mode<synchronous>, transform_indices = @transform_12, window_bounds = array<i64: 128, 32>}, {pipeline_mode = #tpu.pipeline_mode<synchronous>, transform_indices = @transform_13, window_bounds = array<i64: 1, 32>}, {pipeline_mode = #tpu.pipeline_mode<synchronous>, transform_indices = @transform_14, window_bounds = array<i64: 32, 644>}, {pipeline_mode = #tpu.pipeline_mode<synchronous>, transform_indices = @transform_15, window_bounds = array<i64: 1, 644>}, {pipeline_mode = #tpu.pipeline_mode<synchronous>, transform_indices = @transform_16, window_bounds = array<i64: 640, 32>}, {pipeline_mode = #tpu.pipeline_mode<synchronous>, transform_indices = @transform_17, window_bounds = array<i64: 4, 32>}, {pipeline_mode = #tpu.pipeline_mode<synchronous>, transform_indices = @transform_18, window_bounds = array<i64: 1, 32>}, {pipeline_mode = #tpu.pipeline_mode<synchronous>, transform_indices = @transform_19, window_bounds = array<i64: 32, 128>}, {pipeline_mode = #tpu.pipeline_mode<synchronous>, transform_indices = @transform_20, window_bounds = array<i64: 1, 128>}, {pipeline_mode = #tpu.pipeline_mode<synchronous>, transform_indices = @transform_21, window_bounds = array<i64: 128, 32>}, {pipeline_mode = #tpu.pipeline_mode<synchronous>, transform_indices = @transform_22, window_bounds = array<i64: 1, 32>}, {pipeline_mode = #tpu.pipeline_mode<synchronous>, transform_indices = @transform_23, window_bounds = array<i64: 32, 258>}, {pipeline_mode = #tpu.pipeline_mode<synchronous>, transform_indices = @transform_24, window_bounds = array<i64: 1, 258>}, {pipeline_mode = #tpu.pipeline_mode<synchronous>, transform_indices = @transform_25, window_bounds = array<i64: 256, 32>}, {pipeline_mode = #tpu.pipeline_mode<synchronous>, transform_indices = @transform_26, window_bounds = array<i64: 2, 32>}, {pipeline_mode = #tpu.pipeline_mode<synchronous>, transform_indices = @transform_27, window_bounds = array<i64: 32, 128>}, {pipeline_mode = #tpu.pipeline_mode<synchronous>, transform_indices = @transform_28, window_bounds = array<i64: 1, 128>}, {pipeline_mode = #tpu.pipeline_mode<synchronous>, transform_indices = @transform_29, window_bounds = array<i64: 128, 32>}, {pipeline_mode = #tpu.pipeline_mode<synchronous>, transform_indices = @transform_30, window_bounds = array<i64: 1, 32>}, {transform_indices = @transform_31, window_bounds = array<i64: 8, 256>}, {transform_indices = @transform_32, window_bounds = array<i64: 8, 128>}]} {
    %c0 = arith.constant 0 : index
    %c0_0 = arith.constant 0 : index
    %0 = vector.load %arg1[%c0, %c0_0] : memref<8x1xi32, #tpu.memory_space<vmem>>, vector<8x1xi32>
    %1 = tpu.iota {dimensions = array<i32: 1>} : vector<8x256xi32>
    %2 = vector.broadcast %0 : vector<8x1xi32> to vector<8x256xi32>
    %3 = arith.cmpi eq, %1, %2 : vector<8x256xi32>
    %4 = arith.extui %3 : vector<8x256xi1> to vector<8x256xi32>
    %5 = arith.sitofp %4 : vector<8x256xi32> to vector<8x256xf32>
    %6 = arith.truncf %5 : vector<8x256xf32> to vector<8x256xbf16>
    %c0_1 = arith.constant 0 : index
    %c0_2 = arith.constant 0 : index
    %7 = vector.load %arg2[%c0_1, %c0_2] : memref<256x32xbf16, #tpu.memory_space<vmem>>, vector<256x32xbf16>
    %cst = arith.constant dense<0.000000e+00> : vector<8x32xf32>
    %8 = tpu.matmul %6, %7, %cst {dimension_numbers = #tpu.dot_dimension_numbers<[1], [0], [0], [1], [0, 0, 1, 1], [], []>} : vector<8x256xbf16>, vector<256x32xbf16>, vector<8x32xf32> -> vector<8x32xf32>
    %9 = tpu.iota {dimensions = array<i32: 0>} : vector<8x8xi32>
    %10 = tpu.iota {dimensions = array<i32: 1>} : vector<8x8xi32>
    %11 = arith.subi %10, %9 : vector<8x8xi32>
    %12 = arith.sitofp %11 : vector<8x8xi32> to vector<8x8xf32>
    %13 = arith.cmpi sle, %10, %9 : vector<8x8xi32>
    %cst_3 = arith.constant 0.000000e+00 : f32
    %cst_4 = arith.constant -1.000000e+09 : f32
    %14 = vector.broadcast %cst_3 : f32 to vector<8x8xf32>
    %15 = vector.broadcast %cst_4 : f32 to vector<8x8xf32>
    %16 = arith.select %13, %14, %15 : vector<8x8xi1>, vector<8x8xf32>
    %cst_5 = arith.constant 2.500000e-01 : f32
    %17 = vector.broadcast %cst_5 : f32 to vector<8x8xf32>
    %18 = arith.mulf %17, %12 : vector<8x8xf32>
    %19 = arith.addf %18, %16 : vector<8x8xf32>
    %cst_6 = arith.constant 6.250000e-02 : f32
    %20 = vector.broadcast %cst_6 : f32 to vector<8x8xf32>
    %21 = arith.mulf %20, %12 : vector<8x8xf32>
    %22 = arith.addf %21, %16 : vector<8x8xf32>
    %cst_7 = arith.constant 1.562500e-02 : f32
    %23 = vector.broadcast %cst_7 : f32 to vector<8x8xf32>
    %24 = arith.mulf %23, %12 : vector<8x8xf32>
    %25 = arith.addf %24, %16 : vector<8x8xf32>
    %cst_8 = arith.constant 3.906250e-03 : f32
    %26 = vector.broadcast %cst_8 : f32 to vector<8x8xf32>
    %27 = arith.mulf %26, %12 : vector<8x8xf32>
    %28 = arith.addf %27, %16 : vector<8x8xf32>
    %c0_9 = arith.constant 0 : index
    %c0_10 = arith.constant 0 : index
    %29 = vector.load %arg4[%c0_9, %c0_10] : memref<13x32xf32, #tpu.memory_space<vmem>>, vector<1x32xf32>
    %c1 = arith.constant 1 : index
    %c0_11 = arith.constant 0 : index
    %30 = vector.load %arg4[%c1, %c0_11] : memref<13x32xf32, #tpu.memory_space<vmem>>, vector<1x32xf32>
    %31 = arith.mulf %8, %8 : vector<8x32xf32>
    %cst_12 = arith.constant dense<0.000000e+00> : vector<8xf32>
    %32 = vector.multi_reduction <add>, %31, %cst_12 [1] : vector<8x32xf32> to vector<8xf32>
    %33 = vector.shape_cast %32 : vector<8xf32> to vector<8x1xf32>
    %cst_13 = arith.constant 3.200000e+01 : f32
    %34 = vector.broadcast %cst_13 : f32 to vector<8x1xf32>
    %35 = arith.divf %33, %34 : vector<8x1xf32>
    %cst_14 = arith.constant 9.99999997E-7 : f32
    %36 = vector.broadcast %cst_14 : f32 to vector<8x1xf32>
    %37 = arith.addf %35, %36 : vector<8x1xf32>
    %38 = math.rsqrt %37 : vector<8x1xf32>
    %39 = vector.broadcast %38 : vector<8x1xf32> to vector<8x32xf32>
    %40 = arith.mulf %8, %39 : vector<8x32xf32>
    %41 = vector.broadcast %29 : vector<1x32xf32> to vector<8x32xf32>
    %42 = arith.mulf %40, %41 : vector<8x32xf32>
    %43 = arith.truncf %42 : vector<8x32xf32> to vector<8x32xbf16>
    %c0_15 = arith.constant 0 : index
    %c0_16 = arith.constant 0 : index
    %c0_17 = arith.constant 0 : index
    %44 = vector.load %arg5[%c0_15, %c0_16, %c0_17] : memref<6x32x96xbf16, #tpu.memory_space<vmem>>, vector<1x32x96xbf16>
    %45 = vector.shape_cast %44 : vector<1x32x96xbf16> to vector<32x96xbf16>
    %cst_18 = arith.constant dense<0.000000e+00> : vector<8x96xf32>
    %46 = tpu.matmul %43, %45, %cst_18 {dimension_numbers = #tpu.dot_dimension_numbers<[1], [0], [0], [1], [0, 0, 1, 1], [], []>} : vector<8x32xbf16>, vector<32x96xbf16>, vector<8x96xf32> -> vector<8x96xf32>
    %47 = vector.extract_strided_slice %46 {offsets = [0, 0], sizes = [8, 8], strides = [1, 1]} : vector<8x96xf32> to vector<8x8xf32>
    %48 = arith.truncf %47 : vector<8x8xf32> to vector<8x8xbf16>
    %49 = vector.extract_strided_slice %46 {offsets = [0, 32], sizes = [8, 8], strides = [1, 1]} : vector<8x96xf32> to vector<8x8xf32>
    %50 = arith.truncf %49 : vector<8x8xf32> to vector<8x8xbf16>
    %51 = vector.extract_strided_slice %46 {offsets = [0, 64], sizes = [8, 8], strides = [1, 1]} : vector<8x96xf32> to vector<8x8xf32>
    %52 = arith.truncf %51 : vector<8x8xf32> to vector<8x8xbf16>
    %cst_19 = arith.constant dense<0.000000e+00> : vector<8x8xf32>
    %53 = tpu.matmul %48, %50, %cst_19 {dimension_numbers = #tpu.dot_dimension_numbers<[1], [1], [0], [0], [0, 0, 1, 0], [], []>} : vector<8x8xbf16>, vector<8x8xbf16>, vector<8x8xf32> -> vector<8x8xf32>
    %cst_20 = arith.constant 0.353553385 : f32
    %54 = vector.broadcast %cst_20 : f32 to vector<8x8xf32>
    %55 = arith.mulf %53, %54 : vector<8x8xf32>
    %56 = arith.addf %55, %19 : vector<8x8xf32>
    %cst_21 = arith.constant dense<0xFF800000> : vector<8xf32>
    %57 = vector.multi_reduction <maximumf>, %56, %cst_21 [1] : vector<8x8xf32> to vector<8xf32>
    %58 = vector.shape_cast %57 : vector<8xf32> to vector<8x1xf32>
    %59 = vector.broadcast %58 : vector<8x1xf32> to vector<8x8xf32>
    %60 = arith.subf %56, %59 : vector<8x8xf32>
    %61 = math.exp %60 : vector<8x8xf32>
    %cst_22 = arith.constant dense<0.000000e+00> : vector<8xf32>
    %62 = vector.multi_reduction <add>, %61, %cst_22 [1] : vector<8x8xf32> to vector<8xf32>
    %63 = vector.shape_cast %62 : vector<8xf32> to vector<8x1xf32>
    %64 = tpu.reciprocal %63 {approx = true} : vector<8x1xf32> -> vector<8x1xf32>
    %65 = vector.broadcast %64 : vector<8x1xf32> to vector<8x8xf32>
    %66 = arith.mulf %61, %65 : vector<8x8xf32>
    %67 = arith.truncf %66 : vector<8x8xf32> to vector<8x8xbf16>
    %cst_23 = arith.constant dense<0.000000e+00> : vector<8x8xf32>
    %68 = tpu.matmul %67, %52, %cst_23 {dimension_numbers = #tpu.dot_dimension_numbers<[1], [0], [0], [1], [0, 0, 1, 1], [], []>} : vector<8x8xbf16>, vector<8x8xbf16>, vector<8x8xf32> -> vector<8x8xf32>
    %69 = vector.extract_strided_slice %46 {offsets = [0, 8], sizes = [8, 8], strides = [1, 1]} : vector<8x96xf32> to vector<8x8xf32>
    %70 = arith.truncf %69 : vector<8x8xf32> to vector<8x8xbf16>
    %71 = vector.extract_strided_slice %46 {offsets = [0, 40], sizes = [8, 8], strides = [1, 1]} : vector<8x96xf32> to vector<8x8xf32>
    %72 = arith.truncf %71 : vector<8x8xf32> to vector<8x8xbf16>
    %73 = vector.extract_strided_slice %46 {offsets = [0, 72], sizes = [8, 8], strides = [1, 1]} : vector<8x96xf32> to vector<8x8xf32>
    %74 = arith.truncf %73 : vector<8x8xf32> to vector<8x8xbf16>
    %cst_24 = arith.constant dense<0.000000e+00> : vector<8x8xf32>
    %75 = tpu.matmul %70, %72, %cst_24 {dimension_numbers = #tpu.dot_dimension_numbers<[1], [1], [0], [0], [0, 0, 1, 0], [], []>} : vector<8x8xbf16>, vector<8x8xbf16>, vector<8x8xf32> -> vector<8x8xf32>
    %cst_25 = arith.constant 0.353553385 : f32
    %76 = vector.broadcast %cst_25 : f32 to vector<8x8xf32>
    %77 = arith.mulf %75, %76 : vector<8x8xf32>
    %78 = arith.addf %77, %22 : vector<8x8xf32>
    %cst_26 = arith.constant dense<0xFF800000> : vector<8xf32>
    %79 = vector.multi_reduction <maximumf>, %78, %cst_26 [1] : vector<8x8xf32> to vector<8xf32>
    %80 = vector.shape_cast %79 : vector<8xf32> to vector<8x1xf32>
    %81 = vector.broadcast %80 : vector<8x1xf32> to vector<8x8xf32>
    %82 = arith.subf %78, %81 : vector<8x8xf32>
    %83 = math.exp %82 : vector<8x8xf32>
    %cst_27 = arith.constant dense<0.000000e+00> : vector<8xf32>
    %84 = vector.multi_reduction <add>, %83, %cst_27 [1] : vector<8x8xf32> to vector<8xf32>
    %85 = vector.shape_cast %84 : vector<8xf32> to vector<8x1xf32>
    %86 = tpu.reciprocal %85 {approx = true} : vector<8x1xf32> -> vector<8x1xf32>
    %87 = vector.broadcast %86 : vector<8x1xf32> to vector<8x8xf32>
    %88 = arith.mulf %83, %87 : vector<8x8xf32>
    %89 = arith.truncf %88 : vector<8x8xf32> to vector<8x8xbf16>
    %cst_28 = arith.constant dense<0.000000e+00> : vector<8x8xf32>
    %90 = tpu.matmul %89, %74, %cst_28 {dimension_numbers = #tpu.dot_dimension_numbers<[1], [0], [0], [1], [0, 0, 1, 1], [], []>} : vector<8x8xbf16>, vector<8x8xbf16>, vector<8x8xf32> -> vector<8x8xf32>
    %91 = vector.extract_strided_slice %46 {offsets = [0, 16], sizes = [8, 8], strides = [1, 1]} : vector<8x96xf32> to vector<8x8xf32>
    %92 = arith.truncf %91 : vector<8x8xf32> to vector<8x8xbf16>
    %93 = vector.extract_strided_slice %46 {offsets = [0, 48], sizes = [8, 8], strides = [1, 1]} : vector<8x96xf32> to vector<8x8xf32>
    %94 = arith.truncf %93 : vector<8x8xf32> to vector<8x8xbf16>
    %95 = vector.extract_strided_slice %46 {offsets = [0, 80], sizes = [8, 8], strides = [1, 1]} : vector<8x96xf32> to vector<8x8xf32>
    %96 = arith.truncf %95 : vector<8x8xf32> to vector<8x8xbf16>
    %cst_29 = arith.constant dense<0.000000e+00> : vector<8x8xf32>
    %97 = tpu.matmul %92, %94, %cst_29 {dimension_numbers = #tpu.dot_dimension_numbers<[1], [1], [0], [0], [0, 0, 1, 0], [], []>} : vector<8x8xbf16>, vector<8x8xbf16>, vector<8x8xf32> -> vector<8x8xf32>
    %cst_30 = arith.constant 0.353553385 : f32
    %98 = vector.broadcast %cst_30 : f32 to vector<8x8xf32>
    %99 = arith.mulf %97, %98 : vector<8x8xf32>
    %100 = arith.addf %99, %25 : vector<8x8xf32>
    %cst_31 = arith.constant dense<0xFF800000> : vector<8xf32>
    %101 = vector.multi_reduction <maximumf>, %100, %cst_31 [1] : vector<8x8xf32> to vector<8xf32>
    %102 = vector.shape_cast %101 : vector<8xf32> to vector<8x1xf32>
    %103 = vector.broadcast %102 : vector<8x1xf32> to vector<8x8xf32>
    %104 = arith.subf %100, %103 : vector<8x8xf32>
    %105 = math.exp %104 : vector<8x8xf32>
    %cst_32 = arith.constant dense<0.000000e+00> : vector<8xf32>
    %106 = vector.multi_reduction <add>, %105, %cst_32 [1] : vector<8x8xf32> to vector<8xf32>
    %107 = vector.shape_cast %106 : vector<8xf32> to vector<8x1xf32>
    %108 = tpu.reciprocal %107 {approx = true} : vector<8x1xf32> -> vector<8x1xf32>
    %109 = vector.broadcast %108 : vector<8x1xf32> to vector<8x8xf32>
    %110 = arith.mulf %105, %109 : vector<8x8xf32>
    %111 = arith.truncf %110 : vector<8x8xf32> to vector<8x8xbf16>
    %cst_33 = arith.constant dense<0.000000e+00> : vector<8x8xf32>
    %112 = tpu.matmul %111, %96, %cst_33 {dimension_numbers = #tpu.dot_dimension_numbers<[1], [0], [0], [1], [0, 0, 1, 1], [], []>} : vector<8x8xbf16>, vector<8x8xbf16>, vector<8x8xf32> -> vector<8x8xf32>
    %113 = vector.extract_strided_slice %46 {offsets = [0, 24], sizes = [8, 8], strides = [1, 1]} : vector<8x96xf32> to vector<8x8xf32>
    %114 = arith.truncf %113 : vector<8x8xf32> to vector<8x8xbf16>
    %115 = vector.extract_strided_slice %46 {offsets = [0, 56], sizes = [8, 8], strides = [1, 1]} : vector<8x96xf32> to vector<8x8xf32>
    %116 = arith.truncf %115 : vector<8x8xf32> to vector<8x8xbf16>
    %117 = vector.extract_strided_slice %46 {offsets = [0, 88], sizes = [8, 8], strides = [1, 1]} : vector<8x96xf32> to vector<8x8xf32>
    %118 = arith.truncf %117 : vector<8x8xf32> to vector<8x8xbf16>
    %cst_34 = arith.constant dense<0.000000e+00> : vector<8x8xf32>
    %119 = tpu.matmul %114, %116, %cst_34 {dimension_numbers = #tpu.dot_dimension_numbers<[1], [1], [0], [0], [0, 0, 1, 0], [], []>} : vector<8x8xbf16>, vector<8x8xbf16>, vector<8x8xf32> -> vector<8x8xf32>
    %cst_35 = arith.constant 0.353553385 : f32
    %120 = vector.broadcast %cst_35 : f32 to vector<8x8xf32>
    %121 = arith.mulf %119, %120 : vector<8x8xf32>
    %122 = arith.addf %121, %28 : vector<8x8xf32>
    %cst_36 = arith.constant dense<0xFF800000> : vector<8xf32>
    %123 = vector.multi_reduction <maximumf>, %122, %cst_36 [1] : vector<8x8xf32> to vector<8xf32>
    %124 = vector.shape_cast %123 : vector<8xf32> to vector<8x1xf32>
    %125 = vector.broadcast %124 : vector<8x1xf32> to vector<8x8xf32>
    %126 = arith.subf %122, %125 : vector<8x8xf32>
    %127 = math.exp %126 : vector<8x8xf32>
    %cst_37 = arith.constant dense<0.000000e+00> : vector<8xf32>
    %128 = vector.multi_reduction <add>, %127, %cst_37 [1] : vector<8x8xf32> to vector<8xf32>
    %129 = vector.shape_cast %128 : vector<8xf32> to vector<8x1xf32>
    %130 = tpu.reciprocal %129 {approx = true} : vector<8x1xf32> -> vector<8x1xf32>
    %131 = vector.broadcast %130 : vector<8x1xf32> to vector<8x8xf32>
    %132 = arith.mulf %127, %131 : vector<8x8xf32>
    %133 = arith.truncf %132 : vector<8x8xf32> to vector<8x8xbf16>
    %cst_38 = arith.constant dense<0.000000e+00> : vector<8x8xf32>
    %134 = tpu.matmul %133, %118, %cst_38 {dimension_numbers = #tpu.dot_dimension_numbers<[1], [0], [0], [1], [0, 0, 1, 1], [], []>} : vector<8x8xbf16>, vector<8x8xbf16>, vector<8x8xf32> -> vector<8x8xf32>
    %135 = tpu.concatenate %68, %90, %112, %134 in 1 : vector<8x8xf32>, vector<8x8xf32>, vector<8x8xf32>, vector<8x8xf32> -> vector<8x32xf32>
    %136 = arith.truncf %135 : vector<8x32xf32> to vector<8x32xbf16>
    %c0_39 = arith.constant 0 : index
    %c0_40 = arith.constant 0 : index
    %c0_41 = arith.constant 0 : index
    %137 = vector.load %arg6[%c0_39, %c0_40, %c0_41] : memref<6x32x32xbf16, #tpu.memory_space<vmem>>, vector<1x32x32xbf16>
    %138 = vector.shape_cast %137 : vector<1x32x32xbf16> to vector<32x32xbf16>
    %cst_42 = arith.constant dense<0.000000e+00> : vector<8x32xf32>
    %139 = tpu.matmul %136, %138, %cst_42 {dimension_numbers = #tpu.dot_dimension_numbers<[1], [0], [0], [1], [0, 0, 1, 1], [], []>} : vector<8x32xbf16>, vector<32x32xbf16>, vector<8x32xf32> -> vector<8x32xf32>
    %140 = arith.addf %8, %139 : vector<8x32xf32>
    %141 = arith.mulf %140, %140 : vector<8x32xf32>
    %cst_43 = arith.constant dense<0.000000e+00> : vector<8xf32>
    %142 = vector.multi_reduction <add>, %141, %cst_43 [1] : vector<8x32xf32> to vector<8xf32>
    %143 = vector.shape_cast %142 : vector<8xf32> to vector<8x1xf32>
    %cst_44 = arith.constant 3.200000e+01 : f32
    %144 = vector.broadcast %cst_44 : f32 to vector<8x1xf32>
    %145 = arith.divf %143, %144 : vector<8x1xf32>
    %cst_45 = arith.constant 9.99999997E-7 : f32
    %146 = vector.broadcast %cst_45 : f32 to vector<8x1xf32>
    %147 = arith.addf %145, %146 : vector<8x1xf32>
    %148 = math.rsqrt %147 : vector<8x1xf32>
    %149 = vector.broadcast %148 : vector<8x1xf32> to vector<8x32xf32>
    %150 = arith.mulf %140, %149 : vector<8x32xf32>
    %151 = vector.broadcast %30 : vector<1x32xf32> to vector<8x32xf32>
    %152 = arith.mulf %150, %151 : vector<8x32xf32>
    %153 = arith.truncf %152 : vector<8x32xf32> to vector<8x32xbf16>
    %c0_46 = arith.constant 0 : index
    %c0_47 = arith.constant 0 : index
    %154 = vector.load %arg7[%c0_46, %c0_47] : memref<32x512xbf16, #tpu.memory_space<vmem>>, vector<32x512xbf16>
    %cst_48 = arith.constant dense<0.000000e+00> : vector<8x512xf32>
    %155 = tpu.matmul %153, %154, %cst_48 {dimension_numbers = #tpu.dot_dimension_numbers<[1], [0], [0], [1], [0, 0, 1, 1], [], []>} : vector<8x32xbf16>, vector<32x512xbf16>, vector<8x512xf32> -> vector<8x512xf32>
    %c0_49 = arith.constant 0 : index
    %c0_50 = arith.constant 0 : index
    %156 = vector.load %arg8[%c0_49, %c0_50] : memref<1x512xf32, #tpu.memory_space<vmem>>, vector<1x512xf32>
    %157 = vector.broadcast %156 : vector<1x512xf32> to vector<8x512xf32>
    %158 = arith.addf %155, %157 : vector<8x512xf32>
    %cst_51 = arith.constant 5.000000e-01 : f32
    %159 = vector.broadcast %cst_51 : f32 to vector<8x512xf32>
    %160 = arith.mulf %159, %158 : vector<8x512xf32>
    %cst_52 = arith.constant 4.471500e-02 : f32
    %161 = vector.broadcast %cst_52 : f32 to vector<8x512xf32>
    %162 = arith.mulf %161, %158 : vector<8x512xf32>
    %163 = arith.mulf %162, %158 : vector<8x512xf32>
    %164 = arith.mulf %163, %158 : vector<8x512xf32>
    %165 = arith.addf %158, %164 : vector<8x512xf32>
    %cst_53 = arith.constant 0.797884583 : f32
    %166 = vector.broadcast %cst_53 : f32 to vector<8x512xf32>
    %167 = arith.mulf %166, %165 : vector<8x512xf32>
    %168 = math.tanh %167 : vector<8x512xf32>
    %cst_54 = arith.constant 1.000000e+00 : f32
    %169 = vector.broadcast %cst_54 : f32 to vector<8x512xf32>
    %170 = arith.addf %169, %168 : vector<8x512xf32>
    %171 = arith.mulf %160, %170 : vector<8x512xf32>
    %172 = tpu.iota {dimensions = array<i32: 1>} : vector<8x4xi32>
    %c3_i32 = arith.constant 3 : i32
    %173 = vector.broadcast %c3_i32 : i32 to vector<8x1xi32>
    %174 = arith.andi %0, %173 : vector<8x1xi32>
    %175 = vector.broadcast %174 : vector<8x1xi32> to vector<8x4xi32>
    %176 = arith.cmpi eq, %175, %172 : vector<8x4xi32>
    %177 = arith.extui %176 : vector<8x4xi1> to vector<8x4xi32>
    %178 = arith.sitofp %177 : vector<8x4xi32> to vector<8x4xf32>
    %179 = vector.extract_strided_slice %171 {offsets = [0, 0], sizes = [8, 128], strides = [1, 1]} : vector<8x512xf32> to vector<8x128xf32>
    %180 = vector.extract_strided_slice %178 {offsets = [0, 0], sizes = [8, 1], strides = [1, 1]} : vector<8x4xf32> to vector<8x1xf32>
    %181 = vector.broadcast %180 : vector<8x1xf32> to vector<8x128xf32>
    %182 = arith.mulf %179, %181 : vector<8x128xf32>
    %183 = vector.extract_strided_slice %171 {offsets = [0, 128], sizes = [8, 128], strides = [1, 1]} : vector<8x512xf32> to vector<8x128xf32>
    %184 = vector.extract_strided_slice %178 {offsets = [0, 1], sizes = [8, 1], strides = [1, 1]} : vector<8x4xf32> to vector<8x1xf32>
    %185 = vector.broadcast %184 : vector<8x1xf32> to vector<8x128xf32>
    %186 = arith.mulf %183, %185 : vector<8x128xf32>
    %187 = vector.extract_strided_slice %171 {offsets = [0, 256], sizes = [8, 128], strides = [1, 1]} : vector<8x512xf32> to vector<8x128xf32>
    %188 = vector.extract_strided_slice %178 {offsets = [0, 2], sizes = [8, 1], strides = [1, 1]} : vector<8x4xf32> to vector<8x1xf32>
    %189 = vector.broadcast %188 : vector<8x1xf32> to vector<8x128xf32>
    %190 = arith.mulf %187, %189 : vector<8x128xf32>
    %191 = vector.extract_strided_slice %171 {offsets = [0, 384], sizes = [8, 128], strides = [1, 1]} : vector<8x512xf32> to vector<8x128xf32>
    %192 = vector.extract_strided_slice %178 {offsets = [0, 3], sizes = [8, 1], strides = [1, 1]} : vector<8x4xf32> to vector<8x1xf32>
    %193 = vector.broadcast %192 : vector<8x1xf32> to vector<8x128xf32>
    %194 = arith.mulf %191, %193 : vector<8x128xf32>
    %195 = tpu.concatenate %182, %186, %190, %194 in 1 : vector<8x128xf32>, vector<8x128xf32>, vector<8x128xf32>, vector<8x128xf32> -> vector<8x512xf32>
    %196 = arith.truncf %195 : vector<8x512xf32> to vector<8x512xbf16>
    %c0_55 = arith.constant 0 : index
    %c0_56 = arith.constant 0 : index
    %197 = vector.load %arg9[%c0_55, %c0_56] : memref<512x32xbf16, #tpu.memory_space<vmem>>, vector<512x32xbf16>
    %cst_57 = arith.constant dense<0.000000e+00> : vector<8x32xf32>
    %198 = tpu.matmul %196, %197, %cst_57 {dimension_numbers = #tpu.dot_dimension_numbers<[1], [0], [0], [1], [0, 0, 1, 1], [], []>} : vector<8x512xbf16>, vector<512x32xbf16>, vector<8x32xf32> -> vector<8x32xf32>
    %c0_58 = arith.constant 0 : index
    %c0_59 = arith.constant 0 : index
    %199 = vector.load %arg10[%c0_58, %c0_59] : memref<4x32xf32, #tpu.memory_space<vmem>>, vector<4x32xf32>
    %cst_60 = arith.constant dense<0.000000e+00> : vector<8x32xf32>
    %200 = tpu.matmul %178, %199, %cst_60 {dimension_numbers = #tpu.dot_dimension_numbers<[1], [0], [0], [1], [0, 0, 1, 1], [], []>} : vector<8x4xf32>, vector<4x32xf32>, vector<8x32xf32> -> vector<8x32xf32>
    %201 = arith.addf %198, %200 : vector<8x32xf32>
    %202 = arith.addf %140, %201 : vector<8x32xf32>
    %c2 = arith.constant 2 : index
    %c0_61 = arith.constant 0 : index
    %203 = vector.load %arg4[%c2, %c0_61] : memref<13x32xf32, #tpu.memory_space<vmem>>, vector<1x32xf32>
    %c3 = arith.constant 3 : index
    %c0_62 = arith.constant 0 : index
    %204 = vector.load %arg4[%c3, %c0_62] : memref<13x32xf32, #tpu.memory_space<vmem>>, vector<1x32xf32>
    %205 = arith.mulf %202, %202 : vector<8x32xf32>
    %cst_63 = arith.constant dense<0.000000e+00> : vector<8xf32>
    %206 = vector.multi_reduction <add>, %205, %cst_63 [1] : vector<8x32xf32> to vector<8xf32>
    %207 = vector.shape_cast %206 : vector<8xf32> to vector<8x1xf32>
    %cst_64 = arith.constant 3.200000e+01 : f32
    %208 = vector.broadcast %cst_64 : f32 to vector<8x1xf32>
    %209 = arith.divf %207, %208 : vector<8x1xf32>
    %cst_65 = arith.constant 9.99999997E-7 : f32
    %210 = vector.broadcast %cst_65 : f32 to vector<8x1xf32>
    %211 = arith.addf %209, %210 : vector<8x1xf32>
    %212 = math.rsqrt %211 : vector<8x1xf32>
    %213 = vector.broadcast %212 : vector<8x1xf32> to vector<8x32xf32>
    %214 = arith.mulf %202, %213 : vector<8x32xf32>
    %215 = vector.broadcast %203 : vector<1x32xf32> to vector<8x32xf32>
    %216 = arith.mulf %214, %215 : vector<8x32xf32>
    %217 = arith.truncf %216 : vector<8x32xf32> to vector<8x32xbf16>
    %c1_66 = arith.constant 1 : index
    %c0_67 = arith.constant 0 : index
    %c0_68 = arith.constant 0 : index
    %218 = vector.load %arg5[%c1_66, %c0_67, %c0_68] : memref<6x32x96xbf16, #tpu.memory_space<vmem>>, vector<1x32x96xbf16>
    %219 = vector.shape_cast %218 : vector<1x32x96xbf16> to vector<32x96xbf16>
    %cst_69 = arith.constant dense<0.000000e+00> : vector<8x96xf32>
    %220 = tpu.matmul %217, %219, %cst_69 {dimension_numbers = #tpu.dot_dimension_numbers<[1], [0], [0], [1], [0, 0, 1, 1], [], []>} : vector<8x32xbf16>, vector<32x96xbf16>, vector<8x96xf32> -> vector<8x96xf32>
    %221 = vector.extract_strided_slice %220 {offsets = [0, 0], sizes = [8, 8], strides = [1, 1]} : vector<8x96xf32> to vector<8x8xf32>
    %222 = arith.truncf %221 : vector<8x8xf32> to vector<8x8xbf16>
    %223 = vector.extract_strided_slice %220 {offsets = [0, 32], sizes = [8, 8], strides = [1, 1]} : vector<8x96xf32> to vector<8x8xf32>
    %224 = arith.truncf %223 : vector<8x8xf32> to vector<8x8xbf16>
    %225 = vector.extract_strided_slice %220 {offsets = [0, 64], sizes = [8, 8], strides = [1, 1]} : vector<8x96xf32> to vector<8x8xf32>
    %226 = arith.truncf %225 : vector<8x8xf32> to vector<8x8xbf16>
    %cst_70 = arith.constant dense<0.000000e+00> : vector<8x8xf32>
    %227 = tpu.matmul %222, %224, %cst_70 {dimension_numbers = #tpu.dot_dimension_numbers<[1], [1], [0], [0], [0, 0, 1, 0], [], []>} : vector<8x8xbf16>, vector<8x8xbf16>, vector<8x8xf32> -> vector<8x8xf32>
    %cst_71 = arith.constant 0.353553385 : f32
    %228 = vector.broadcast %cst_71 : f32 to vector<8x8xf32>
    %229 = arith.mulf %227, %228 : vector<8x8xf32>
    %230 = arith.addf %229, %19 : vector<8x8xf32>
    %cst_72 = arith.constant dense<0xFF800000> : vector<8xf32>
    %231 = vector.multi_reduction <maximumf>, %230, %cst_72 [1] : vector<8x8xf32> to vector<8xf32>
    %232 = vector.shape_cast %231 : vector<8xf32> to vector<8x1xf32>
    %233 = vector.broadcast %232 : vector<8x1xf32> to vector<8x8xf32>
    %234 = arith.subf %230, %233 : vector<8x8xf32>
    %235 = math.exp %234 : vector<8x8xf32>
    %cst_73 = arith.constant dense<0.000000e+00> : vector<8xf32>
    %236 = vector.multi_reduction <add>, %235, %cst_73 [1] : vector<8x8xf32> to vector<8xf32>
    %237 = vector.shape_cast %236 : vector<8xf32> to vector<8x1xf32>
    %238 = tpu.reciprocal %237 {approx = true} : vector<8x1xf32> -> vector<8x1xf32>
    %239 = vector.broadcast %238 : vector<8x1xf32> to vector<8x8xf32>
    %240 = arith.mulf %235, %239 : vector<8x8xf32>
    %241 = arith.truncf %240 : vector<8x8xf32> to vector<8x8xbf16>
    %cst_74 = arith.constant dense<0.000000e+00> : vector<8x8xf32>
    %242 = tpu.matmul %241, %226, %cst_74 {dimension_numbers = #tpu.dot_dimension_numbers<[1], [0], [0], [1], [0, 0, 1, 1], [], []>} : vector<8x8xbf16>, vector<8x8xbf16>, vector<8x8xf32> -> vector<8x8xf32>
    %243 = vector.extract_strided_slice %220 {offsets = [0, 8], sizes = [8, 8], strides = [1, 1]} : vector<8x96xf32> to vector<8x8xf32>
    %244 = arith.truncf %243 : vector<8x8xf32> to vector<8x8xbf16>
    %245 = vector.extract_strided_slice %220 {offsets = [0, 40], sizes = [8, 8], strides = [1, 1]} : vector<8x96xf32> to vector<8x8xf32>
    %246 = arith.truncf %245 : vector<8x8xf32> to vector<8x8xbf16>
    %247 = vector.extract_strided_slice %220 {offsets = [0, 72], sizes = [8, 8], strides = [1, 1]} : vector<8x96xf32> to vector<8x8xf32>
    %248 = arith.truncf %247 : vector<8x8xf32> to vector<8x8xbf16>
    %cst_75 = arith.constant dense<0.000000e+00> : vector<8x8xf32>
    %249 = tpu.matmul %244, %246, %cst_75 {dimension_numbers = #tpu.dot_dimension_numbers<[1], [1], [0], [0], [0, 0, 1, 0], [], []>} : vector<8x8xbf16>, vector<8x8xbf16>, vector<8x8xf32> -> vector<8x8xf32>
    %cst_76 = arith.constant 0.353553385 : f32
    %250 = vector.broadcast %cst_76 : f32 to vector<8x8xf32>
    %251 = arith.mulf %249, %250 : vector<8x8xf32>
    %252 = arith.addf %251, %22 : vector<8x8xf32>
    %cst_77 = arith.constant dense<0xFF800000> : vector<8xf32>
    %253 = vector.multi_reduction <maximumf>, %252, %cst_77 [1] : vector<8x8xf32> to vector<8xf32>
    %254 = vector.shape_cast %253 : vector<8xf32> to vector<8x1xf32>
    %255 = vector.broadcast %254 : vector<8x1xf32> to vector<8x8xf32>
    %256 = arith.subf %252, %255 : vector<8x8xf32>
    %257 = math.exp %256 : vector<8x8xf32>
    %cst_78 = arith.constant dense<0.000000e+00> : vector<8xf32>
    %258 = vector.multi_reduction <add>, %257, %cst_78 [1] : vector<8x8xf32> to vector<8xf32>
    %259 = vector.shape_cast %258 : vector<8xf32> to vector<8x1xf32>
    %260 = tpu.reciprocal %259 {approx = true} : vector<8x1xf32> -> vector<8x1xf32>
    %261 = vector.broadcast %260 : vector<8x1xf32> to vector<8x8xf32>
    %262 = arith.mulf %257, %261 : vector<8x8xf32>
    %263 = arith.truncf %262 : vector<8x8xf32> to vector<8x8xbf16>
    %cst_79 = arith.constant dense<0.000000e+00> : vector<8x8xf32>
    %264 = tpu.matmul %263, %248, %cst_79 {dimension_numbers = #tpu.dot_dimension_numbers<[1], [0], [0], [1], [0, 0, 1, 1], [], []>} : vector<8x8xbf16>, vector<8x8xbf16>, vector<8x8xf32> -> vector<8x8xf32>
    %265 = vector.extract_strided_slice %220 {offsets = [0, 16], sizes = [8, 8], strides = [1, 1]} : vector<8x96xf32> to vector<8x8xf32>
    %266 = arith.truncf %265 : vector<8x8xf32> to vector<8x8xbf16>
    %267 = vector.extract_strided_slice %220 {offsets = [0, 48], sizes = [8, 8], strides = [1, 1]} : vector<8x96xf32> to vector<8x8xf32>
    %268 = arith.truncf %267 : vector<8x8xf32> to vector<8x8xbf16>
    %269 = vector.extract_strided_slice %220 {offsets = [0, 80], sizes = [8, 8], strides = [1, 1]} : vector<8x96xf32> to vector<8x8xf32>
    %270 = arith.truncf %269 : vector<8x8xf32> to vector<8x8xbf16>
    %cst_80 = arith.constant dense<0.000000e+00> : vector<8x8xf32>
    %271 = tpu.matmul %266, %268, %cst_80 {dimension_numbers = #tpu.dot_dimension_numbers<[1], [1], [0], [0], [0, 0, 1, 0], [], []>} : vector<8x8xbf16>, vector<8x8xbf16>, vector<8x8xf32> -> vector<8x8xf32>
    %cst_81 = arith.constant 0.353553385 : f32
    %272 = vector.broadcast %cst_81 : f32 to vector<8x8xf32>
    %273 = arith.mulf %271, %272 : vector<8x8xf32>
    %274 = arith.addf %273, %25 : vector<8x8xf32>
    %cst_82 = arith.constant dense<0xFF800000> : vector<8xf32>
    %275 = vector.multi_reduction <maximumf>, %274, %cst_82 [1] : vector<8x8xf32> to vector<8xf32>
    %276 = vector.shape_cast %275 : vector<8xf32> to vector<8x1xf32>
    %277 = vector.broadcast %276 : vector<8x1xf32> to vector<8x8xf32>
    %278 = arith.subf %274, %277 : vector<8x8xf32>
    %279 = math.exp %278 : vector<8x8xf32>
    %cst_83 = arith.constant dense<0.000000e+00> : vector<8xf32>
    %280 = vector.multi_reduction <add>, %279, %cst_83 [1] : vector<8x8xf32> to vector<8xf32>
    %281 = vector.shape_cast %280 : vector<8xf32> to vector<8x1xf32>
    %282 = tpu.reciprocal %281 {approx = true} : vector<8x1xf32> -> vector<8x1xf32>
    %283 = vector.broadcast %282 : vector<8x1xf32> to vector<8x8xf32>
    %284 = arith.mulf %279, %283 : vector<8x8xf32>
    %285 = arith.truncf %284 : vector<8x8xf32> to vector<8x8xbf16>
    %cst_84 = arith.constant dense<0.000000e+00> : vector<8x8xf32>
    %286 = tpu.matmul %285, %270, %cst_84 {dimension_numbers = #tpu.dot_dimension_numbers<[1], [0], [0], [1], [0, 0, 1, 1], [], []>} : vector<8x8xbf16>, vector<8x8xbf16>, vector<8x8xf32> -> vector<8x8xf32>
    %287 = vector.extract_strided_slice %220 {offsets = [0, 24], sizes = [8, 8], strides = [1, 1]} : vector<8x96xf32> to vector<8x8xf32>
    %288 = arith.truncf %287 : vector<8x8xf32> to vector<8x8xbf16>
    %289 = vector.extract_strided_slice %220 {offsets = [0, 56], sizes = [8, 8], strides = [1, 1]} : vector<8x96xf32> to vector<8x8xf32>
    %290 = arith.truncf %289 : vector<8x8xf32> to vector<8x8xbf16>
    %291 = vector.extract_strided_slice %220 {offsets = [0, 88], sizes = [8, 8], strides = [1, 1]} : vector<8x96xf32> to vector<8x8xf32>
    %292 = arith.truncf %291 : vector<8x8xf32> to vector<8x8xbf16>
    %cst_85 = arith.constant dense<0.000000e+00> : vector<8x8xf32>
    %293 = tpu.matmul %288, %290, %cst_85 {dimension_numbers = #tpu.dot_dimension_numbers<[1], [1], [0], [0], [0, 0, 1, 0], [], []>} : vector<8x8xbf16>, vector<8x8xbf16>, vector<8x8xf32> -> vector<8x8xf32>
    %cst_86 = arith.constant 0.353553385 : f32
    %294 = vector.broadcast %cst_86 : f32 to vector<8x8xf32>
    %295 = arith.mulf %293, %294 : vector<8x8xf32>
    %296 = arith.addf %295, %28 : vector<8x8xf32>
    %cst_87 = arith.constant dense<0xFF800000> : vector<8xf32>
    %297 = vector.multi_reduction <maximumf>, %296, %cst_87 [1] : vector<8x8xf32> to vector<8xf32>
    %298 = vector.shape_cast %297 : vector<8xf32> to vector<8x1xf32>
    %299 = vector.broadcast %298 : vector<8x1xf32> to vector<8x8xf32>
    %300 = arith.subf %296, %299 : vector<8x8xf32>
    %301 = math.exp %300 : vector<8x8xf32>
    %cst_88 = arith.constant dense<0.000000e+00> : vector<8xf32>
    %302 = vector.multi_reduction <add>, %301, %cst_88 [1] : vector<8x8xf32> to vector<8xf32>
    %303 = vector.shape_cast %302 : vector<8xf32> to vector<8x1xf32>
    %304 = tpu.reciprocal %303 {approx = true} : vector<8x1xf32> -> vector<8x1xf32>
    %305 = vector.broadcast %304 : vector<8x1xf32> to vector<8x8xf32>
    %306 = arith.mulf %301, %305 : vector<8x8xf32>
    %307 = arith.truncf %306 : vector<8x8xf32> to vector<8x8xbf16>
    %cst_89 = arith.constant dense<0.000000e+00> : vector<8x8xf32>
    %308 = tpu.matmul %307, %292, %cst_89 {dimension_numbers = #tpu.dot_dimension_numbers<[1], [0], [0], [1], [0, 0, 1, 1], [], []>} : vector<8x8xbf16>, vector<8x8xbf16>, vector<8x8xf32> -> vector<8x8xf32>
    %309 = tpu.concatenate %242, %264, %286, %308 in 1 : vector<8x8xf32>, vector<8x8xf32>, vector<8x8xf32>, vector<8x8xf32> -> vector<8x32xf32>
    %310 = arith.truncf %309 : vector<8x32xf32> to vector<8x32xbf16>
    %c1_90 = arith.constant 1 : index
    %c0_91 = arith.constant 0 : index
    %c0_92 = arith.constant 0 : index
    %311 = vector.load %arg6[%c1_90, %c0_91, %c0_92] : memref<6x32x32xbf16, #tpu.memory_space<vmem>>, vector<1x32x32xbf16>
    %312 = vector.shape_cast %311 : vector<1x32x32xbf16> to vector<32x32xbf16>
    %cst_93 = arith.constant dense<0.000000e+00> : vector<8x32xf32>
    %313 = tpu.matmul %310, %312, %cst_93 {dimension_numbers = #tpu.dot_dimension_numbers<[1], [0], [0], [1], [0, 0, 1, 1], [], []>} : vector<8x32xbf16>, vector<32x32xbf16>, vector<8x32xf32> -> vector<8x32xf32>
    %314 = arith.addf %202, %313 : vector<8x32xf32>
    %315 = arith.mulf %314, %314 : vector<8x32xf32>
    %cst_94 = arith.constant dense<0.000000e+00> : vector<8xf32>
    %316 = vector.multi_reduction <add>, %315, %cst_94 [1] : vector<8x32xf32> to vector<8xf32>
    %317 = vector.shape_cast %316 : vector<8xf32> to vector<8x1xf32>
    %cst_95 = arith.constant 3.200000e+01 : f32
    %318 = vector.broadcast %cst_95 : f32 to vector<8x1xf32>
    %319 = arith.divf %317, %318 : vector<8x1xf32>
    %cst_96 = arith.constant 9.99999997E-7 : f32
    %320 = vector.broadcast %cst_96 : f32 to vector<8x1xf32>
    %321 = arith.addf %319, %320 : vector<8x1xf32>
    %322 = math.rsqrt %321 : vector<8x1xf32>
    %323 = vector.broadcast %322 : vector<8x1xf32> to vector<8x32xf32>
    %324 = arith.mulf %314, %323 : vector<8x32xf32>
    %325 = vector.broadcast %204 : vector<1x32xf32> to vector<8x32xf32>
    %326 = arith.mulf %324, %325 : vector<8x32xf32>
    %327 = arith.truncf %326 : vector<8x32xf32> to vector<8x32xbf16>
    %c0_97 = arith.constant 0 : index
    %c0_98 = arith.constant 0 : index
    %328 = vector.load %arg11[%c0_97, %c0_98] : memref<32x128xbf16, #tpu.memory_space<vmem>>, vector<32x128xbf16>
    %cst_99 = arith.constant dense<0.000000e+00> : vector<8x128xf32>
    %329 = tpu.matmul %327, %328, %cst_99 {dimension_numbers = #tpu.dot_dimension_numbers<[1], [0], [0], [1], [0, 0, 1, 1], [], []>} : vector<8x32xbf16>, vector<32x128xbf16>, vector<8x128xf32> -> vector<8x128xf32>
    %c0_100 = arith.constant 0 : index
    %c0_101 = arith.constant 0 : index
    %330 = vector.load %arg12[%c0_100, %c0_101] : memref<1x128xf32, #tpu.memory_space<vmem>>, vector<1x128xf32>
    %331 = vector.broadcast %330 : vector<1x128xf32> to vector<8x128xf32>
    %332 = arith.addf %329, %331 : vector<8x128xf32>
    %cst_102 = arith.constant 5.000000e-01 : f32
    %333 = vector.broadcast %cst_102 : f32 to vector<8x128xf32>
    %334 = arith.mulf %333, %332 : vector<8x128xf32>
    %cst_103 = arith.constant 4.471500e-02 : f32
    %335 = vector.broadcast %cst_103 : f32 to vector<8x128xf32>
    %336 = arith.mulf %335, %332 : vector<8x128xf32>
    %337 = arith.mulf %336, %332 : vector<8x128xf32>
    %338 = arith.mulf %337, %332 : vector<8x128xf32>
    %339 = arith.addf %332, %338 : vector<8x128xf32>
    %cst_104 = arith.constant 0.797884583 : f32
    %340 = vector.broadcast %cst_104 : f32 to vector<8x128xf32>
    %341 = arith.mulf %340, %339 : vector<8x128xf32>
    %342 = math.tanh %341 : vector<8x128xf32>
    %cst_105 = arith.constant 1.000000e+00 : f32
    %343 = vector.broadcast %cst_105 : f32 to vector<8x128xf32>
    %344 = arith.addf %343, %342 : vector<8x128xf32>
    %345 = arith.mulf %334, %344 : vector<8x128xf32>
    %346 = arith.truncf %345 : vector<8x128xf32> to vector<8x128xbf16>
    %c0_106 = arith.constant 0 : index
    %c0_107 = arith.constant 0 : index
    %347 = vector.load %arg13[%c0_106, %c0_107] : memref<128x32xbf16, #tpu.memory_space<vmem>>, vector<128x32xbf16>
    %cst_108 = arith.constant dense<0.000000e+00> : vector<8x32xf32>
    %348 = tpu.matmul %346, %347, %cst_108 {dimension_numbers = #tpu.dot_dimension_numbers<[1], [0], [0], [1], [0, 0, 1, 1], [], []>} : vector<8x128xbf16>, vector<128x32xbf16>, vector<8x32xf32> -> vector<8x32xf32>
    %c0_109 = arith.constant 0 : index
    %c0_110 = arith.constant 0 : index
    %349 = vector.load %arg14[%c0_109, %c0_110] : memref<1x32xf32, #tpu.memory_space<vmem>>, vector<1x32xf32>
    %350 = vector.broadcast %349 : vector<1x32xf32> to vector<8x32xf32>
    %351 = arith.addf %348, %350 : vector<8x32xf32>
    %352 = arith.addf %314, %351 : vector<8x32xf32>
    %c4 = arith.constant 4 : index
    %c0_111 = arith.constant 0 : index
    %353 = vector.load %arg4[%c4, %c0_111] : memref<13x32xf32, #tpu.memory_space<vmem>>, vector<1x32xf32>
    %c5 = arith.constant 5 : index
    %c0_112 = arith.constant 0 : index
    %354 = vector.load %arg4[%c5, %c0_112] : memref<13x32xf32, #tpu.memory_space<vmem>>, vector<1x32xf32>
    %355 = arith.mulf %352, %352 : vector<8x32xf32>
    %cst_113 = arith.constant dense<0.000000e+00> : vector<8xf32>
    %356 = vector.multi_reduction <add>, %355, %cst_113 [1] : vector<8x32xf32> to vector<8xf32>
    %357 = vector.shape_cast %356 : vector<8xf32> to vector<8x1xf32>
    %cst_114 = arith.constant 3.200000e+01 : f32
    %358 = vector.broadcast %cst_114 : f32 to vector<8x1xf32>
    %359 = arith.divf %357, %358 : vector<8x1xf32>
    %cst_115 = arith.constant 9.99999997E-7 : f32
    %360 = vector.broadcast %cst_115 : f32 to vector<8x1xf32>
    %361 = arith.addf %359, %360 : vector<8x1xf32>
    %362 = math.rsqrt %361 : vector<8x1xf32>
    %363 = vector.broadcast %362 : vector<8x1xf32> to vector<8x32xf32>
    %364 = arith.mulf %352, %363 : vector<8x32xf32>
    %365 = vector.broadcast %353 : vector<1x32xf32> to vector<8x32xf32>
    %366 = arith.mulf %364, %365 : vector<8x32xf32>
    %367 = arith.truncf %366 : vector<8x32xf32> to vector<8x32xbf16>
    %c2_116 = arith.constant 2 : index
    %c0_117 = arith.constant 0 : index
    %c0_118 = arith.constant 0 : index
    %368 = vector.load %arg5[%c2_116, %c0_117, %c0_118] : memref<6x32x96xbf16, #tpu.memory_space<vmem>>, vector<1x32x96xbf16>
    %369 = vector.shape_cast %368 : vector<1x32x96xbf16> to vector<32x96xbf16>
    %cst_119 = arith.constant dense<0.000000e+00> : vector<8x96xf32>
    %370 = tpu.matmul %367, %369, %cst_119 {dimension_numbers = #tpu.dot_dimension_numbers<[1], [0], [0], [1], [0, 0, 1, 1], [], []>} : vector<8x32xbf16>, vector<32x96xbf16>, vector<8x96xf32> -> vector<8x96xf32>
    %371 = vector.extract_strided_slice %370 {offsets = [0, 0], sizes = [8, 8], strides = [1, 1]} : vector<8x96xf32> to vector<8x8xf32>
    %372 = arith.truncf %371 : vector<8x8xf32> to vector<8x8xbf16>
    %373 = vector.extract_strided_slice %370 {offsets = [0, 32], sizes = [8, 8], strides = [1, 1]} : vector<8x96xf32> to vector<8x8xf32>
    %374 = arith.truncf %373 : vector<8x8xf32> to vector<8x8xbf16>
    %375 = vector.extract_strided_slice %370 {offsets = [0, 64], sizes = [8, 8], strides = [1, 1]} : vector<8x96xf32> to vector<8x8xf32>
    %376 = arith.truncf %375 : vector<8x8xf32> to vector<8x8xbf16>
    %cst_120 = arith.constant dense<0.000000e+00> : vector<8x8xf32>
    %377 = tpu.matmul %372, %374, %cst_120 {dimension_numbers = #tpu.dot_dimension_numbers<[1], [1], [0], [0], [0, 0, 1, 0], [], []>} : vector<8x8xbf16>, vector<8x8xbf16>, vector<8x8xf32> -> vector<8x8xf32>
    %cst_121 = arith.constant 0.353553385 : f32
    %378 = vector.broadcast %cst_121 : f32 to vector<8x8xf32>
    %379 = arith.mulf %377, %378 : vector<8x8xf32>
    %380 = arith.addf %379, %19 : vector<8x8xf32>
    %cst_122 = arith.constant dense<0xFF800000> : vector<8xf32>
    %381 = vector.multi_reduction <maximumf>, %380, %cst_122 [1] : vector<8x8xf32> to vector<8xf32>
    %382 = vector.shape_cast %381 : vector<8xf32> to vector<8x1xf32>
    %383 = vector.broadcast %382 : vector<8x1xf32> to vector<8x8xf32>
    %384 = arith.subf %380, %383 : vector<8x8xf32>
    %385 = math.exp %384 : vector<8x8xf32>
    %cst_123 = arith.constant dense<0.000000e+00> : vector<8xf32>
    %386 = vector.multi_reduction <add>, %385, %cst_123 [1] : vector<8x8xf32> to vector<8xf32>
    %387 = vector.shape_cast %386 : vector<8xf32> to vector<8x1xf32>
    %388 = tpu.reciprocal %387 {approx = true} : vector<8x1xf32> -> vector<8x1xf32>
    %389 = vector.broadcast %388 : vector<8x1xf32> to vector<8x8xf32>
    %390 = arith.mulf %385, %389 : vector<8x8xf32>
    %391 = arith.truncf %390 : vector<8x8xf32> to vector<8x8xbf16>
    %cst_124 = arith.constant dense<0.000000e+00> : vector<8x8xf32>
    %392 = tpu.matmul %391, %376, %cst_124 {dimension_numbers = #tpu.dot_dimension_numbers<[1], [0], [0], [1], [0, 0, 1, 1], [], []>} : vector<8x8xbf16>, vector<8x8xbf16>, vector<8x8xf32> -> vector<8x8xf32>
    %393 = vector.extract_strided_slice %370 {offsets = [0, 8], sizes = [8, 8], strides = [1, 1]} : vector<8x96xf32> to vector<8x8xf32>
    %394 = arith.truncf %393 : vector<8x8xf32> to vector<8x8xbf16>
    %395 = vector.extract_strided_slice %370 {offsets = [0, 40], sizes = [8, 8], strides = [1, 1]} : vector<8x96xf32> to vector<8x8xf32>
    %396 = arith.truncf %395 : vector<8x8xf32> to vector<8x8xbf16>
    %397 = vector.extract_strided_slice %370 {offsets = [0, 72], sizes = [8, 8], strides = [1, 1]} : vector<8x96xf32> to vector<8x8xf32>
    %398 = arith.truncf %397 : vector<8x8xf32> to vector<8x8xbf16>
    %cst_125 = arith.constant dense<0.000000e+00> : vector<8x8xf32>
    %399 = tpu.matmul %394, %396, %cst_125 {dimension_numbers = #tpu.dot_dimension_numbers<[1], [1], [0], [0], [0, 0, 1, 0], [], []>} : vector<8x8xbf16>, vector<8x8xbf16>, vector<8x8xf32> -> vector<8x8xf32>
    %cst_126 = arith.constant 0.353553385 : f32
    %400 = vector.broadcast %cst_126 : f32 to vector<8x8xf32>
    %401 = arith.mulf %399, %400 : vector<8x8xf32>
    %402 = arith.addf %401, %22 : vector<8x8xf32>
    %cst_127 = arith.constant dense<0xFF800000> : vector<8xf32>
    %403 = vector.multi_reduction <maximumf>, %402, %cst_127 [1] : vector<8x8xf32> to vector<8xf32>
    %404 = vector.shape_cast %403 : vector<8xf32> to vector<8x1xf32>
    %405 = vector.broadcast %404 : vector<8x1xf32> to vector<8x8xf32>
    %406 = arith.subf %402, %405 : vector<8x8xf32>
    %407 = math.exp %406 : vector<8x8xf32>
    %cst_128 = arith.constant dense<0.000000e+00> : vector<8xf32>
    %408 = vector.multi_reduction <add>, %407, %cst_128 [1] : vector<8x8xf32> to vector<8xf32>
    %409 = vector.shape_cast %408 : vector<8xf32> to vector<8x1xf32>
    %410 = tpu.reciprocal %409 {approx = true} : vector<8x1xf32> -> vector<8x1xf32>
    %411 = vector.broadcast %410 : vector<8x1xf32> to vector<8x8xf32>
    %412 = arith.mulf %407, %411 : vector<8x8xf32>
    %413 = arith.truncf %412 : vector<8x8xf32> to vector<8x8xbf16>
    %cst_129 = arith.constant dense<0.000000e+00> : vector<8x8xf32>
    %414 = tpu.matmul %413, %398, %cst_129 {dimension_numbers = #tpu.dot_dimension_numbers<[1], [0], [0], [1], [0, 0, 1, 1], [], []>} : vector<8x8xbf16>, vector<8x8xbf16>, vector<8x8xf32> -> vector<8x8xf32>
    %415 = vector.extract_strided_slice %370 {offsets = [0, 16], sizes = [8, 8], strides = [1, 1]} : vector<8x96xf32> to vector<8x8xf32>
    %416 = arith.truncf %415 : vector<8x8xf32> to vector<8x8xbf16>
    %417 = vector.extract_strided_slice %370 {offsets = [0, 48], sizes = [8, 8], strides = [1, 1]} : vector<8x96xf32> to vector<8x8xf32>
    %418 = arith.truncf %417 : vector<8x8xf32> to vector<8x8xbf16>
    %419 = vector.extract_strided_slice %370 {offsets = [0, 80], sizes = [8, 8], strides = [1, 1]} : vector<8x96xf32> to vector<8x8xf32>
    %420 = arith.truncf %419 : vector<8x8xf32> to vector<8x8xbf16>
    %cst_130 = arith.constant dense<0.000000e+00> : vector<8x8xf32>
    %421 = tpu.matmul %416, %418, %cst_130 {dimension_numbers = #tpu.dot_dimension_numbers<[1], [1], [0], [0], [0, 0, 1, 0], [], []>} : vector<8x8xbf16>, vector<8x8xbf16>, vector<8x8xf32> -> vector<8x8xf32>
    %cst_131 = arith.constant 0.353553385 : f32
    %422 = vector.broadcast %cst_131 : f32 to vector<8x8xf32>
    %423 = arith.mulf %421, %422 : vector<8x8xf32>
    %424 = arith.addf %423, %25 : vector<8x8xf32>
    %cst_132 = arith.constant dense<0xFF800000> : vector<8xf32>
    %425 = vector.multi_reduction <maximumf>, %424, %cst_132 [1] : vector<8x8xf32> to vector<8xf32>
    %426 = vector.shape_cast %425 : vector<8xf32> to vector<8x1xf32>
    %427 = vector.broadcast %426 : vector<8x1xf32> to vector<8x8xf32>
    %428 = arith.subf %424, %427 : vector<8x8xf32>
    %429 = math.exp %428 : vector<8x8xf32>
    %cst_133 = arith.constant dense<0.000000e+00> : vector<8xf32>
    %430 = vector.multi_reduction <add>, %429, %cst_133 [1] : vector<8x8xf32> to vector<8xf32>
    %431 = vector.shape_cast %430 : vector<8xf32> to vector<8x1xf32>
    %432 = tpu.reciprocal %431 {approx = true} : vector<8x1xf32> -> vector<8x1xf32>
    %433 = vector.broadcast %432 : vector<8x1xf32> to vector<8x8xf32>
    %434 = arith.mulf %429, %433 : vector<8x8xf32>
    %435 = arith.truncf %434 : vector<8x8xf32> to vector<8x8xbf16>
    %cst_134 = arith.constant dense<0.000000e+00> : vector<8x8xf32>
    %436 = tpu.matmul %435, %420, %cst_134 {dimension_numbers = #tpu.dot_dimension_numbers<[1], [0], [0], [1], [0, 0, 1, 1], [], []>} : vector<8x8xbf16>, vector<8x8xbf16>, vector<8x8xf32> -> vector<8x8xf32>
    %437 = vector.extract_strided_slice %370 {offsets = [0, 24], sizes = [8, 8], strides = [1, 1]} : vector<8x96xf32> to vector<8x8xf32>
    %438 = arith.truncf %437 : vector<8x8xf32> to vector<8x8xbf16>
    %439 = vector.extract_strided_slice %370 {offsets = [0, 56], sizes = [8, 8], strides = [1, 1]} : vector<8x96xf32> to vector<8x8xf32>
    %440 = arith.truncf %439 : vector<8x8xf32> to vector<8x8xbf16>
    %441 = vector.extract_strided_slice %370 {offsets = [0, 88], sizes = [8, 8], strides = [1, 1]} : vector<8x96xf32> to vector<8x8xf32>
    %442 = arith.truncf %441 : vector<8x8xf32> to vector<8x8xbf16>
    %cst_135 = arith.constant dense<0.000000e+00> : vector<8x8xf32>
    %443 = tpu.matmul %438, %440, %cst_135 {dimension_numbers = #tpu.dot_dimension_numbers<[1], [1], [0], [0], [0, 0, 1, 0], [], []>} : vector<8x8xbf16>, vector<8x8xbf16>, vector<8x8xf32> -> vector<8x8xf32>
    %cst_136 = arith.constant 0.353553385 : f32
    %444 = vector.broadcast %cst_136 : f32 to vector<8x8xf32>
    %445 = arith.mulf %443, %444 : vector<8x8xf32>
    %446 = arith.addf %445, %28 : vector<8x8xf32>
    %cst_137 = arith.constant dense<0xFF800000> : vector<8xf32>
    %447 = vector.multi_reduction <maximumf>, %446, %cst_137 [1] : vector<8x8xf32> to vector<8xf32>
    %448 = vector.shape_cast %447 : vector<8xf32> to vector<8x1xf32>
    %449 = vector.broadcast %448 : vector<8x1xf32> to vector<8x8xf32>
    %450 = arith.subf %446, %449 : vector<8x8xf32>
    %451 = math.exp %450 : vector<8x8xf32>
    %cst_138 = arith.constant dense<0.000000e+00> : vector<8xf32>
    %452 = vector.multi_reduction <add>, %451, %cst_138 [1] : vector<8x8xf32> to vector<8xf32>
    %453 = vector.shape_cast %452 : vector<8xf32> to vector<8x1xf32>
    %454 = tpu.reciprocal %453 {approx = true} : vector<8x1xf32> -> vector<8x1xf32>
    %455 = vector.broadcast %454 : vector<8x1xf32> to vector<8x8xf32>
    %456 = arith.mulf %451, %455 : vector<8x8xf32>
    %457 = arith.truncf %456 : vector<8x8xf32> to vector<8x8xbf16>
    %cst_139 = arith.constant dense<0.000000e+00> : vector<8x8xf32>
    %458 = tpu.matmul %457, %442, %cst_139 {dimension_numbers = #tpu.dot_dimension_numbers<[1], [0], [0], [1], [0, 0, 1, 1], [], []>} : vector<8x8xbf16>, vector<8x8xbf16>, vector<8x8xf32> -> vector<8x8xf32>
    %459 = tpu.concatenate %392, %414, %436, %458 in 1 : vector<8x8xf32>, vector<8x8xf32>, vector<8x8xf32>, vector<8x8xf32> -> vector<8x32xf32>
    %460 = arith.truncf %459 : vector<8x32xf32> to vector<8x32xbf16>
    %c2_140 = arith.constant 2 : index
    %c0_141 = arith.constant 0 : index
    %c0_142 = arith.constant 0 : index
    %461 = vector.load %arg6[%c2_140, %c0_141, %c0_142] : memref<6x32x32xbf16, #tpu.memory_space<vmem>>, vector<1x32x32xbf16>
    %462 = vector.shape_cast %461 : vector<1x32x32xbf16> to vector<32x32xbf16>
    %cst_143 = arith.constant dense<0.000000e+00> : vector<8x32xf32>
    %463 = tpu.matmul %460, %462, %cst_143 {dimension_numbers = #tpu.dot_dimension_numbers<[1], [0], [0], [1], [0, 0, 1, 1], [], []>} : vector<8x32xbf16>, vector<32x32xbf16>, vector<8x32xf32> -> vector<8x32xf32>
    %464 = arith.addf %352, %463 : vector<8x32xf32>
    %465 = arith.mulf %464, %464 : vector<8x32xf32>
    %cst_144 = arith.constant dense<0.000000e+00> : vector<8xf32>
    %466 = vector.multi_reduction <add>, %465, %cst_144 [1] : vector<8x32xf32> to vector<8xf32>
    %467 = vector.shape_cast %466 : vector<8xf32> to vector<8x1xf32>
    %cst_145 = arith.constant 3.200000e+01 : f32
    %468 = vector.broadcast %cst_145 : f32 to vector<8x1xf32>
    %469 = arith.divf %467, %468 : vector<8x1xf32>
    %cst_146 = arith.constant 9.99999997E-7 : f32
    %470 = vector.broadcast %cst_146 : f32 to vector<8x1xf32>
    %471 = arith.addf %469, %470 : vector<8x1xf32>
    %472 = math.rsqrt %471 : vector<8x1xf32>
    %473 = vector.broadcast %472 : vector<8x1xf32> to vector<8x32xf32>
    %474 = arith.mulf %464, %473 : vector<8x32xf32>
    %475 = vector.broadcast %354 : vector<1x32xf32> to vector<8x32xf32>
    %476 = arith.mulf %474, %475 : vector<8x32xf32>
    %477 = arith.truncf %476 : vector<8x32xf32> to vector<8x32xbf16>
    %c0_147 = arith.constant 0 : index
    %c0_148 = arith.constant 0 : index
    %478 = vector.load %arg15[%c0_147, %c0_148] : memref<32x644xbf16, #tpu.memory_space<vmem>>, vector<32x644xbf16>
    %cst_149 = arith.constant dense<0.000000e+00> : vector<8x644xf32>
    %479 = tpu.matmul %477, %478, %cst_149 {dimension_numbers = #tpu.dot_dimension_numbers<[1], [0], [0], [1], [0, 0, 1, 1], [], []>} : vector<8x32xbf16>, vector<32x644xbf16>, vector<8x644xf32> -> vector<8x644xf32>
    %c0_150 = arith.constant 0 : index
    %c0_151 = arith.constant 0 : index
    %480 = vector.load %arg16[%c0_150, %c0_151] : memref<1x644xf32, #tpu.memory_space<vmem>>, vector<1x644xf32>
    %481 = vector.broadcast %480 : vector<1x644xf32> to vector<8x644xf32>
    %482 = arith.addf %479, %481 : vector<8x644xf32>
    %483 = vector.extract_strided_slice %482 {offsets = [0, 0], sizes = [8, 640], strides = [1, 1]} : vector<8x644xf32> to vector<8x640xf32>
    %cst_152 = arith.constant 5.000000e-01 : f32
    %484 = vector.broadcast %cst_152 : f32 to vector<8x640xf32>
    %485 = arith.mulf %484, %483 : vector<8x640xf32>
    %cst_153 = arith.constant 4.471500e-02 : f32
    %486 = vector.broadcast %cst_153 : f32 to vector<8x640xf32>
    %487 = arith.mulf %486, %483 : vector<8x640xf32>
    %488 = arith.mulf %487, %483 : vector<8x640xf32>
    %489 = arith.mulf %488, %483 : vector<8x640xf32>
    %490 = arith.addf %483, %489 : vector<8x640xf32>
    %cst_154 = arith.constant 0.797884583 : f32
    %491 = vector.broadcast %cst_154 : f32 to vector<8x640xf32>
    %492 = arith.mulf %491, %490 : vector<8x640xf32>
    %493 = math.tanh %492 : vector<8x640xf32>
    %cst_155 = arith.constant 1.000000e+00 : f32
    %494 = vector.broadcast %cst_155 : f32 to vector<8x640xf32>
    %495 = arith.addf %494, %493 : vector<8x640xf32>
    %496 = arith.mulf %485, %495 : vector<8x640xf32>
    %497 = vector.extract_strided_slice %482 {offsets = [0, 640], sizes = [8, 4], strides = [1, 1]} : vector<8x644xf32> to vector<8x4xf32>
    %cst_156 = arith.constant dense<0xFF800000> : vector<8xf32>
    %498 = vector.multi_reduction <maximumf>, %497, %cst_156 [1] : vector<8x4xf32> to vector<8xf32>
    %499 = vector.shape_cast %498 : vector<8xf32> to vector<8x1xf32>
    %500 = vector.broadcast %499 : vector<8x1xf32> to vector<8x4xf32>
    %501 = arith.subf %497, %500 : vector<8x4xf32>
    %502 = math.exp %501 : vector<8x4xf32>
    %cst_157 = arith.constant dense<0.000000e+00> : vector<8xf32>
    %503 = vector.multi_reduction <add>, %502, %cst_157 [1] : vector<8x4xf32> to vector<8xf32>
    %504 = vector.shape_cast %503 : vector<8xf32> to vector<8x1xf32>
    %505 = vector.broadcast %504 : vector<8x1xf32> to vector<8x4xf32>
    %506 = arith.divf %502, %505 : vector<8x4xf32>
    %507 = tpu.iota {dimensions = array<i32: 1>} : vector<8x4xi32>
    %508 = arith.sitofp %507 : vector<8x4xi32> to vector<8x4xf32>
    %509 = vector.broadcast %499 : vector<8x1xf32> to vector<8x4xf32>
    %510 = arith.cmpf oeq, %497, %509 : vector<8x4xf32>
    %cst_158 = arith.constant 4.000000e+00 : f32
    %511 = vector.broadcast %cst_158 : f32 to vector<8x4xf32>
    %512 = arith.select %510, %508, %511 : vector<8x4xi1>, vector<8x4xf32>
    %cst_159 = arith.constant dense<0x7F800000> : vector<8xf32>
    %513 = vector.multi_reduction <minimumf>, %512, %cst_159 [1] : vector<8x4xf32> to vector<8xf32>
    %514 = vector.shape_cast %513 : vector<8xf32> to vector<8x1xf32>
    %515 = vector.broadcast %514 : vector<8x1xf32> to vector<8x4xf32>
    %516 = arith.cmpf oeq, %508, %515 : vector<8x4xf32>
    %517 = arith.extui %516 : vector<8x4xi1> to vector<8x4xi32>
    %518 = arith.sitofp %517 : vector<8x4xi32> to vector<8x4xf32>
    %519 = arith.mulf %518, %506 : vector<8x4xf32>
    %520 = vector.extract_strided_slice %496 {offsets = [0, 0], sizes = [8, 128], strides = [1, 1]} : vector<8x640xf32> to vector<8x128xf32>
    %521 = vector.extract_strided_slice %519 {offsets = [0, 0], sizes = [8, 1], strides = [1, 1]} : vector<8x4xf32> to vector<8x1xf32>
    %522 = vector.broadcast %521 : vector<8x1xf32> to vector<8x128xf32>
    %523 = arith.mulf %520, %522 : vector<8x128xf32>
    %524 = vector.extract_strided_slice %496 {offsets = [0, 128], sizes = [8, 128], strides = [1, 1]} : vector<8x640xf32> to vector<8x128xf32>
    %525 = vector.extract_strided_slice %519 {offsets = [0, 1], sizes = [8, 1], strides = [1, 1]} : vector<8x4xf32> to vector<8x1xf32>
    %526 = vector.broadcast %525 : vector<8x1xf32> to vector<8x128xf32>
    %527 = arith.mulf %524, %526 : vector<8x128xf32>
    %528 = vector.extract_strided_slice %496 {offsets = [0, 256], sizes = [8, 128], strides = [1, 1]} : vector<8x640xf32> to vector<8x128xf32>
    %529 = vector.extract_strided_slice %519 {offsets = [0, 2], sizes = [8, 1], strides = [1, 1]} : vector<8x4xf32> to vector<8x1xf32>
    %530 = vector.broadcast %529 : vector<8x1xf32> to vector<8x128xf32>
    %531 = arith.mulf %528, %530 : vector<8x128xf32>
    %532 = vector.extract_strided_slice %496 {offsets = [0, 384], sizes = [8, 128], strides = [1, 1]} : vector<8x640xf32> to vector<8x128xf32>
    %533 = vector.extract_strided_slice %519 {offsets = [0, 3], sizes = [8, 1], strides = [1, 1]} : vector<8x4xf32> to vector<8x1xf32>
    %534 = vector.broadcast %533 : vector<8x1xf32> to vector<8x128xf32>
    %535 = arith.mulf %532, %534 : vector<8x128xf32>
    %536 = vector.extract_strided_slice %496 {offsets = [0, 512], sizes = [8, 128], strides = [1, 1]} : vector<8x640xf32> to vector<8x128xf32>
    %537 = tpu.concatenate %523, %527, %531, %535, %536 in 1 : vector<8x128xf32>, vector<8x128xf32>, vector<8x128xf32>, vector<8x128xf32>, vector<8x128xf32> -> vector<8x640xf32>
    %538 = arith.truncf %537 : vector<8x640xf32> to vector<8x640xbf16>
    %c0_160 = arith.constant 0 : index
    %c0_161 = arith.constant 0 : index
    %539 = vector.load %arg17[%c0_160, %c0_161] : memref<640x32xbf16, #tpu.memory_space<vmem>>, vector<640x32xbf16>
    %cst_162 = arith.constant dense<0.000000e+00> : vector<8x32xf32>
    %540 = tpu.matmul %538, %539, %cst_162 {dimension_numbers = #tpu.dot_dimension_numbers<[1], [0], [0], [1], [0, 0, 1, 1], [], []>} : vector<8x640xbf16>, vector<640x32xbf16>, vector<8x32xf32> -> vector<8x32xf32>
    %c0_163 = arith.constant 0 : index
    %c0_164 = arith.constant 0 : index
    %541 = vector.load %arg18[%c0_163, %c0_164] : memref<4x32xf32, #tpu.memory_space<vmem>>, vector<4x32xf32>
    %cst_165 = arith.constant dense<0.000000e+00> : vector<8x32xf32>
    %542 = tpu.matmul %519, %541, %cst_165 {dimension_numbers = #tpu.dot_dimension_numbers<[1], [0], [0], [1], [0, 0, 1, 1], [], []>} : vector<8x4xf32>, vector<4x32xf32>, vector<8x32xf32> -> vector<8x32xf32>
    %543 = arith.addf %540, %542 : vector<8x32xf32>
    %c0_166 = arith.constant 0 : index
    %c0_167 = arith.constant 0 : index
    %544 = vector.load %arg19[%c0_166, %c0_167] : memref<1x32xf32, #tpu.memory_space<vmem>>, vector<1x32xf32>
    %545 = vector.broadcast %544 : vector<1x32xf32> to vector<8x32xf32>
    %546 = arith.addf %543, %545 : vector<8x32xf32>
    %547 = arith.addf %464, %546 : vector<8x32xf32>
    %c6 = arith.constant 6 : index
    %c0_168 = arith.constant 0 : index
    %548 = vector.load %arg4[%c6, %c0_168] : memref<13x32xf32, #tpu.memory_space<vmem>>, vector<1x32xf32>
    %c7 = arith.constant 7 : index
    %c0_169 = arith.constant 0 : index
    %549 = vector.load %arg4[%c7, %c0_169] : memref<13x32xf32, #tpu.memory_space<vmem>>, vector<1x32xf32>
    %550 = arith.mulf %547, %547 : vector<8x32xf32>
    %cst_170 = arith.constant dense<0.000000e+00> : vector<8xf32>
    %551 = vector.multi_reduction <add>, %550, %cst_170 [1] : vector<8x32xf32> to vector<8xf32>
    %552 = vector.shape_cast %551 : vector<8xf32> to vector<8x1xf32>
    %cst_171 = arith.constant 3.200000e+01 : f32
    %553 = vector.broadcast %cst_171 : f32 to vector<8x1xf32>
    %554 = arith.divf %552, %553 : vector<8x1xf32>
    %cst_172 = arith.constant 9.99999997E-7 : f32
    %555 = vector.broadcast %cst_172 : f32 to vector<8x1xf32>
    %556 = arith.addf %554, %555 : vector<8x1xf32>
    %557 = math.rsqrt %556 : vector<8x1xf32>
    %558 = vector.broadcast %557 : vector<8x1xf32> to vector<8x32xf32>
    %559 = arith.mulf %547, %558 : vector<8x32xf32>
    %560 = vector.broadcast %548 : vector<1x32xf32> to vector<8x32xf32>
    %561 = arith.mulf %559, %560 : vector<8x32xf32>
    %562 = arith.truncf %561 : vector<8x32xf32> to vector<8x32xbf16>
    %c3_173 = arith.constant 3 : index
    %c0_174 = arith.constant 0 : index
    %c0_175 = arith.constant 0 : index
    %563 = vector.load %arg5[%c3_173, %c0_174, %c0_175] : memref<6x32x96xbf16, #tpu.memory_space<vmem>>, vector<1x32x96xbf16>
    %564 = vector.shape_cast %563 : vector<1x32x96xbf16> to vector<32x96xbf16>
    %cst_176 = arith.constant dense<0.000000e+00> : vector<8x96xf32>
    %565 = tpu.matmul %562, %564, %cst_176 {dimension_numbers = #tpu.dot_dimension_numbers<[1], [0], [0], [1], [0, 0, 1, 1], [], []>} : vector<8x32xbf16>, vector<32x96xbf16>, vector<8x96xf32> -> vector<8x96xf32>
    %566 = vector.extract_strided_slice %565 {offsets = [0, 0], sizes = [8, 8], strides = [1, 1]} : vector<8x96xf32> to vector<8x8xf32>
    %567 = arith.truncf %566 : vector<8x8xf32> to vector<8x8xbf16>
    %568 = vector.extract_strided_slice %565 {offsets = [0, 32], sizes = [8, 8], strides = [1, 1]} : vector<8x96xf32> to vector<8x8xf32>
    %569 = arith.truncf %568 : vector<8x8xf32> to vector<8x8xbf16>
    %570 = vector.extract_strided_slice %565 {offsets = [0, 64], sizes = [8, 8], strides = [1, 1]} : vector<8x96xf32> to vector<8x8xf32>
    %571 = arith.truncf %570 : vector<8x8xf32> to vector<8x8xbf16>
    %cst_177 = arith.constant dense<0.000000e+00> : vector<8x8xf32>
    %572 = tpu.matmul %567, %569, %cst_177 {dimension_numbers = #tpu.dot_dimension_numbers<[1], [1], [0], [0], [0, 0, 1, 0], [], []>} : vector<8x8xbf16>, vector<8x8xbf16>, vector<8x8xf32> -> vector<8x8xf32>
    %cst_178 = arith.constant 0.353553385 : f32
    %573 = vector.broadcast %cst_178 : f32 to vector<8x8xf32>
    %574 = arith.mulf %572, %573 : vector<8x8xf32>
    %575 = arith.addf %574, %19 : vector<8x8xf32>
    %cst_179 = arith.constant dense<0xFF800000> : vector<8xf32>
    %576 = vector.multi_reduction <maximumf>, %575, %cst_179 [1] : vector<8x8xf32> to vector<8xf32>
    %577 = vector.shape_cast %576 : vector<8xf32> to vector<8x1xf32>
    %578 = vector.broadcast %577 : vector<8x1xf32> to vector<8x8xf32>
    %579 = arith.subf %575, %578 : vector<8x8xf32>
    %580 = math.exp %579 : vector<8x8xf32>
    %cst_180 = arith.constant dense<0.000000e+00> : vector<8xf32>
    %581 = vector.multi_reduction <add>, %580, %cst_180 [1] : vector<8x8xf32> to vector<8xf32>
    %582 = vector.shape_cast %581 : vector<8xf32> to vector<8x1xf32>
    %583 = tpu.reciprocal %582 {approx = true} : vector<8x1xf32> -> vector<8x1xf32>
    %584 = vector.broadcast %583 : vector<8x1xf32> to vector<8x8xf32>
    %585 = arith.mulf %580, %584 : vector<8x8xf32>
    %586 = arith.truncf %585 : vector<8x8xf32> to vector<8x8xbf16>
    %cst_181 = arith.constant dense<0.000000e+00> : vector<8x8xf32>
    %587 = tpu.matmul %586, %571, %cst_181 {dimension_numbers = #tpu.dot_dimension_numbers<[1], [0], [0], [1], [0, 0, 1, 1], [], []>} : vector<8x8xbf16>, vector<8x8xbf16>, vector<8x8xf32> -> vector<8x8xf32>
    %588 = vector.extract_strided_slice %565 {offsets = [0, 8], sizes = [8, 8], strides = [1, 1]} : vector<8x96xf32> to vector<8x8xf32>
    %589 = arith.truncf %588 : vector<8x8xf32> to vector<8x8xbf16>
    %590 = vector.extract_strided_slice %565 {offsets = [0, 40], sizes = [8, 8], strides = [1, 1]} : vector<8x96xf32> to vector<8x8xf32>
    %591 = arith.truncf %590 : vector<8x8xf32> to vector<8x8xbf16>
    %592 = vector.extract_strided_slice %565 {offsets = [0, 72], sizes = [8, 8], strides = [1, 1]} : vector<8x96xf32> to vector<8x8xf32>
    %593 = arith.truncf %592 : vector<8x8xf32> to vector<8x8xbf16>
    %cst_182 = arith.constant dense<0.000000e+00> : vector<8x8xf32>
    %594 = tpu.matmul %589, %591, %cst_182 {dimension_numbers = #tpu.dot_dimension_numbers<[1], [1], [0], [0], [0, 0, 1, 0], [], []>} : vector<8x8xbf16>, vector<8x8xbf16>, vector<8x8xf32> -> vector<8x8xf32>
    %cst_183 = arith.constant 0.353553385 : f32
    %595 = vector.broadcast %cst_183 : f32 to vector<8x8xf32>
    %596 = arith.mulf %594, %595 : vector<8x8xf32>
    %597 = arith.addf %596, %22 : vector<8x8xf32>
    %cst_184 = arith.constant dense<0xFF800000> : vector<8xf32>
    %598 = vector.multi_reduction <maximumf>, %597, %cst_184 [1] : vector<8x8xf32> to vector<8xf32>
    %599 = vector.shape_cast %598 : vector<8xf32> to vector<8x1xf32>
    %600 = vector.broadcast %599 : vector<8x1xf32> to vector<8x8xf32>
    %601 = arith.subf %597, %600 : vector<8x8xf32>
    %602 = math.exp %601 : vector<8x8xf32>
    %cst_185 = arith.constant dense<0.000000e+00> : vector<8xf32>
    %603 = vector.multi_reduction <add>, %602, %cst_185 [1] : vector<8x8xf32> to vector<8xf32>
    %604 = vector.shape_cast %603 : vector<8xf32> to vector<8x1xf32>
    %605 = tpu.reciprocal %604 {approx = true} : vector<8x1xf32> -> vector<8x1xf32>
    %606 = vector.broadcast %605 : vector<8x1xf32> to vector<8x8xf32>
    %607 = arith.mulf %602, %606 : vector<8x8xf32>
    %608 = arith.truncf %607 : vector<8x8xf32> to vector<8x8xbf16>
    %cst_186 = arith.constant dense<0.000000e+00> : vector<8x8xf32>
    %609 = tpu.matmul %608, %593, %cst_186 {dimension_numbers = #tpu.dot_dimension_numbers<[1], [0], [0], [1], [0, 0, 1, 1], [], []>} : vector<8x8xbf16>, vector<8x8xbf16>, vector<8x8xf32> -> vector<8x8xf32>
    %610 = vector.extract_strided_slice %565 {offsets = [0, 16], sizes = [8, 8], strides = [1, 1]} : vector<8x96xf32> to vector<8x8xf32>
    %611 = arith.truncf %610 : vector<8x8xf32> to vector<8x8xbf16>
    %612 = vector.extract_strided_slice %565 {offsets = [0, 48], sizes = [8, 8], strides = [1, 1]} : vector<8x96xf32> to vector<8x8xf32>
    %613 = arith.truncf %612 : vector<8x8xf32> to vector<8x8xbf16>
    %614 = vector.extract_strided_slice %565 {offsets = [0, 80], sizes = [8, 8], strides = [1, 1]} : vector<8x96xf32> to vector<8x8xf32>
    %615 = arith.truncf %614 : vector<8x8xf32> to vector<8x8xbf16>
    %cst_187 = arith.constant dense<0.000000e+00> : vector<8x8xf32>
    %616 = tpu.matmul %611, %613, %cst_187 {dimension_numbers = #tpu.dot_dimension_numbers<[1], [1], [0], [0], [0, 0, 1, 0], [], []>} : vector<8x8xbf16>, vector<8x8xbf16>, vector<8x8xf32> -> vector<8x8xf32>
    %cst_188 = arith.constant 0.353553385 : f32
    %617 = vector.broadcast %cst_188 : f32 to vector<8x8xf32>
    %618 = arith.mulf %616, %617 : vector<8x8xf32>
    %619 = arith.addf %618, %25 : vector<8x8xf32>
    %cst_189 = arith.constant dense<0xFF800000> : vector<8xf32>
    %620 = vector.multi_reduction <maximumf>, %619, %cst_189 [1] : vector<8x8xf32> to vector<8xf32>
    %621 = vector.shape_cast %620 : vector<8xf32> to vector<8x1xf32>
    %622 = vector.broadcast %621 : vector<8x1xf32> to vector<8x8xf32>
    %623 = arith.subf %619, %622 : vector<8x8xf32>
    %624 = math.exp %623 : vector<8x8xf32>
    %cst_190 = arith.constant dense<0.000000e+00> : vector<8xf32>
    %625 = vector.multi_reduction <add>, %624, %cst_190 [1] : vector<8x8xf32> to vector<8xf32>
    %626 = vector.shape_cast %625 : vector<8xf32> to vector<8x1xf32>
    %627 = tpu.reciprocal %626 {approx = true} : vector<8x1xf32> -> vector<8x1xf32>
    %628 = vector.broadcast %627 : vector<8x1xf32> to vector<8x8xf32>
    %629 = arith.mulf %624, %628 : vector<8x8xf32>
    %630 = arith.truncf %629 : vector<8x8xf32> to vector<8x8xbf16>
    %cst_191 = arith.constant dense<0.000000e+00> : vector<8x8xf32>
    %631 = tpu.matmul %630, %615, %cst_191 {dimension_numbers = #tpu.dot_dimension_numbers<[1], [0], [0], [1], [0, 0, 1, 1], [], []>} : vector<8x8xbf16>, vector<8x8xbf16>, vector<8x8xf32> -> vector<8x8xf32>
    %632 = vector.extract_strided_slice %565 {offsets = [0, 24], sizes = [8, 8], strides = [1, 1]} : vector<8x96xf32> to vector<8x8xf32>
    %633 = arith.truncf %632 : vector<8x8xf32> to vector<8x8xbf16>
    %634 = vector.extract_strided_slice %565 {offsets = [0, 56], sizes = [8, 8], strides = [1, 1]} : vector<8x96xf32> to vector<8x8xf32>
    %635 = arith.truncf %634 : vector<8x8xf32> to vector<8x8xbf16>
    %636 = vector.extract_strided_slice %565 {offsets = [0, 88], sizes = [8, 8], strides = [1, 1]} : vector<8x96xf32> to vector<8x8xf32>
    %637 = arith.truncf %636 : vector<8x8xf32> to vector<8x8xbf16>
    %cst_192 = arith.constant dense<0.000000e+00> : vector<8x8xf32>
    %638 = tpu.matmul %633, %635, %cst_192 {dimension_numbers = #tpu.dot_dimension_numbers<[1], [1], [0], [0], [0, 0, 1, 0], [], []>} : vector<8x8xbf16>, vector<8x8xbf16>, vector<8x8xf32> -> vector<8x8xf32>
    %cst_193 = arith.constant 0.353553385 : f32
    %639 = vector.broadcast %cst_193 : f32 to vector<8x8xf32>
    %640 = arith.mulf %638, %639 : vector<8x8xf32>
    %641 = arith.addf %640, %28 : vector<8x8xf32>
    %cst_194 = arith.constant dense<0xFF800000> : vector<8xf32>
    %642 = vector.multi_reduction <maximumf>, %641, %cst_194 [1] : vector<8x8xf32> to vector<8xf32>
    %643 = vector.shape_cast %642 : vector<8xf32> to vector<8x1xf32>
    %644 = vector.broadcast %643 : vector<8x1xf32> to vector<8x8xf32>
    %645 = arith.subf %641, %644 : vector<8x8xf32>
    %646 = math.exp %645 : vector<8x8xf32>
    %cst_195 = arith.constant dense<0.000000e+00> : vector<8xf32>
    %647 = vector.multi_reduction <add>, %646, %cst_195 [1] : vector<8x8xf32> to vector<8xf32>
    %648 = vector.shape_cast %647 : vector<8xf32> to vector<8x1xf32>
    %649 = tpu.reciprocal %648 {approx = true} : vector<8x1xf32> -> vector<8x1xf32>
    %650 = vector.broadcast %649 : vector<8x1xf32> to vector<8x8xf32>
    %651 = arith.mulf %646, %650 : vector<8x8xf32>
    %652 = arith.truncf %651 : vector<8x8xf32> to vector<8x8xbf16>
    %cst_196 = arith.constant dense<0.000000e+00> : vector<8x8xf32>
    %653 = tpu.matmul %652, %637, %cst_196 {dimension_numbers = #tpu.dot_dimension_numbers<[1], [0], [0], [1], [0, 0, 1, 1], [], []>} : vector<8x8xbf16>, vector<8x8xbf16>, vector<8x8xf32> -> vector<8x8xf32>
    %654 = tpu.concatenate %587, %609, %631, %653 in 1 : vector<8x8xf32>, vector<8x8xf32>, vector<8x8xf32>, vector<8x8xf32> -> vector<8x32xf32>
    %655 = arith.truncf %654 : vector<8x32xf32> to vector<8x32xbf16>
    %c3_197 = arith.constant 3 : index
    %c0_198 = arith.constant 0 : index
    %c0_199 = arith.constant 0 : index
    %656 = vector.load %arg6[%c3_197, %c0_198, %c0_199] : memref<6x32x32xbf16, #tpu.memory_space<vmem>>, vector<1x32x32xbf16>
    %657 = vector.shape_cast %656 : vector<1x32x32xbf16> to vector<32x32xbf16>
    %cst_200 = arith.constant dense<0.000000e+00> : vector<8x32xf32>
    %658 = tpu.matmul %655, %657, %cst_200 {dimension_numbers = #tpu.dot_dimension_numbers<[1], [0], [0], [1], [0, 0, 1, 1], [], []>} : vector<8x32xbf16>, vector<32x32xbf16>, vector<8x32xf32> -> vector<8x32xf32>
    %659 = arith.addf %547, %658 : vector<8x32xf32>
    %660 = arith.mulf %659, %659 : vector<8x32xf32>
    %cst_201 = arith.constant dense<0.000000e+00> : vector<8xf32>
    %661 = vector.multi_reduction <add>, %660, %cst_201 [1] : vector<8x32xf32> to vector<8xf32>
    %662 = vector.shape_cast %661 : vector<8xf32> to vector<8x1xf32>
    %cst_202 = arith.constant 3.200000e+01 : f32
    %663 = vector.broadcast %cst_202 : f32 to vector<8x1xf32>
    %664 = arith.divf %662, %663 : vector<8x1xf32>
    %cst_203 = arith.constant 9.99999997E-7 : f32
    %665 = vector.broadcast %cst_203 : f32 to vector<8x1xf32>
    %666 = arith.addf %664, %665 : vector<8x1xf32>
    %667 = math.rsqrt %666 : vector<8x1xf32>
    %668 = vector.broadcast %667 : vector<8x1xf32> to vector<8x32xf32>
    %669 = arith.mulf %659, %668 : vector<8x32xf32>
    %670 = vector.broadcast %549 : vector<1x32xf32> to vector<8x32xf32>
    %671 = arith.mulf %669, %670 : vector<8x32xf32>
    %672 = arith.truncf %671 : vector<8x32xf32> to vector<8x32xbf16>
    %c0_204 = arith.constant 0 : index
    %c0_205 = arith.constant 0 : index
    %673 = vector.load %arg20[%c0_204, %c0_205] : memref<32x128xbf16, #tpu.memory_space<vmem>>, vector<32x128xbf16>
    %cst_206 = arith.constant dense<0.000000e+00> : vector<8x128xf32>
    %674 = tpu.matmul %672, %673, %cst_206 {dimension_numbers = #tpu.dot_dimension_numbers<[1], [0], [0], [1], [0, 0, 1, 1], [], []>} : vector<8x32xbf16>, vector<32x128xbf16>, vector<8x128xf32> -> vector<8x128xf32>
    %c0_207 = arith.constant 0 : index
    %c0_208 = arith.constant 0 : index
    %675 = vector.load %arg21[%c0_207, %c0_208] : memref<1x128xf32, #tpu.memory_space<vmem>>, vector<1x128xf32>
    %676 = vector.broadcast %675 : vector<1x128xf32> to vector<8x128xf32>
    %677 = arith.addf %674, %676 : vector<8x128xf32>
    %cst_209 = arith.constant 5.000000e-01 : f32
    %678 = vector.broadcast %cst_209 : f32 to vector<8x128xf32>
    %679 = arith.mulf %678, %677 : vector<8x128xf32>
    %cst_210 = arith.constant 4.471500e-02 : f32
    %680 = vector.broadcast %cst_210 : f32 to vector<8x128xf32>
    %681 = arith.mulf %680, %677 : vector<8x128xf32>
    %682 = arith.mulf %681, %677 : vector<8x128xf32>
    %683 = arith.mulf %682, %677 : vector<8x128xf32>
    %684 = arith.addf %677, %683 : vector<8x128xf32>
    %cst_211 = arith.constant 0.797884583 : f32
    %685 = vector.broadcast %cst_211 : f32 to vector<8x128xf32>
    %686 = arith.mulf %685, %684 : vector<8x128xf32>
    %687 = math.tanh %686 : vector<8x128xf32>
    %cst_212 = arith.constant 1.000000e+00 : f32
    %688 = vector.broadcast %cst_212 : f32 to vector<8x128xf32>
    %689 = arith.addf %688, %687 : vector<8x128xf32>
    %690 = arith.mulf %679, %689 : vector<8x128xf32>
    %691 = arith.truncf %690 : vector<8x128xf32> to vector<8x128xbf16>
    %c0_213 = arith.constant 0 : index
    %c0_214 = arith.constant 0 : index
    %692 = vector.load %arg22[%c0_213, %c0_214] : memref<128x32xbf16, #tpu.memory_space<vmem>>, vector<128x32xbf16>
    %cst_215 = arith.constant dense<0.000000e+00> : vector<8x32xf32>
    %693 = tpu.matmul %691, %692, %cst_215 {dimension_numbers = #tpu.dot_dimension_numbers<[1], [0], [0], [1], [0, 0, 1, 1], [], []>} : vector<8x128xbf16>, vector<128x32xbf16>, vector<8x32xf32> -> vector<8x32xf32>
    %c0_216 = arith.constant 0 : index
    %c0_217 = arith.constant 0 : index
    %694 = vector.load %arg23[%c0_216, %c0_217] : memref<1x32xf32, #tpu.memory_space<vmem>>, vector<1x32xf32>
    %695 = vector.broadcast %694 : vector<1x32xf32> to vector<8x32xf32>
    %696 = arith.addf %693, %695 : vector<8x32xf32>
    %697 = arith.addf %659, %696 : vector<8x32xf32>
    %c8 = arith.constant 8 : index
    %c0_218 = arith.constant 0 : index
    %698 = vector.load %arg4[%c8, %c0_218] : memref<13x32xf32, #tpu.memory_space<vmem>>, vector<1x32xf32>
    %c9 = arith.constant 9 : index
    %c0_219 = arith.constant 0 : index
    %699 = vector.load %arg4[%c9, %c0_219] : memref<13x32xf32, #tpu.memory_space<vmem>>, vector<1x32xf32>
    %700 = arith.mulf %697, %697 : vector<8x32xf32>
    %cst_220 = arith.constant dense<0.000000e+00> : vector<8xf32>
    %701 = vector.multi_reduction <add>, %700, %cst_220 [1] : vector<8x32xf32> to vector<8xf32>
    %702 = vector.shape_cast %701 : vector<8xf32> to vector<8x1xf32>
    %cst_221 = arith.constant 3.200000e+01 : f32
    %703 = vector.broadcast %cst_221 : f32 to vector<8x1xf32>
    %704 = arith.divf %702, %703 : vector<8x1xf32>
    %cst_222 = arith.constant 9.99999997E-7 : f32
    %705 = vector.broadcast %cst_222 : f32 to vector<8x1xf32>
    %706 = arith.addf %704, %705 : vector<8x1xf32>
    %707 = math.rsqrt %706 : vector<8x1xf32>
    %708 = vector.broadcast %707 : vector<8x1xf32> to vector<8x32xf32>
    %709 = arith.mulf %697, %708 : vector<8x32xf32>
    %710 = vector.broadcast %698 : vector<1x32xf32> to vector<8x32xf32>
    %711 = arith.mulf %709, %710 : vector<8x32xf32>
    %712 = arith.truncf %711 : vector<8x32xf32> to vector<8x32xbf16>
    %c4_223 = arith.constant 4 : index
    %c0_224 = arith.constant 0 : index
    %c0_225 = arith.constant 0 : index
    %713 = vector.load %arg5[%c4_223, %c0_224, %c0_225] : memref<6x32x96xbf16, #tpu.memory_space<vmem>>, vector<1x32x96xbf16>
    %714 = vector.shape_cast %713 : vector<1x32x96xbf16> to vector<32x96xbf16>
    %cst_226 = arith.constant dense<0.000000e+00> : vector<8x96xf32>
    %715 = tpu.matmul %712, %714, %cst_226 {dimension_numbers = #tpu.dot_dimension_numbers<[1], [0], [0], [1], [0, 0, 1, 1], [], []>} : vector<8x32xbf16>, vector<32x96xbf16>, vector<8x96xf32> -> vector<8x96xf32>
    %716 = vector.extract_strided_slice %715 {offsets = [0, 0], sizes = [8, 8], strides = [1, 1]} : vector<8x96xf32> to vector<8x8xf32>
    %717 = arith.truncf %716 : vector<8x8xf32> to vector<8x8xbf16>
    %718 = vector.extract_strided_slice %715 {offsets = [0, 32], sizes = [8, 8], strides = [1, 1]} : vector<8x96xf32> to vector<8x8xf32>
    %719 = arith.truncf %718 : vector<8x8xf32> to vector<8x8xbf16>
    %720 = vector.extract_strided_slice %715 {offsets = [0, 64], sizes = [8, 8], strides = [1, 1]} : vector<8x96xf32> to vector<8x8xf32>
    %721 = arith.truncf %720 : vector<8x8xf32> to vector<8x8xbf16>
    %cst_227 = arith.constant dense<0.000000e+00> : vector<8x8xf32>
    %722 = tpu.matmul %717, %719, %cst_227 {dimension_numbers = #tpu.dot_dimension_numbers<[1], [1], [0], [0], [0, 0, 1, 0], [], []>} : vector<8x8xbf16>, vector<8x8xbf16>, vector<8x8xf32> -> vector<8x8xf32>
    %cst_228 = arith.constant 0.353553385 : f32
    %723 = vector.broadcast %cst_228 : f32 to vector<8x8xf32>
    %724 = arith.mulf %722, %723 : vector<8x8xf32>
    %725 = arith.addf %724, %19 : vector<8x8xf32>
    %cst_229 = arith.constant dense<0xFF800000> : vector<8xf32>
    %726 = vector.multi_reduction <maximumf>, %725, %cst_229 [1] : vector<8x8xf32> to vector<8xf32>
    %727 = vector.shape_cast %726 : vector<8xf32> to vector<8x1xf32>
    %728 = vector.broadcast %727 : vector<8x1xf32> to vector<8x8xf32>
    %729 = arith.subf %725, %728 : vector<8x8xf32>
    %730 = math.exp %729 : vector<8x8xf32>
    %cst_230 = arith.constant dense<0.000000e+00> : vector<8xf32>
    %731 = vector.multi_reduction <add>, %730, %cst_230 [1] : vector<8x8xf32> to vector<8xf32>
    %732 = vector.shape_cast %731 : vector<8xf32> to vector<8x1xf32>
    %733 = tpu.reciprocal %732 {approx = true} : vector<8x1xf32> -> vector<8x1xf32>
    %734 = vector.broadcast %733 : vector<8x1xf32> to vector<8x8xf32>
    %735 = arith.mulf %730, %734 : vector<8x8xf32>
    %736 = arith.truncf %735 : vector<8x8xf32> to vector<8x8xbf16>
    %cst_231 = arith.constant dense<0.000000e+00> : vector<8x8xf32>
    %737 = tpu.matmul %736, %721, %cst_231 {dimension_numbers = #tpu.dot_dimension_numbers<[1], [0], [0], [1], [0, 0, 1, 1], [], []>} : vector<8x8xbf16>, vector<8x8xbf16>, vector<8x8xf32> -> vector<8x8xf32>
    %738 = vector.extract_strided_slice %715 {offsets = [0, 8], sizes = [8, 8], strides = [1, 1]} : vector<8x96xf32> to vector<8x8xf32>
    %739 = arith.truncf %738 : vector<8x8xf32> to vector<8x8xbf16>
    %740 = vector.extract_strided_slice %715 {offsets = [0, 40], sizes = [8, 8], strides = [1, 1]} : vector<8x96xf32> to vector<8x8xf32>
    %741 = arith.truncf %740 : vector<8x8xf32> to vector<8x8xbf16>
    %742 = vector.extract_strided_slice %715 {offsets = [0, 72], sizes = [8, 8], strides = [1, 1]} : vector<8x96xf32> to vector<8x8xf32>
    %743 = arith.truncf %742 : vector<8x8xf32> to vector<8x8xbf16>
    %cst_232 = arith.constant dense<0.000000e+00> : vector<8x8xf32>
    %744 = tpu.matmul %739, %741, %cst_232 {dimension_numbers = #tpu.dot_dimension_numbers<[1], [1], [0], [0], [0, 0, 1, 0], [], []>} : vector<8x8xbf16>, vector<8x8xbf16>, vector<8x8xf32> -> vector<8x8xf32>
    %cst_233 = arith.constant 0.353553385 : f32
    %745 = vector.broadcast %cst_233 : f32 to vector<8x8xf32>
    %746 = arith.mulf %744, %745 : vector<8x8xf32>
    %747 = arith.addf %746, %22 : vector<8x8xf32>
    %cst_234 = arith.constant dense<0xFF800000> : vector<8xf32>
    %748 = vector.multi_reduction <maximumf>, %747, %cst_234 [1] : vector<8x8xf32> to vector<8xf32>
    %749 = vector.shape_cast %748 : vector<8xf32> to vector<8x1xf32>
    %750 = vector.broadcast %749 : vector<8x1xf32> to vector<8x8xf32>
    %751 = arith.subf %747, %750 : vector<8x8xf32>
    %752 = math.exp %751 : vector<8x8xf32>
    %cst_235 = arith.constant dense<0.000000e+00> : vector<8xf32>
    %753 = vector.multi_reduction <add>, %752, %cst_235 [1] : vector<8x8xf32> to vector<8xf32>
    %754 = vector.shape_cast %753 : vector<8xf32> to vector<8x1xf32>
    %755 = tpu.reciprocal %754 {approx = true} : vector<8x1xf32> -> vector<8x1xf32>
    %756 = vector.broadcast %755 : vector<8x1xf32> to vector<8x8xf32>
    %757 = arith.mulf %752, %756 : vector<8x8xf32>
    %758 = arith.truncf %757 : vector<8x8xf32> to vector<8x8xbf16>
    %cst_236 = arith.constant dense<0.000000e+00> : vector<8x8xf32>
    %759 = tpu.matmul %758, %743, %cst_236 {dimension_numbers = #tpu.dot_dimension_numbers<[1], [0], [0], [1], [0, 0, 1, 1], [], []>} : vector<8x8xbf16>, vector<8x8xbf16>, vector<8x8xf32> -> vector<8x8xf32>
    %760 = vector.extract_strided_slice %715 {offsets = [0, 16], sizes = [8, 8], strides = [1, 1]} : vector<8x96xf32> to vector<8x8xf32>
    %761 = arith.truncf %760 : vector<8x8xf32> to vector<8x8xbf16>
    %762 = vector.extract_strided_slice %715 {offsets = [0, 48], sizes = [8, 8], strides = [1, 1]} : vector<8x96xf32> to vector<8x8xf32>
    %763 = arith.truncf %762 : vector<8x8xf32> to vector<8x8xbf16>
    %764 = vector.extract_strided_slice %715 {offsets = [0, 80], sizes = [8, 8], strides = [1, 1]} : vector<8x96xf32> to vector<8x8xf32>
    %765 = arith.truncf %764 : vector<8x8xf32> to vector<8x8xbf16>
    %cst_237 = arith.constant dense<0.000000e+00> : vector<8x8xf32>
    %766 = tpu.matmul %761, %763, %cst_237 {dimension_numbers = #tpu.dot_dimension_numbers<[1], [1], [0], [0], [0, 0, 1, 0], [], []>} : vector<8x8xbf16>, vector<8x8xbf16>, vector<8x8xf32> -> vector<8x8xf32>
    %cst_238 = arith.constant 0.353553385 : f32
    %767 = vector.broadcast %cst_238 : f32 to vector<8x8xf32>
    %768 = arith.mulf %766, %767 : vector<8x8xf32>
    %769 = arith.addf %768, %25 : vector<8x8xf32>
    %cst_239 = arith.constant dense<0xFF800000> : vector<8xf32>
    %770 = vector.multi_reduction <maximumf>, %769, %cst_239 [1] : vector<8x8xf32> to vector<8xf32>
    %771 = vector.shape_cast %770 : vector<8xf32> to vector<8x1xf32>
    %772 = vector.broadcast %771 : vector<8x1xf32> to vector<8x8xf32>
    %773 = arith.subf %769, %772 : vector<8x8xf32>
    %774 = math.exp %773 : vector<8x8xf32>
    %cst_240 = arith.constant dense<0.000000e+00> : vector<8xf32>
    %775 = vector.multi_reduction <add>, %774, %cst_240 [1] : vector<8x8xf32> to vector<8xf32>
    %776 = vector.shape_cast %775 : vector<8xf32> to vector<8x1xf32>
    %777 = tpu.reciprocal %776 {approx = true} : vector<8x1xf32> -> vector<8x1xf32>
    %778 = vector.broadcast %777 : vector<8x1xf32> to vector<8x8xf32>
    %779 = arith.mulf %774, %778 : vector<8x8xf32>
    %780 = arith.truncf %779 : vector<8x8xf32> to vector<8x8xbf16>
    %cst_241 = arith.constant dense<0.000000e+00> : vector<8x8xf32>
    %781 = tpu.matmul %780, %765, %cst_241 {dimension_numbers = #tpu.dot_dimension_numbers<[1], [0], [0], [1], [0, 0, 1, 1], [], []>} : vector<8x8xbf16>, vector<8x8xbf16>, vector<8x8xf32> -> vector<8x8xf32>
    %782 = vector.extract_strided_slice %715 {offsets = [0, 24], sizes = [8, 8], strides = [1, 1]} : vector<8x96xf32> to vector<8x8xf32>
    %783 = arith.truncf %782 : vector<8x8xf32> to vector<8x8xbf16>
    %784 = vector.extract_strided_slice %715 {offsets = [0, 56], sizes = [8, 8], strides = [1, 1]} : vector<8x96xf32> to vector<8x8xf32>
    %785 = arith.truncf %784 : vector<8x8xf32> to vector<8x8xbf16>
    %786 = vector.extract_strided_slice %715 {offsets = [0, 88], sizes = [8, 8], strides = [1, 1]} : vector<8x96xf32> to vector<8x8xf32>
    %787 = arith.truncf %786 : vector<8x8xf32> to vector<8x8xbf16>
    %cst_242 = arith.constant dense<0.000000e+00> : vector<8x8xf32>
    %788 = tpu.matmul %783, %785, %cst_242 {dimension_numbers = #tpu.dot_dimension_numbers<[1], [1], [0], [0], [0, 0, 1, 0], [], []>} : vector<8x8xbf16>, vector<8x8xbf16>, vector<8x8xf32> -> vector<8x8xf32>
    %cst_243 = arith.constant 0.353553385 : f32
    %789 = vector.broadcast %cst_243 : f32 to vector<8x8xf32>
    %790 = arith.mulf %788, %789 : vector<8x8xf32>
    %791 = arith.addf %790, %28 : vector<8x8xf32>
    %cst_244 = arith.constant dense<0xFF800000> : vector<8xf32>
    %792 = vector.multi_reduction <maximumf>, %791, %cst_244 [1] : vector<8x8xf32> to vector<8xf32>
    %793 = vector.shape_cast %792 : vector<8xf32> to vector<8x1xf32>
    %794 = vector.broadcast %793 : vector<8x1xf32> to vector<8x8xf32>
    %795 = arith.subf %791, %794 : vector<8x8xf32>
    %796 = math.exp %795 : vector<8x8xf32>
    %cst_245 = arith.constant dense<0.000000e+00> : vector<8xf32>
    %797 = vector.multi_reduction <add>, %796, %cst_245 [1] : vector<8x8xf32> to vector<8xf32>
    %798 = vector.shape_cast %797 : vector<8xf32> to vector<8x1xf32>
    %799 = tpu.reciprocal %798 {approx = true} : vector<8x1xf32> -> vector<8x1xf32>
    %800 = vector.broadcast %799 : vector<8x1xf32> to vector<8x8xf32>
    %801 = arith.mulf %796, %800 : vector<8x8xf32>
    %802 = arith.truncf %801 : vector<8x8xf32> to vector<8x8xbf16>
    %cst_246 = arith.constant dense<0.000000e+00> : vector<8x8xf32>
    %803 = tpu.matmul %802, %787, %cst_246 {dimension_numbers = #tpu.dot_dimension_numbers<[1], [0], [0], [1], [0, 0, 1, 1], [], []>} : vector<8x8xbf16>, vector<8x8xbf16>, vector<8x8xf32> -> vector<8x8xf32>
    %804 = tpu.concatenate %737, %759, %781, %803 in 1 : vector<8x8xf32>, vector<8x8xf32>, vector<8x8xf32>, vector<8x8xf32> -> vector<8x32xf32>
    %805 = arith.truncf %804 : vector<8x32xf32> to vector<8x32xbf16>
    %c4_247 = arith.constant 4 : index
    %c0_248 = arith.constant 0 : index
    %c0_249 = arith.constant 0 : index
    %806 = vector.load %arg6[%c4_247, %c0_248, %c0_249] : memref<6x32x32xbf16, #tpu.memory_space<vmem>>, vector<1x32x32xbf16>
    %807 = vector.shape_cast %806 : vector<1x32x32xbf16> to vector<32x32xbf16>
    %cst_250 = arith.constant dense<0.000000e+00> : vector<8x32xf32>
    %808 = tpu.matmul %805, %807, %cst_250 {dimension_numbers = #tpu.dot_dimension_numbers<[1], [0], [0], [1], [0, 0, 1, 1], [], []>} : vector<8x32xbf16>, vector<32x32xbf16>, vector<8x32xf32> -> vector<8x32xf32>
    %809 = arith.addf %697, %808 : vector<8x32xf32>
    %810 = arith.mulf %809, %809 : vector<8x32xf32>
    %cst_251 = arith.constant dense<0.000000e+00> : vector<8xf32>
    %811 = vector.multi_reduction <add>, %810, %cst_251 [1] : vector<8x32xf32> to vector<8xf32>
    %812 = vector.shape_cast %811 : vector<8xf32> to vector<8x1xf32>
    %cst_252 = arith.constant 3.200000e+01 : f32
    %813 = vector.broadcast %cst_252 : f32 to vector<8x1xf32>
    %814 = arith.divf %812, %813 : vector<8x1xf32>
    %cst_253 = arith.constant 9.99999997E-7 : f32
    %815 = vector.broadcast %cst_253 : f32 to vector<8x1xf32>
    %816 = arith.addf %814, %815 : vector<8x1xf32>
    %817 = math.rsqrt %816 : vector<8x1xf32>
    %818 = vector.broadcast %817 : vector<8x1xf32> to vector<8x32xf32>
    %819 = arith.mulf %809, %818 : vector<8x32xf32>
    %820 = vector.broadcast %699 : vector<1x32xf32> to vector<8x32xf32>
    %821 = arith.mulf %819, %820 : vector<8x32xf32>
    %822 = arith.truncf %821 : vector<8x32xf32> to vector<8x32xbf16>
    %c0_254 = arith.constant 0 : index
    %c0_255 = arith.constant 0 : index
    %823 = vector.load %arg24[%c0_254, %c0_255] : memref<32x258xbf16, #tpu.memory_space<vmem>>, vector<32x258xbf16>
    %cst_256 = arith.constant dense<0.000000e+00> : vector<8x258xf32>
    %824 = tpu.matmul %822, %823, %cst_256 {dimension_numbers = #tpu.dot_dimension_numbers<[1], [0], [0], [1], [0, 0, 1, 1], [], []>} : vector<8x32xbf16>, vector<32x258xbf16>, vector<8x258xf32> -> vector<8x258xf32>
    %c0_257 = arith.constant 0 : index
    %c0_258 = arith.constant 0 : index
    %825 = vector.load %arg25[%c0_257, %c0_258] : memref<1x258xf32, #tpu.memory_space<vmem>>, vector<1x258xf32>
    %826 = vector.broadcast %825 : vector<1x258xf32> to vector<8x258xf32>
    %827 = arith.addf %824, %826 : vector<8x258xf32>
    %828 = vector.extract_strided_slice %827 {offsets = [0, 0], sizes = [8, 256], strides = [1, 1]} : vector<8x258xf32> to vector<8x256xf32>
    %cst_259 = arith.constant 5.000000e-01 : f32
    %829 = vector.broadcast %cst_259 : f32 to vector<8x256xf32>
    %830 = arith.mulf %829, %828 : vector<8x256xf32>
    %cst_260 = arith.constant 4.471500e-02 : f32
    %831 = vector.broadcast %cst_260 : f32 to vector<8x256xf32>
    %832 = arith.mulf %831, %828 : vector<8x256xf32>
    %833 = arith.mulf %832, %828 : vector<8x256xf32>
    %834 = arith.mulf %833, %828 : vector<8x256xf32>
    %835 = arith.addf %828, %834 : vector<8x256xf32>
    %cst_261 = arith.constant 0.797884583 : f32
    %836 = vector.broadcast %cst_261 : f32 to vector<8x256xf32>
    %837 = arith.mulf %836, %835 : vector<8x256xf32>
    %838 = math.tanh %837 : vector<8x256xf32>
    %cst_262 = arith.constant 1.000000e+00 : f32
    %839 = vector.broadcast %cst_262 : f32 to vector<8x256xf32>
    %840 = arith.addf %839, %838 : vector<8x256xf32>
    %841 = arith.mulf %830, %840 : vector<8x256xf32>
    %842 = vector.extract_strided_slice %827 {offsets = [0, 256], sizes = [8, 2], strides = [1, 1]} : vector<8x258xf32> to vector<8x2xf32>
    %cst_263 = arith.constant dense<0xFF800000> : vector<8xf32>
    %843 = vector.multi_reduction <maximumf>, %842, %cst_263 [1] : vector<8x2xf32> to vector<8xf32>
    %844 = vector.shape_cast %843 : vector<8xf32> to vector<8x1xf32>
    %845 = vector.broadcast %844 : vector<8x1xf32> to vector<8x2xf32>
    %846 = arith.subf %842, %845 : vector<8x2xf32>
    %847 = math.exp %846 : vector<8x2xf32>
    %cst_264 = arith.constant dense<0.000000e+00> : vector<8xf32>
    %848 = vector.multi_reduction <add>, %847, %cst_264 [1] : vector<8x2xf32> to vector<8xf32>
    %849 = vector.shape_cast %848 : vector<8xf32> to vector<8x1xf32>
    %850 = vector.broadcast %849 : vector<8x1xf32> to vector<8x2xf32>
    %851 = arith.divf %847, %850 : vector<8x2xf32>
    %852 = tpu.iota {dimensions = array<i32: 1>} : vector<8x2xi32>
    %853 = arith.sitofp %852 : vector<8x2xi32> to vector<8x2xf32>
    %854 = vector.broadcast %844 : vector<8x1xf32> to vector<8x2xf32>
    %855 = arith.cmpf oeq, %842, %854 : vector<8x2xf32>
    %cst_265 = arith.constant 2.000000e+00 : f32
    %856 = vector.broadcast %cst_265 : f32 to vector<8x2xf32>
    %857 = arith.select %855, %853, %856 : vector<8x2xi1>, vector<8x2xf32>
    %cst_266 = arith.constant dense<0x7F800000> : vector<8xf32>
    %858 = vector.multi_reduction <minimumf>, %857, %cst_266 [1] : vector<8x2xf32> to vector<8xf32>
    %859 = vector.shape_cast %858 : vector<8xf32> to vector<8x1xf32>
    %860 = vector.broadcast %859 : vector<8x1xf32> to vector<8x2xf32>
    %861 = arith.cmpf oeq, %853, %860 : vector<8x2xf32>
    %862 = arith.extui %861 : vector<8x2xi1> to vector<8x2xi32>
    %863 = arith.sitofp %862 : vector<8x2xi32> to vector<8x2xf32>
    %864 = arith.mulf %863, %851 : vector<8x2xf32>
    %865 = vector.extract_strided_slice %841 {offsets = [0, 0], sizes = [8, 128], strides = [1, 1]} : vector<8x256xf32> to vector<8x128xf32>
    %866 = vector.extract_strided_slice %864 {offsets = [0, 0], sizes = [8, 1], strides = [1, 1]} : vector<8x2xf32> to vector<8x1xf32>
    %867 = vector.broadcast %866 : vector<8x1xf32> to vector<8x128xf32>
    %868 = arith.mulf %865, %867 : vector<8x128xf32>
    %869 = vector.extract_strided_slice %841 {offsets = [0, 128], sizes = [8, 128], strides = [1, 1]} : vector<8x256xf32> to vector<8x128xf32>
    %870 = vector.extract_strided_slice %864 {offsets = [0, 1], sizes = [8, 1], strides = [1, 1]} : vector<8x2xf32> to vector<8x1xf32>
    %871 = vector.broadcast %870 : vector<8x1xf32> to vector<8x128xf32>
    %872 = arith.mulf %869, %871 : vector<8x128xf32>
    %873 = tpu.concatenate %868, %872 in 1 : vector<8x128xf32>, vector<8x128xf32> -> vector<8x256xf32>
    %874 = arith.truncf %873 : vector<8x256xf32> to vector<8x256xbf16>
    %c0_267 = arith.constant 0 : index
    %c0_268 = arith.constant 0 : index
    %875 = vector.load %arg26[%c0_267, %c0_268] : memref<256x32xbf16, #tpu.memory_space<vmem>>, vector<256x32xbf16>
    %cst_269 = arith.constant dense<0.000000e+00> : vector<8x32xf32>
    %876 = tpu.matmul %874, %875, %cst_269 {dimension_numbers = #tpu.dot_dimension_numbers<[1], [0], [0], [1], [0, 0, 1, 1], [], []>} : vector<8x256xbf16>, vector<256x32xbf16>, vector<8x32xf32> -> vector<8x32xf32>
    %c0_270 = arith.constant 0 : index
    %c0_271 = arith.constant 0 : index
    %877 = vector.load %arg27[%c0_270, %c0_271] : memref<2x32xf32, #tpu.memory_space<vmem>>, vector<2x32xf32>
    %cst_272 = arith.constant dense<0.000000e+00> : vector<8x32xf32>
    %878 = tpu.matmul %864, %877, %cst_272 {dimension_numbers = #tpu.dot_dimension_numbers<[1], [0], [0], [1], [0, 0, 1, 1], [], []>} : vector<8x2xf32>, vector<2x32xf32>, vector<8x32xf32> -> vector<8x32xf32>
    %879 = arith.addf %876, %878 : vector<8x32xf32>
    %880 = arith.addf %809, %879 : vector<8x32xf32>
    %c10 = arith.constant 10 : index
    %c0_273 = arith.constant 0 : index
    %881 = vector.load %arg4[%c10, %c0_273] : memref<13x32xf32, #tpu.memory_space<vmem>>, vector<1x32xf32>
    %c11 = arith.constant 11 : index
    %c0_274 = arith.constant 0 : index
    %882 = vector.load %arg4[%c11, %c0_274] : memref<13x32xf32, #tpu.memory_space<vmem>>, vector<1x32xf32>
    %883 = arith.mulf %880, %880 : vector<8x32xf32>
    %cst_275 = arith.constant dense<0.000000e+00> : vector<8xf32>
    %884 = vector.multi_reduction <add>, %883, %cst_275 [1] : vector<8x32xf32> to vector<8xf32>
    %885 = vector.shape_cast %884 : vector<8xf32> to vector<8x1xf32>
    %cst_276 = arith.constant 3.200000e+01 : f32
    %886 = vector.broadcast %cst_276 : f32 to vector<8x1xf32>
    %887 = arith.divf %885, %886 : vector<8x1xf32>
    %cst_277 = arith.constant 9.99999997E-7 : f32
    %888 = vector.broadcast %cst_277 : f32 to vector<8x1xf32>
    %889 = arith.addf %887, %888 : vector<8x1xf32>
    %890 = math.rsqrt %889 : vector<8x1xf32>
    %891 = vector.broadcast %890 : vector<8x1xf32> to vector<8x32xf32>
    %892 = arith.mulf %880, %891 : vector<8x32xf32>
    %893 = vector.broadcast %881 : vector<1x32xf32> to vector<8x32xf32>
    %894 = arith.mulf %892, %893 : vector<8x32xf32>
    %895 = arith.truncf %894 : vector<8x32xf32> to vector<8x32xbf16>
    %c5_278 = arith.constant 5 : index
    %c0_279 = arith.constant 0 : index
    %c0_280 = arith.constant 0 : index
    %896 = vector.load %arg5[%c5_278, %c0_279, %c0_280] : memref<6x32x96xbf16, #tpu.memory_space<vmem>>, vector<1x32x96xbf16>
    %897 = vector.shape_cast %896 : vector<1x32x96xbf16> to vector<32x96xbf16>
    %cst_281 = arith.constant dense<0.000000e+00> : vector<8x96xf32>
    %898 = tpu.matmul %895, %897, %cst_281 {dimension_numbers = #tpu.dot_dimension_numbers<[1], [0], [0], [1], [0, 0, 1, 1], [], []>} : vector<8x32xbf16>, vector<32x96xbf16>, vector<8x96xf32> -> vector<8x96xf32>
    %899 = vector.extract_strided_slice %898 {offsets = [0, 0], sizes = [8, 8], strides = [1, 1]} : vector<8x96xf32> to vector<8x8xf32>
    %900 = arith.truncf %899 : vector<8x8xf32> to vector<8x8xbf16>
    %901 = vector.extract_strided_slice %898 {offsets = [0, 32], sizes = [8, 8], strides = [1, 1]} : vector<8x96xf32> to vector<8x8xf32>
    %902 = arith.truncf %901 : vector<8x8xf32> to vector<8x8xbf16>
    %903 = vector.extract_strided_slice %898 {offsets = [0, 64], sizes = [8, 8], strides = [1, 1]} : vector<8x96xf32> to vector<8x8xf32>
    %904 = arith.truncf %903 : vector<8x8xf32> to vector<8x8xbf16>
    %cst_282 = arith.constant dense<0.000000e+00> : vector<8x8xf32>
    %905 = tpu.matmul %900, %902, %cst_282 {dimension_numbers = #tpu.dot_dimension_numbers<[1], [1], [0], [0], [0, 0, 1, 0], [], []>} : vector<8x8xbf16>, vector<8x8xbf16>, vector<8x8xf32> -> vector<8x8xf32>
    %cst_283 = arith.constant 0.353553385 : f32
    %906 = vector.broadcast %cst_283 : f32 to vector<8x8xf32>
    %907 = arith.mulf %905, %906 : vector<8x8xf32>
    %908 = arith.addf %907, %19 : vector<8x8xf32>
    %cst_284 = arith.constant dense<0xFF800000> : vector<8xf32>
    %909 = vector.multi_reduction <maximumf>, %908, %cst_284 [1] : vector<8x8xf32> to vector<8xf32>
    %910 = vector.shape_cast %909 : vector<8xf32> to vector<8x1xf32>
    %911 = vector.broadcast %910 : vector<8x1xf32> to vector<8x8xf32>
    %912 = arith.subf %908, %911 : vector<8x8xf32>
    %913 = math.exp %912 : vector<8x8xf32>
    %cst_285 = arith.constant dense<0.000000e+00> : vector<8xf32>
    %914 = vector.multi_reduction <add>, %913, %cst_285 [1] : vector<8x8xf32> to vector<8xf32>
    %915 = vector.shape_cast %914 : vector<8xf32> to vector<8x1xf32>
    %916 = tpu.reciprocal %915 {approx = true} : vector<8x1xf32> -> vector<8x1xf32>
    %917 = vector.broadcast %916 : vector<8x1xf32> to vector<8x8xf32>
    %918 = arith.mulf %913, %917 : vector<8x8xf32>
    %919 = arith.truncf %918 : vector<8x8xf32> to vector<8x8xbf16>
    %cst_286 = arith.constant dense<0.000000e+00> : vector<8x8xf32>
    %920 = tpu.matmul %919, %904, %cst_286 {dimension_numbers = #tpu.dot_dimension_numbers<[1], [0], [0], [1], [0, 0, 1, 1], [], []>} : vector<8x8xbf16>, vector<8x8xbf16>, vector<8x8xf32> -> vector<8x8xf32>
    %921 = vector.extract_strided_slice %898 {offsets = [0, 8], sizes = [8, 8], strides = [1, 1]} : vector<8x96xf32> to vector<8x8xf32>
    %922 = arith.truncf %921 : vector<8x8xf32> to vector<8x8xbf16>
    %923 = vector.extract_strided_slice %898 {offsets = [0, 40], sizes = [8, 8], strides = [1, 1]} : vector<8x96xf32> to vector<8x8xf32>
    %924 = arith.truncf %923 : vector<8x8xf32> to vector<8x8xbf16>
    %925 = vector.extract_strided_slice %898 {offsets = [0, 72], sizes = [8, 8], strides = [1, 1]} : vector<8x96xf32> to vector<8x8xf32>
    %926 = arith.truncf %925 : vector<8x8xf32> to vector<8x8xbf16>
    %cst_287 = arith.constant dense<0.000000e+00> : vector<8x8xf32>
    %927 = tpu.matmul %922, %924, %cst_287 {dimension_numbers = #tpu.dot_dimension_numbers<[1], [1], [0], [0], [0, 0, 1, 0], [], []>} : vector<8x8xbf16>, vector<8x8xbf16>, vector<8x8xf32> -> vector<8x8xf32>
    %cst_288 = arith.constant 0.353553385 : f32
    %928 = vector.broadcast %cst_288 : f32 to vector<8x8xf32>
    %929 = arith.mulf %927, %928 : vector<8x8xf32>
    %930 = arith.addf %929, %22 : vector<8x8xf32>
    %cst_289 = arith.constant dense<0xFF800000> : vector<8xf32>
    %931 = vector.multi_reduction <maximumf>, %930, %cst_289 [1] : vector<8x8xf32> to vector<8xf32>
    %932 = vector.shape_cast %931 : vector<8xf32> to vector<8x1xf32>
    %933 = vector.broadcast %932 : vector<8x1xf32> to vector<8x8xf32>
    %934 = arith.subf %930, %933 : vector<8x8xf32>
    %935 = math.exp %934 : vector<8x8xf32>
    %cst_290 = arith.constant dense<0.000000e+00> : vector<8xf32>
    %936 = vector.multi_reduction <add>, %935, %cst_290 [1] : vector<8x8xf32> to vector<8xf32>
    %937 = vector.shape_cast %936 : vector<8xf32> to vector<8x1xf32>
    %938 = tpu.reciprocal %937 {approx = true} : vector<8x1xf32> -> vector<8x1xf32>
    %939 = vector.broadcast %938 : vector<8x1xf32> to vector<8x8xf32>
    %940 = arith.mulf %935, %939 : vector<8x8xf32>
    %941 = arith.truncf %940 : vector<8x8xf32> to vector<8x8xbf16>
    %cst_291 = arith.constant dense<0.000000e+00> : vector<8x8xf32>
    %942 = tpu.matmul %941, %926, %cst_291 {dimension_numbers = #tpu.dot_dimension_numbers<[1], [0], [0], [1], [0, 0, 1, 1], [], []>} : vector<8x8xbf16>, vector<8x8xbf16>, vector<8x8xf32> -> vector<8x8xf32>
    %943 = vector.extract_strided_slice %898 {offsets = [0, 16], sizes = [8, 8], strides = [1, 1]} : vector<8x96xf32> to vector<8x8xf32>
    %944 = arith.truncf %943 : vector<8x8xf32> to vector<8x8xbf16>
    %945 = vector.extract_strided_slice %898 {offsets = [0, 48], sizes = [8, 8], strides = [1, 1]} : vector<8x96xf32> to vector<8x8xf32>
    %946 = arith.truncf %945 : vector<8x8xf32> to vector<8x8xbf16>
    %947 = vector.extract_strided_slice %898 {offsets = [0, 80], sizes = [8, 8], strides = [1, 1]} : vector<8x96xf32> to vector<8x8xf32>
    %948 = arith.truncf %947 : vector<8x8xf32> to vector<8x8xbf16>
    %cst_292 = arith.constant dense<0.000000e+00> : vector<8x8xf32>
    %949 = tpu.matmul %944, %946, %cst_292 {dimension_numbers = #tpu.dot_dimension_numbers<[1], [1], [0], [0], [0, 0, 1, 0], [], []>} : vector<8x8xbf16>, vector<8x8xbf16>, vector<8x8xf32> -> vector<8x8xf32>
    %cst_293 = arith.constant 0.353553385 : f32
    %950 = vector.broadcast %cst_293 : f32 to vector<8x8xf32>
    %951 = arith.mulf %949, %950 : vector<8x8xf32>
    %952 = arith.addf %951, %25 : vector<8x8xf32>
    %cst_294 = arith.constant dense<0xFF800000> : vector<8xf32>
    %953 = vector.multi_reduction <maximumf>, %952, %cst_294 [1] : vector<8x8xf32> to vector<8xf32>
    %954 = vector.shape_cast %953 : vector<8xf32> to vector<8x1xf32>
    %955 = vector.broadcast %954 : vector<8x1xf32> to vector<8x8xf32>
    %956 = arith.subf %952, %955 : vector<8x8xf32>
    %957 = math.exp %956 : vector<8x8xf32>
    %cst_295 = arith.constant dense<0.000000e+00> : vector<8xf32>
    %958 = vector.multi_reduction <add>, %957, %cst_295 [1] : vector<8x8xf32> to vector<8xf32>
    %959 = vector.shape_cast %958 : vector<8xf32> to vector<8x1xf32>
    %960 = tpu.reciprocal %959 {approx = true} : vector<8x1xf32> -> vector<8x1xf32>
    %961 = vector.broadcast %960 : vector<8x1xf32> to vector<8x8xf32>
    %962 = arith.mulf %957, %961 : vector<8x8xf32>
    %963 = arith.truncf %962 : vector<8x8xf32> to vector<8x8xbf16>
    %cst_296 = arith.constant dense<0.000000e+00> : vector<8x8xf32>
    %964 = tpu.matmul %963, %948, %cst_296 {dimension_numbers = #tpu.dot_dimension_numbers<[1], [0], [0], [1], [0, 0, 1, 1], [], []>} : vector<8x8xbf16>, vector<8x8xbf16>, vector<8x8xf32> -> vector<8x8xf32>
    %965 = vector.extract_strided_slice %898 {offsets = [0, 24], sizes = [8, 8], strides = [1, 1]} : vector<8x96xf32> to vector<8x8xf32>
    %966 = arith.truncf %965 : vector<8x8xf32> to vector<8x8xbf16>
    %967 = vector.extract_strided_slice %898 {offsets = [0, 56], sizes = [8, 8], strides = [1, 1]} : vector<8x96xf32> to vector<8x8xf32>
    %968 = arith.truncf %967 : vector<8x8xf32> to vector<8x8xbf16>
    %969 = vector.extract_strided_slice %898 {offsets = [0, 88], sizes = [8, 8], strides = [1, 1]} : vector<8x96xf32> to vector<8x8xf32>
    %970 = arith.truncf %969 : vector<8x8xf32> to vector<8x8xbf16>
    %cst_297 = arith.constant dense<0.000000e+00> : vector<8x8xf32>
    %971 = tpu.matmul %966, %968, %cst_297 {dimension_numbers = #tpu.dot_dimension_numbers<[1], [1], [0], [0], [0, 0, 1, 0], [], []>} : vector<8x8xbf16>, vector<8x8xbf16>, vector<8x8xf32> -> vector<8x8xf32>
    %cst_298 = arith.constant 0.353553385 : f32
    %972 = vector.broadcast %cst_298 : f32 to vector<8x8xf32>
    %973 = arith.mulf %971, %972 : vector<8x8xf32>
    %974 = arith.addf %973, %28 : vector<8x8xf32>
    %cst_299 = arith.constant dense<0xFF800000> : vector<8xf32>
    %975 = vector.multi_reduction <maximumf>, %974, %cst_299 [1] : vector<8x8xf32> to vector<8xf32>
    %976 = vector.shape_cast %975 : vector<8xf32> to vector<8x1xf32>
    %977 = vector.broadcast %976 : vector<8x1xf32> to vector<8x8xf32>
    %978 = arith.subf %974, %977 : vector<8x8xf32>
    %979 = math.exp %978 : vector<8x8xf32>
    %cst_300 = arith.constant dense<0.000000e+00> : vector<8xf32>
    %980 = vector.multi_reduction <add>, %979, %cst_300 [1] : vector<8x8xf32> to vector<8xf32>
    %981 = vector.shape_cast %980 : vector<8xf32> to vector<8x1xf32>
    %982 = tpu.reciprocal %981 {approx = true} : vector<8x1xf32> -> vector<8x1xf32>
    %983 = vector.broadcast %982 : vector<8x1xf32> to vector<8x8xf32>
    %984 = arith.mulf %979, %983 : vector<8x8xf32>
    %985 = arith.truncf %984 : vector<8x8xf32> to vector<8x8xbf16>
    %cst_301 = arith.constant dense<0.000000e+00> : vector<8x8xf32>
    %986 = tpu.matmul %985, %970, %cst_301 {dimension_numbers = #tpu.dot_dimension_numbers<[1], [0], [0], [1], [0, 0, 1, 1], [], []>} : vector<8x8xbf16>, vector<8x8xbf16>, vector<8x8xf32> -> vector<8x8xf32>
    %987 = tpu.concatenate %920, %942, %964, %986 in 1 : vector<8x8xf32>, vector<8x8xf32>, vector<8x8xf32>, vector<8x8xf32> -> vector<8x32xf32>
    %988 = arith.truncf %987 : vector<8x32xf32> to vector<8x32xbf16>
    %c5_302 = arith.constant 5 : index
    %c0_303 = arith.constant 0 : index
    %c0_304 = arith.constant 0 : index
    %989 = vector.load %arg6[%c5_302, %c0_303, %c0_304] : memref<6x32x32xbf16, #tpu.memory_space<vmem>>, vector<1x32x32xbf16>
    %990 = vector.shape_cast %989 : vector<1x32x32xbf16> to vector<32x32xbf16>
    %cst_305 = arith.constant dense<0.000000e+00> : vector<8x32xf32>
    %991 = tpu.matmul %988, %990, %cst_305 {dimension_numbers = #tpu.dot_dimension_numbers<[1], [0], [0], [1], [0, 0, 1, 1], [], []>} : vector<8x32xbf16>, vector<32x32xbf16>, vector<8x32xf32> -> vector<8x32xf32>
    %992 = arith.addf %880, %991 : vector<8x32xf32>
    %993 = arith.mulf %992, %992 : vector<8x32xf32>
    %cst_306 = arith.constant dense<0.000000e+00> : vector<8xf32>
    %994 = vector.multi_reduction <add>, %993, %cst_306 [1] : vector<8x32xf32> to vector<8xf32>
    %995 = vector.shape_cast %994 : vector<8xf32> to vector<8x1xf32>
    %cst_307 = arith.constant 3.200000e+01 : f32
    %996 = vector.broadcast %cst_307 : f32 to vector<8x1xf32>
    %997 = arith.divf %995, %996 : vector<8x1xf32>
    %cst_308 = arith.constant 9.99999997E-7 : f32
    %998 = vector.broadcast %cst_308 : f32 to vector<8x1xf32>
    %999 = arith.addf %997, %998 : vector<8x1xf32>
    %1000 = math.rsqrt %999 : vector<8x1xf32>
    %1001 = vector.broadcast %1000 : vector<8x1xf32> to vector<8x32xf32>
    %1002 = arith.mulf %992, %1001 : vector<8x32xf32>
    %1003 = vector.broadcast %882 : vector<1x32xf32> to vector<8x32xf32>
    %1004 = arith.mulf %1002, %1003 : vector<8x32xf32>
    %1005 = arith.truncf %1004 : vector<8x32xf32> to vector<8x32xbf16>
    %c0_309 = arith.constant 0 : index
    %c0_310 = arith.constant 0 : index
    %1006 = vector.load %arg28[%c0_309, %c0_310] : memref<32x128xbf16, #tpu.memory_space<vmem>>, vector<32x128xbf16>
    %cst_311 = arith.constant dense<0.000000e+00> : vector<8x128xf32>
    %1007 = tpu.matmul %1005, %1006, %cst_311 {dimension_numbers = #tpu.dot_dimension_numbers<[1], [0], [0], [1], [0, 0, 1, 1], [], []>} : vector<8x32xbf16>, vector<32x128xbf16>, vector<8x128xf32> -> vector<8x128xf32>
    %c0_312 = arith.constant 0 : index
    %c0_313 = arith.constant 0 : index
    %1008 = vector.load %arg29[%c0_312, %c0_313] : memref<1x128xf32, #tpu.memory_space<vmem>>, vector<1x128xf32>
    %1009 = vector.broadcast %1008 : vector<1x128xf32> to vector<8x128xf32>
    %1010 = arith.addf %1007, %1009 : vector<8x128xf32>
    %cst_314 = arith.constant 5.000000e-01 : f32
    %1011 = vector.broadcast %cst_314 : f32 to vector<8x128xf32>
    %1012 = arith.mulf %1011, %1010 : vector<8x128xf32>
    %cst_315 = arith.constant 4.471500e-02 : f32
    %1013 = vector.broadcast %cst_315 : f32 to vector<8x128xf32>
    %1014 = arith.mulf %1013, %1010 : vector<8x128xf32>
    %1015 = arith.mulf %1014, %1010 : vector<8x128xf32>
    %1016 = arith.mulf %1015, %1010 : vector<8x128xf32>
    %1017 = arith.addf %1010, %1016 : vector<8x128xf32>
    %cst_316 = arith.constant 0.797884583 : f32
    %1018 = vector.broadcast %cst_316 : f32 to vector<8x128xf32>
    %1019 = arith.mulf %1018, %1017 : vector<8x128xf32>
    %1020 = math.tanh %1019 : vector<8x128xf32>
    %cst_317 = arith.constant 1.000000e+00 : f32
    %1021 = vector.broadcast %cst_317 : f32 to vector<8x128xf32>
    %1022 = arith.addf %1021, %1020 : vector<8x128xf32>
    %1023 = arith.mulf %1012, %1022 : vector<8x128xf32>
    %1024 = arith.truncf %1023 : vector<8x128xf32> to vector<8x128xbf16>
    %c0_318 = arith.constant 0 : index
    %c0_319 = arith.constant 0 : index
    %1025 = vector.load %arg30[%c0_318, %c0_319] : memref<128x32xbf16, #tpu.memory_space<vmem>>, vector<128x32xbf16>
    %cst_320 = arith.constant dense<0.000000e+00> : vector<8x32xf32>
    %1026 = tpu.matmul %1024, %1025, %cst_320 {dimension_numbers = #tpu.dot_dimension_numbers<[1], [0], [0], [1], [0, 0, 1, 1], [], []>} : vector<8x128xbf16>, vector<128x32xbf16>, vector<8x32xf32> -> vector<8x32xf32>
    %c0_321 = arith.constant 0 : index
    %c0_322 = arith.constant 0 : index
    %1027 = vector.load %arg31[%c0_321, %c0_322] : memref<1x32xf32, #tpu.memory_space<vmem>>, vector<1x32xf32>
    %1028 = vector.broadcast %1027 : vector<1x32xf32> to vector<8x32xf32>
    %1029 = arith.addf %1026, %1028 : vector<8x32xf32>
    %1030 = arith.addf %992, %1029 : vector<8x32xf32>
    %1031 = arith.mulf %1030, %1030 : vector<8x32xf32>
    %cst_323 = arith.constant dense<0.000000e+00> : vector<8xf32>
    %1032 = vector.multi_reduction <add>, %1031, %cst_323 [1] : vector<8x32xf32> to vector<8xf32>
    %1033 = vector.shape_cast %1032 : vector<8xf32> to vector<8x1xf32>
    %cst_324 = arith.constant 3.200000e+01 : f32
    %1034 = vector.broadcast %cst_324 : f32 to vector<8x1xf32>
    %1035 = arith.divf %1033, %1034 : vector<8x1xf32>
    %cst_325 = arith.constant 9.99999997E-7 : f32
    %1036 = vector.broadcast %cst_325 : f32 to vector<8x1xf32>
    %1037 = arith.addf %1035, %1036 : vector<8x1xf32>
    %1038 = math.rsqrt %1037 : vector<8x1xf32>
    %1039 = vector.broadcast %1038 : vector<8x1xf32> to vector<8x32xf32>
    %1040 = arith.mulf %1030, %1039 : vector<8x32xf32>
    %c12 = arith.constant 12 : index
    %c0_326 = arith.constant 0 : index
    %1041 = vector.load %arg4[%c12, %c0_326] : memref<13x32xf32, #tpu.memory_space<vmem>>, vector<1x32xf32>
    %1042 = vector.broadcast %1041 : vector<1x32xf32> to vector<8x32xf32>
    %1043 = arith.mulf %1040, %1042 : vector<8x32xf32>
    %1044 = arith.truncf %1043 : vector<8x32xf32> to vector<8x32xbf16>
    %c0_327 = arith.constant 0 : index
    %c0_328 = arith.constant 0 : index
    %1045 = vector.load %arg3[%c0_327, %c0_328] : memref<32x256xbf16, #tpu.memory_space<vmem>>, vector<32x256xbf16>
    %cst_329 = arith.constant dense<0.000000e+00> : vector<8x256xf32>
    %1046 = tpu.matmul %1044, %1045, %cst_329 {dimension_numbers = #tpu.dot_dimension_numbers<[1], [0], [0], [1], [0, 0, 1, 1], [], []>} : vector<8x32xbf16>, vector<32x256xbf16>, vector<8x256xf32> -> vector<8x256xf32>
    %c0_330 = arith.constant 0 : index
    %c0_331 = arith.constant 0 : index
    %1047 = vector.load %arg32[%c0_330, %c0_331] : memref<8x256xf32, #tpu.memory_space<vmem>>, vector<8x256xf32>
    tpu.vector_store %arg32[%c0_330, %c0_331], %1046 {strides = array<i32>} : memref<8x256xf32, #tpu.memory_space<vmem>>, vector<8x256xf32>,
    %cst_332 = arith.constant 0.000000e+00 : f32
    %1048 = vector.broadcast %cst_332 : f32 to vector<8x122xf32>
    %1049 = tpu.concatenate %519, %864, %1048 in 1 : vector<8x4xf32>, vector<8x2xf32>, vector<8x122xf32> -> vector<8x128xf32>
    %c0_333 = arith.constant 0 : index
    %c0_334 = arith.constant 0 : index
    %1050 = vector.load %arg33[%c0_333, %c0_334] : memref<8x128xf32, #tpu.memory_space<vmem>>, vector<8x128xf32>
    tpu.vector_store %arg33[%c0_333, %c0_334], %1049 {strides = array<i32>} : memref<8x128xf32, #tpu.memory_space<vmem>>, vector<8x128xf32>,
    return
  }
  func.func @transform_0(%arg0: i32) -> (i32, i32) {
    %c0_i32 = arith.constant 0 : i32
    %c0_i32_0 = arith.constant 0 : i32
    return %arg0, %c0_i32 : i32, i32
  }
  func.func @transform_1(%arg0: i32) -> (i32, i32) {
    %c0_i32 = arith.constant 0 : i32
    %c0_i32_0 = arith.constant 0 : i32
    %c0_i32_1 = arith.constant 0 : i32
    return %c0_i32, %c0_i32_0 : i32, i32
  }
  func.func @transform_2(%arg0: i32) -> (i32, i32) {
    %c0_i32 = arith.constant 0 : i32
    %c0_i32_0 = arith.constant 0 : i32
    %c0_i32_1 = arith.constant 0 : i32
    return %c0_i32, %c0_i32_0 : i32, i32
  }
  func.func @transform_3(%arg0: i32) -> (i32, i32) {
    %c0_i32 = arith.constant 0 : i32
    %c0_i32_0 = arith.constant 0 : i32
    %c0_i32_1 = arith.constant 0 : i32
    return %c0_i32, %c0_i32_0 : i32, i32
  }
  func.func @transform_4(%arg0: i32) -> (i32, i32, i32) {
    %c0_i32 = arith.constant 0 : i32
    %c0_i32_0 = arith.constant 0 : i32
    %c0_i32_1 = arith.constant 0 : i32
    %c0_i32_2 = arith.constant 0 : i32
    return %c0_i32, %c0_i32_0, %c0_i32_1 : i32, i32, i32
  }
  func.func @transform_5(%arg0: i32) -> (i32, i32, i32) {
    %c0_i32 = arith.constant 0 : i32
    %c0_i32_0 = arith.constant 0 : i32
    %c0_i32_1 = arith.constant 0 : i32
    %c0_i32_2 = arith.constant 0 : i32
    return %c0_i32, %c0_i32_0, %c0_i32_1 : i32, i32, i32
  }
  func.func @transform_6(%arg0: i32) -> (i32, i32) {
    %c0_i32 = arith.constant 0 : i32
    %c0_i32_0 = arith.constant 0 : i32
    %c0_i32_1 = arith.constant 0 : i32
    return %c0_i32, %c0_i32_0 : i32, i32
  }
  func.func @transform_7(%arg0: i32) -> (i32, i32) {
    %c0_i32 = arith.constant 0 : i32
    %c0_i32_0 = arith.constant 0 : i32
    %c0_i32_1 = arith.constant 0 : i32
    return %c0_i32, %c0_i32_0 : i32, i32
  }
  func.func @transform_8(%arg0: i32) -> (i32, i32) {
    %c0_i32 = arith.constant 0 : i32
    %c0_i32_0 = arith.constant 0 : i32
    %c0_i32_1 = arith.constant 0 : i32
    return %c0_i32, %c0_i32_0 : i32, i32
  }
  func.func @transform_9(%arg0: i32) -> (i32, i32) {
    %c0_i32 = arith.constant 0 : i32
    %c0_i32_0 = arith.constant 0 : i32
    %c0_i32_1 = arith.constant 0 : i32
    return %c0_i32, %c0_i32_0 : i32, i32
  }
  func.func @transform_10(%arg0: i32) -> (i32, i32) {
    %c0_i32 = arith.constant 0 : i32
    %c0_i32_0 = arith.constant 0 : i32
    %c0_i32_1 = arith.constant 0 : i32
    return %c0_i32, %c0_i32_0 : i32, i32
  }
  func.func @transform_11(%arg0: i32) -> (i32, i32) {
    %c0_i32 = arith.constant 0 : i32
    %c0_i32_0 = arith.constant 0 : i32
    %c0_i32_1 = arith.constant 0 : i32
    return %c0_i32, %c0_i32_0 : i32, i32
  }
  func.func @transform_12(%arg0: i32) -> (i32, i32) {
    %c0_i32 = arith.constant 0 : i32
    %c0_i32_0 = arith.constant 0 : i32
    %c0_i32_1 = arith.constant 0 : i32
    return %c0_i32, %c0_i32_0 : i32, i32
  }
  func.func @transform_13(%arg0: i32) -> (i32, i32) {
    %c0_i32 = arith.constant 0 : i32
    %c0_i32_0 = arith.constant 0 : i32
    %c0_i32_1 = arith.constant 0 : i32
    return %c0_i32, %c0_i32_0 : i32, i32
  }
  func.func @transform_14(%arg0: i32) -> (i32, i32) {
    %c0_i32 = arith.constant 0 : i32
    %c0_i32_0 = arith.constant 0 : i32
    %c0_i32_1 = arith.constant 0 : i32
    return %c0_i32, %c0_i32_0 : i32, i32
  }
  func.func @transform_15(%arg0: i32) -> (i32, i32) {
    %c0_i32 = arith.constant 0 : i32
    %c0_i32_0 = arith.constant 0 : i32
    %c0_i32_1 = arith.constant 0 : i32
    return %c0_i32, %c0_i32_0 : i32, i32
  }
  func.func @transform_16(%arg0: i32) -> (i32, i32) {
    %c0_i32 = arith.constant 0 : i32
    %c0_i32_0 = arith.constant 0 : i32
    %c0_i32_1 = arith.constant 0 : i32
    return %c0_i32, %c0_i32_0 : i32, i32
  }
  func.func @transform_17(%arg0: i32) -> (i32, i32) {
    %c0_i32 = arith.constant 0 : i32
    %c0_i32_0 = arith.constant 0 : i32
    %c0_i32_1 = arith.constant 0 : i32
    return %c0_i32, %c0_i32_0 : i32, i32
  }
  func.func @transform_18(%arg0: i32) -> (i32, i32) {
    %c0_i32 = arith.constant 0 : i32
    %c0_i32_0 = arith.constant 0 : i32
    %c0_i32_1 = arith.constant 0 : i32
    return %c0_i32, %c0_i32_0 : i32, i32
  }
  func.func @transform_19(%arg0: i32) -> (i32, i32) {
    %c0_i32 = arith.constant 0 : i32
    %c0_i32_0 = arith.constant 0 : i32
    %c0_i32_1 = arith.constant 0 : i32
    return %c0_i32, %c0_i32_0 : i32, i32
  }
  func.func @transform_20(%arg0: i32) -> (i32, i32) {
    %c0_i32 = arith.constant 0 : i32
    %c0_i32_0 = arith.constant 0 : i32
    %c0_i32_1 = arith.constant 0 : i32
    return %c0_i32, %c0_i32_0 : i32, i32
  }
  func.func @transform_21(%arg0: i32) -> (i32, i32) {
    %c0_i32 = arith.constant 0 : i32
    %c0_i32_0 = arith.constant 0 : i32
    %c0_i32_1 = arith.constant 0 : i32
    return %c0_i32, %c0_i32_0 : i32, i32
  }
  func.func @transform_22(%arg0: i32) -> (i32, i32) {
    %c0_i32 = arith.constant 0 : i32
    %c0_i32_0 = arith.constant 0 : i32
    %c0_i32_1 = arith.constant 0 : i32
    return %c0_i32, %c0_i32_0 : i32, i32
  }
  func.func @transform_23(%arg0: i32) -> (i32, i32) {
    %c0_i32 = arith.constant 0 : i32
    %c0_i32_0 = arith.constant 0 : i32
    %c0_i32_1 = arith.constant 0 : i32
    return %c0_i32, %c0_i32_0 : i32, i32
  }
  func.func @transform_24(%arg0: i32) -> (i32, i32) {
    %c0_i32 = arith.constant 0 : i32
    %c0_i32_0 = arith.constant 0 : i32
    %c0_i32_1 = arith.constant 0 : i32
    return %c0_i32, %c0_i32_0 : i32, i32
  }
  func.func @transform_25(%arg0: i32) -> (i32, i32) {
    %c0_i32 = arith.constant 0 : i32
    %c0_i32_0 = arith.constant 0 : i32
    %c0_i32_1 = arith.constant 0 : i32
    return %c0_i32, %c0_i32_0 : i32, i32
  }
  func.func @transform_26(%arg0: i32) -> (i32, i32) {
    %c0_i32 = arith.constant 0 : i32
    %c0_i32_0 = arith.constant 0 : i32
    %c0_i32_1 = arith.constant 0 : i32
    return %c0_i32, %c0_i32_0 : i32, i32
  }
  func.func @transform_27(%arg0: i32) -> (i32, i32) {
    %c0_i32 = arith.constant 0 : i32
    %c0_i32_0 = arith.constant 0 : i32
    %c0_i32_1 = arith.constant 0 : i32
    return %c0_i32, %c0_i32_0 : i32, i32
  }
  func.func @transform_28(%arg0: i32) -> (i32, i32) {
    %c0_i32 = arith.constant 0 : i32
    %c0_i32_0 = arith.constant 0 : i32
    %c0_i32_1 = arith.constant 0 : i32
    return %c0_i32, %c0_i32_0 : i32, i32
  }
  func.func @transform_29(%arg0: i32) -> (i32, i32) {
    %c0_i32 = arith.constant 0 : i32
    %c0_i32_0 = arith.constant 0 : i32
    %c0_i32_1 = arith.constant 0 : i32
    return %c0_i32, %c0_i32_0 : i32, i32
  }
  func.func @transform_30(%arg0: i32) -> (i32, i32) {
    %c0_i32 = arith.constant 0 : i32
    %c0_i32_0 = arith.constant 0 : i32
    %c0_i32_1 = arith.constant 0 : i32
    return %c0_i32, %c0_i32_0 : i32, i32
  }
  func.func @transform_31(%arg0: i32) -> (i32, i32) {
    %c0_i32 = arith.constant 0 : i32
    %c0_i32_0 = arith.constant 0 : i32
    return %arg0, %c0_i32 : i32, i32
  }
  func.func @transform_32(%arg0: i32) -> (i32, i32) {
    %c0_i32 = arith.constant 0 : i32
    %c0_i32_0 = arith.constant 0 : i32
    return %arg0, %c0_i32 : i32, i32
  }
}

</mosaic_0001>

<llo_original>
// kernel: tpu_custom_call.1
$region0: #{tpu_custom_call.1}
  #allocation0 [shape = 'u32[]', space=smem, size = 0x4, offset = 0x4, fixed_abs, tag = 'smem constant byte address 0x4 - core index']
  #allocation1 [shape = 'u32[72,128]{1,0:T(1,128)}', space=vmem, size = 0x9000, scoped, tag = 'internal scratch']
  %s0 = inlined_call_operand.smem [shape: u32[33], index: -1, kind: input, shape index: {}]
  %s1 = sld [smem:[%s0]]
  %s2 = scalar_lea.smem %s0, 1
  %s3 = sld [smem:[%s2]]
  %s4 = scalar_lea.smem %s0, 2
  %s5 = sld [smem:[%s4]]
  %s6 = scalar_lea.smem %s0, 3
  %s7 = sld [smem:[%s6]]
  %s8 = scalar_lea.smem %s0, 4
  %s9 = sld [smem:[%s8]]
  %s10 = scalar_lea.smem %s0, 5
  %s11 = sld [smem:[%s10]]
  %s12 = scalar_lea.smem %s0, 6
  %s13 = sld [smem:[%s12]]
  %s14 = scalar_lea.smem %s0, 7
  %s15 = sld [smem:[%s14]]
  %s16 = scalar_lea.smem %s0, 8
  %s17 = sld [smem:[%s16]]
  %s18 = scalar_lea.smem %s0, 9
  %s19 = sld [smem:[%s18]]
  %s20 = scalar_lea.smem %s0, 10
  %s21 = sld [smem:[%s20]]
  %s22 = scalar_lea.smem %s0, 11
  %s23 = sld [smem:[%s22]]
  %s24 = scalar_lea.smem %s0, 12
  %s25 = sld [smem:[%s24]]
  %s26 = scalar_lea.smem %s0, 13
  %s27 = sld [smem:[%s26]]
  %s28 = scalar_lea.smem %s0, 14
  %s29 = sld [smem:[%s28]]
  %s30 = scalar_lea.smem %s0, 15
  %s31 = sld [smem:[%s30]]
  %s32 = scalar_lea.smem %s0, 16
  %s33 = sld [smem:[%s32]]
  %s34 = scalar_lea.smem %s0, 17
  %s35 = sld [smem:[%s34]]
  %s36 = scalar_lea.smem %s0, 18
  %s37 = sld [smem:[%s36]]
  %s38 = scalar_lea.smem %s0, 19
  %s39 = sld [smem:[%s38]]
  %s40 = scalar_lea.smem %s0, 20
  %s41 = sld [smem:[%s40]]
  %s42 = scalar_lea.smem %s0, 21
  %s43 = sld [smem:[%s42]]
  %s44 = scalar_lea.smem %s0, 22
  %s45 = sld [smem:[%s44]]
  %s46 = scalar_lea.smem %s0, 23
  %s47 = sld [smem:[%s46]]
  %s48 = scalar_lea.smem %s0, 24
  %s49 = sld [smem:[%s48]]
  %s50 = scalar_lea.smem %s0, 25
  %s51 = sld [smem:[%s50]]
  %s52 = scalar_lea.smem %s0, 26
  %s53 = sld [smem:[%s52]]
  %s54 = scalar_lea.smem %s0, 27
  %s55 = sld [smem:[%s54]]
  %s56 = scalar_lea.smem %s0, 28
  %s57 = sld [smem:[%s56]]
  %s58 = scalar_lea.smem %s0, 29
  %s59 = sld [smem:[%s58]]
  %s60 = scalar_lea.smem %s0, 30
  %s61 = sld [smem:[%s60]]
  %s62 = scalar_lea.smem %s0, 31
  %s63 = sld [smem:[%s62]]
  %s64 = scalar_lea.smem %s0, 32
  %s65 = sld [smem:[%s64]]
  %66 = xla_tuple %s63, %s65
  %s67 = sld [smem:[#allocation0]]
  $region165: #{tpu_custom_call.1} parent=0
    _
  %s69 = ssub.s32 1, %s67
  %s70 = scalar_select 0, %s69, %s67
  $region1: #{tpu_custom_call.1} parent=0
    #allocation2 [shape = 'u8[16384]{0}', space=vmem, size = 0x4000, scoped, tag = 'output window, operand 0']
    #allocation3 [shape = 's32[2]{0}', space=sflag, size = 0x8, scoped, tag = 'scoped memory for tpu_custom_call.1']
    #allocation4 [shape = 'u8[8192]{0}', space=vmem, size = 0x2000, scoped, tag = 'output window, operand 1']
    #allocation5 [shape = 's32[2]{0}', space=sflag, size = 0x8, scoped, tag = 'scoped memory for tpu_custom_call.1']
    %71 = vsyncpa [#allocation3], 0
    %s72 = scalar_lea.sflag [#allocation3], 1
    %73 = vsyncpa %s72, 0
    %74 = vsyncpa [#allocation5], 0
    %s75 = scalar_lea.sflag [#allocation5], 1
    %76 = vsyncpa %s75, 0
    loop: start=0, step=1, limit=4
    $region2: #{tpu_custom_call.1} parent=1 // loop_pre_header
      _
    $region3: #{tpu_custom_call.1} parent=1 // loop_header
      %s78 = sphi 0, %s82
      %p79 = scmp.ge.s32.totalorder %s78, 4
      %s88 = sphi 0, %s90
      %s91 = sphi 0, %s88
      %s92 = sphi 0, %s91
      %s108 = sphi 0, %s92
      %s112 = sphi 0, %s112
      %s114 = sphi 0, %s112
      %s115 = sphi 0, %s114
      %s129 = sphi 0, %s115
      %s133 = sphi 0, %s133
      %s135 = sphi 0, %s133
      %s136 = sphi 0, %s135
      %s150 = sphi 0, %s136
      %s154 = sphi 0, %s154
      %s156 = sphi 0, %s154
      %s157 = sphi 0, %s156
      %s171 = sphi 0, %s157
      %s175 = sphi 0, %s175
      %s177 = sphi 0, %s175
      %s178 = sphi 0, %s177
      %s192 = sphi 0, %s178
      %s196 = sphi 0, %s196
      %s198 = sphi 0, %s196
      %s199 = sphi 0, %s198
      %s213 = sphi 0, %s199
      %s217 = sphi 0, %s217
      %s219 = sphi 0, %s217
      %s220 = sphi 0, %s219
      %s234 = sphi 0, %s220
      %s238 = sphi 0, %s238
      %s240 = sphi 0, %s238
      %s241 = sphi 0, %s240
      %s255 = sphi 0, %s241
      %s259 = sphi 0, %s259
      %s261 = sphi 0, %s259
      %s262 = sphi 0, %s261
      %s276 = sphi 0, %s262
      %s280 = sphi 0, %s280
      %s282 = sphi 0, %s280
      %s283 = sphi 0, %s282
      %s297 = sphi 0, %s283
      %s301 = sphi 0, %s301
      %s303 = sphi 0, %s301
      %s304 = sphi 0, %s303
      %s318 = sphi 0, %s304
      %s322 = sphi 0, %s322
      %s324 = sphi 0, %s322
      %s325 = sphi 0, %s324
      %s339 = sphi 0, %s325
      %s343 = sphi 0, %s343
      %s345 = sphi 0, %s343
      %s346 = sphi 0, %s345
      %s360 = sphi 0, %s346
      %s364 = sphi 0, %s364
      %s366 = sphi 0, %s364
      %s367 = sphi 0, %s366
      %s381 = sphi 0, %s367
      %s385 = sphi 0, %s385
      %s387 = sphi 0, %s385
      %s388 = sphi 0, %s387
      %s402 = sphi 0, %s388
      %s406 = sphi 0, %s406
      %s408 = sphi 0, %s406
      %s409 = sphi 0, %s408
      %s423 = sphi 0, %s409
      %s427 = sphi 0, %s427
      %s429 = sphi 0, %s427
      %s430 = sphi 0, %s429
      %s444 = sphi 0, %s430
      %s448 = sphi 0, %s448
      %s450 = sphi 0, %s448
      %s451 = sphi 0, %s450
      %s465 = sphi 0, %s451
      %s469 = sphi 0, %s469
      %s471 = sphi 0, %s469
      %s472 = sphi 0, %s471
      %s486 = sphi 0, %s472
      %s490 = sphi 0, %s490
      %s492 = sphi 0, %s490
      %s493 = sphi 0, %s492
      %s507 = sphi 0, %s493
      %s511 = sphi 0, %s511
      %s513 = sphi 0, %s511
      %s514 = sphi 0, %s513
      %s528 = sphi 0, %s514
      %s532 = sphi 0, %s532
      %s534 = sphi 0, %s532
      %s535 = sphi 0, %s534
      %s549 = sphi 0, %s535
      %s553 = sphi 0, %s553
      %s555 = sphi 0, %s553
      %s556 = sphi 0, %s555
      %s570 = sphi 0, %s556
      %s574 = sphi 0, %s574
      %s576 = sphi 0, %s574
      %s577 = sphi 0, %s576
      %s591 = sphi 0, %s577
      %s595 = sphi 0, %s595
      %s597 = sphi 0, %s595
      %s598 = sphi 0, %s597
      %s612 = sphi 0, %s598
      %s616 = sphi 0, %s616
      %s618 = sphi 0, %s616
      %s619 = sphi 0, %s618
      %s633 = sphi 0, %s619
      %s637 = sphi 0, %s637
      %s639 = sphi 0, %s637
      %s640 = sphi 0, %s639
      %s654 = sphi 0, %s640
      %s658 = sphi 0, %s658
      %s660 = sphi 0, %s658
      %s661 = sphi 0, %s660
      %s675 = sphi 0, %s661
      %s679 = sphi 0, %s679
      %s681 = sphi 0, %s679
      %s682 = sphi 0, %s681
      %s696 = sphi 0, %s682
      %s700 = sphi 0, %s700
      %s702 = sphi 0, %s700
      %s703 = sphi 0, %s702
      %s717 = sphi 0, %s703
      %s721 = sphi 0, %s721
      %s723 = sphi 0, %s721
      %s724 = sphi 0, %s723
      %s738 = sphi 0, %s724
      %s744 = sphi 0, %s746
      %s747 = sphi 0, %s744
      %s748 = sphi 0, %s747
      %s764 = sphi 0, %s748
      %s770 = sphi 0, %s772
      %s773 = sphi 0, %s770
      %s774 = sphi 0, %s773
      %s790 = sphi 0, %s774
    $region4: #{tpu_custom_call.1} parent=1 // loop_header_branch
      %81 = sbr.rel (%p79) target = $region8
    $region5: #{tpu_custom_call.1} parent=1 // loop_body
      %s83 = ssub.s32 %s78, 1
      %s84 = ssub.s32 %s78, 2
      %s85 = sadd.s32 %s78, 1
      %s86 = ssub.s32 %s78, %s85
      %p87 = scmp.eq.s32.totalorder %s86, 0
      %s89 = sadd.s32 %s88, 1
      %s90 = scalar_select %p87, %s88, %s89
      %p93 = pneg %p87
      %p94 = scmp.eq.s32.totalorder %s78, 1
      %p95 = por %p93, %p94
      %p96 = scmp.ne.s32.totalorder %s88, %s91
      %p97 = scmp.eq.s32.totalorder %s78, 0
      %p98 = por %p96, %p97
      %p99 = scmp.ne.s32.totalorder %s88, %s91
      %p100 = scmp.eq.s32.totalorder %s83, 1
      %p101 = por %p99, %p100
      %p102 = scmp.ne.s32.totalorder %s91, %s92
      %p103 = scmp.eq.s32.totalorder %s83, 0
      %p104 = por %p102, %p103
      %p105 = scmp.ne.s32.totalorder %s91, %s92
      %p106 = scmp.eq.s32.totalorder %s84, 1
      %p107 = por %p105, %p106
      %p109 = scmp.ne.s32.totalorder %s92, %s108
      %p110 = scmp.eq.s32.totalorder %s84, 0
      %p111 = por %p109, %p110
      %s113 = sadd.s32 %s112, 1
      %p116 = scmp.eq.s32.totalorder %s78, 1
      %p117 = scmp.ne.s32.totalorder %s112, %s114
      %p118 = scmp.eq.s32.totalorder %s78, 0
      %p119 = por %p117, %p118
      %p120 = scmp.ne.s32.totalorder %s112, %s114
      %p121 = scmp.eq.s32.totalorder %s83, 1
      %p122 = por %p120, %p121
      %p123 = scmp.ne.s32.totalorder %s114, %s115
      %p124 = scmp.eq.s32.totalorder %s83, 0
      %p125 = por %p123, %p124
      %p126 = scmp.ne.s32.totalorder %s114, %s115
      %p127 = scmp.eq.s32.totalorder %s84, 1
      %p128 = por %p126, %p127
      %p130 = scmp.ne.s32.totalorder %s115, %s129
      %p131 = scmp.eq.s32.totalorder %s84, 0
      %p132 = por %p130, %p131
      %s134 = sadd.s32 %s133, 1
      %p137 = scmp.eq.s32.totalorder %s78, 1
      %p138 = scmp.ne.s32.totalorder %s133, %s135
      %p139 = scmp.eq.s32.totalorder %s78, 0
      %p140 = por %p138, %p139
      %p141 = scmp.ne.s32.totalorder %s133, %s135
      %p142 = scmp.eq.s32.totalorder %s83, 1
      %p143 = por %p141, %p142
      %p144 = scmp.ne.s32.totalorder %s135, %s136
      %p145 = scmp.eq.s32.totalorder %s83, 0
      %p146 = por %p144, %p145
      %p147 = scmp.ne.s32.totalorder %s135, %s136
      %p148 = scmp.eq.s32.totalorder %s84, 1
      %p149 = por %p147, %p148
      %p151 = scmp.ne.s32.totalorder %s136, %s150
      %p152 = scmp.eq.s32.totalorder %s84, 0
      %p153 = por %p151, %p152
      %s155 = sadd.s32 %s154, 1
      %p158 = scmp.eq.s32.totalorder %s78, 1
      %p159 = scmp.ne.s32.totalorder %s154, %s156
      %p160 = scmp.eq.s32.totalorder %s78, 0
      %p161 = por %p159, %p160
      %p162 = scmp.ne.s32.totalorder %s154, %s156
      %p163 = scmp.eq.s32.totalorder %s83, 1
      %p164 = por %p162, %p163
      %p165 = scmp.ne.s32.totalorder %s156, %s157
      %p166 = scmp.eq.s32.totalorder %s83, 0
      %p167 = por %p165, %p166
      %p168 = scmp.ne.s32.totalorder %s156, %s157
      %p169 = scmp.eq.s32.totalorder %s84, 1
      %p170 = por %p168, %p169
      %p172 = scmp.ne.s32.totalorder %s157, %s171
      %p173 = scmp.eq.s32.totalorder %s84, 0
      %p174 = por %p172, %p173
      %s176 = sadd.s32 %s175, 1
      %p179 = scmp.eq.s32.totalorder %s78, 1
      %p180 = scmp.ne.s32.totalorder %s175, %s177
      %p181 = scmp.eq.s32.totalorder %s78, 0
      %p182 = por %p180, %p181
      %p183 = scmp.ne.s32.totalorder %s175, %s177
      %p184 = scmp.eq.s32.totalorder %s83, 1
      %p185 = por %p183, %p184
      %p186 = scmp.ne.s32.totalorder %s177, %s178
      %p187 = scmp.eq.s32.totalorder %s83, 0
      %p188 = por %p186, %p187
      %p189 = scmp.ne.s32.totalorder %s177, %s178
      %p190 = scmp.eq.s32.totalorder %s84, 1
      %p191 = por %p189, %p190
      %p193 = scmp.ne.s32.totalorder %s178, %s192
      %p194 = scmp.eq.s32.totalorder %s84, 0
      %p195 = por %p193, %p194
      %s197 = sadd.s32 %s196, 1
      %p200 = scmp.eq.s32.totalorder %s78, 1
      %p201 = scmp.ne.s32.totalorder %s196, %s198
      %p202 = scmp.eq.s32.totalorder %s78, 0
      %p203 = por %p201, %p202
      %p204 = scmp.ne.s32.totalorder %s196, %s198
      %p205 = scmp.eq.s32.totalorder %s83, 1
      %p206 = por %p204, %p205
      %p207 = scmp.ne.s32.totalorder %s198, %s199
      %p208 = scmp.eq.s32.totalorder %s83, 0
      %p209 = por %p207, %p208
      %p210 = scmp.ne.s32.totalorder %s198, %s199
      %p211 = scmp.eq.s32.totalorder %s84, 1
      %p212 = por %p210, %p211
      %p214 = scmp.ne.s32.totalorder %s199, %s213
      %p215 = scmp.eq.s32.totalorder %s84, 0
      %p216 = por %p214, %p215
      %s218 = sadd.s32 %s217, 1
      %p221 = scmp.eq.s32.totalorder %s78, 1
      %p222 = scmp.ne.s32.totalorder %s217, %s219
      %p223 = scmp.eq.s32.totalorder %s78, 0
      %p224 = por %p222, %p223
      %p225 = scmp.ne.s32.totalorder %s217, %s219
      %p226 = scmp.eq.s32.totalorder %s83, 1
      %p227 = por %p225, %p226
      %p228 = scmp.ne.s32.totalorder %s219, %s220
      %p229 = scmp.eq.s32.totalorder %s83, 0
      %p230 = por %p228, %p229
      %p231 = scmp.ne.s32.totalorder %s219, %s220
      %p232 = scmp.eq.s32.totalorder %s84, 1
      %p233 = por %p231, %p232
      %p235 = scmp.ne.s32.totalorder %s220, %s234
      %p236 = scmp.eq.s32.totalorder %s84, 0
      %p237 = por %p235, %p236
      %s239 = sadd.s32 %s238, 1
      %p242 = scmp.eq.s32.totalorder %s78, 1
      %p243 = scmp.ne.s32.totalorder %s238, %s240
      %p244 = scmp.eq.s32.totalorder %s78, 0
      %p245 = por %p243, %p244
      %p246 = scmp.ne.s32.totalorder %s238, %s240
      %p247 = scmp.eq.s32.totalorder %s83, 1
      %p248 = por %p246, %p247
      %p249 = scmp.ne.s32.totalorder %s240, %s241
      %p250 = scmp.eq.s32.totalorder %s83, 0
      %p251 = por %p249, %p250
      %p252 = scmp.ne.s32.totalorder %s240, %s241
      %p253 = scmp.eq.s32.totalorder %s84, 1
      %p254 = por %p252, %p253
      %p256 = scmp.ne.s32.totalorder %s241, %s255
      %p257 = scmp.eq.s32.totalorder %s84, 0
      %p258 = por %p256, %p257
      %s260 = sadd.s32 %s259, 1
      %p263 = scmp.eq.s32.totalorder %s78, 1
      %p264 = scmp.ne.s32.totalorder %s259, %s261
      %p265 = scmp.eq.s32.totalorder %s78, 0
      %p266 = por %p264, %p265
      %p267 = scmp.ne.s32.totalorder %s259, %s261
      %p268 = scmp.eq.s32.totalorder %s83, 1
      %p269 = por %p267, %p268
      %p270 = scmp.ne.s32.totalorder %s261, %s262
      %p271 = scmp.eq.s32.totalorder %s83, 0
      %p272 = por %p270, %p271
      %p273 = scmp.ne.s32.totalorder %s261, %s262
      %p274 = scmp.eq.s32.totalorder %s84, 1
      %p275 = por %p273, %p274
      %p277 = scmp.ne.s32.totalorder %s262, %s276
      %p278 = scmp.eq.s32.totalorder %s84, 0
      %p279 = por %p277, %p278
      %s281 = sadd.s32 %s280, 1
      %p284 = scmp.eq.s32.totalorder %s78, 1
      %p285 = scmp.ne.s32.totalorder %s280, %s282
      %p286 = scmp.eq.s32.totalorder %s78, 0
      %p287 = por %p285, %p286
      %p288 = scmp.ne.s32.totalorder %s280, %s282
      %p289 = scmp.eq.s32.totalorder %s83, 1
      %p290 = por %p288, %p289
      %p291 = scmp.ne.s32.totalorder %s282, %s283
      %p292 = scmp.eq.s32.totalorder %s83, 0
      %p293 = por %p291, %p292
      %p294 = scmp.ne.s32.totalorder %s282, %s283
      %p295 = scmp.eq.s32.totalorder %s84, 1
      %p296 = por %p294, %p295
      %p298 = scmp.ne.s32.totalorder %s283, %s297
      %p299 = scmp.eq.s32.totalorder %s84, 0
      %p300 = por %p298, %p299
      %s302 = sadd.s32 %s301, 1
      %p305 = scmp.eq.s32.totalorder %s78, 1
      %p306 = scmp.ne.s32.totalorder %s301, %s303
      %p307 = scmp.eq.s32.totalorder %s78, 0
      %p308 = por %p306, %p307
      %p309 = scmp.ne.s32.totalorder %s301, %s303
      %p310 = scmp.eq.s32.totalorder %s83, 1
      %p311 = por %p309, %p310
      %p312 = scmp.ne.s32.totalorder %s303, %s304
      %p313 = scmp.eq.s32.totalorder %s83, 0
      %p314 = por %p312, %p313
      %p315 = scmp.ne.s32.totalorder %s303, %s304
      %p316 = scmp.eq.s32.totalorder %s84, 1
      %p317 = por %p315, %p316
      %p319 = scmp.ne.s32.totalorder %s304, %s318
      %p320 = scmp.eq.s32.totalorder %s84, 0
      %p321 = por %p319, %p320
      %s323 = sadd.s32 %s322, 1
      %p326 = scmp.eq.s32.totalorder %s78, 1
      %p327 = scmp.ne.s32.totalorder %s322, %s324
      %p328 = scmp.eq.s32.totalorder %s78, 0
      %p329 = por %p327, %p328
      %p330 = scmp.ne.s32.totalorder %s322, %s324
      %p331 = scmp.eq.s32.totalorder %s83, 1
      %p332 = por %p330, %p331
      %p333 = scmp.ne.s32.totalorder %s324, %s325
      %p334 = scmp.eq.s32.totalorder %s83, 0
      %p335 = por %p333, %p334
      %p336 = scmp.ne.s32.totalorder %s324, %s325
      %p337 = scmp.eq.s32.totalorder %s84, 1
      %p338 = por %p336, %p337
      %p340 = scmp.ne.s32.totalorder %s325, %s339
      %p341 = scmp.eq.s32.totalorder %s84, 0
      %p342 = por %p340, %p341
      %s344 = sadd.s32 %s343, 1
      %p347 = scmp.eq.s32.totalorder %s78, 1
      %p348 = scmp.ne.s32.totalorder %s343, %s345
      %p349 = scmp.eq.s32.totalorder %s78, 0
      %p350 = por %p348, %p349
      %p351 = scmp.ne.s32.totalorder %s343, %s345
      %p352 = scmp.eq.s32.totalorder %s83, 1
      %p353 = por %p351, %p352
      %p354 = scmp.ne.s32.totalorder %s345, %s346
      %p355 = scmp.eq.s32.totalorder %s83, 0
      %p356 = por %p354, %p355
      %p357 = scmp.ne.s32.totalorder %s345, %s346
      %p358 = scmp.eq.s32.totalorder %s84, 1
      %p359 = por %p357, %p358
      %p361 = scmp.ne.s32.totalorder %s346, %s360
      %p362 = scmp.eq.s32.totalorder %s84, 0
      %p363 = por %p361, %p362
      %s365 = sadd.s32 %s364, 1
      %p368 = scmp.eq.s32.totalorder %s78, 1
      %p369 = scmp.ne.s32.totalorder %s364, %s366
      %p370 = scmp.eq.s32.totalorder %s78, 0
      %p371 = por %p369, %p370
      %p372 = scmp.ne.s32.totalorder %s364, %s366
      %p373 = scmp.eq.s32.totalorder %s83, 1
      %p374 = por %p372, %p373
      %p375 = scmp.ne.s32.totalorder %s366, %s367
      %p376 = scmp.eq.s32.totalorder %s83, 0
      %p377 = por %p375, %p376
      %p378 = scmp.ne.s32.totalorder %s366, %s367
      %p379 = scmp.eq.s32.totalorder %s84, 1
      %p380 = por %p378, %p379
      %p382 = scmp.ne.s32.totalorder %s367, %s381
      %p383 = scmp.eq.s32.totalorder %s84, 0
      %p384 = por %p382, %p383
      %s386 = sadd.s32 %s385, 1
      %p389 = scmp.eq.s32.totalorder %s78, 1
      %p390 = scmp.ne.s32.totalorder %s385, %s387
      %p391 = scmp.eq.s32.totalorder %s78, 0
      %p392 = por %p390, %p391
      %p393 = scmp.ne.s32.totalorder %s385, %s387
      %p394 = scmp.eq.s32.totalorder %s83, 1
      %p395 = por %p393, %p394
      %p396 = scmp.ne.s32.totalorder %s387, %s388
      %p397 = scmp.eq.s32.totalorder %s83, 0
      %p398 = por %p396, %p397
      %p399 = scmp.ne.s32.totalorder %s387, %s388
      %p400 = scmp.eq.s32.totalorder %s84, 1
      %p401 = por %p399, %p400
      %p403 = scmp.ne.s32.totalorder %s388, %s402
      %p404 = scmp.eq.s32.totalorder %s84, 0
      %p405 = por %p403, %p404
      %s407 = sadd.s32 %s406, 1
      %p410 = scmp.eq.s32.totalorder %s78, 1
      %p411 = scmp.ne.s32.totalorder %s406, %s408
      %p412 = scmp.eq.s32.totalorder %s78, 0
      %p413 = por %p411, %p412
      %p414 = scmp.ne.s32.totalorder %s406, %s408
      %p415 = scmp.eq.s32.totalorder %s83, 1
      %p416 = por %p414, %p415
      %p417 = scmp.ne.s32.totalorder %s408, %s409
      %p418 = scmp.eq.s32.totalorder %s83, 0
      %p419 = por %p417, %p418
      %p420 = scmp.ne.s32.totalorder %s408, %s409
      %p421 = scmp.eq.s32.totalorder %s84, 1
      %p422 = por %p420, %p421
      %p424 = scmp.ne.s32.totalorder %s409, %s423
      %p425 = scmp.eq.s32.totalorder %s84, 0
      %p426 = por %p424, %p425
      %s428 = sadd.s32 %s427, 1
      %p431 = scmp.eq.s32.totalorder %s78, 1
      %p432 = scmp.ne.s32.totalorder %s427, %s429
      %p433 = scmp.eq.s32.totalorder %s78, 0
      %p434 = por %p432, %p433
      %p435 = scmp.ne.s32.totalorder %s427, %s429
      %p436 = scmp.eq.s32.totalorder %s83, 1
      %p437 = por %p435, %p436
      %p438 = scmp.ne.s32.totalorder %s429, %s430
      %p439 = scmp.eq.s32.totalorder %s83, 0
      %p440 = por %p438, %p439
      %p441 = scmp.ne.s32.totalorder %s429, %s430
      %p442 = scmp.eq.s32.totalorder %s84, 1
      %p443 = por %p441, %p442
      %p445 = scmp.ne.s32.totalorder %s430, %s444
      %p446 = scmp.eq.s32.totalorder %s84, 0
      %p447 = por %p445, %p446
      %s449 = sadd.s32 %s448, 1
      %p452 = scmp.eq.s32.totalorder %s78, 1
      %p453 = scmp.ne.s32.totalorder %s448, %s450
      %p454 = scmp.eq.s32.totalorder %s78, 0
      %p455 = por %p453, %p454
      %p456 = scmp.ne.s32.totalorder %s448, %s450
      %p457 = scmp.eq.s32.totalorder %s83, 1
      %p458 = por %p456, %p457
      %p459 = scmp.ne.s32.totalorder %s450, %s451
      %p460 = scmp.eq.s32.totalorder %s83, 0
      %p461 = por %p459, %p460
      %p462 = scmp.ne.s32.totalorder %s450, %s451
      %p463 = scmp.eq.s32.totalorder %s84, 1
      %p464 = por %p462, %p463
      %p466 = scmp.ne.s32.totalorder %s451, %s465
      %p467 = scmp.eq.s32.totalorder %s84, 0
      %p468 = por %p466, %p467
      %s470 = sadd.s32 %s469, 1
      %p473 = scmp.eq.s32.totalorder %s78, 1
      %p474 = scmp.ne.s32.totalorder %s469, %s471
      %p475 = scmp.eq.s32.totalorder %s78, 0
      %p476 = por %p474, %p475
      %p477 = scmp.ne.s32.totalorder %s469, %s471
      %p478 = scmp.eq.s32.totalorder %s83, 1
      %p479 = por %p477, %p478
      %p480 = scmp.ne.s32.totalorder %s471, %s472
      %p481 = scmp.eq.s32.totalorder %s83, 0
      %p482 = por %p480, %p481
      %p483 = scmp.ne.s32.totalorder %s471, %s472
      %p484 = scmp.eq.s32.totalorder %s84, 1
      %p485 = por %p483, %p484
      %p487 = scmp.ne.s32.totalorder %s472, %s486
      %p488 = scmp.eq.s32.totalorder %s84, 0
      %p489 = por %p487, %p488
      %s491 = sadd.s32 %s490, 1
      %p494 = scmp.eq.s32.totalorder %s78, 1
      %p495 = scmp.ne.s32.totalorder %s490, %s492
      %p496 = scmp.eq.s32.totalorder %s78, 0
      %p497 = por %p495, %p496
      %p498 = scmp.ne.s32.totalorder %s490, %s492
      %p499 = scmp.eq.s32.totalorder %s83, 1
      %p500 = por %p498, %p499
      %p501 = scmp.ne.s32.totalorder %s492, %s493
      %p502 = scmp.eq.s32.totalorder %s83, 0
      %p503 = por %p501, %p502
      %p504 = scmp.ne.s32.totalorder %s492, %s493
      %p505 = scmp.eq.s32.totalorder %s84, 1
      %p506 = por %p504, %p505
      %p508 = scmp.ne.s32.totalorder %s493, %s507
      %p509 = scmp.eq.s32.totalorder %s84, 0
      %p510 = por %p508, %p509
      %s512 = sadd.s32 %s511, 1
      %p515 = scmp.eq.s32.totalorder %s78, 1
      %p516 = scmp.ne.s32.totalorder %s511, %s513
      %p517 = scmp.eq.s32.totalorder %s78, 0
      %p518 = por %p516, %p517
      %p519 = scmp.ne.s32.totalorder %s511, %s513
      %p520 = scmp.eq.s32.totalorder %s83, 1
      %p521 = por %p519, %p520
      %p522 = scmp.ne.s32.totalorder %s513, %s514
      %p523 = scmp.eq.s32.totalorder %s83, 0
      %p524 = por %p522, %p523
      %p525 = scmp.ne.s32.totalorder %s513, %s514
      %p526 = scmp.eq.s32.totalorder %s84, 1
      %p527 = por %p525, %p526
      %p529 = scmp.ne.s32.totalorder %s514, %s528
      %p530 = scmp.eq.s32.totalorder %s84, 0
      %p531 = por %p529, %p530
      %s533 = sadd.s32 %s532, 1
      %p536 = scmp.eq.s32.totalorder %s78, 1
      %p537 = scmp.ne.s32.totalorder %s532, %s534
      %p538 = scmp.eq.s32.totalorder %s78, 0
      %p539 = por %p537, %p538
      %p540 = scmp.ne.s32.totalorder %s532, %s534
      %p541 = scmp.eq.s32.totalorder %s83, 1
      %p542 = por %p540, %p541
      %p543 = scmp.ne.s32.totalorder %s534, %s535
      %p544 = scmp.eq.s32.totalorder %s83, 0
      %p545 = por %p543, %p544
      %p546 = scmp.ne.s32.totalorder %s534, %s535
      %p547 = scmp.eq.s32.totalorder %s84, 1
      %p548 = por %p546, %p547
      %p550 = scmp.ne.s32.totalorder %s535, %s549
      %p551 = scmp.eq.s32.totalorder %s84, 0
      %p552 = por %p550, %p551
      %s554 = sadd.s32 %s553, 1
      %p557 = scmp.eq.s32.totalorder %s78, 1
      %p558 = scmp.ne.s32.totalorder %s553, %s555
      %p559 = scmp.eq.s32.totalorder %s78, 0
      %p560 = por %p558, %p559
      %p561 = scmp.ne.s32.totalorder %s553, %s555
      %p562 = scmp.eq.s32.totalorder %s83, 1
      %p563 = por %p561, %p562
      %p564 = scmp.ne.s32.totalorder %s555, %s556
      %p565 = scmp.eq.s32.totalorder %s83, 0
      %p566 = por %p564, %p565
      %p567 = scmp.ne.s32.totalorder %s555, %s556
      %p568 = scmp.eq.s32.totalorder %s84, 1
      %p569 = por %p567, %p568
      %p571 = scmp.ne.s32.totalorder %s556, %s570
      %p572 = scmp.eq.s32.totalorder %s84, 0
      %p573 = por %p571, %p572
      %s575 = sadd.s32 %s574, 1
      %p578 = scmp.eq.s32.totalorder %s78, 1
      %p579 = scmp.ne.s32.totalorder %s574, %s576
      %p580 = scmp.eq.s32.totalorder %s78, 0
      %p581 = por %p579, %p580
      %p582 = scmp.ne.s32.totalorder %s574, %s576
      %p583 = scmp.eq.s32.totalorder %s83, 1
      %p584 = por %p582, %p583
      %p585 = scmp.ne.s32.totalorder %s576, %s577
      %p586 = scmp.eq.s32.totalorder %s83, 0
      %p587 = por %p585, %p586
      %p588 = scmp.ne.s32.totalorder %s576, %s577
      %p589 = scmp.eq.s32.totalorder %s84, 1
      %p590 = por %p588, %p589
      %p592 = scmp.ne.s32.totalorder %s577, %s591
      %p593 = scmp.eq.s32.totalorder %s84, 0
      %p594 = por %p592, %p593
      %s596 = sadd.s32 %s595, 1
      %p599 = scmp.eq.s32.totalorder %s78, 1
      %p600 = scmp.ne.s32.totalorder %s595, %s597
      %p601 = scmp.eq.s32.totalorder %s78, 0
      %p602 = por %p600, %p601
      %p603 = scmp.ne.s32.totalorder %s595, %s597
      %p604 = scmp.eq.s32.totalorder %s83, 1
      %p605 = por %p603, %p604
      %p606 = scmp.ne.s32.totalorder %s597, %s598
      %p607 = scmp.eq.s32.totalorder %s83, 0
      %p608 = por %p606, %p607
      %p609 = scmp.ne.s32.totalorder %s597, %s598
      %p610 = scmp.eq.s32.totalorder %s84, 1
      %p611 = por %p609, %p610
      %p613 = scmp.ne.s32.totalorder %s598, %s612
      %p614 = scmp.eq.s32.totalorder %s84, 0
      %p615 = por %p613, %p614
      %s617 = sadd.s32 %s616, 1
      %p620 = scmp.eq.s32.totalorder %s78, 1
      %p621 = scmp.ne.s32.totalorder %s616, %s618
      %p622 = scmp.eq.s32.totalorder %s78, 0
      %p623 = por %p621, %p622
      %p624 = scmp.ne.s32.totalorder %s616, %s618
      %p625 = scmp.eq.s32.totalorder %s83, 1
      %p626 = por %p624, %p625
      %p627 = scmp.ne.s32.totalorder %s618, %s619
      %p628 = scmp.eq.s32.totalorder %s83, 0
      %p629 = por %p627, %p628
      %p630 = scmp.ne.s32.totalorder %s618, %s619
      %p631 = scmp.eq.s32.totalorder %s84, 1
      %p632 = por %p630, %p631
      %p634 = scmp.ne.s32.totalorder %s619, %s633
      %p635 = scmp.eq.s32.totalorder %s84, 0
      %p636 = por %p634, %p635
      %s638 = sadd.s32 %s637, 1
      %p641 = scmp.eq.s32.totalorder %s78, 1
      %p642 = scmp.ne.s32.totalorder %s637, %s639
      %p643 = scmp.eq.s32.totalorder %s78, 0
      %p644 = por %p642, %p643
      %p645 = scmp.ne.s32.totalorder %s637, %s639
      %p646 = scmp.eq.s32.totalorder %s83, 1
      %p647 = por %p645, %p646
      %p648 = scmp.ne.s32.totalorder %s639, %s640
      %p649 = scmp.eq.s32.totalorder %s83, 0
      %p650 = por %p648, %p649
      %p651 = scmp.ne.s32.totalorder %s639, %s640
      %p652 = scmp.eq.s32.totalorder %s84, 1
      %p653 = por %p651, %p652
      %p655 = scmp.ne.s32.totalorder %s640, %s654
      %p656 = scmp.eq.s32.totalorder %s84, 0
      %p657 = por %p655, %p656
      %s659 = sadd.s32 %s658, 1
      %p662 = scmp.eq.s32.totalorder %s78, 1
      %p663 = scmp.ne.s32.totalorder %s658, %s660
      %p664 = scmp.eq.s32.totalorder %s78, 0
      %p665 = por %p663, %p664
      %p666 = scmp.ne.s32.totalorder %s658, %s660
      %p667 = scmp.eq.s32.totalorder %s83, 1
      %p668 = por %p666, %p667
      %p669 = scmp.ne.s32.totalorder %s660, %s661
      %p670 = scmp.eq.s32.totalorder %s83, 0
      %p671 = por %p669, %p670
      %p672 = scmp.ne.s32.totalorder %s660, %s661
      %p673 = scmp.eq.s32.totalorder %s84, 1
      %p674 = por %p672, %p673
      %p676 = scmp.ne.s32.totalorder %s661, %s675
      %p677 = scmp.eq.s32.totalorder %s84, 0
      %p678 = por %p676, %p677
      %s680 = sadd.s32 %s679, 1
      %p683 = scmp.eq.s32.totalorder %s78, 1
      %p684 = scmp.ne.s32.totalorder %s679, %s681
      %p685 = scmp.eq.s32.totalorder %s78, 0
      %p686 = por %p684, %p685
      %p687 = scmp.ne.s32.totalorder %s679, %s681
      %p688 = scmp.eq.s32.totalorder %s83, 1
      %p689 = por %p687, %p688
      %p690 = scmp.ne.s32.totalorder %s681, %s682
      %p691 = scmp.eq.s32.totalorder %s83, 0
      %p692 = por %p690, %p691
      %p693 = scmp.ne.s32.totalorder %s681, %s682
      %p694 = scmp.eq.s32.totalorder %s84, 1
      %p695 = por %p693, %p694
      %p697 = scmp.ne.s32.totalorder %s682, %s696
      %p698 = scmp.eq.s32.totalorder %s84, 0
      %p699 = por %p697, %p698
      %s701 = sadd.s32 %s700, 1
      %p704 = scmp.eq.s32.totalorder %s78, 1
      %p705 = scmp.ne.s32.totalorder %s700, %s702
      %p706 = scmp.eq.s32.totalorder %s78, 0
      %p707 = por %p705, %p706
      %p708 = scmp.ne.s32.totalorder %s700, %s702
      %p709 = scmp.eq.s32.totalorder %s83, 1
      %p710 = por %p708, %p709
      %p711 = scmp.ne.s32.totalorder %s702, %s703
      %p712 = scmp.eq.s32.totalorder %s83, 0
      %p713 = por %p711, %p712
      %p714 = scmp.ne.s32.totalorder %s702, %s703
      %p715 = scmp.eq.s32.totalorder %s84, 1
      %p716 = por %p714, %p715
      %p718 = scmp.ne.s32.totalorder %s703, %s717
      %p719 = scmp.eq.s32.totalorder %s84, 0
      %p720 = por %p718, %p719
      %s722 = sadd.s32 %s721, 1
      %p725 = scmp.eq.s32.totalorder %s78, 1
      %p726 = scmp.ne.s32.totalorder %s721, %s723
      %p727 = scmp.eq.s32.totalorder %s78, 0
      %p728 = por %p726, %p727
      %p729 = scmp.ne.s32.totalorder %s721, %s723
      %p730 = scmp.eq.s32.totalorder %s83, 1
      %p731 = por %p729, %p730
      %p732 = scmp.ne.s32.totalorder %s723, %s724
      %p733 = scmp.eq.s32.totalorder %s83, 0
      %p734 = por %p732, %p733
      %p735 = scmp.ne.s32.totalorder %s723, %s724
      %p736 = scmp.eq.s32.totalorder %s84, 1
      %p737 = por %p735, %p736
      %p739 = scmp.ne.s32.totalorder %s724, %s738
      %p740 = scmp.eq.s32.totalorder %s84, 0
      %p741 = por %p739, %p740
      %s742 = ssub.s32 %s78, %s85
      %p743 = scmp.eq.s32.totalorder %s742, 0
      %s745 = sadd.s32 %s744, 1
      %s746 = scalar_select %p743, %s744, %s745
      %p749 = pneg %p743
      %p750 = scmp.eq.s32.totalorder %s78, 1
      %p751 = por %p749, %p750
      %p752 = scmp.ne.s32.totalorder %s744, %s747
      %p753 = scmp.eq.s32.totalorder %s78, 0
      %p754 = por %p752, %p753
      %p755 = scmp.ne.s32.totalorder %s744, %s747
      %p756 = scmp.eq.s32.totalorder %s83, 1
      %p757 = por %p755, %p756
      %p758 = scmp.ne.s32.totalorder %s747, %s748
      %p759 = scmp.eq.s32.totalorder %s83, 0
      %p760 = por %p758, %p759
      %p761 = scmp.ne.s32.totalorder %s747, %s748
      %p762 = scmp.eq.s32.totalorder %s84, 1
      %p763 = por %p761, %p762
      %p765 = scmp.ne.s32.totalorder %s748, %s764
      %p766 = scmp.eq.s32.totalorder %s84, 0
      %p767 = por %p765, %p766
      %s768 = ssub.s32 %s78, %s85
      %p769 = scmp.eq.s32.totalorder %s768, 0
      %s771 = sadd.s32 %s770, 1
      %s772 = scalar_select %p769, %s770, %s771
      %p775 = pneg %p769
      %p776 = scmp.eq.s32.totalorder %s78, 1
      %p777 = por %p775, %p776
      %p778 = scmp.ne.s32.totalorder %s770, %s773
      %p779 = scmp.eq.s32.totalorder %s78, 0
      %p780 = por %p778, %p779
      %p781 = scmp.ne.s32.totalorder %s770, %s773
      %p782 = scmp.eq.s32.totalorder %s83, 1
      %p783 = por %p781, %p782
      %p784 = scmp.ne.s32.totalorder %s773, %s774
      %p785 = scmp.eq.s32.totalorder %s83, 0
      %p786 = por %p784, %p785
      %p787 = scmp.ne.s32.totalorder %s773, %s774
      %p788 = scmp.eq.s32.totalorder %s84, 1
      %p789 = por %p787, %p788
      %p791 = scmp.ne.s32.totalorder %s774, %s790
      %p792 = scmp.eq.s32.totalorder %s84, 0
      %p793 = por %p791, %p792
      %p794 = scmp.le.s32.totalorder 1, %s78
      %p795 = scmp.lt.s32.totalorder %s78, 3
      %p796 = pnand %p794, %p795
      %p797 = pneg %p796
      // Predicated region
      $region9: #{tpu_custom_call.1} parent=5 // pred_check
        _
      $region10: #{tpu_custom_call.1} parent=5 // pred_check_branch
        %799 = sbr.rel (%p796) target = $region12
      $region11: #{tpu_custom_call.1} parent=5 // pred_region
        %s800 = ssub.s32 %s78, 1
        // Predicated region
        $region13: #{tpu_custom_call.1} parent=11 // pred_check
          %p801 = pneg %p125
        $region14: #{tpu_custom_call.1} parent=11 // pred_check_branch
          %803 = sbr.rel (%p801) target = $region16
        $region15: #{tpu_custom_call.1} parent=11 // pred_region
          _
        $region16: #{tpu_custom_call.1} parent=11 // pred_fallthru
          _
        // Predicated region
        $region17: #{tpu_custom_call.1} parent=11 // pred_check
          %p804 = pneg %p146
        $region18: #{tpu_custom_call.1} parent=11 // pred_check_branch
          %806 = sbr.rel (%p804) target = $region20
        $region19: #{tpu_custom_call.1} parent=11 // pred_region
          _
        $region20: #{tpu_custom_call.1} parent=11 // pred_fallthru
          _
        // Predicated region
        $region21: #{tpu_custom_call.1} parent=11 // pred_check
          %p807 = pneg %p167
        $region22: #{tpu_custom_call.1} parent=11 // pred_check_branch
          %809 = sbr.rel (%p807) target = $region24
        $region23: #{tpu_custom_call.1} parent=11 // pred_region
          _
        $region24: #{tpu_custom_call.1} parent=11 // pred_fallthru
          _
        // Predicated region
        $region25: #{tpu_custom_call.1} parent=11 // pred_check
          %p810 = pneg %p188
        $region26: #{tpu_custom_call.1} parent=11 // pred_check_branch
          %812 = sbr.rel (%p810) target = $region28
        $region27: #{tpu_custom_call.1} parent=11 // pred_region
          _
        $region28: #{tpu_custom_call.1} parent=11 // pred_fallthru
          _
        // Predicated region
        $region29: #{tpu_custom_call.1} parent=11 // pred_check
          %p813 = pneg %p209
        $region30: #{tpu_custom_call.1} parent=11 // pred_check_branch
          %815 = sbr.rel (%p813) target = $region32
        $region31: #{tpu_custom_call.1} parent=11 // pred_region
          _
        $region32: #{tpu_custom_call.1} parent=11 // pred_fallthru
          _
        // Predicated region
        $region33: #{tpu_custom_call.1} parent=11 // pred_check
          %p816 = pneg %p230
        $region34: #{tpu_custom_call.1} parent=11 // pred_check_branch
          %818 = sbr.rel (%p816) target = $region36
        $region35: #{tpu_custom_call.1} parent=11 // pred_region
          _
        $region36: #{tpu_custom_call.1} parent=11 // pred_fallthru
          _
        // Predicated region
        $region37: #{tpu_custom_call.1} parent=11 // pred_check
          %p819 = pneg %p251
        $region38: #{tpu_custom_call.1} parent=11 // pred_check_branch
          %821 = sbr.rel (%p819) target = $region40
        $region39: #{tpu_custom_call.1} parent=11 // pred_region
          _
        $region40: #{tpu_custom_call.1} parent=11 // pred_fallthru
          _
        // Predicated region
        $region41: #{tpu_custom_call.1} parent=11 // pred_check
          %p822 = pneg %p272
        $region42: #{tpu_custom_call.1} parent=11 // pred_check_branch
          %824 = sbr.rel (%p822) target = $region44
        $region43: #{tpu_custom_call.1} parent=11 // pred_region
          _
        $region44: #{tpu_custom_call.1} parent=11 // pred_fallthru
          _
        // Predicated region
        $region45: #{tpu_custom_call.1} parent=11 // pred_check
          %p825 = pneg %p293
        $region46: #{tpu_custom_call.1} parent=11 // pred_check_branch
          %827 = sbr.rel (%p825) target = $region48
        $region47: #{tpu_custom_call.1} parent=11 // pred_region
          _
        $region48: #{tpu_custom_call.1} parent=11 // pred_fallthru
          _
        // Predicated region
        $region49: #{tpu_custom_call.1} parent=11 // pred_check
          %p828 = pneg %p314
        $region50: #{tpu_custom_call.1} parent=11 // pred_check_branch
          %830 = sbr.rel (%p828) target = $region52
        $region51: #{tpu_custom_call.1} parent=11 // pred_region
          _
        $region52: #{tpu_custom_call.1} parent=11 // pred_fallthru
          _
        // Predicated region
        $region53: #{tpu_custom_call.1} parent=11 // pred_check
          %p831 = pneg %p335
        $region54: #{tpu_custom_call.1} parent=11 // pred_check_branch
          %833 = sbr.rel (%p831) target = $region56
        $region55: #{tpu_custom_call.1} parent=11 // pred_region
          _
        $region56: #{tpu_custom_call.1} parent=11 // pred_fallthru
          _
        // Predicated region
        $region57: #{tpu_custom_call.1} parent=11 // pred_check
          %p834 = pneg %p356
        $region58: #{tpu_custom_call.1} parent=11 // pred_check_branch
          %836 = sbr.rel (%p834) target = $region60
        $region59: #{tpu_custom_call.1} parent=11 // pred_region
          _
        $region60: #{tpu_custom_call.1} parent=11 // pred_fallthru
          _
        // Predicated region
        $region61: #{tpu_custom_call.1} parent=11 // pred_check
          %p837 = pneg %p377
        $region62: #{tpu_custom_call.1} parent=11 // pred_check_branch
          %839 = sbr.rel (%p837) target = $region64
        $region63: #{tpu_custom_call.1} parent=11 // pred_region
          _
        $region64: #{tpu_custom_call.1} parent=11 // pred_fallthru
          _
        // Predicated region
        $region65: #{tpu_custom_call.1} parent=11 // pred_check
          %p840 = pneg %p398
        $region66: #{tpu_custom_call.1} parent=11 // pred_check_branch
          %842 = sbr.rel (%p840) target = $region68
        $region67: #{tpu_custom_call.1} parent=11 // pred_region
          _
        $region68: #{tpu_custom_call.1} parent=11 // pred_fallthru
          _
        // Predicated region
        $region69: #{tpu_custom_call.1} parent=11 // pred_check
          %p843 = pneg %p419
        $region70: #{tpu_custom_call.1} parent=11 // pred_check_branch
          %845 = sbr.rel (%p843) target = $region72
        $region71: #{tpu_custom_call.1} parent=11 // pred_region
          _
        $region72: #{tpu_custom_call.1} parent=11 // pred_fallthru
          _
        // Predicated region
        $region73: #{tpu_custom_call.1} parent=11 // pred_check
          %p846 = pneg %p440
        $region74: #{tpu_custom_call.1} parent=11 // pred_check_branch
          %848 = sbr.rel (%p846) target = $region76
        $region75: #{tpu_custom_call.1} parent=11 // pred_region
          _
        $region76: #{tpu_custom_call.1} parent=11 // pred_fallthru
          _
        // Predicated region
        $region77: #{tpu_custom_call.1} parent=11 // pred_check
          %p849 = pneg %p461
        $region78: #{tpu_custom_call.1} parent=11 // pred_check_branch
          %851 = sbr.rel (%p849) target = $region80
        $region79: #{tpu_custom_call.1} parent=11 // pred_region
          _
        $region80: #{tpu_custom_call.1} parent=11 // pred_fallthru
          _
        // Predicated region
        $region81: #{tpu_custom_call.1} parent=11 // pred_check
          %p852 = pneg %p482
        $region82: #{tpu_custom_call.1} parent=11 // pred_check_branch
          %854 = sbr.rel (%p852) target = $region84
        $region83: #{tpu_custom_call.1} parent=11 // pred_region
          _
        $region84: #{tpu_custom_call.1} parent=11 // pred_fallthru
          _
        // Predicated region
        $region85: #{tpu_custom_call.1} parent=11 // pred_check
          %p855 = pneg %p503
        $region86: #{tpu_custom_call.1} parent=11 // pred_check_branch
          %857 = sbr.rel (%p855) target = $region88
        $region87: #{tpu_custom_call.1} parent=11 // pred_region
          _
        $region88: #{tpu_custom_call.1} parent=11 // pred_fallthru
          _
        // Predicated region
        $region89: #{tpu_custom_call.1} parent=11 // pred_check
          %p858 = pneg %p524
        $region90: #{tpu_custom_call.1} parent=11 // pred_check_branch
          %860 = sbr.rel (%p858) target = $region92
        $region91: #{tpu_custom_call.1} parent=11 // pred_region
          _
        $region92: #{tpu_custom_call.1} parent=11 // pred_fallthru
          _
        // Predicated region
        $region93: #{tpu_custom_call.1} parent=11 // pred_check
          %p861 = pneg %p545
        $region94: #{tpu_custom_call.1} parent=11 // pred_check_branch
          %863 = sbr.rel (%p861) target = $region96
        $region95: #{tpu_custom_call.1} parent=11 // pred_region
          _
        $region96: #{tpu_custom_call.1} parent=11 // pred_fallthru
          _
        // Predicated region
        $region97: #{tpu_custom_call.1} parent=11 // pred_check
          %p864 = pneg %p566
        $region98: #{tpu_custom_call.1} parent=11 // pred_check_branch
          %866 = sbr.rel (%p864) target = $region100
        $region99: #{tpu_custom_call.1} parent=11 // pred_region
          _
        $region100: #{tpu_custom_call.1} parent=11 // pred_fallthru
          _
        // Predicated region
        $region101: #{tpu_custom_call.1} parent=11 // pred_check
          %p867 = pneg %p587
        $region102: #{tpu_custom_call.1} parent=11 // pred_check_branch
          %869 = sbr.rel (%p867) target = $region104
        $region103: #{tpu_custom_call.1} parent=11 // pred_region
          _
        $region104: #{tpu_custom_call.1} parent=11 // pred_fallthru
          _
        // Predicated region
        $region105: #{tpu_custom_call.1} parent=11 // pred_check
          %p870 = pneg %p608
        $region106: #{tpu_custom_call.1} parent=11 // pred_check_branch
          %872 = sbr.rel (%p870) target = $region108
        $region107: #{tpu_custom_call.1} parent=11 // pred_region
          _
        $region108: #{tpu_custom_call.1} parent=11 // pred_fallthru
          _
        // Predicated region
        $region109: #{tpu_custom_call.1} parent=11 // pred_check
          %p873 = pneg %p629
        $region110: #{tpu_custom_call.1} parent=11 // pred_check_branch
          %875 = sbr.rel (%p873) target = $region112
        $region111: #{tpu_custom_call.1} parent=11 // pred_region
          _
        $region112: #{tpu_custom_call.1} parent=11 // pred_fallthru
          _
        // Predicated region
        $region113: #{tpu_custom_call.1} parent=11 // pred_check
          %p876 = pneg %p650
        $region114: #{tpu_custom_call.1} parent=11 // pred_check_branch
          %878 = sbr.rel (%p876) target = $region116
        $region115: #{tpu_custom_call.1} parent=11 // pred_region
          _
        $region116: #{tpu_custom_call.1} parent=11 // pred_fallthru
          _
        // Predicated region
        $region117: #{tpu_custom_call.1} parent=11 // pred_check
          %p879 = pneg %p671
        $region118: #{tpu_custom_call.1} parent=11 // pred_check_branch
          %881 = sbr.rel (%p879) target = $region120
        $region119: #{tpu_custom_call.1} parent=11 // pred_region
          _
        $region120: #{tpu_custom_call.1} parent=11 // pred_fallthru
          _
        // Predicated region
        $region121: #{tpu_custom_call.1} parent=11 // pred_check
          %p882 = pneg %p692
        $region122: #{tpu_custom_call.1} parent=11 // pred_check_branch
          %884 = sbr.rel (%p882) target = $region124
        $region123: #{tpu_custom_call.1} parent=11 // pred_region
          _
        $region124: #{tpu_custom_call.1} parent=11 // pred_fallthru
          _
        // Predicated region
        $region125: #{tpu_custom_call.1} parent=11 // pred_check
          %p885 = pneg %p713
        $region126: #{tpu_custom_call.1} parent=11 // pred_check_branch
          %887 = sbr.rel (%p885) target = $region128
        $region127: #{tpu_custom_call.1} parent=11 // pred_region
          _
        $region128: #{tpu_custom_call.1} parent=11 // pred_fallthru
          _
        // Predicated region
        $region129: #{tpu_custom_call.1} parent=11 // pred_check
          %p888 = pneg %p734
        $region130: #{tpu_custom_call.1} parent=11 // pred_check_branch
          %890 = sbr.rel (%p888) target = $region132
        $region131: #{tpu_custom_call.1} parent=11 // pred_region
          _
        $region132: #{tpu_custom_call.1} parent=11 // pred_fallthru
          _
      $region12: #{tpu_custom_call.1} parent=5 // pred_fallthru
        _
      %p891 = scmp.lt.s32.totalorder %s78, 2
      // Predicated region
      $region133: #{tpu_custom_call.1} parent=5 // pred_check
        %p892 = pneg %p891
      $region134: #{tpu_custom_call.1} parent=5 // pred_check_branch
        %894 = sbr.rel (%p892) target = $region136
      $region135: #{tpu_custom_call.1} parent=5 // pred_region
        // Predicated region
        $region137: #{tpu_custom_call.1} parent=135 // pred_check
          %p895 = pneg %p98
        $region138: #{tpu_custom_call.1} parent=135 // pred_check_branch
          %897 = sbr.rel (%p895) target = $region140
        $region139: #{tpu_custom_call.1} parent=135 // pred_region
          %p898 = scmp.lt.s32.totalorder %s78, 1
          %s899 = scalar_select %p898, %s78, 1
          %s900 = smul.addr %s899, 8
          %s901 = scalar_lea.vmem %s1, %s900
        $region140: #{tpu_custom_call.1} parent=135 // pred_fallthru
          _
      $region136: #{tpu_custom_call.1} parent=5 // pred_fallthru
        _
      %p902 = scmp.le.s32.totalorder 1, %s78
      %p903 = scmp.lt.s32.totalorder %s78, 3
      %p904 = pnand %p902, %p903
      %p905 = pneg %p904
      // Predicated region
      $region141: #{tpu_custom_call.1} parent=5 // pred_check
        _
      $region142: #{tpu_custom_call.1} parent=5 // pred_check_branch
        %907 = sbr.rel (%p904) target = $region144
      $region143: #{tpu_custom_call.1} parent=5 // pred_region
        %s908 = ssub.s32 %s78, 1
        %p909 = scmp.lt.s32.totalorder %s83, 1
        %s910 = scalar_select %p909, %s83, 1
        %s911 = smul.addr %s910, 8
        %s912 = scalar_lea.vmem %s1, %s911
        %p913 = pneg %p104
        %p914 = pneg %p101
        %p915 = pneg %p125
        %p916 = pneg %p122
        %p917 = pneg %p146
        %p918 = pneg %p143
        %p919 = pneg %p167
        %p920 = pneg %p164
        %p921 = pneg %p188
        %p922 = pneg %p185
        %p923 = pneg %p209
        %p924 = pneg %p206
        %p925 = pneg %p230
        %p926 = pneg %p227
        %p927 = pneg %p251
        %p928 = pneg %p248
        %p929 = pneg %p272
        %p930 = pneg %p269
        %p931 = pneg %p293
        %p932 = pneg %p290
        %p933 = pneg %p314
        %p934 = pneg %p311
        %p935 = pneg %p335
        %p936 = pneg %p332
        %p937 = pneg %p356
        %p938 = pneg %p353
        %p939 = pneg %p377
        %p940 = pneg %p374
        %p941 = pneg %p398
        %p942 = pneg %p395
        %p943 = pneg %p419
        %p944 = pneg %p416
        %p945 = pneg %p440
        %p946 = pneg %p437
        %p947 = pneg %p461
        %p948 = pneg %p458
        %p949 = pneg %p482
        %p950 = pneg %p479
        %p951 = pneg %p503
        %p952 = pneg %p500
        %p953 = pneg %p524
        %p954 = pneg %p521
        %p955 = pneg %p545
        %p956 = pneg %p542
        %p957 = pneg %p566
        %p958 = pneg %p563
        %p959 = pneg %p587
        %p960 = pneg %p584
        %p961 = pneg %p608
        %p962 = pneg %p605
        %p963 = pneg %p629
        %p964 = pneg %p626
        %p965 = pneg %p650
        %p966 = pneg %p647
        %p967 = pneg %p671
        %p968 = pneg %p668
        %p969 = pneg %p692
        %p970 = pneg %p689
        %p971 = pneg %p713
        %p972 = pneg %p710
        %p973 = pneg %p734
        %p974 = pneg %p731
        %p975 = pneg %p760
        %p976 = pneg %p757
        %s977 = sand.u32 %s747, 1
        %s978 = scalar_lea.sflag [#allocation3], %s977
        %s979 = sand.u32 %s747, 1
        %s980 = smul.addr %s979, 16
        %s981 = scalar_lea.vmem [#allocation2], %s980
        %p982 = pneg %p786
        %p983 = pneg %p783
        %s984 = sand.u32 %s773, 1
        %s985 = scalar_lea.sflag [#allocation5], %s984
        %s986 = sand.u32 %s773, 1
        %s987 = smul.addr %s986, 8
        %s988 = scalar_lea.vmem [#allocation4], %s987
        %p989 = scmp.lt.s32.totalorder %s83, 1
        %s990 = scalar_select %p989, %s83, 1
        %s991 = smul.addr %s990, 8
        %s992 = scalar_lea.vmem %s1, %s991
        %v994 = vld [vmem:[%s992] sm:$0xff]
        %v995 = vlaneseq
        %v996 = vand.u32 %v995, 127
        %v997 = vadd.s32 %v996, 128
        %998 = vset.pattern.permute.xlu0 0
        %999 = vperm.xlu0 %998, %v994
        %v1000 = vpop.permute.xlu0 %999
        %vm1001 = vcmp.eq.s32.totalorder %v996, %v1000
        %vm1002 = vcmp.eq.s32.totalorder %v997, %v1000
        %v1003 = vsel %vm1001, 1, 0
        %v1004 = vsel %vm1002, 1, 0
        %v1005 = vcvt.s32.f32 %v1003
        %v1006 = vcvt.s32.f32 %v1004
        %v1007 = vpack.c.bf16 %v1005, %v1005
        %v1008 = vpack.c.bf16 %v1006, %v1006
        %v1009 = vld [vmem:[%s3] sm:$0xf]
        %v1010 = vld [vmem:[%s3 + $0x4] sm:$0xf]
        %v1011 = vld [vmem:[%s3 + $0x8] sm:$0xf]
        %v1012 = vld [vmem:[%s3 + $0xc] sm:$0xf]
        %v1013 = vld [vmem:[%s3 + $0x10] sm:$0xf]
        %v1014 = vld [vmem:[%s3 + $0x14] sm:$0xf]
        %v1015 = vld [vmem:[%s3 + $0x18] sm:$0xf]
        %v1016 = vld [vmem:[%s3 + $0x1c] sm:$0xf]
        %v1017 = vld [vmem:[%s3 + $0x20] sm:$0xf]
        %v1018 = vld [vmem:[%s3 + $0x24] sm:$0xf]
        %v1019 = vld [vmem:[%s3 + $0x28] sm:$0xf]
        %v1020 = vld [vmem:[%s3 + $0x2c] sm:$0xf]
        %v1021 = vld [vmem:[%s3 + $0x30] sm:$0xf]
        %v1022 = vld [vmem:[%s3 + $0x34] sm:$0xf]
        %v1023 = vld [vmem:[%s3 + $0x38] sm:$0xf]
        %v1024 = vld [vmem:[%s3 + $0x3c] sm:$0xf]
        %v1025 = vld [vmem:[%s3 + $0x40] sm:$0xf]
        %v1026 = vld [vmem:[%s3 + $0x44] sm:$0xf]
        %v1027 = vld [vmem:[%s3 + $0x48] sm:$0xf]
        %v1028 = vld [vmem:[%s3 + $0x4c] sm:$0xf]
        %v1029 = vld [vmem:[%s3 + $0x50] sm:$0xf]
        %v1030 = vld [vmem:[%s3 + $0x54] sm:$0xf]
        %v1031 = vld [vmem:[%s3 + $0x58] sm:$0xf]
        %v1032 = vld [vmem:[%s3 + $0x5c] sm:$0xf]
        %v1033 = vld [vmem:[%s3 + $0x60] sm:$0xf]
        %v1034 = vld [vmem:[%s3 + $0x64] sm:$0xf]
        %v1035 = vld [vmem:[%s3 + $0x68] sm:$0xf]
        %v1036 = vld [vmem:[%s3 + $0x6c] sm:$0xf]
        %v1037 = vld [vmem:[%s3 + $0x70] sm:$0xf]
        %v1038 = vld [vmem:[%s3 + $0x74] sm:$0xf]
        %v1039 = vld [vmem:[%s3 + $0x78] sm:$0xf]
        %v1040 = vld [vmem:[%s3 + $0x7c] sm:$0xf]
        %v1073 = vunpack.c.l.b16 %v1009
        %v1074 = vunpack.c.l.b16 %v1010
        %v1075 = vunpack.c.l.b16 %v1011
        %v1076 = vunpack.c.l.b16 %v1012
        %v1077 = vunpack.c.l.b16 %v1013
        %v1078 = vunpack.c.l.b16 %v1014
        %v1079 = vunpack.c.l.b16 %v1015
        %v1080 = vunpack.c.l.b16 %v1016
        %v1081 = vunpack.c.l.b16 %v1017
        %v1082 = vunpack.c.l.b16 %v1018
        %v1083 = vunpack.c.l.b16 %v1019
        %v1084 = vunpack.c.l.b16 %v1020
        %v1085 = vunpack.c.l.b16 %v1021
        %v1086 = vunpack.c.l.b16 %v1022
        %v1087 = vunpack.c.l.b16 %v1023
        %v1088 = vunpack.c.l.b16 %v1024
        %v1089 = vunpack.c.l.b16 %v1025
        %v1090 = vunpack.c.l.b16 %v1026
        %v1091 = vunpack.c.l.b16 %v1027
        %v1092 = vunpack.c.l.b16 %v1028
        %v1093 = vunpack.c.l.b16 %v1029
        %v1094 = vunpack.c.l.b16 %v1030
        %v1095 = vunpack.c.l.b16 %v1031
        %v1096 = vunpack.c.l.b16 %v1032
        %v1097 = vunpack.c.l.b16 %v1033
        %v1098 = vunpack.c.l.b16 %v1034
        %v1099 = vunpack.c.l.b16 %v1035
        %v1100 = vunpack.c.l.b16 %v1036
        %v1101 = vunpack.c.l.b16 %v1037
        %v1102 = vunpack.c.l.b16 %v1038
        %v1103 = vunpack.c.l.b16 %v1039
        %v1104 = vunpack.c.l.b16 %v1040
        %v1105 = vpack.c.b16 %v1074, %v1073
        %v1106 = vpack.c.b16 %v1076, %v1075
        %v1107 = vpack.c.b16 %v1078, %v1077
        %v1108 = vpack.c.b16 %v1080, %v1079
        %v1109 = vpack.c.b16 %v1082, %v1081
        %v1110 = vpack.c.b16 %v1084, %v1083
        %v1111 = vpack.c.b16 %v1086, %v1085
        %v1112 = vpack.c.b16 %v1088, %v1087
        %v1113 = vpack.c.b16 %v1090, %v1089
        %v1114 = vpack.c.b16 %v1092, %v1091
        %v1115 = vpack.c.b16 %v1094, %v1093
        %v1116 = vpack.c.b16 %v1096, %v1095
        %v1117 = vpack.c.b16 %v1098, %v1097
        %v1118 = vpack.c.b16 %v1100, %v1099
        %v1119 = vpack.c.b16 %v1102, %v1101
        %v1120 = vpack.c.b16 %v1104, %v1103
        %1137 = vmatpush.bf16.msra.mxu0 %v1112
        %1138 = vmatpush.bf16.msra.mxu0 %v1111
        %1139 = vmatpush.bf16.msra.mxu0 %v1110
        %1140 = vmatpush.bf16.msra.mxu0 %v1109
        %1141 = vmatpush.bf16.msra.mxu0 %v1108
        %1142 = vmatpush.bf16.msra.mxu0 %v1107
        %1143 = vmatpush.bf16.msra.mxu0 %v1106
        %1144 = vmatpush.bf16.msra.mxu0 %v1105
        %1145 = vmatmul.bf16.gmra.mxu0 %v1007
        %v1146 = vpop.f32.mrf.mxu0
        %v1147 = vadd.f32 0.0, %v1146
        %v1148 = vpop.f32.mrf.mxu0
        %1149 = vdwg.mxu0
        %1150 = vmatpush.bf16.msra.mxu0 %v1120
        %1151 = vmatpush.bf16.msra.mxu0 %v1119
        %1152 = vmatpush.bf16.msra.mxu0 %v1118
        %1153 = vmatpush.bf16.msra.mxu0 %v1117
        %1154 = vmatpush.bf16.msra.mxu0 %v1116
        %1155 = vmatpush.bf16.msra.mxu0 %v1115
        %1156 = vmatpush.bf16.msra.mxu0 %v1114
        %1157 = vmatpush.bf16.msra.mxu0 %v1113
        %1158 = vmatmul.bf16.gmra.mxu0 %v1008
        %v1159 = vpop.f32.mrf.mxu0
        %v1160 = vadd.f32 %v1147, %v1159
        %v1161 = vpop.f32.mrf.mxu0
        %1162 = vdwg.mxu0
        %v1163 = vlaneseq
        %v1164 = vshrl.u32 %v1163, 7
        %v1165 = vsub.s32 %v996, %v1164
        %v1166 = vcvt.s32.f32 %v1165
        %vm1167 = vcmp.le.s32.totalorder %v996, %v1164
        %v1168 = vsel %vm1167, 0.0, -1e+09
        %v1169 = vmul.f32 %v1166, 0.25
        %v1170 = vadd.f32 %v1169, %v1168
        %v1171 = vmul.f32 %v1166, 0.0625
        %v1172 = vadd.f32 %v1171, %v1168
        %v1173 = vmul.f32 %v1166, 0.015625
        %v1174 = vadd.f32 %v1173, %v1168
        %v1175 = vmul.f32 %v1166, 0.00390625
        %v1176 = vadd.f32 %v1175, %v1168
        %v1177 = vld [vmem:[%s7] sm:$0x1]
        %v1178 = vld [vmem:[%s7 + $0x1] sm:$0x1]
        %v1179 = vmul.f32 %v1160, %v1160
        %vm1180 = vcmask 261120
        %v1181 = vsel %vm1180, %v1179, 0.0
        %1182 = vadd.xlane.f32.xlu0 %v1181
        %v1183 = vpop.xlane.xlu0 %1182
        %v1184 = vrcp.pop 32.0
        %v1185 = vmul.f32 32.0, %v1184
        %v1186 = vsub.f32 1.0, %v1185
        %v1187 = vmul.f32 %v1184, %v1186
        %v1188 = vadd.f32 %v1184, %v1187
        %vm1189 = vweird.f32 %v1184
        %v1190 = vsel %vm1189, %v1184, %v1188
        %v1191 = vmul.f32 %v1183, %v1190
        %v1192 = vadd.f32 %v1191, 1e-06
        %v1193 = vrsqrt.pop %v1192
        %v1194 = vmul.f32 %v1193, %v1192
        %v1195 = vmul.f32 %v1194, %v1193
        %v1196 = vmul.f32 0.5, %v1195
        %v1197 = vsub.f32 1.5, %v1196
        %v1198 = vmul.f32 %v1193, %v1197
        %vm1199 = vweird.f32 %v1192
        %vm1200 = vweird.f32 %v1193
        %vm1201 = vmor %vm1199, %vm1200
        %v1202 = vsel %vm1201, %v1193, %v1198
        %v1203 = vmul.f32 %v1160, %v1202
        %v1204 = vperm.slane %v1177, 0
        %v1205 = vmul.f32 %v1203, %v1204
        %v1206 = vpack.c.bf16 %v1205, %v1205
        %v1207 = vld [vmem:[%s9] sm:$0xf]
        %v1208 = vld [vmem:[%s9 + $0x4] sm:$0xf]
        %v1209 = vld [vmem:[%s9 + $0x8] sm:$0xf]
        %v1210 = vld [vmem:[%s9 + $0xc] sm:$0xf]
        %v1215 = vunpack.c.l.b16 %v1207
        %v1216 = vunpack.c.l.b16 %v1208
        %v1217 = vunpack.c.l.b16 %v1209
        %v1218 = vunpack.c.l.b16 %v1210
        %v1219 = vpack.c.b16 %v1216, %v1215
        %v1220 = vpack.c.b16 %v1218, %v1217
        %v1224 = vsel %vm1180, %v1206, 0
        %1226 = vmatpush.bf16.msra.mxu0 0
        %1227 = vmatpush.bf16.msra.mxu0 0
        %1228 = vmatpush.bf16.msra.mxu0 0
        %1229 = vmatpush.bf16.msra.mxu0 0
        %1230 = vmatpush.bf16.msra.mxu0 0
        %1231 = vmatpush.bf16.msra.mxu0 0
        %1232 = vmatpush.bf16.msra.mxu0 %v1220
        %1233 = vmatpush.bf16.msra.mxu0 %v1219
        %1234 = vmatmul.bf16.gmra.mxu0 %v1224
        %v1235 = vpop.f32.mrf.mxu0
        %v1236 = vadd.f32 0.0, %v1235
        %v1237 = vpop.f32.mrf.mxu0
        %1238 = vdwg.mxu0
        %v1239 = vpack.c.bf16 %v1236, %v1236
        %1241 = vrot.lane.b32.xlu0 %v1239, 96
        %v1242 = vpop.permute.xlu0 %1241
        %vm1243 = vcmask 64512
        %v1245 = vsel %vm1243, %v1239, 0
        %v1248 = vsel %vm1243, %v1242, 0
        %1250 = vmatpush.bf16.xpose.msra.mxu0 0
        %1251 = vmatpush.bf16.xpose.msra.mxu0 0
        %1252 = vmatpush.bf16.xpose.msra.mxu0 0
        %1253 = vmatpush.bf16.xpose.msra.mxu0 0
        %1254 = vmatpush.bf16.xpose.msra.mxu0 0
        %1255 = vmatpush.bf16.xpose.msra.mxu0 0
        %1256 = vmatpush.bf16.xpose.msra.mxu0 0
        %1257 = vmatpush.bf16.xpose.msra.mxu0 %v1248
        %1258 = vmatmul.bf16.gmra.mxu0 %v1245
        %v1259 = vpop.f32.mrf.mxu0
        %v1260 = vadd.f32 0.0, %v1259
        %v1261 = vpop.f32.mrf.mxu0
        %1262 = vdwg.mxu0
        %v1263 = vmul.f32 %v1260, 0.35355338
        %v1264 = vadd.f32 %v1263, %v1170
        %v1265 = vsel %vm1243, %v1264, -inf
        %1266 = vmax.xlane.f32.xlu0 %v1265
        %v1267 = vpop.xlane.xlu0 %1266
        %v1268 = vsub.f32 %v1264, %v1267
        %v1269 = vmul.f32 %v1268, 1.442695
        %v1270 = vpow.pop %v1269
        %v1271 = vsel %vm1243, %v1270, 0.0
        %1272 = vadd.xlane.f32.xlu0 %v1271
        %v1273 = vpop.xlane.xlu0 %1272
        %v1274 = vrcp.pop %v1273
        %v1275 = vmul.f32 %v1270, %v1274
        %v1276 = vpack.c.bf16 %v1275, %v1275
        %1277 = vrot.lane.b32.xlu0 %v1239, 64
        %v1278 = vpop.permute.xlu0 %1277
        %v1280 = vsel %vm1243, %v1276, 0
        %vm1282 = vcmask 1043456
        %v1284 = vsel %vm1282, %v1278, 0
        %1286 = vmatpush.bf16.msra.mxu0 0
        %1287 = vmatpush.bf16.msra.mxu0 0
        %1288 = vmatpush.bf16.msra.mxu0 0
        %1289 = vmatpush.bf16.msra.mxu0 0
        %1290 = vmatpush.bf16.msra.mxu0 0
        %1291 = vmatpush.bf16.msra.mxu0 0
        %1292 = vmatpush.bf16.msra.mxu0 0
        %1293 = vmatpush.bf16.msra.mxu0 %v1284
        %1294 = vmatmul.bf16.gmra.mxu0 %v1280
        %v1295 = vpop.f32.mrf.mxu0
        %v1296 = vadd.f32 0.0, %v1295
        %v1297 = vpop.f32.mrf.mxu0
        %1298 = vdwg.mxu0
        %1299 = vrot.lane.b32.xlu0 %v1239, 120
        %v1300 = vpop.permute.xlu0 %1299
        %1301 = vrot.lane.b32.xlu0 %v1239, 88
        %v1302 = vpop.permute.xlu0 %1301
        %v1304 = vsel %vm1243, %v1300, 0
        %v1307 = vsel %vm1243, %v1302, 0
        %1309 = vmatpush.bf16.xpose.msra.mxu0 0
        %1310 = vmatpush.bf16.xpose.msra.mxu0 0
        %1311 = vmatpush.bf16.xpose.msra.mxu0 0
        %1312 = vmatpush.bf16.xpose.msra.mxu0 0
        %1313 = vmatpush.bf16.xpose.msra.mxu0 0
        %1314 = vmatpush.bf16.xpose.msra.mxu0 0
        %1315 = vmatpush.bf16.xpose.msra.mxu0 0
        %1316 = vmatpush.bf16.xpose.msra.mxu0 %v1307
        %1317 = vmatmul.bf16.gmra.mxu0 %v1304
        %v1318 = vpop.f32.mrf.mxu0
        %v1319 = vadd.f32 0.0, %v1318
        %v1320 = vpop.f32.mrf.mxu0
        %1321 = vdwg.mxu0
        %v1322 = vmul.f32 %v1319, 0.35355338
        %v1323 = vadd.f32 %v1322, %v1172
        %v1324 = vsel %vm1243, %v1323, -inf
        %1325 = vmax.xlane.f32.xlu0 %v1324
        %v1326 = vpop.xlane.xlu0 %1325
        %v1327 = vsub.f32 %v1323, %v1326
        %v1328 = vmul.f32 %v1327, 1.442695
        %v1329 = vpow.pop %v1328
        %v1330 = vsel %vm1243, %v1329, 0.0
        %1331 = vadd.xlane.f32.xlu0 %v1330
        %v1332 = vpop.xlane.xlu0 %1331
        %v1333 = vrcp.pop %v1332
        %v1334 = vmul.f32 %v1329, %v1333
        %v1335 = vpack.c.bf16 %v1334, %v1334
        %1336 = vrot.lane.b32.xlu0 %v1239, 56
        %v1337 = vpop.permute.xlu0 %1336
        %v1339 = vsel %vm1243, %v1335, 0
        %v1342 = vsel %vm1282, %v1337, 0
        %1344 = vmatpush.bf16.msra.mxu0 0
        %1345 = vmatpush.bf16.msra.mxu0 0
        %1346 = vmatpush.bf16.msra.mxu0 0
        %1347 = vmatpush.bf16.msra.mxu0 0
        %1348 = vmatpush.bf16.msra.mxu0 0
        %1349 = vmatpush.bf16.msra.mxu0 0
        %1350 = vmatpush.bf16.msra.mxu0 0
        %1351 = vmatpush.bf16.msra.mxu0 %v1342
        %1352 = vmatmul.bf16.gmra.mxu0 %v1339
        %v1353 = vpop.f32.mrf.mxu0
        %v1354 = vadd.f32 0.0, %v1353
        %v1355 = vpop.f32.mrf.mxu0
        %1356 = vdwg.mxu0
        %1357 = vrot.lane.b32.xlu0 %v1239, 112
        %v1358 = vpop.permute.xlu0 %1357
        %1359 = vrot.lane.b32.xlu0 %v1239, 80
        %v1360 = vpop.permute.xlu0 %1359
        %v1362 = vsel %vm1243, %v1358, 0
        %v1365 = vsel %vm1243, %v1360, 0
        %1367 = vmatpush.bf16.xpose.msra.mxu0 0
        %1368 = vmatpush.bf16.xpose.msra.mxu0 0
        %1369 = vmatpush.bf16.xpose.msra.mxu0 0
        %1370 = vmatpush.bf16.xpose.msra.mxu0 0
        %1371 = vmatpush.bf16.xpose.msra.mxu0 0
        %1372 = vmatpush.bf16.xpose.msra.mxu0 0
        %1373 = vmatpush.bf16.xpose.msra.mxu0 0
        %1374 = vmatpush.bf16.xpose.msra.mxu0 %v1365
        %1375 = vmatmul.bf16.gmra.mxu0 %v1362
        %v1376 = vpop.f32.mrf.mxu0
        %v1377 = vadd.f32 0.0, %v1376
        %v1378 = vpop.f32.mrf.mxu0
        %1379 = vdwg.mxu0
        %v1380 = vmul.f32 %v1377, 0.35355338
        %v1381 = vadd.f32 %v1380, %v1174
        %v1382 = vsel %vm1243, %v1381, -inf
        %1383 = vmax.xlane.f32.xlu0 %v1382
        %v1384 = vpop.xlane.xlu0 %1383
        %v1385 = vsub.f32 %v1381, %v1384
        %v1386 = vmul.f32 %v1385, 1.442695
        %v1387 = vpow.pop %v1386
        %v1388 = vsel %vm1243, %v1387, 0.0
        %1389 = vadd.xlane.f32.xlu0 %v1388
        %v1390 = vpop.xlane.xlu0 %1389
        %v1391 = vrcp.pop %v1390
        %v1392 = vmul.f32 %v1387, %v1391
        %v1393 = vpack.c.bf16 %v1392, %v1392
        %1394 = vrot.lane.b32.xlu0 %v1239, 48
        %v1395 = vpop.permute.xlu0 %1394
        %v1397 = vsel %vm1243, %v1393, 0
        %v1400 = vsel %vm1282, %v1395, 0
        %1402 = vmatpush.bf16.msra.mxu0 0
        %1403 = vmatpush.bf16.msra.mxu0 0
        %1404 = vmatpush.bf16.msra.mxu0 0
        %1405 = vmatpush.bf16.msra.mxu0 0
        %1406 = vmatpush.bf16.msra.mxu0 0
        %1407 = vmatpush.bf16.msra.mxu0 0
        %1408 = vmatpush.bf16.msra.mxu0 0
        %1409 = vmatpush.bf16.msra.mxu0 %v1400
        %1410 = vmatmul.bf16.gmra.mxu0 %v1397
        %v1411 = vpop.f32.mrf.mxu0
        %v1412 = vadd.f32 0.0, %v1411
        %v1413 = vpop.f32.mrf.mxu0
        %1414 = vdwg.mxu0
        %1415 = vrot.lane.b32.xlu0 %v1239, 104
        %v1416 = vpop.permute.xlu0 %1415
        %1417 = vrot.lane.b32.xlu0 %v1239, 72
        %v1418 = vpop.permute.xlu0 %1417
        %v1420 = vsel %vm1243, %v1416, 0
        %v1423 = vsel %vm1243, %v1418, 0
        %1425 = vmatpush.bf16.xpose.msra.mxu0 0
        %1426 = vmatpush.bf16.xpose.msra.mxu0 0
        %1427 = vmatpush.bf16.xpose.msra.mxu0 0
        %1428 = vmatpush.bf16.xpose.msra.mxu0 0
        %1429 = vmatpush.bf16.xpose.msra.mxu0 0
        %1430 = vmatpush.bf16.xpose.msra.mxu0 0
        %1431 = vmatpush.bf16.xpose.msra.mxu0 0
        %1432 = vmatpush.bf16.xpose.msra.mxu0 %v1423
        %1433 = vmatmul.bf16.gmra.mxu0 %v1420
        %v1434 = vpop.f32.mrf.mxu0
        %v1435 = vadd.f32 0.0, %v1434
        %v1436 = vpop.f32.mrf.mxu0
        %1437 = vdwg.mxu0
        %v1438 = vmul.f32 %v1435, 0.35355338
        %v1439 = vadd.f32 %v1438, %v1176
        %v1440 = vsel %vm1243, %v1439, -inf
        %1441 = vmax.xlane.f32.xlu0 %v1440
        %v1442 = vpop.xlane.xlu0 %1441
        %v1443 = vsub.f32 %v1439, %v1442
        %v1444 = vmul.f32 %v1443, 1.442695
        %v1445 = vpow.pop %v1444
        %v1446 = vsel %vm1243, %v1445, 0.0
        %1447 = vadd.xlane.f32.xlu0 %v1446
        %v1448 = vpop.xlane.xlu0 %1447
        %v1449 = vrcp.pop %v1448
        %v1450 = vmul.f32 %v1445, %v1449
        %v1451 = vpack.c.bf16 %v1450, %v1450
        %1452 = vrot.lane.b32.xlu0 %v1239, 40
        %v1453 = vpop.permute.xlu0 %1452
        %v1455 = vsel %vm1243, %v1451, 0
        %v1458 = vsel %vm1282, %v1453, 0
        %1460 = vmatpush.bf16.msra.mxu0 0
        %1461 = vmatpush.bf16.msra.mxu0 0
        %1462 = vmatpush.bf16.msra.mxu0 0
        %1463 = vmatpush.bf16.msra.mxu0 0
        %1464 = vmatpush.bf16.msra.mxu0 0
        %1465 = vmatpush.bf16.msra.mxu0 0
        %1466 = vmatpush.bf16.msra.mxu0 0
        %1467 = vmatpush.bf16.msra.mxu0 %v1458
        %1468 = vmatmul.bf16.gmra.mxu0 %v1455
        %v1469 = vpop.f32.mrf.mxu0
        %v1470 = vadd.f32 0.0, %v1469
        %v1471 = vpop.f32.mrf.mxu0
        %1472 = vdwg.mxu0
        %1474 = vrot.lane.b32.xlu0 %v1354, 8
        %v1475 = vpop.permute.xlu0 %1474
        %1478 = vrot.lane.b32.xlu0 %v1412, 16
        %v1479 = vpop.permute.xlu0 %1478
        %1482 = vrot.lane.b32.xlu0 %v1470, 24
        %v1483 = vpop.permute.xlu0 %1482
        %v1485 = vsel %vm1243, %v1296, %v1475
        %vm1486 = vcmask 130048
        %v1487 = vsel %vm1486, %v1485, %v1479
        %vm1488 = vcmask 195584
        %v1489 = vsel %vm1488, %v1487, %v1483
        %v1490 = vpack.c.bf16 %v1489, %v1489
        %v1491 = vld [vmem:[%s11] sm:$0xf]
        %v1492 = vld [vmem:[%s11 + $0x4] sm:$0xf]
        %v1493 = vld [vmem:[%s11 + $0x8] sm:$0xf]
        %v1494 = vld [vmem:[%s11 + $0xc] sm:$0xf]
        %v1499 = vunpack.c.l.b16 %v1491
        %v1500 = vunpack.c.l.b16 %v1492
        %v1501 = vunpack.c.l.b16 %v1493
        %v1502 = vunpack.c.l.b16 %v1494
        %v1503 = vpack.c.b16 %v1500, %v1499
        %v1504 = vpack.c.b16 %v1502, %v1501
        %v1508 = vsel %vm1180, %v1490, 0
        %1510 = vmatpush.bf16.msra.mxu0 0
        %1511 = vmatpush.bf16.msra.mxu0 0
        %1512 = vmatpush.bf16.msra.mxu0 0
        %1513 = vmatpush.bf16.msra.mxu0 0
        %1514 = vmatpush.bf16.msra.mxu0 0
        %1515 = vmatpush.bf16.msra.mxu0 0
        %1516 = vmatpush.bf16.msra.mxu0 %v1504
        %1517 = vmatpush.bf16.msra.mxu0 %v1503
        %1518 = vmatmul.bf16.gmra.mxu0 %v1508
        %v1519 = vpop.f32.mrf.mxu0
        %v1520 = vadd.f32 0.0, %v1519
        %v1521 = vpop.f32.mrf.mxu0
        %1522 = vdwg.mxu0
        %v1523 = vadd.f32 %v1160, %v1520
        %v1524 = vmul.f32 %v1523, %v1523
        %v1525 = vsel %vm1180, %v1524, 0.0
        %1526 = vadd.xlane.f32.xlu0 %v1525
        %v1527 = vpop.xlane.xlu0 %1526
        %v1528 = vmul.f32 %v1527, %v1190
        %v1529 = vadd.f32 %v1528, 1e-06
        %v1530 = vrsqrt.pop %v1529
        %v1531 = vmul.f32 %v1530, %v1529
        %v1532 = vmul.f32 %v1531, %v1530
        %v1533 = vmul.f32 0.5, %v1532
        %v1534 = vsub.f32 1.5, %v1533
        %v1535 = vmul.f32 %v1530, %v1534
        %vm1536 = vweird.f32 %v1529
        %vm1537 = vweird.f32 %v1530
        %vm1538 = vmor %vm1536, %vm1537
        %v1539 = vsel %vm1538, %v1530, %v1535
        %v1540 = vmul.f32 %v1523, %v1539
        %v1541 = vperm.slane %v1178, 0
        %v1542 = vmul.f32 %v1540, %v1541
        %v1543 = vpack.c.bf16 %v1542, %v1542
        %v1544 = vld [vmem:[%s13] sm:$0xff]
        %v1545 = vld [vmem:[%s13 + $0x8] sm:$0xff]
        %v1546 = vld [vmem:[%s13 + $0x10] sm:$0xff]
        %v1547 = vld [vmem:[%s13 + $0x18] sm:$0xff]
        %v1548 = vld [vmem:[%s13 + $0x20] sm:$0xff]
        %v1549 = vld [vmem:[%s13 + $0x28] sm:$0xff]
        %v1550 = vld [vmem:[%s13 + $0x30] sm:$0xff]
        %v1551 = vld [vmem:[%s13 + $0x38] sm:$0xff]
        %v1552 = vld [vmem:[%s15] sm:$0xf]
        %v1554 = vperm.slane %v1552, 0
        %v1555 = vperm.slane %v1552, 1
        %v1556 = vperm.slane %v1552, 2
        %v1557 = vperm.slane %v1552, 3
        %v1570 = vunpack.c.l.b16 %v1544
        %v1571 = vunpack.c.h.b16 %v1544
        %v1572 = vunpack.c.l.b16 %v1545
        %v1573 = vunpack.c.h.b16 %v1545
        %v1574 = vunpack.c.l.b16 %v1546
        %v1575 = vunpack.c.h.b16 %v1546
        %v1576 = vunpack.c.l.b16 %v1547
        %v1577 = vunpack.c.h.b16 %v1547
        %v1578 = vunpack.c.l.b16 %v1548
        %v1579 = vunpack.c.h.b16 %v1548
        %v1580 = vunpack.c.l.b16 %v1549
        %v1581 = vunpack.c.h.b16 %v1549
        %v1582 = vunpack.c.l.b16 %v1550
        %v1583 = vunpack.c.h.b16 %v1550
        %v1584 = vunpack.c.l.b16 %v1551
        %v1585 = vunpack.c.h.b16 %v1551
        %v1586 = vpack.c.b16 %v1574, %v1570
        %v1587 = vpack.c.b16 %v1575, %v1571
        %v1588 = vpack.c.b16 %v1576, %v1572
        %v1589 = vpack.c.b16 %v1577, %v1573
        %v1590 = vpack.c.b16 %v1582, %v1578
        %v1591 = vpack.c.b16 %v1583, %v1579
        %v1592 = vpack.c.b16 %v1584, %v1580
        %v1593 = vpack.c.b16 %v1585, %v1581
        %v1603 = vsel %vm1180, %v1543, 0
        %1605 = vmatpush.bf16.msra.mxu0 0
        %1606 = vmatpush.bf16.msra.mxu0 0
        %1607 = vmatpush.bf16.msra.mxu0 0
        %1608 = vmatpush.bf16.msra.mxu0 0
        %1609 = vmatpush.bf16.msra.mxu0 0
        %1610 = vmatpush.bf16.msra.mxu0 0
        %1611 = vmatpush.bf16.msra.mxu0 %v1590
        %1612 = vmatpush.bf16.msra.mxu0 %v1586
        %1613 = vmatmul.bf16.gmra.mxu0 %v1603
        %v1614 = vpop.f32.mrf.mxu0
        %v1615 = vadd.f32 %v1554, %v1614
        %v1616 = vpop.f32.mrf.mxu0
        %1617 = vdwg.mxu0
        %1618 = vmatpush.bf16.msra.mxu0 0
        %1619 = vmatpush.bf16.msra.mxu0 0
        %1620 = vmatpush.bf16.msra.mxu0 0
        %1621 = vmatpush.bf16.msra.mxu0 0
        %1622 = vmatpush.bf16.msra.mxu0 0
        %1623 = vmatpush.bf16.msra.mxu0 0
        %1624 = vmatpush.bf16.msra.mxu0 %v1591
        %1625 = vmatpush.bf16.msra.mxu0 %v1587
        %1626 = vmatmul.bf16.gmra.mxu0 %v1603
        %v1627 = vpop.f32.mrf.mxu0
        %v1628 = vadd.f32 %v1555, %v1627
        %v1629 = vpop.f32.mrf.mxu0
        %1630 = vdwg.mxu0
        %1631 = vmatpush.bf16.msra.mxu0 0
        %1632 = vmatpush.bf16.msra.mxu0 0
        %1633 = vmatpush.bf16.msra.mxu0 0
        %1634 = vmatpush.bf16.msra.mxu0 0
        %1635 = vmatpush.bf16.msra.mxu0 0
        %1636 = vmatpush.bf16.msra.mxu0 0
        %1637 = vmatpush.bf16.msra.mxu0 %v1592
        %1638 = vmatpush.bf16.msra.mxu0 %v1588
        %1639 = vmatmul.bf16.gmra.mxu0 %v1603
        %v1640 = vpop.f32.mrf.mxu0
        %v1641 = vadd.f32 %v1556, %v1640
        %v1642 = vpop.f32.mrf.mxu0
        %1643 = vdwg.mxu0
        %1644 = vmatpush.bf16.msra.mxu0 0
        %1645 = vmatpush.bf16.msra.mxu0 0
        %1646 = vmatpush.bf16.msra.mxu0 0
        %1647 = vmatpush.bf16.msra.mxu0 0
        %1648 = vmatpush.bf16.msra.mxu0 0
        %1649 = vmatpush.bf16.msra.mxu0 0
        %1650 = vmatpush.bf16.msra.mxu0 %v1593
        %1651 = vmatpush.bf16.msra.mxu0 %v1589
        %1652 = vmatmul.bf16.gmra.mxu0 %v1603
        %v1653 = vpop.f32.mrf.mxu0
        %v1654 = vadd.f32 %v1557, %v1653
        %v1655 = vpop.f32.mrf.mxu0
        %1656 = vdwg.mxu0
        %v1657 = vmul.f32 %v1615, 0.5
        %v1658 = vmul.f32 %v1628, 0.5
        %v1659 = vmul.f32 %v1641, 0.5
        %v1660 = vmul.f32 %v1654, 0.5
        %v1661 = vmul.f32 %v1615, 0.044715
        %v1662 = vmul.f32 %v1628, 0.044715
        %v1663 = vmul.f32 %v1641, 0.044715
        %v1664 = vmul.f32 %v1654, 0.044715
        %v1665 = vmul.f32 %v1661, %v1615
        %v1666 = vmul.f32 %v1662, %v1628
        %v1667 = vmul.f32 %v1663, %v1641
        %v1668 = vmul.f32 %v1664, %v1654
        %v1669 = vmul.f32 %v1665, %v1615
        %v1670 = vmul.f32 %v1666, %v1628
        %v1671 = vmul.f32 %v1667, %v1641
        %v1672 = vmul.f32 %v1668, %v1654
        %v1673 = vadd.f32 %v1615, %v1669
        %v1674 = vadd.f32 %v1628, %v1670
        %v1675 = vadd.f32 %v1641, %v1671
        %v1676 = vadd.f32 %v1654, %v1672
        %v1677 = vmul.f32 %v1673, 0.7978846
        %v1678 = vmul.f32 %v1674, 0.7978846
        %v1679 = vmul.f32 %v1675, 0.7978846
        %v1680 = vmul.f32 %v1676, 0.7978846
        %v1681 = vtanh.pop %v1677
        %v1682 = vtanh.pop %v1678
        %v1683 = vtanh.pop %v1679
        %v1684 = vtanh.pop %v1680
        %v1685 = vadd.f32 %v1681, 1.0
        %v1686 = vadd.f32 %v1682, 1.0
        %v1687 = vadd.f32 %v1683, 1.0
        %v1688 = vadd.f32 %v1684, 1.0
        %v1689 = vmul.f32 %v1657, %v1685
        %v1690 = vmul.f32 %v1658, %v1686
        %v1691 = vmul.f32 %v1659, %v1687
        %v1692 = vmul.f32 %v1660, %v1688
        %v1693 = vand.u32 %v994, 3
        %1694 = vset.pattern.permute.xlu0 0
        %1695 = vperm.xlu0 %1694, %v1693
        %v1696 = vpop.permute.xlu0 %1695
        %vm1697 = vcmp.eq.s32.totalorder %v1696, %v996
        %v1698 = vsel %vm1697, 1, 0
        %v1699 = vcvt.s32.f32 %v1698
        %1701 = vset.pattern.permute.xlu0 0
        %1702 = vperm.xlu0 %1701, %v1699
        %v1703 = vpop.permute.xlu0 %1702
        %v1705 = vmul.f32 %v1689, %v1703
        %1706 = vset.pattern.permute.xlu0 1
        %1707 = vperm.xlu0 %1706, %v1699
        %v1708 = vpop.permute.xlu0 %1707
        %v1710 = vmul.f32 %v1690, %v1708
        %1711 = vset.pattern.permute.xlu0 2
        %1712 = vperm.xlu0 %1711, %v1699
        %v1713 = vpop.permute.xlu0 %1712
        %v1715 = vmul.f32 %v1691, %v1713
        %1716 = vset.pattern.permute.xlu0 3
        %1717 = vperm.xlu0 %1716, %v1699
        %v1718 = vpop.permute.xlu0 %1717
        %v1720 = vmul.f32 %v1692, %v1718
        %v1721 = vpack.c.bf16 %v1705, %v1705
        %v1722 = vpack.c.bf16 %v1710, %v1710
        %v1723 = vpack.c.bf16 %v1715, %v1715
        %v1724 = vpack.c.bf16 %v1720, %v1720
        %v1725 = vld [vmem:[%s17] sm:$0xf]
        %v1726 = vld [vmem:[%s17 + $0x4] sm:$0xf]
        %v1727 = vld [vmem:[%s17 + $0x8] sm:$0xf]
        %v1728 = vld [vmem:[%s17 + $0xc] sm:$0xf]
        %v1729 = vld [vmem:[%s17 + $0x10] sm:$0xf]
        %v1730 = vld [vmem:[%s17 + $0x14] sm:$0xf]
        %v1731 = vld [vmem:[%s17 + $0x18] sm:$0xf]
        %v1732 = vld [vmem:[%s17 + $0x1c] sm:$0xf]
        %v1733 = vld [vmem:[%s17 + $0x20] sm:$0xf]
        %v1734 = vld [vmem:[%s17 + $0x24] sm:$0xf]
        %v1735 = vld [vmem:[%s17 + $0x28] sm:$0xf]
        %v1736 = vld [vmem:[%s17 + $0x2c] sm:$0xf]
        %v1737 = vld [vmem:[%s17 + $0x30] sm:$0xf]
        %v1738 = vld [vmem:[%s17 + $0x34] sm:$0xf]
        %v1739 = vld [vmem:[%s17 + $0x38] sm:$0xf]
        %v1740 = vld [vmem:[%s17 + $0x3c] sm:$0xf]
        %v1741 = vld [vmem:[%s17 + $0x40] sm:$0xf]
        %v1742 = vld [vmem:[%s17 + $0x44] sm:$0xf]
        %v1743 = vld [vmem:[%s17 + $0x48] sm:$0xf]
        %v1744 = vld [vmem:[%s17 + $0x4c] sm:$0xf]
        %v1745 = vld [vmem:[%s17 + $0x50] sm:$0xf]
        %v1746 = vld [vmem:[%s17 + $0x54] sm:$0xf]
        %v1747 = vld [vmem:[%s17 + $0x58] sm:$0xf]
        %v1748 = vld [vmem:[%s17 + $0x5c] sm:$0xf]
        %v1749 = vld [vmem:[%s17 + $0x60] sm:$0xf]
        %v1750 = vld [vmem:[%s17 + $0x64] sm:$0xf]
        %v1751 = vld [vmem:[%s17 + $0x68] sm:$0xf]
        %v1752 = vld [vmem:[%s17 + $0x6c] sm:$0xf]
        %v1753 = vld [vmem:[%s17 + $0x70] sm:$0xf]
        %v1754 = vld [vmem:[%s17 + $0x74] sm:$0xf]
        %v1755 = vld [vmem:[%s17 + $0x78] sm:$0xf]
        %v1756 = vld [vmem:[%s17 + $0x7c] sm:$0xf]
        %v1757 = vld [vmem:[%s17 + $0x80] sm:$0xf]
        %v1758 = vld [vmem:[%s17 + $0x84] sm:$0xf]
        %v1759 = vld [vmem:[%s17 + $0x88] sm:$0xf]
        %v1760 = vld [vmem:[%s17 + $0x8c] sm:$0xf]
        %v1761 = vld [vmem:[%s17 + $0x90] sm:$0xf]
        %v1762 = vld [vmem:[%s17 + $0x94] sm:$0xf]
        %v1763 = vld [vmem:[%s17 + $0x98] sm:$0xf]
        %v1764 = vld [vmem:[%s17 + $0x9c] sm:$0xf]
        %v1765 = vld [vmem:[%s17 + $0xa0] sm:$0xf]
        %v1766 = vld [vmem:[%s17 + $0xa4] sm:$0xf]
        %v1767 = vld [vmem:[%s17 + $0xa8] sm:$0xf]
        %v1768 = vld [vmem:[%s17 + $0xac] sm:$0xf]
        %v1769 = vld [vmem:[%s17 + $0xb0] sm:$0xf]
        %v1770 = vld [vmem:[%s17 + $0xb4] sm:$0xf]
        %v1771 = vld [vmem:[%s17 + $0xb8] sm:$0xf]
        %v1772 = vld [vmem:[%s17 + $0xbc] sm:$0xf]
        %v1773 = vld [vmem:[%s17 + $0xc0] sm:$0xf]
        %v1774 = vld [vmem:[%s17 + $0xc4] sm:$0xf]
        %v1775 = vld [vmem:[%s17 + $0xc8] sm:$0xf]
        %v1776 = vld [vmem:[%s17 + $0xcc] sm:$0xf]
        %v1777 = vld [vmem:[%s17 + $0xd0] sm:$0xf]
        %v1778 = vld [vmem:[%s17 + $0xd4] sm:$0xf]
        %v1779 = vld [vmem:[%s17 + $0xd8] sm:$0xf]
        %v1780 = vld [vmem:[%s17 + $0xdc] sm:$0xf]
        %v1781 = vld [vmem:[%s17 + $0xe0] sm:$0xf]
        %v1782 = vld [vmem:[%s17 + $0xe4] sm:$0xf]
        %v1783 = vld [vmem:[%s17 + $0xe8] sm:$0xf]
        %v1784 = vld [vmem:[%s17 + $0xec] sm:$0xf]
        %v1785 = vld [vmem:[%s17 + $0xf0] sm:$0xf]
        %v1786 = vld [vmem:[%s17 + $0xf4] sm:$0xf]
        %v1787 = vld [vmem:[%s17 + $0xf8] sm:$0xf]
        %v1788 = vld [vmem:[%s17 + $0xfc] sm:$0xf]
        %v1789 = vld [vmem:[%s19] sm:$0xf]
        %vm1790 = vcmask 31744
        %v1791 = vsel %vm1790, %v1699, 0
        %v1794 = vsel %vm1282, %v1789, 0
        %1796 = vmatpush.msra.mxu0 0.0
        %1797 = vmatpush.msra.mxu0 0.0
        %1798 = vmatpush.msra.mxu0 0.0
        %1799 = vmatpush.msra.mxu0 0.0
        %1800 = vmatpush.msra.mxu0 0.0
        %1801 = vmatpush.msra.mxu0 0.0
        %1802 = vmatpush.msra.mxu0 0.0
        %1803 = vmatpush.msra.mxu0 0.0
        %1804 = vmatpush.msra.mxu0 0.0
        %1805 = vmatpush.msra.mxu0 0.0
        %1806 = vmatpush.msra.mxu0 0.0
        %1807 = vmatpush.msra.mxu0 0.0
        %1808 = vmatpush.msra.mxu0 0.0
        %1809 = vmatpush.msra.mxu0 0.0
        %1810 = vmatpush.msra.mxu0 0.0
        %1811 = vmatpush.msra.mxu0 %v1794
        %1812 = vmatmul.f32.gmra.mxu0 %v1791
        %v1813 = vpop.f32.mrf.mxu0
        %v1814 = vadd.f32 0.0, %v1813
        %1815 = vdwg.mxu0
        %v1880 = vunpack.c.l.b16 %v1725
        %v1881 = vunpack.c.l.b16 %v1726
        %v1882 = vunpack.c.l.b16 %v1727
        %v1883 = vunpack.c.l.b16 %v1728
        %v1884 = vunpack.c.l.b16 %v1729
        %v1885 = vunpack.c.l.b16 %v1730
        %v1886 = vunpack.c.l.b16 %v1731
        %v1887 = vunpack.c.l.b16 %v1732
        %v1888 = vunpack.c.l.b16 %v1733
        %v1889 = vunpack.c.l.b16 %v1734
        %v1890 = vunpack.c.l.b16 %v1735
        %v1891 = vunpack.c.l.b16 %v1736
        %v1892 = vunpack.c.l.b16 %v1737
        %v1893 = vunpack.c.l.b16 %v1738
        %v1894 = vunpack.c.l.b16 %v1739
        %v1895 = vunpack.c.l.b16 %v1740
        %v1896 = vunpack.c.l.b16 %v1741
        %v1897 = vunpack.c.l.b16 %v1742
        %v1898 = vunpack.c.l.b16 %v1743
        %v1899 = vunpack.c.l.b16 %v1744
        %v1900 = vunpack.c.l.b16 %v1745
        %v1901 = vunpack.c.l.b16 %v1746
        %v1902 = vunpack.c.l.b16 %v1747
        %v1903 = vunpack.c.l.b16 %v1748
        %v1904 = vunpack.c.l.b16 %v1749
        %v1905 = vunpack.c.l.b16 %v1750
        %v1906 = vunpack.c.l.b16 %v1751
        %v1907 = vunpack.c.l.b16 %v1752
        %v1908 = vunpack.c.l.b16 %v1753
        %v1909 = vunpack.c.l.b16 %v1754
        %v1910 = vunpack.c.l.b16 %v1755
        %v1911 = vunpack.c.l.b16 %v1756
        %v1912 = vunpack.c.l.b16 %v1757
        %v1913 = vunpack.c.l.b16 %v1758
        %v1914 = vunpack.c.l.b16 %v1759
        %v1915 = vunpack.c.l.b16 %v1760
        %v1916 = vunpack.c.l.b16 %v1761
        %v1917 = vunpack.c.l.b16 %v1762
        %v1918 = vunpack.c.l.b16 %v1763
        %v1919 = vunpack.c.l.b16 %v1764
        %v1920 = vunpack.c.l.b16 %v1765
        %v1921 = vunpack.c.l.b16 %v1766
        %v1922 = vunpack.c.l.b16 %v1767
        %v1923 = vunpack.c.l.b16 %v1768
        %v1924 = vunpack.c.l.b16 %v1769
        %v1925 = vunpack.c.l.b16 %v1770
        %v1926 = vunpack.c.l.b16 %v1771
        %v1927 = vunpack.c.l.b16 %v1772
        %v1928 = vunpack.c.l.b16 %v1773
        %v1929 = vunpack.c.l.b16 %v1774
        %v1930 = vunpack.c.l.b16 %v1775
        %v1931 = vunpack.c.l.b16 %v1776
        %v1932 = vunpack.c.l.b16 %v1777
        %v1933 = vunpack.c.l.b16 %v1778
        %v1934 = vunpack.c.l.b16 %v1779
        %v1935 = vunpack.c.l.b16 %v1780
        %v1936 = vunpack.c.l.b16 %v1781
        %v1937 = vunpack.c.l.b16 %v1782
        %v1938 = vunpack.c.l.b16 %v1783
        %v1939 = vunpack.c.l.b16 %v1784
        %v1940 = vunpack.c.l.b16 %v1785
        %v1941 = vunpack.c.l.b16 %v1786
        %v1942 = vunpack.c.l.b16 %v1787
        %v1943 = vunpack.c.l.b16 %v1788
        %v1944 = vpack.c.b16 %v1881, %v1880
        %v1945 = vpack.c.b16 %v1883, %v1882
        %v1946 = vpack.c.b16 %v1885, %v1884
        %v1947 = vpack.c.b16 %v1887, %v1886
        %v1948 = vpack.c.b16 %v1889, %v1888
        %v1949 = vpack.c.b16 %v1891, %v1890
        %v1950 = vpack.c.b16 %v1893, %v1892
        %v1951 = vpack.c.b16 %v1895, %v1894
        %v1952 = vpack.c.b16 %v1897, %v1896
        %v1953 = vpack.c.b16 %v1899, %v1898
        %v1954 = vpack.c.b16 %v1901, %v1900
        %v1955 = vpack.c.b16 %v1903, %v1902
        %v1956 = vpack.c.b16 %v1905, %v1904
        %v1957 = vpack.c.b16 %v1907, %v1906
        %v1958 = vpack.c.b16 %v1909, %v1908
        %v1959 = vpack.c.b16 %v1911, %v1910
        %v1960 = vpack.c.b16 %v1913, %v1912
        %v1961 = vpack.c.b16 %v1915, %v1914
        %v1962 = vpack.c.b16 %v1917, %v1916
        %v1963 = vpack.c.b16 %v1919, %v1918
        %v1964 = vpack.c.b16 %v1921, %v1920
        %v1965 = vpack.c.b16 %v1923, %v1922
        %v1966 = vpack.c.b16 %v1925, %v1924
        %v1967 = vpack.c.b16 %v1927, %v1926
        %v1968 = vpack.c.b16 %v1929, %v1928
        %v1969 = vpack.c.b16 %v1931, %v1930
        %v1970 = vpack.c.b16 %v1933, %v1932
        %v1971 = vpack.c.b16 %v1935, %v1934
        %v1972 = vpack.c.b16 %v1937, %v1936
        %v1973 = vpack.c.b16 %v1939, %v1938
        %v1974 = vpack.c.b16 %v1941, %v1940
        %v1975 = vpack.c.b16 %v1943, %v1942
        %2008 = vmatpush.bf16.msra.mxu0 %v1951
        %2009 = vmatpush.bf16.msra.mxu0 %v1950
        %2010 = vmatpush.bf16.msra.mxu0 %v1949
        %2011 = vmatpush.bf16.msra.mxu0 %v1948
        %2012 = vmatpush.bf16.msra.mxu0 %v1947
        %2013 = vmatpush.bf16.msra.mxu0 %v1946
        %2014 = vmatpush.bf16.msra.mxu0 %v1945
        %2015 = vmatpush.bf16.msra.mxu0 %v1944
        %2016 = vmatmul.bf16.gmra.mxu0 %v1721
        %v2017 = vpop.f32.mrf.mxu0
        %v2018 = vadd.f32 %v1814, %v2017
        %v2019 = vpop.f32.mrf.mxu0
        %2020 = vdwg.mxu0
        %2021 = vmatpush.bf16.msra.mxu0 %v1959
        %2022 = vmatpush.bf16.msra.mxu0 %v1958
        %2023 = vmatpush.bf16.msra.mxu0 %v1957
        %2024 = vmatpush.bf16.msra.mxu0 %v1956
        %2025 = vmatpush.bf16.msra.mxu0 %v1955
        %2026 = vmatpush.bf16.msra.mxu0 %v1954
        %2027 = vmatpush.bf16.msra.mxu0 %v1953
        %2028 = vmatpush.bf16.msra.mxu0 %v1952
        %2029 = vmatmul.bf16.gmra.mxu0 %v1722
        %v2030 = vpop.f32.mrf.mxu0
        %v2031 = vadd.f32 %v2018, %v2030
        %v2032 = vpop.f32.mrf.mxu0
        %2033 = vdwg.mxu0
        %2034 = vmatpush.bf16.msra.mxu0 %v1967
        %2035 = vmatpush.bf16.msra.mxu0 %v1966
        %2036 = vmatpush.bf16.msra.mxu0 %v1965
        %2037 = vmatpush.bf16.msra.mxu0 %v1964
        %2038 = vmatpush.bf16.msra.mxu0 %v1963
        %2039 = vmatpush.bf16.msra.mxu0 %v1962
        %2040 = vmatpush.bf16.msra.mxu0 %v1961
        %2041 = vmatpush.bf16.msra.mxu0 %v1960
        %2042 = vmatmul.bf16.gmra.mxu0 %v1723
        %v2043 = vpop.f32.mrf.mxu0
        %v2044 = vadd.f32 %v2031, %v2043
        %v2045 = vpop.f32.mrf.mxu0
        %2046 = vdwg.mxu0
        %2047 = vmatpush.bf16.msra.mxu0 %v1975
        %2048 = vmatpush.bf16.msra.mxu0 %v1974
        %2049 = vmatpush.bf16.msra.mxu0 %v1973
        %2050 = vmatpush.bf16.msra.mxu0 %v1972
        %2051 = vmatpush.bf16.msra.mxu0 %v1971
        %2052 = vmatpush.bf16.msra.mxu0 %v1970
        %2053 = vmatpush.bf16.msra.mxu0 %v1969
        %2054 = vmatpush.bf16.msra.mxu0 %v1968
        %2055 = vmatmul.bf16.gmra.mxu0 %v1724
        %v2056 = vpop.f32.mrf.mxu0
        %v2057 = vadd.f32 %v2044, %v2056
        %v2058 = vpop.f32.mrf.mxu0
        %2059 = vdwg.mxu0
        %v2060 = vadd.f32 %v1523, %v2057
        %v2061 = vld [vmem:[%s7 + $0x2] sm:$0x1]
        %v2062 = vld [vmem:[%s7 + $0x3] sm:$0x1]
        %v2063 = vmul.f32 %v2060, %v2060
        %v2064 = vsel %vm1180, %v2063, 0.0
        %2065 = vadd.xlane.f32.xlu0 %v2064
        %v2066 = vpop.xlane.xlu0 %2065
        %v2067 = vmul.f32 %v2066, %v1190
        %v2068 = vadd.f32 %v2067, 1e-06
        %v2069 = vrsqrt.pop %v2068
        %v2070 = vmul.f32 %v2069, %v2068
        %v2071 = vmul.f32 %v2070, %v2069
        %v2072 = vmul.f32 0.5, %v2071
        %v2073 = vsub.f32 1.5, %v2072
        %v2074 = vmul.f32 %v2069, %v2073
        %vm2075 = vweird.f32 %v2068
        %vm2076 = vweird.f32 %v2069
        %vm2077 = vmor %vm2075, %vm2076
        %v2078 = vsel %vm2077, %v2069, %v2074
        %v2079 = vmul.f32 %v2060, %v2078
        %v2080 = vperm.slane %v2061, 0
        %v2081 = vmul.f32 %v2079, %v2080
        %v2082 = vpack.c.bf16 %v2081, %v2081
        %s2083 = scalar_lea.vmem %s9, 16
        %v2084 = vld [vmem:[%s2083] sm:$0xf]
        %v2085 = vld [vmem:[%s2083 + $0x4] sm:$0xf]
        %v2086 = vld [vmem:[%s2083 + $0x8] sm:$0xf]
        %v2087 = vld [vmem:[%s2083 + $0xc] sm:$0xf]
        %v2092 = vunpack.c.l.b16 %v2084
        %v2093 = vunpack.c.l.b16 %v2085
        %v2094 = vunpack.c.l.b16 %v2086
        %v2095 = vunpack.c.l.b16 %v2087
        %v2096 = vpack.c.b16 %v2093, %v2092
        %v2097 = vpack.c.b16 %v2095, %v2094
        %v2101 = vsel %vm1180, %v2082, 0
        %2103 = vmatpush.bf16.msra.mxu0 0
        %2104 = vmatpush.bf16.msra.mxu0 0
        %2105 = vmatpush.bf16.msra.mxu0 0
        %2106 = vmatpush.bf16.msra.mxu0 0
        %2107 = vmatpush.bf16.msra.mxu0 0
        %2108 = vmatpush.bf16.msra.mxu0 0
        %2109 = vmatpush.bf16.msra.mxu0 %v2097
        %2110 = vmatpush.bf16.msra.mxu0 %v2096
        %2111 = vmatmul.bf16.gmra.mxu0 %v2101
        %v2112 = vpop.f32.mrf.mxu0
        %v2113 = vadd.f32 0.0, %v2112
        %v2114 = vpop.f32.mrf.mxu0
        %2115 = vdwg.mxu0
        %v2116 = vpack.c.bf16 %v2113, %v2113
        %2118 = vrot.lane.b32.xlu0 %v2116, 96
        %v2119 = vpop.permute.xlu0 %2118
        %v2121 = vsel %vm1243, %v2116, 0
        %v2124 = vsel %vm1243, %v2119, 0
        %2126 = vmatpush.bf16.xpose.msra.mxu0 0
        %2127 = vmatpush.bf16.xpose.msra.mxu0 0
        %2128 = vmatpush.bf16.xpose.msra.mxu0 0
        %2129 = vmatpush.bf16.xpose.msra.mxu0 0
        %2130 = vmatpush.bf16.xpose.msra.mxu0 0
        %2131 = vmatpush.bf16.xpose.msra.mxu0 0
        %2132 = vmatpush.bf16.xpose.msra.mxu0 0
        %2133 = vmatpush.bf16.xpose.msra.mxu0 %v2124
        %2134 = vmatmul.bf16.gmra.mxu0 %v2121
        %v2135 = vpop.f32.mrf.mxu0
        %v2136 = vadd.f32 0.0, %v2135
        %v2137 = vpop.f32.mrf.mxu0
        %2138 = vdwg.mxu0
        %v2139 = vmul.f32 %v2136, 0.35355338
        %v2140 = vadd.f32 %v2139, %v1170
        %v2141 = vsel %vm1243, %v2140, -inf
        %2142 = vmax.xlane.f32.xlu0 %v2141
        %v2143 = vpop.xlane.xlu0 %2142
        %v2144 = vsub.f32 %v2140, %v2143
        %v2145 = vmul.f32 %v2144, 1.442695
        %v2146 = vpow.pop %v2145
        %v2147 = vsel %vm1243, %v2146, 0.0
        %2148 = vadd.xlane.f32.xlu0 %v2147
        %v2149 = vpop.xlane.xlu0 %2148
        %v2150 = vrcp.pop %v2149
        %v2151 = vmul.f32 %v2146, %v2150
        %v2152 = vpack.c.bf16 %v2151, %v2151
        %2153 = vrot.lane.b32.xlu0 %v2116, 64
        %v2154 = vpop.permute.xlu0 %2153
        %v2156 = vsel %vm1243, %v2152, 0
        %v2159 = vsel %vm1282, %v2154, 0
        %2161 = vmatpush.bf16.msra.mxu0 0
        %2162 = vmatpush.bf16.msra.mxu0 0
        %2163 = vmatpush.bf16.msra.mxu0 0
        %2164 = vmatpush.bf16.msra.mxu0 0
        %2165 = vmatpush.bf16.msra.mxu0 0
        %2166 = vmatpush.bf16.msra.mxu0 0
        %2167 = vmatpush.bf16.msra.mxu0 0
        %2168 = vmatpush.bf16.msra.mxu0 %v2159
        %2169 = vmatmul.bf16.gmra.mxu0 %v2156
        %v2170 = vpop.f32.mrf.mxu0
        %v2171 = vadd.f32 0.0, %v2170
        %v2172 = vpop.f32.mrf.mxu0
        %2173 = vdwg.mxu0
        %2174 = vrot.lane.b32.xlu0 %v2116, 120
        %v2175 = vpop.permute.xlu0 %2174
        %2176 = vrot.lane.b32.xlu0 %v2116, 88
        %v2177 = vpop.permute.xlu0 %2176
        %v2179 = vsel %vm1243, %v2175, 0
        %v2182 = vsel %vm1243, %v2177, 0
        %2184 = vmatpush.bf16.xpose.msra.mxu0 0
        %2185 = vmatpush.bf16.xpose.msra.mxu0 0
        %2186 = vmatpush.bf16.xpose.msra.mxu0 0
        %2187 = vmatpush.bf16.xpose.msra.mxu0 0
        %2188 = vmatpush.bf16.xpose.msra.mxu0 0
        %2189 = vmatpush.bf16.xpose.msra.mxu0 0
        %2190 = vmatpush.bf16.xpose.msra.mxu0 0
        %2191 = vmatpush.bf16.xpose.msra.mxu0 %v2182
        %2192 = vmatmul.bf16.gmra.mxu0 %v2179
        %v2193 = vpop.f32.mrf.mxu0
        %v2194 = vadd.f32 0.0, %v2193
        %v2195 = vpop.f32.mrf.mxu0
        %2196 = vdwg.mxu0
        %v2197 = vmul.f32 %v2194, 0.35355338
        %v2198 = vadd.f32 %v2197, %v1172
        %v2199 = vsel %vm1243, %v2198, -inf
        %2200 = vmax.xlane.f32.xlu0 %v2199
        %v2201 = vpop.xlane.xlu0 %2200
        %v2202 = vsub.f32 %v2198, %v2201
        %v2203 = vmul.f32 %v2202, 1.442695
        %v2204 = vpow.pop %v2203
        %v2205 = vsel %vm1243, %v2204, 0.0
        %2206 = vadd.xlane.f32.xlu0 %v2205
        %v2207 = vpop.xlane.xlu0 %2206
        %v2208 = vrcp.pop %v2207
        %v2209 = vmul.f32 %v2204, %v2208
        %v2210 = vpack.c.bf16 %v2209, %v2209
        %2211 = vrot.lane.b32.xlu0 %v2116, 56
        %v2212 = vpop.permute.xlu0 %2211
        %v2214 = vsel %vm1243, %v2210, 0
        %v2217 = vsel %vm1282, %v2212, 0
        %2219 = vmatpush.bf16.msra.mxu0 0
        %2220 = vmatpush.bf16.msra.mxu0 0
        %2221 = vmatpush.bf16.msra.mxu0 0
        %2222 = vmatpush.bf16.msra.mxu0 0
        %2223 = vmatpush.bf16.msra.mxu0 0
        %2224 = vmatpush.bf16.msra.mxu0 0
        %2225 = vmatpush.bf16.msra.mxu0 0
        %2226 = vmatpush.bf16.msra.mxu0 %v2217
        %2227 = vmatmul.bf16.gmra.mxu0 %v2214
        %v2228 = vpop.f32.mrf.mxu0
        %v2229 = vadd.f32 0.0, %v2228
        %v2230 = vpop.f32.mrf.mxu0
        %2231 = vdwg.mxu0
        %2232 = vrot.lane.b32.xlu0 %v2116, 112
        %v2233 = vpop.permute.xlu0 %2232
        %2234 = vrot.lane.b32.xlu0 %v2116, 80
        %v2235 = vpop.permute.xlu0 %2234
        %v2237 = vsel %vm1243, %v2233, 0
        %v2240 = vsel %vm1243, %v2235, 0
        %2242 = vmatpush.bf16.xpose.msra.mxu0 0
        %2243 = vmatpush.bf16.xpose.msra.mxu0 0
        %2244 = vmatpush.bf16.xpose.msra.mxu0 0
        %2245 = vmatpush.bf16.xpose.msra.mxu0 0
        %2246 = vmatpush.bf16.xpose.msra.mxu0 0
        %2247 = vmatpush.bf16.xpose.msra.mxu0 0
        %2248 = vmatpush.bf16.xpose.msra.mxu0 0
        %2249 = vmatpush.bf16.xpose.msra.mxu0 %v2240
        %2250 = vmatmul.bf16.gmra.mxu0 %v2237
        %v2251 = vpop.f32.mrf.mxu0
        %v2252 = vadd.f32 0.0, %v2251
        %v2253 = vpop.f32.mrf.mxu0
        %2254 = vdwg.mxu0
        %v2255 = vmul.f32 %v2252, 0.35355338
        %v2256 = vadd.f32 %v2255, %v1174
        %v2257 = vsel %vm1243, %v2256, -inf
        %2258 = vmax.xlane.f32.xlu0 %v2257
        %v2259 = vpop.xlane.xlu0 %2258
        %v2260 = vsub.f32 %v2256, %v2259
        %v2261 = vmul.f32 %v2260, 1.442695
        %v2262 = vpow.pop %v2261
        %v2263 = vsel %vm1243, %v2262, 0.0
        %2264 = vadd.xlane.f32.xlu0 %v2263
        %v2265 = vpop.xlane.xlu0 %2264
        %v2266 = vrcp.pop %v2265
        %v2267 = vmul.f32 %v2262, %v2266
        %v2268 = vpack.c.bf16 %v2267, %v2267
        %2269 = vrot.lane.b32.xlu0 %v2116, 48
        %v2270 = vpop.permute.xlu0 %2269
        %v2272 = vsel %vm1243, %v2268, 0
        %v2275 = vsel %vm1282, %v2270, 0
        %2277 = vmatpush.bf16.msra.mxu0 0
        %2278 = vmatpush.bf16.msra.mxu0 0
        %2279 = vmatpush.bf16.msra.mxu0 0
        %2280 = vmatpush.bf16.msra.mxu0 0
        %2281 = vmatpush.bf16.msra.mxu0 0
        %2282 = vmatpush.bf16.msra.mxu0 0
        %2283 = vmatpush.bf16.msra.mxu0 0
        %2284 = vmatpush.bf16.msra.mxu0 %v2275
        %2285 = vmatmul.bf16.gmra.mxu0 %v2272
        %v2286 = vpop.f32.mrf.mxu0
        %v2287 = vadd.f32 0.0, %v2286
        %v2288 = vpop.f32.mrf.mxu0
        %2289 = vdwg.mxu0
        %2290 = vrot.lane.b32.xlu0 %v2116, 104
        %v2291 = vpop.permute.xlu0 %2290
        %2292 = vrot.lane.b32.xlu0 %v2116, 72
        %v2293 = vpop.permute.xlu0 %2292
        %v2295 = vsel %vm1243, %v2291, 0
        %v2298 = vsel %vm1243, %v2293, 0
        %2300 = vmatpush.bf16.xpose.msra.mxu0 0
        %2301 = vmatpush.bf16.xpose.msra.mxu0 0
        %2302 = vmatpush.bf16.xpose.msra.mxu0 0
        %2303 = vmatpush.bf16.xpose.msra.mxu0 0
        %2304 = vmatpush.bf16.xpose.msra.mxu0 0
        %2305 = vmatpush.bf16.xpose.msra.mxu0 0
        %2306 = vmatpush.bf16.xpose.msra.mxu0 0
        %2307 = vmatpush.bf16.xpose.msra.mxu0 %v2298
        %2308 = vmatmul.bf16.gmra.mxu0 %v2295
        %v2309 = vpop.f32.mrf.mxu0
        %v2310 = vadd.f32 0.0, %v2309
        %v2311 = vpop.f32.mrf.mxu0
        %2312 = vdwg.mxu0
        %v2313 = vmul.f32 %v2310, 0.35355338
        %v2314 = vadd.f32 %v2313, %v1176
        %v2315 = vsel %vm1243, %v2314, -inf
        %2316 = vmax.xlane.f32.xlu0 %v2315
        %v2317 = vpop.xlane.xlu0 %2316
        %v2318 = vsub.f32 %v2314, %v2317
        %v2319 = vmul.f32 %v2318, 1.442695
        %v2320 = vpow.pop %v2319
        %v2321 = vsel %vm1243, %v2320, 0.0
        %2322 = vadd.xlane.f32.xlu0 %v2321
        %v2323 = vpop.xlane.xlu0 %2322
        %v2324 = vrcp.pop %v2323
        %v2325 = vmul.f32 %v2320, %v2324
        %v2326 = vpack.c.bf16 %v2325, %v2325
        %2327 = vrot.lane.b32.xlu0 %v2116, 40
        %v2328 = vpop.permute.xlu0 %2327
        %v2330 = vsel %vm1243, %v2326, 0
        %v2333 = vsel %vm1282, %v2328, 0
        %2335 = vmatpush.bf16.msra.mxu0 0
        %2336 = vmatpush.bf16.msra.mxu0 0
        %2337 = vmatpush.bf16.msra.mxu0 0
        %2338 = vmatpush.bf16.msra.mxu0 0
        %2339 = vmatpush.bf16.msra.mxu0 0
        %2340 = vmatpush.bf16.msra.mxu0 0
        %2341 = vmatpush.bf16.msra.mxu0 0
        %2342 = vmatpush.bf16.msra.mxu0 %v2333
        %2343 = vmatmul.bf16.gmra.mxu0 %v2330
        %v2344 = vpop.f32.mrf.mxu0
        %v2345 = vadd.f32 0.0, %v2344
        %v2346 = vpop.f32.mrf.mxu0
        %2347 = vdwg.mxu0
        %2349 = vrot.lane.b32.xlu0 %v2229, 8
        %v2350 = vpop.permute.xlu0 %2349
        %2353 = vrot.lane.b32.xlu0 %v2287, 16
        %v2354 = vpop.permute.xlu0 %2353
        %2357 = vrot.lane.b32.xlu0 %v2345, 24
        %v2358 = vpop.permute.xlu0 %2357
        %v2360 = vsel %vm1243, %v2171, %v2350
        %v2361 = vsel %vm1486, %v2360, %v2354
        %v2362 = vsel %vm1488, %v2361, %v2358
        %v2363 = vpack.c.bf16 %v2362, %v2362
        %s2364 = scalar_lea.vmem %s11, 16
        %v2365 = vld [vmem:[%s2364] sm:$0xf]
        %v2366 = vld [vmem:[%s2364 + $0x4] sm:$0xf]
        %v2367 = vld [vmem:[%s2364 + $0x8] sm:$0xf]
        %v2368 = vld [vmem:[%s2364 + $0xc] sm:$0xf]
        %v2373 = vunpack.c.l.b16 %v2365
        %v2374 = vunpack.c.l.b16 %v2366
        %v2375 = vunpack.c.l.b16 %v2367
        %v2376 = vunpack.c.l.b16 %v2368
        %v2377 = vpack.c.b16 %v2374, %v2373
        %v2378 = vpack.c.b16 %v2376, %v2375
        %v2382 = vsel %vm1180, %v2363, 0
        %2384 = vmatpush.bf16.msra.mxu0 0
        %2385 = vmatpush.bf16.msra.mxu0 0
        %2386 = vmatpush.bf16.msra.mxu0 0
        %2387 = vmatpush.bf16.msra.mxu0 0
        %2388 = vmatpush.bf16.msra.mxu0 0
        %2389 = vmatpush.bf16.msra.mxu0 0
        %2390 = vmatpush.bf16.msra.mxu0 %v2378
        %2391 = vmatpush.bf16.msra.mxu0 %v2377
        %2392 = vmatmul.bf16.gmra.mxu0 %v2382
        %v2393 = vpop.f32.mrf.mxu0
        %v2394 = vadd.f32 0.0, %v2393
        %v2395 = vpop.f32.mrf.mxu0
        %2396 = vdwg.mxu0
        %v2397 = vadd.f32 %v2060, %v2394
        %v2398 = vmul.f32 %v2397, %v2397
        %v2399 = vsel %vm1180, %v2398, 0.0
        %2400 = vadd.xlane.f32.xlu0 %v2399
        %v2401 = vpop.xlane.xlu0 %2400
        %v2402 = vmul.f32 %v2401, %v1190
        %v2403 = vadd.f32 %v2402, 1e-06
        %v2404 = vrsqrt.pop %v2403
        %v2405 = vmul.f32 %v2404, %v2403
        %v2406 = vmul.f32 %v2405, %v2404
        %v2407 = vmul.f32 0.5, %v2406
        %v2408 = vsub.f32 1.5, %v2407
        %v2409 = vmul.f32 %v2404, %v2408
        %vm2410 = vweird.f32 %v2403
        %vm2411 = vweird.f32 %v2404
        %vm2412 = vmor %vm2410, %vm2411
        %v2413 = vsel %vm2412, %v2404, %v2409
        %v2414 = vmul.f32 %v2397, %v2413
        %v2415 = vperm.slane %v2062, 0
        %v2416 = vmul.f32 %v2414, %v2415
        %v2417 = vpack.c.bf16 %v2416, %v2416
        %v2418 = vld [vmem:[%s21] sm:$0xf]
        %v2419 = vld [vmem:[%s21 + $0x4] sm:$0xf]
        %v2420 = vld [vmem:[%s21 + $0x8] sm:$0xf]
        %v2421 = vld [vmem:[%s21 + $0xc] sm:$0xf]
        %v2422 = vld [vmem:[%s23] sm:$0x1]
        %v2424 = vperm.slane %v2422, 0
        %v2430 = vunpack.c.l.b16 %v2418
        %v2431 = vunpack.c.l.b16 %v2419
        %v2432 = vunpack.c.l.b16 %v2420
        %v2433 = vunpack.c.l.b16 %v2421
        %v2434 = vpack.c.b16 %v2431, %v2430
        %v2435 = vpack.c.b16 %v2433, %v2432
        %v2439 = vsel %vm1180, %v2417, 0
        %2441 = vmatpush.bf16.msra.mxu0 0
        %2442 = vmatpush.bf16.msra.mxu0 0
        %2443 = vmatpush.bf16.msra.mxu0 0
        %2444 = vmatpush.bf16.msra.mxu0 0
        %2445 = vmatpush.bf16.msra.mxu0 0
        %2446 = vmatpush.bf16.msra.mxu0 0
        %2447 = vmatpush.bf16.msra.mxu0 %v2435
        %2448 = vmatpush.bf16.msra.mxu0 %v2434
        %2449 = vmatmul.bf16.gmra.mxu0 %v2439
        %v2450 = vpop.f32.mrf.mxu0
        %v2451 = vadd.f32 %v2424, %v2450
        %v2452 = vpop.f32.mrf.mxu0
        %2453 = vdwg.mxu0
        %v2454 = vmul.f32 %v2451, 0.5
        %v2455 = vmul.f32 %v2451, 0.044715
        %v2456 = vmul.f32 %v2455, %v2451
        %v2457 = vmul.f32 %v2456, %v2451
        %v2458 = vadd.f32 %v2451, %v2457
        %v2459 = vmul.f32 %v2458, 0.7978846
        %v2460 = vtanh.pop %v2459
        %v2461 = vadd.f32 %v2460, 1.0
        %v2462 = vmul.f32 %v2454, %v2461
        %v2463 = vpack.c.bf16 %v2462, %v2462
        %v2464 = vld [vmem:[%s25] sm:$0xf]
        %v2465 = vld [vmem:[%s25 + $0x4] sm:$0xf]
        %v2466 = vld [vmem:[%s25 + $0x8] sm:$0xf]
        %v2467 = vld [vmem:[%s25 + $0xc] sm:$0xf]
        %v2468 = vld [vmem:[%s25 + $0x10] sm:$0xf]
        %v2469 = vld [vmem:[%s25 + $0x14] sm:$0xf]
        %v2470 = vld [vmem:[%s25 + $0x18] sm:$0xf]
        %v2471 = vld [vmem:[%s25 + $0x1c] sm:$0xf]
        %v2472 = vld [vmem:[%s25 + $0x20] sm:$0xf]
        %v2473 = vld [vmem:[%s25 + $0x24] sm:$0xf]
        %v2474 = vld [vmem:[%s25 + $0x28] sm:$0xf]
        %v2475 = vld [vmem:[%s25 + $0x2c] sm:$0xf]
        %v2476 = vld [vmem:[%s25 + $0x30] sm:$0xf]
        %v2477 = vld [vmem:[%s25 + $0x34] sm:$0xf]
        %v2478 = vld [vmem:[%s25 + $0x38] sm:$0xf]
        %v2479 = vld [vmem:[%s25 + $0x3c] sm:$0xf]
        %v2480 = vld [vmem:[%s27] sm:$0x1]
        %v2482 = vperm.slane %v2480, 0
        %v2500 = vunpack.c.l.b16 %v2464
        %v2501 = vunpack.c.l.b16 %v2465
        %v2502 = vunpack.c.l.b16 %v2466
        %v2503 = vunpack.c.l.b16 %v2467
        %v2504 = vunpack.c.l.b16 %v2468
        %v2505 = vunpack.c.l.b16 %v2469
        %v2506 = vunpack.c.l.b16 %v2470
        %v2507 = vunpack.c.l.b16 %v2471
        %v2508 = vunpack.c.l.b16 %v2472
        %v2509 = vunpack.c.l.b16 %v2473
        %v2510 = vunpack.c.l.b16 %v2474
        %v2511 = vunpack.c.l.b16 %v2475
        %v2512 = vunpack.c.l.b16 %v2476
        %v2513 = vunpack.c.l.b16 %v2477
        %v2514 = vunpack.c.l.b16 %v2478
        %v2515 = vunpack.c.l.b16 %v2479
        %v2516 = vpack.c.b16 %v2501, %v2500
        %v2517 = vpack.c.b16 %v2503, %v2502
        %v2518 = vpack.c.b16 %v2505, %v2504
        %v2519 = vpack.c.b16 %v2507, %v2506
        %v2520 = vpack.c.b16 %v2509, %v2508
        %v2521 = vpack.c.b16 %v2511, %v2510
        %v2522 = vpack.c.b16 %v2513, %v2512
        %v2523 = vpack.c.b16 %v2515, %v2514
        %2532 = vmatpush.bf16.msra.mxu0 %v2523
        %2533 = vmatpush.bf16.msra.mxu0 %v2522
        %2534 = vmatpush.bf16.msra.mxu0 %v2521
        %2535 = vmatpush.bf16.msra.mxu0 %v2520
        %2536 = vmatpush.bf16.msra.mxu0 %v2519
        %2537 = vmatpush.bf16.msra.mxu0 %v2518
        %2538 = vmatpush.bf16.msra.mxu0 %v2517
        %2539 = vmatpush.bf16.msra.mxu0 %v2516
        %2540 = vmatmul.bf16.gmra.mxu0 %v2463
        %v2541 = vpop.f32.mrf.mxu0
        %v2542 = vadd.f32 %v2482, %v2541
        %v2543 = vpop.f32.mrf.mxu0
        %2544 = vdwg.mxu0
        %v2545 = vadd.f32 %v2397, %v2542
        %v2546 = vld [vmem:[%s7 + $0x4] sm:$0x1]
        %v2547 = vld [vmem:[%s7 + $0x5] sm:$0x1]
        %v2548 = vmul.f32 %v2545, %v2545
        %v2549 = vsel %vm1180, %v2548, 0.0
        %2550 = vadd.xlane.f32.xlu0 %v2549
        %v2551 = vpop.xlane.xlu0 %2550
        %v2552 = vmul.f32 %v2551, %v1190
        %v2553 = vadd.f32 %v2552, 1e-06
        %v2554 = vrsqrt.pop %v2553
        %v2555 = vmul.f32 %v2554, %v2553
        %v2556 = vmul.f32 %v2555, %v2554
        %v2557 = vmul.f32 0.5, %v2556
        %v2558 = vsub.f32 1.5, %v2557
        %v2559 = vmul.f32 %v2554, %v2558
        %vm2560 = vweird.f32 %v2553
        %vm2561 = vweird.f32 %v2554
        %vm2562 = vmor %vm2560, %vm2561
        %v2563 = vsel %vm2562, %v2554, %v2559
        %v2564 = vmul.f32 %v2545, %v2563
        %v2565 = vperm.slane %v2546, 0
        %v2566 = vmul.f32 %v2564, %v2565
        %v2567 = vpack.c.bf16 %v2566, %v2566
        %s2568 = scalar_lea.vmem %s9, 32
        %v2569 = vld [vmem:[%s2568] sm:$0xf]
        %v2570 = vld [vmem:[%s2568 + $0x4] sm:$0xf]
        %v2571 = vld [vmem:[%s2568 + $0x8] sm:$0xf]
        %v2572 = vld [vmem:[%s2568 + $0xc] sm:$0xf]
        %v2577 = vunpack.c.l.b16 %v2569
        %v2578 = vunpack.c.l.b16 %v2570
        %v2579 = vunpack.c.l.b16 %v2571
        %v2580 = vunpack.c.l.b16 %v2572
        %v2581 = vpack.c.b16 %v2578, %v2577
        %v2582 = vpack.c.b16 %v2580, %v2579
        %v2586 = vsel %vm1180, %v2567, 0
        %2588 = vmatpush.bf16.msra.mxu0 0
        %2589 = vmatpush.bf16.msra.mxu0 0
        %2590 = vmatpush.bf16.msra.mxu0 0
        %2591 = vmatpush.bf16.msra.mxu0 0
        %2592 = vmatpush.bf16.msra.mxu0 0
        %2593 = vmatpush.bf16.msra.mxu0 0
        %2594 = vmatpush.bf16.msra.mxu0 %v2582
        %2595 = vmatpush.bf16.msra.mxu0 %v2581
        %2596 = vmatmul.bf16.gmra.mxu0 %v2586
        %v2597 = vpop.f32.mrf.mxu0
        %v2598 = vadd.f32 0.0, %v2597
        %v2599 = vpop.f32.mrf.mxu0
        %2600 = vdwg.mxu0
        %v2601 = vpack.c.bf16 %v2598, %v2598
        %2603 = vrot.lane.b32.xlu0 %v2601, 96
        %v2604 = vpop.permute.xlu0 %2603
        %v2606 = vsel %vm1243, %v2601, 0
        %v2609 = vsel %vm1243, %v2604, 0
        %2611 = vmatpush.bf16.xpose.msra.mxu0 0
        %2612 = vmatpush.bf16.xpose.msra.mxu0 0
        %2613 = vmatpush.bf16.xpose.msra.mxu0 0
        %2614 = vmatpush.bf16.xpose.msra.mxu0 0
        %2615 = vmatpush.bf16.xpose.msra.mxu0 0
        %2616 = vmatpush.bf16.xpose.msra.mxu0 0
        %2617 = vmatpush.bf16.xpose.msra.mxu0 0
        %2618 = vmatpush.bf16.xpose.msra.mxu0 %v2609
        %2619 = vmatmul.bf16.gmra.mxu0 %v2606
        %v2620 = vpop.f32.mrf.mxu0
        %v2621 = vadd.f32 0.0, %v2620
        %v2622 = vpop.f32.mrf.mxu0
        %2623 = vdwg.mxu0
        %v2624 = vmul.f32 %v2621, 0.35355338
        %v2625 = vadd.f32 %v2624, %v1170
        %v2626 = vsel %vm1243, %v2625, -inf
        %2627 = vmax.xlane.f32.xlu0 %v2626
        %v2628 = vpop.xlane.xlu0 %2627
        %v2629 = vsub.f32 %v2625, %v2628
        %v2630 = vmul.f32 %v2629, 1.442695
        %v2631 = vpow.pop %v2630
        %v2632 = vsel %vm1243, %v2631, 0.0
        %2633 = vadd.xlane.f32.xlu0 %v2632
        %v2634 = vpop.xlane.xlu0 %2633
        %v2635 = vrcp.pop %v2634
        %v2636 = vmul.f32 %v2631, %v2635
        %v2637 = vpack.c.bf16 %v2636, %v2636
        %2638 = vrot.lane.b32.xlu0 %v2601, 64
        %v2639 = vpop.permute.xlu0 %2638
        %v2641 = vsel %vm1243, %v2637, 0
        %v2644 = vsel %vm1282, %v2639, 0
        %2646 = vmatpush.bf16.msra.mxu0 0
        %2647 = vmatpush.bf16.msra.mxu0 0
        %2648 = vmatpush.bf16.msra.mxu0 0
        %2649 = vmatpush.bf16.msra.mxu0 0
        %2650 = vmatpush.bf16.msra.mxu0 0
        %2651 = vmatpush.bf16.msra.mxu0 0
        %2652 = vmatpush.bf16.msra.mxu0 0
        %2653 = vmatpush.bf16.msra.mxu0 %v2644
        %2654 = vmatmul.bf16.gmra.mxu0 %v2641
        %v2655 = vpop.f32.mrf.mxu0
        %v2656 = vadd.f32 0.0, %v2655
        %v2657 = vpop.f32.mrf.mxu0
        %2658 = vdwg.mxu0
        %2659 = vrot.lane.b32.xlu0 %v2601, 120
        %v2660 = vpop.permute.xlu0 %2659
        %2661 = vrot.lane.b32.xlu0 %v2601, 88
        %v2662 = vpop.permute.xlu0 %2661
        %v2664 = vsel %vm1243, %v2660, 0
        %v2667 = vsel %vm1243, %v2662, 0
        %2669 = vmatpush.bf16.xpose.msra.mxu0 0
        %2670 = vmatpush.bf16.xpose.msra.mxu0 0
        %2671 = vmatpush.bf16.xpose.msra.mxu0 0
        %2672 = vmatpush.bf16.xpose.msra.mxu0 0
        %2673 = vmatpush.bf16.xpose.msra.mxu0 0
        %2674 = vmatpush.bf16.xpose.msra.mxu0 0
        %2675 = vmatpush.bf16.xpose.msra.mxu0 0
        %2676 = vmatpush.bf16.xpose.msra.mxu0 %v2667
        %2677 = vmatmul.bf16.gmra.mxu0 %v2664
        %v2678 = vpop.f32.mrf.mxu0
        %v2679 = vadd.f32 0.0, %v2678
        %v2680 = vpop.f32.mrf.mxu0
        %2681 = vdwg.mxu0
        %v2682 = vmul.f32 %v2679, 0.35355338
        %v2683 = vadd.f32 %v2682, %v1172
        %v2684 = vsel %vm1243, %v2683, -inf
        %2685 = vmax.xlane.f32.xlu0 %v2684
        %v2686 = vpop.xlane.xlu0 %2685
        %v2687 = vsub.f32 %v2683, %v2686
        %v2688 = vmul.f32 %v2687, 1.442695
        %v2689 = vpow.pop %v2688
        %v2690 = vsel %vm1243, %v2689, 0.0
        %2691 = vadd.xlane.f32.xlu0 %v2690
        %v2692 = vpop.xlane.xlu0 %2691
        %v2693 = vrcp.pop %v2692
        %v2694 = vmul.f32 %v2689, %v2693
        %v2695 = vpack.c.bf16 %v2694, %v2694
        %2696 = vrot.lane.b32.xlu0 %v2601, 56
        %v2697 = vpop.permute.xlu0 %2696
        %v2699 = vsel %vm1243, %v2695, 0
        %v2702 = vsel %vm1282, %v2697, 0
        %2704 = vmatpush.bf16.msra.mxu0 0
        %2705 = vmatpush.bf16.msra.mxu0 0
        %2706 = vmatpush.bf16.msra.mxu0 0
        %2707 = vmatpush.bf16.msra.mxu0 0
        %2708 = vmatpush.bf16.msra.mxu0 0
        %2709 = vmatpush.bf16.msra.mxu0 0
        %2710 = vmatpush.bf16.msra.mxu0 0
        %2711 = vmatpush.bf16.msra.mxu0 %v2702
        %2712 = vmatmul.bf16.gmra.mxu0 %v2699
        %v2713 = vpop.f32.mrf.mxu0
        %v2714 = vadd.f32 0.0, %v2713
        %v2715 = vpop.f32.mrf.mxu0
        %2716 = vdwg.mxu0
        %2717 = vrot.lane.b32.xlu0 %v2601, 112
        %v2718 = vpop.permute.xlu0 %2717
        %2719 = vrot.lane.b32.xlu0 %v2601, 80
        %v2720 = vpop.permute.xlu0 %2719
        %v2722 = vsel %vm1243, %v2718, 0
        %v2725 = vsel %vm1243, %v2720, 0
        %2727 = vmatpush.bf16.xpose.msra.mxu0 0
        %2728 = vmatpush.bf16.xpose.msra.mxu0 0
        %2729 = vmatpush.bf16.xpose.msra.mxu0 0
        %2730 = vmatpush.bf16.xpose.msra.mxu0 0
        %2731 = vmatpush.bf16.xpose.msra.mxu0 0
        %2732 = vmatpush.bf16.xpose.msra.mxu0 0
        %2733 = vmatpush.bf16.xpose.msra.mxu0 0
        %2734 = vmatpush.bf16.xpose.msra.mxu0 %v2725
        %2735 = vmatmul.bf16.gmra.mxu0 %v2722
        %v2736 = vpop.f32.mrf.mxu0
        %v2737 = vadd.f32 0.0, %v2736
        %v2738 = vpop.f32.mrf.mxu0
        %2739 = vdwg.mxu0
        %v2740 = vmul.f32 %v2737, 0.35355338
        %v2741 = vadd.f32 %v2740, %v1174
        %v2742 = vsel %vm1243, %v2741, -inf
        %2743 = vmax.xlane.f32.xlu0 %v2742
        %v2744 = vpop.xlane.xlu0 %2743
        %v2745 = vsub.f32 %v2741, %v2744
        %v2746 = vmul.f32 %v2745, 1.442695
        %v2747 = vpow.pop %v2746
        %v2748 = vsel %vm1243, %v2747, 0.0
        %2749 = vadd.xlane.f32.xlu0 %v2748
        %v2750 = vpop.xlane.xlu0 %2749
        %v2751 = vrcp.pop %v2750
        %v2752 = vmul.f32 %v2747, %v2751
        %v2753 = vpack.c.bf16 %v2752, %v2752
        %2754 = vrot.lane.b32.xlu0 %v2601, 48
        %v2755 = vpop.permute.xlu0 %2754
        %v2757 = vsel %vm1243, %v2753, 0
        %v2760 = vsel %vm1282, %v2755, 0
        %2762 = vmatpush.bf16.msra.mxu0 0
        %2763 = vmatpush.bf16.msra.mxu0 0
        %2764 = vmatpush.bf16.msra.mxu0 0
        %2765 = vmatpush.bf16.msra.mxu0 0
        %2766 = vmatpush.bf16.msra.mxu0 0
        %2767 = vmatpush.bf16.msra.mxu0 0
        %2768 = vmatpush.bf16.msra.mxu0 0
        %2769 = vmatpush.bf16.msra.mxu0 %v2760
        %2770 = vmatmul.bf16.gmra.mxu0 %v2757
        %v2771 = vpop.f32.mrf.mxu0
        %v2772 = vadd.f32 0.0, %v2771
        %v2773 = vpop.f32.mrf.mxu0
        %2774 = vdwg.mxu0
        %2775 = vrot.lane.b32.xlu0 %v2601, 104
        %v2776 = vpop.permute.xlu0 %2775
        %2777 = vrot.lane.b32.xlu0 %v2601, 72
        %v2778 = vpop.permute.xlu0 %2777
        %v2780 = vsel %vm1243, %v2776, 0
        %v2783 = vsel %vm1243, %v2778, 0
        %2785 = vmatpush.bf16.xpose.msra.mxu0 0
        %2786 = vmatpush.bf16.xpose.msra.mxu0 0
        %2787 = vmatpush.bf16.xpose.msra.mxu0 0
        %2788 = vmatpush.bf16.xpose.msra.mxu0 0
        %2789 = vmatpush.bf16.xpose.msra.mxu0 0
        %2790 = vmatpush.bf16.xpose.msra.mxu0 0
        %2791 = vmatpush.bf16.xpose.msra.mxu0 0
        %2792 = vmatpush.bf16.xpose.msra.mxu0 %v2783
        %2793 = vmatmul.bf16.gmra.mxu0 %v2780
        %v2794 = vpop.f32.mrf.mxu0
        %v2795 = vadd.f32 0.0, %v2794
        %v2796 = vpop.f32.mrf.mxu0
        %2797 = vdwg.mxu0
        %v2798 = vmul.f32 %v2795, 0.35355338
        %v2799 = vadd.f32 %v2798, %v1176
        %v2800 = vsel %vm1243, %v2799, -inf
        %2801 = vmax.xlane.f32.xlu0 %v2800
        %v2802 = vpop.xlane.xlu0 %2801
        %v2803 = vsub.f32 %v2799, %v2802
        %v2804 = vmul.f32 %v2803, 1.442695
        %v2805 = vpow.pop %v2804
        %v2806 = vsel %vm1243, %v2805, 0.0
        %2807 = vadd.xlane.f32.xlu0 %v2806
        %v2808 = vpop.xlane.xlu0 %2807
        %v2809 = vrcp.pop %v2808
        %v2810 = vmul.f32 %v2805, %v2809
        %v2811 = vpack.c.bf16 %v2810, %v2810
        %2812 = vrot.lane.b32.xlu0 %v2601, 40
        %v2813 = vpop.permute.xlu0 %2812
        %v2815 = vsel %vm1243, %v2811, 0
        %v2818 = vsel %vm1282, %v2813, 0
        %2820 = vmatpush.bf16.msra.mxu0 0
        %2821 = vmatpush.bf16.msra.mxu0 0
        %2822 = vmatpush.bf16.msra.mxu0 0
        %2823 = vmatpush.bf16.msra.mxu0 0
        %2824 = vmatpush.bf16.msra.mxu0 0
        %2825 = vmatpush.bf16.msra.mxu0 0
        %2826 = vmatpush.bf16.msra.mxu0 0
        %2827 = vmatpush.bf16.msra.mxu0 %v2818
        %2828 = vmatmul.bf16.gmra.mxu0 %v2815
        %v2829 = vpop.f32.mrf.mxu0
        %v2830 = vadd.f32 0.0, %v2829
        %v2831 = vpop.f32.mrf.mxu0
        %2832 = vdwg.mxu0
        %2834 = vrot.lane.b32.xlu0 %v2714, 8
        %v2835 = vpop.permute.xlu0 %2834
        %2838 = vrot.lane.b32.xlu0 %v2772, 16
        %v2839 = vpop.permute.xlu0 %2838
        %2842 = vrot.lane.b32.xlu0 %v2830, 24
        %v2843 = vpop.permute.xlu0 %2842
        %v2845 = vsel %vm1243, %v2656, %v2835
        %v2846 = vsel %vm1486, %v2845, %v2839
        %v2847 = vsel %vm1488, %v2846, %v2843
        %v2848 = vpack.c.bf16 %v2847, %v2847
        %s2849 = scalar_lea.vmem %s11, 32
        %v2850 = vld [vmem:[%s2849] sm:$0xf]
        %v2851 = vld [vmem:[%s2849 + $0x4] sm:$0xf]
        %v2852 = vld [vmem:[%s2849 + $0x8] sm:$0xf]
        %v2853 = vld [vmem:[%s2849 + $0xc] sm:$0xf]
        %v2858 = vunpack.c.l.b16 %v2850
        %v2859 = vunpack.c.l.b16 %v2851
        %v2860 = vunpack.c.l.b16 %v2852
        %v2861 = vunpack.c.l.b16 %v2853
        %v2862 = vpack.c.b16 %v2859, %v2858
        %v2863 = vpack.c.b16 %v2861, %v2860
        %v2867 = vsel %vm1180, %v2848, 0
        %2869 = vmatpush.bf16.msra.mxu0 0
        %2870 = vmatpush.bf16.msra.mxu0 0
        %2871 = vmatpush.bf16.msra.mxu0 0
        %2872 = vmatpush.bf16.msra.mxu0 0
        %2873 = vmatpush.bf16.msra.mxu0 0
        %2874 = vmatpush.bf16.msra.mxu0 0
        %2875 = vmatpush.bf16.msra.mxu0 %v2863
        %2876 = vmatpush.bf16.msra.mxu0 %v2862
        %2877 = vmatmul.bf16.gmra.mxu0 %v2867
        %v2878 = vpop.f32.mrf.mxu0
        %v2879 = vadd.f32 0.0, %v2878
        %v2880 = vpop.f32.mrf.mxu0
        %2881 = vdwg.mxu0
        %v2882 = vadd.f32 %v2545, %v2879
        %v2883 = vmul.f32 %v2882, %v2882
        %v2884 = vsel %vm1180, %v2883, 0.0
        %2885 = vadd.xlane.f32.xlu0 %v2884
        %v2886 = vpop.xlane.xlu0 %2885
        %v2887 = vmul.f32 %v2886, %v1190
        %v2888 = vadd.f32 %v2887, 1e-06
        %v2889 = vrsqrt.pop %v2888
        %v2890 = vmul.f32 %v2889, %v2888
        %v2891 = vmul.f32 %v2890, %v2889
        %v2892 = vmul.f32 0.5, %v2891
        %v2893 = vsub.f32 1.5, %v2892
        %v2894 = vmul.f32 %v2889, %v2893
        %vm2895 = vweird.f32 %v2888
        %vm2896 = vweird.f32 %v2889
        %vm2897 = vmor %vm2895, %vm2896
        %v2898 = vsel %vm2897, %v2889, %v2894
        %v2899 = vmul.f32 %v2882, %v2898
        %v2900 = vperm.slane %v2547, 0
        %v2901 = vmul.f32 %v2899, %v2900
        %v2902 = vpack.c.bf16 %v2901, %v2901
        %v2903 = vld [vmem:[%s29] sm:$0xff]
        %v2904 = vld [vmem:[%s29 + $0x8] sm:$0xff]
        %v2905 = vld [vmem:[%s29 + $0x10] sm:$0xff]
        %v2906 = vld [vmem:[%s29 + $0x18] sm:$0xff]
        %v2907 = vld [vmem:[%s29 + $0x20] sm:$0xff]
        %v2908 = vld [vmem:[%s29 + $0x28] sm:$0xff]
        %v2909 = vld [vmem:[%s29 + $0x30] sm:$0xff]
        %v2910 = vld [vmem:[%s29 + $0x38] sm:$0xff]
        %v2911 = vld [vmem:[%s29 + $0x40] sm:$0xff]
        %v2912 = vld [vmem:[%s29 + $0x48] sm:$0xff]
        %v2913 = vld [vmem:[%s29 + $0x50] sm:$0xff]
        %v2914 = vld [vmem:[%s29 + $0x58] sm:$0xff]
        %v2915 = vld [vmem:[%s31] sm:$0x3f]
        %v2917 = vperm.slane %v2915, 0
        %v2918 = vperm.slane %v2915, 1
        %v2919 = vperm.slane %v2915, 2
        %v2920 = vperm.slane %v2915, 3
        %v2921 = vperm.slane %v2915, 4
        %v2922 = vperm.slane %v2915, 5
        %v2941 = vunpack.c.l.b16 %v2903
        %v2942 = vunpack.c.h.b16 %v2903
        %v2943 = vunpack.c.l.b16 %v2904
        %v2944 = vunpack.c.h.b16 %v2904
        %v2945 = vunpack.c.l.b16 %v2905
        %v2946 = vunpack.c.h.b16 %v2905
        %v2947 = vunpack.c.l.b16 %v2906
        %v2948 = vunpack.c.h.b16 %v2906
        %v2949 = vunpack.c.l.b16 %v2907
        %v2950 = vunpack.c.h.b16 %v2907
        %v2951 = vunpack.c.l.b16 %v2908
        %v2952 = vunpack.c.h.b16 %v2908
        %v2953 = vunpack.c.l.b16 %v2909
        %v2954 = vunpack.c.h.b16 %v2909
        %v2955 = vunpack.c.l.b16 %v2910
        %v2956 = vunpack.c.h.b16 %v2910
        %v2957 = vunpack.c.l.b16 %v2911
        %v2958 = vunpack.c.h.b16 %v2911
        %v2959 = vunpack.c.l.b16 %v2912
        %v2960 = vunpack.c.h.b16 %v2912
        %v2961 = vunpack.c.l.b16 %v2913
        %v2962 = vunpack.c.h.b16 %v2913
        %v2963 = vunpack.c.l.b16 %v2914
        %v2964 = vunpack.c.h.b16 %v2914
        %v2965 = vpack.c.b16 %v2947, %v2941
        %v2966 = vpack.c.b16 %v2948, %v2942
        %v2967 = vpack.c.b16 %v2949, %v2943
        %v2968 = vpack.c.b16 %v2950, %v2944
        %v2969 = vpack.c.b16 %v2951, %v2945
        %v2970 = vpack.c.b16 %v2952, %v2946
        %v2971 = vpack.c.b16 %v2959, %v2953
        %v2972 = vpack.c.b16 %v2960, %v2954
        %v2973 = vpack.c.b16 %v2961, %v2955
        %v2974 = vpack.c.b16 %v2962, %v2956
        %v2975 = vpack.c.b16 %v2963, %v2957
        %v2976 = vpack.c.b16 %v2964, %v2958
        %v2990 = vsel %vm1180, %v2902, 0
        %2992 = vmatpush.bf16.msra.mxu0 0
        %2993 = vmatpush.bf16.msra.mxu0 0
        %2994 = vmatpush.bf16.msra.mxu0 0
        %2995 = vmatpush.bf16.msra.mxu0 0
        %2996 = vmatpush.bf16.msra.mxu0 0
        %2997 = vmatpush.bf16.msra.mxu0 0
        %2998 = vmatpush.bf16.msra.mxu0 %v2971
        %2999 = vmatpush.bf16.msra.mxu0 %v2965
        %3000 = vmatmul.bf16.gmra.mxu0 %v2990
        %v3001 = vpop.f32.mrf.mxu0
        %v3002 = vadd.f32 %v2917, %v3001
        %v3003 = vpop.f32.mrf.mxu0
        %3004 = vdwg.mxu0
        %3005 = vmatpush.bf16.msra.mxu0 0
        %3006 = vmatpush.bf16.msra.mxu0 0
        %3007 = vmatpush.bf16.msra.mxu0 0
        %3008 = vmatpush.bf16.msra.mxu0 0
        %3009 = vmatpush.bf16.msra.mxu0 0
        %3010 = vmatpush.bf16.msra.mxu0 0
        %3011 = vmatpush.bf16.msra.mxu0 %v2972
        %3012 = vmatpush.bf16.msra.mxu0 %v2966
        %3013 = vmatmul.bf16.gmra.mxu0 %v2990
        %v3014 = vpop.f32.mrf.mxu0
        %v3015 = vadd.f32 %v2918, %v3014
        %v3016 = vpop.f32.mrf.mxu0
        %3017 = vdwg.mxu0
        %3018 = vmatpush.bf16.msra.mxu0 0
        %3019 = vmatpush.bf16.msra.mxu0 0
        %3020 = vmatpush.bf16.msra.mxu0 0
        %3021 = vmatpush.bf16.msra.mxu0 0
        %3022 = vmatpush.bf16.msra.mxu0 0
        %3023 = vmatpush.bf16.msra.mxu0 0
        %3024 = vmatpush.bf16.msra.mxu0 %v2973
        %3025 = vmatpush.bf16.msra.mxu0 %v2967
        %3026 = vmatmul.bf16.gmra.mxu0 %v2990
        %v3027 = vpop.f32.mrf.mxu0
        %v3028 = vadd.f32 %v2919, %v3027
        %v3029 = vpop.f32.mrf.mxu0
        %3030 = vdwg.mxu0
        %3031 = vmatpush.bf16.msra.mxu0 0
        %3032 = vmatpush.bf16.msra.mxu0 0
        %3033 = vmatpush.bf16.msra.mxu0 0
        %3034 = vmatpush.bf16.msra.mxu0 0
        %3035 = vmatpush.bf16.msra.mxu0 0
        %3036 = vmatpush.bf16.msra.mxu0 0
        %3037 = vmatpush.bf16.msra.mxu0 %v2974
        %3038 = vmatpush.bf16.msra.mxu0 %v2968
        %3039 = vmatmul.bf16.gmra.mxu0 %v2990
        %v3040 = vpop.f32.mrf.mxu0
        %v3041 = vadd.f32 %v2920, %v3040
        %v3042 = vpop.f32.mrf.mxu0
        %3043 = vdwg.mxu0
        %3044 = vmatpush.bf16.msra.mxu0 0
        %3045 = vmatpush.bf16.msra.mxu0 0
        %3046 = vmatpush.bf16.msra.mxu0 0
        %3047 = vmatpush.bf16.msra.mxu0 0
        %3048 = vmatpush.bf16.msra.mxu0 0
        %3049 = vmatpush.bf16.msra.mxu0 0
        %3050 = vmatpush.bf16.msra.mxu0 %v2975
        %3051 = vmatpush.bf16.msra.mxu0 %v2969
        %3052 = vmatmul.bf16.gmra.mxu0 %v2990
        %v3053 = vpop.f32.mrf.mxu0
        %v3054 = vadd.f32 %v2921, %v3053
        %v3055 = vpop.f32.mrf.mxu0
        %3056 = vdwg.mxu0
        %3057 = vmatpush.bf16.msra.mxu0 0
        %3058 = vmatpush.bf16.msra.mxu0 0
        %3059 = vmatpush.bf16.msra.mxu0 0
        %3060 = vmatpush.bf16.msra.mxu0 0
        %3061 = vmatpush.bf16.msra.mxu0 0
        %3062 = vmatpush.bf16.msra.mxu0 0
        %3063 = vmatpush.bf16.msra.mxu0 %v2976
        %3064 = vmatpush.bf16.msra.mxu0 %v2970
        %3065 = vmatmul.bf16.gmra.mxu0 %v2990
        %v3066 = vpop.f32.mrf.mxu0
        %v3067 = vadd.f32 %v2922, %v3066
        %v3068 = vpop.f32.mrf.mxu0
        %3069 = vdwg.mxu0
        %v3070 = vmul.f32 %v3002, 0.5
        %v3071 = vmul.f32 %v3015, 0.5
        %v3072 = vmul.f32 %v3028, 0.5
        %v3073 = vmul.f32 %v3041, 0.5
        %v3074 = vmul.f32 %v3054, 0.5
        %v3075 = vmul.f32 %v3002, 0.044715
        %v3076 = vmul.f32 %v3015, 0.044715
        %v3077 = vmul.f32 %v3028, 0.044715
        %v3078 = vmul.f32 %v3041, 0.044715
        %v3079 = vmul.f32 %v3054, 0.044715
        %v3080 = vmul.f32 %v3075, %v3002
        %v3081 = vmul.f32 %v3076, %v3015
        %v3082 = vmul.f32 %v3077, %v3028
        %v3083 = vmul.f32 %v3078, %v3041
        %v3084 = vmul.f32 %v3079, %v3054
        %v3085 = vmul.f32 %v3080, %v3002
        %v3086 = vmul.f32 %v3081, %v3015
        %v3087 = vmul.f32 %v3082, %v3028
        %v3088 = vmul.f32 %v3083, %v3041
        %v3089 = vmul.f32 %v3084, %v3054
        %v3090 = vadd.f32 %v3002, %v3085
        %v3091 = vadd.f32 %v3015, %v3086
        %v3092 = vadd.f32 %v3028, %v3087
        %v3093 = vadd.f32 %v3041, %v3088
        %v3094 = vadd.f32 %v3054, %v3089
        %v3095 = vmul.f32 %v3090, 0.7978846
        %v3096 = vmul.f32 %v3091, 0.7978846
        %v3097 = vmul.f32 %v3092, 0.7978846
        %v3098 = vmul.f32 %v3093, 0.7978846
        %v3099 = vmul.f32 %v3094, 0.7978846
        %v3100 = vtanh.pop %v3095
        %v3101 = vtanh.pop %v3096
        %v3102 = vtanh.pop %v3097
        %v3103 = vtanh.pop %v3098
        %v3104 = vtanh.pop %v3099
        %v3105 = vadd.f32 %v3100, 1.0
        %v3106 = vadd.f32 %v3101, 1.0
        %v3107 = vadd.f32 %v3102, 1.0
        %v3108 = vadd.f32 %v3103, 1.0
        %v3109 = vadd.f32 %v3104, 1.0
        %v3110 = vmul.f32 %v3070, %v3105
        %v3111 = vmul.f32 %v3071, %v3106
        %v3112 = vmul.f32 %v3072, %v3107
        %v3113 = vmul.f32 %v3073, %v3108
        %v3114 = vmul.f32 %v3074, %v3109
        %v3115 = vsel %vm1790, %v3067, -inf
        %3116 = vmax.xlane.f32.xlu0 %v3115
        %v3117 = vpop.xlane.xlu0 %3116
        %v3118 = vsub.f32 %v3067, %v3117
        %v3119 = vmul.f32 %v3118, 1.442695
        %v3120 = vpow.pop %v3119
        %v3121 = vsel %vm1790, %v3120, 0.0
        %3122 = vadd.xlane.f32.xlu0 %v3121
        %v3123 = vpop.xlane.xlu0 %3122
        %v3124 = vrcp.pop %v3123
        %v3125 = vmul.f32 %v3123, %v3124
        %v3126 = vsub.f32 1.0, %v3125
        %v3127 = vmul.f32 %v3124, %v3126
        %v3128 = vadd.f32 %v3124, %v3127
        %vm3129 = vweird.f32 %v3123
        %vm3130 = vweird.f32 %v3124
        %vm3131 = vmor %vm3129, %vm3130
        %v3132 = vsel %vm3131, %v3124, %v3128
        %v3133 = vand.u32 2147483647, %v3123
        %vm3134 = vcmp.eq.f32.partialorder %v3133, 8.507059e+37
        %v3135 = vand.u32 %v3123, 2147483648
        %v3136 = vor.u32 1.1754944e-38, %v3135
        %v3137 = vsel %vm3134, %v3136, %v3132
        %v3138 = vmul.f32 %v3120, %v3137
        %v3139 = vcvt.s32.f32 %v996
        %vm3140 = vcmp.eq.f32.partialorder %v3067, %v3117
        %v3141 = vsel %vm3140, %v3139, 4.0
        %v3142 = vsel %vm1790, %v3141, inf
        %3143 = vmin.xlane.f32.xlu0 %v3142
        %v3144 = vpop.xlane.xlu0 %3143
        %vm3145 = vcmp.eq.f32.partialorder %v3139, %v3144
        %v3146 = vsel %vm3145, 1, 0
        %v3147 = vcvt.s32.f32 %v3146
        %v3148 = vmul.f32 %v3147, %v3138
        %3150 = vset.pattern.permute.xlu0 0
        %3151 = vperm.xlu0 %3150, %v3148
        %v3152 = vpop.permute.xlu0 %3151
        %v3154 = vmul.f32 %v3110, %v3152
        %3155 = vset.pattern.permute.xlu0 1
        %3156 = vperm.xlu0 %3155, %v3148
        %v3157 = vpop.permute.xlu0 %3156
        %v3159 = vmul.f32 %v3111, %v3157
        %3160 = vset.pattern.permute.xlu0 2
        %3161 = vperm.xlu0 %3160, %v3148
        %v3162 = vpop.permute.xlu0 %3161
        %v3164 = vmul.f32 %v3112, %v3162
        %3165 = vset.pattern.permute.xlu0 3
        %3166 = vperm.xlu0 %3165, %v3148
        %v3167 = vpop.permute.xlu0 %3166
        %v3169 = vmul.f32 %v3113, %v3167
        %v3170 = vpack.c.bf16 %v3154, %v3154
        %v3171 = vpack.c.bf16 %v3159, %v3159
        %v3172 = vpack.c.bf16 %v3164, %v3164
        %v3173 = vpack.c.bf16 %v3169, %v3169
        %v3174 = vpack.c.bf16 %v3114, %v3114
        %v3175 = vld [vmem:[%s33] sm:$0xf]
        %v3176 = vld [vmem:[%s33 + $0x4] sm:$0xf]
        %v3177 = vld [vmem:[%s33 + $0x8] sm:$0xf]
        %v3178 = vld [vmem:[%s33 + $0xc] sm:$0xf]
        %v3179 = vld [vmem:[%s33 + $0x10] sm:$0xf]
        %v3180 = vld [vmem:[%s33 + $0x14] sm:$0xf]
        %v3181 = vld [vmem:[%s33 + $0x18] sm:$0xf]
        %v3182 = vld [vmem:[%s33 + $0x1c] sm:$0xf]
        %v3183 = vld [vmem:[%s33 + $0x20] sm:$0xf]
        %v3184 = vld [vmem:[%s33 + $0x24] sm:$0xf]
        %v3185 = vld [vmem:[%s33 + $0x28] sm:$0xf]
        %v3186 = vld [vmem:[%s33 + $0x2c] sm:$0xf]
        %v3187 = vld [vmem:[%s33 + $0x30] sm:$0xf]
        %v3188 = vld [vmem:[%s33 + $0x34] sm:$0xf]
        %v3189 = vld [vmem:[%s33 + $0x38] sm:$0xf]
        %v3190 = vld [vmem:[%s33 + $0x3c] sm:$0xf]
        %v3191 = vld [vmem:[%s33 + $0x40] sm:$0xf]
        %v3192 = vld [vmem:[%s33 + $0x44] sm:$0xf]
        %v3193 = vld [vmem:[%s33 + $0x48] sm:$0xf]
        %v3194 = vld [vmem:[%s33 + $0x4c] sm:$0xf]
        %v3195 = vld [vmem:[%s33 + $0x50] sm:$0xf]
        %v3196 = vld [vmem:[%s33 + $0x54] sm:$0xf]
        %v3197 = vld [vmem:[%s33 + $0x58] sm:$0xf]
        %v3198 = vld [vmem:[%s33 + $0x5c] sm:$0xf]
        %v3199 = vld [vmem:[%s33 + $0x60] sm:$0xf]
        %v3200 = vld [vmem:[%s33 + $0x64] sm:$0xf]
        %v3201 = vld [vmem:[%s33 + $0x68] sm:$0xf]
        %v3202 = vld [vmem:[%s33 + $0x6c] sm:$0xf]
        %v3203 = vld [vmem:[%s33 + $0x70] sm:$0xf]
        %v3204 = vld [vmem:[%s33 + $0x74] sm:$0xf]
        %v3205 = vld [vmem:[%s33 + $0x78] sm:$0xf]
        %v3206 = vld [vmem:[%s33 + $0x7c] sm:$0xf]
        %v3207 = vld [vmem:[%s33 + $0x80] sm:$0xf]
        %v3208 = vld [vmem:[%s33 + $0x84] sm:$0xf]
        %v3209 = vld [vmem:[%s33 + $0x88] sm:$0xf]
        %v3210 = vld [vmem:[%s33 + $0x8c] sm:$0xf]
        %v3211 = vld [vmem:[%s33 + $0x90] sm:$0xf]
        %v3212 = vld [vmem:[%s33 + $0x94] sm:$0xf]
        %v3213 = vld [vmem:[%s33 + $0x98] sm:$0xf]
        %v3214 = vld [vmem:[%s33 + $0x9c] sm:$0xf]
        %v3215 = vld [vmem:[%s33 + $0xa0] sm:$0xf]
        %v3216 = vld [vmem:[%s33 + $0xa4] sm:$0xf]
        %v3217 = vld [vmem:[%s33 + $0xa8] sm:$0xf]
        %v3218 = vld [vmem:[%s33 + $0xac] sm:$0xf]
        %v3219 = vld [vmem:[%s33 + $0xb0] sm:$0xf]
        %v3220 = vld [vmem:[%s33 + $0xb4] sm:$0xf]
        %v3221 = vld [vmem:[%s33 + $0xb8] sm:$0xf]
        %v3222 = vld [vmem:[%s33 + $0xbc] sm:$0xf]
        %v3223 = vld [vmem:[%s33 + $0xc0] sm:$0xf]
        %v3224 = vld [vmem:[%s33 + $0xc4] sm:$0xf]
        %v3225 = vld [vmem:[%s33 + $0xc8] sm:$0xf]
        %v3226 = vld [vmem:[%s33 + $0xcc] sm:$0xf]
        %v3227 = vld [vmem:[%s33 + $0xd0] sm:$0xf]
        %v3228 = vld [vmem:[%s33 + $0xd4] sm:$0xf]
        %v3229 = vld [vmem:[%s33 + $0xd8] sm:$0xf]
        %v3230 = vld [vmem:[%s33 + $0xdc] sm:$0xf]
        %v3231 = vld [vmem:[%s33 + $0xe0] sm:$0xf]
        %v3232 = vld [vmem:[%s33 + $0xe4] sm:$0xf]
        %v3233 = vld [vmem:[%s33 + $0xe8] sm:$0xf]
        %v3234 = vld [vmem:[%s33 + $0xec] sm:$0xf]
        %v3235 = vld [vmem:[%s33 + $0xf0] sm:$0xf]
        %v3236 = vld [vmem:[%s33 + $0xf4] sm:$0xf]
        %v3237 = vld [vmem:[%s33 + $0xf8] sm:$0xf]
        %v3238 = vld [vmem:[%s33 + $0xfc] sm:$0xf]
        %v3239 = vld [vmem:[%s33 + $0x100] sm:$0xf]
        %v3240 = vld [vmem:[%s33 + $0x104] sm:$0xf]
        %v3241 = vld [vmem:[%s33 + $0x108] sm:$0xf]
        %v3242 = vld [vmem:[%s33 + $0x10c] sm:$0xf]
        %v3243 = vld [vmem:[%s33 + $0x110] sm:$0xf]
        %v3244 = vld [vmem:[%s33 + $0x114] sm:$0xf]
        %v3245 = vld [vmem:[%s33 + $0x118] sm:$0xf]
        %v3246 = vld [vmem:[%s33 + $0x11c] sm:$0xf]
        %v3247 = vld [vmem:[%s33 + $0x120] sm:$0xf]
        %v3248 = vld [vmem:[%s33 + $0x124] sm:$0xf]
        %v3249 = vld [vmem:[%s33 + $0x128] sm:$0xf]
        %v3250 = vld [vmem:[%s33 + $0x12c] sm:$0xf]
        %v3251 = vld [vmem:[%s33 + $0x130] sm:$0xf]
        %v3252 = vld [vmem:[%s33 + $0x134] sm:$0xf]
        %v3253 = vld [vmem:[%s33 + $0x138] sm:$0xf]
        %v3254 = vld [vmem:[%s33 + $0x13c] sm:$0xf]
        %v3255 = vld [vmem:[%s35] sm:$0xf]
        %v3256 = vsel %vm1790, %v3148, 0
        %v3259 = vsel %vm1282, %v3255, 0
        %3261 = vmatpush.msra.mxu0 0.0
        %3262 = vmatpush.msra.mxu0 0.0
        %3263 = vmatpush.msra.mxu0 0.0
        %3264 = vmatpush.msra.mxu0 0.0
        %3265 = vmatpush.msra.mxu0 0.0
        %3266 = vmatpush.msra.mxu0 0.0
        %3267 = vmatpush.msra.mxu0 0.0
        %3268 = vmatpush.msra.mxu0 0.0
        %3269 = vmatpush.msra.mxu0 0.0
        %3270 = vmatpush.msra.mxu0 0.0
        %3271 = vmatpush.msra.mxu0 0.0
        %3272 = vmatpush.msra.mxu0 0.0
        %3273 = vmatpush.msra.mxu0 0.0
        %3274 = vmatpush.msra.mxu0 0.0
        %3275 = vmatpush.msra.mxu0 0.0
        %3276 = vmatpush.msra.mxu0 %v3259
        %3277 = vmatmul.f32.gmra.mxu0 %v3256
        %v3278 = vpop.f32.mrf.mxu0
        %v3279 = vadd.f32 0.0, %v3278
        %3280 = vdwg.mxu0
        %v3361 = vunpack.c.l.b16 %v3175
        %v3362 = vunpack.c.l.b16 %v3176
        %v3363 = vunpack.c.l.b16 %v3177
        %v3364 = vunpack.c.l.b16 %v3178
        %v3365 = vunpack.c.l.b16 %v3179
        %v3366 = vunpack.c.l.b16 %v3180
        %v3367 = vunpack.c.l.b16 %v3181
        %v3368 = vunpack.c.l.b16 %v3182
        %v3369 = vunpack.c.l.b16 %v3183
        %v3370 = vunpack.c.l.b16 %v3184
        %v3371 = vunpack.c.l.b16 %v3185
        %v3372 = vunpack.c.l.b16 %v3186
        %v3373 = vunpack.c.l.b16 %v3187
        %v3374 = vunpack.c.l.b16 %v3188
        %v3375 = vunpack.c.l.b16 %v3189
        %v3376 = vunpack.c.l.b16 %v3190
        %v3377 = vunpack.c.l.b16 %v3191
        %v3378 = vunpack.c.l.b16 %v3192
        %v3379 = vunpack.c.l.b16 %v3193
        %v3380 = vunpack.c.l.b16 %v3194
        %v3381 = vunpack.c.l.b16 %v3195
        %v3382 = vunpack.c.l.b16 %v3196
        %v3383 = vunpack.c.l.b16 %v3197
        %v3384 = vunpack.c.l.b16 %v3198
        %v3385 = vunpack.c.l.b16 %v3199
        %v3386 = vunpack.c.l.b16 %v3200
        %v3387 = vunpack.c.l.b16 %v3201
        %v3388 = vunpack.c.l.b16 %v3202
        %v3389 = vunpack.c.l.b16 %v3203
        %v3390 = vunpack.c.l.b16 %v3204
        %v3391 = vunpack.c.l.b16 %v3205
        %v3392 = vunpack.c.l.b16 %v3206
        %v3393 = vunpack.c.l.b16 %v3207
        %v3394 = vunpack.c.l.b16 %v3208
        %v3395 = vunpack.c.l.b16 %v3209
        %v3396 = vunpack.c.l.b16 %v3210
        %v3397 = vunpack.c.l.b16 %v3211
        %v3398 = vunpack.c.l.b16 %v3212
        %v3399 = vunpack.c.l.b16 %v3213
        %v3400 = vunpack.c.l.b16 %v3214
        %v3401 = vunpack.c.l.b16 %v3215
        %v3402 = vunpack.c.l.b16 %v3216
        %v3403 = vunpack.c.l.b16 %v3217
        %v3404 = vunpack.c.l.b16 %v3218
        %v3405 = vunpack.c.l.b16 %v3219
        %v3406 = vunpack.c.l.b16 %v3220
        %v3407 = vunpack.c.l.b16 %v3221
        %v3408 = vunpack.c.l.b16 %v3222
        %v3409 = vunpack.c.l.b16 %v3223
        %v3410 = vunpack.c.l.b16 %v3224
        %v3411 = vunpack.c.l.b16 %v3225
        %v3412 = vunpack.c.l.b16 %v3226
        %v3413 = vunpack.c.l.b16 %v3227
        %v3414 = vunpack.c.l.b16 %v3228
        %v3415 = vunpack.c.l.b16 %v3229
        %v3416 = vunpack.c.l.b16 %v3230
        %v3417 = vunpack.c.l.b16 %v3231
        %v3418 = vunpack.c.l.b16 %v3232
        %v3419 = vunpack.c.l.b16 %v3233
        %v3420 = vunpack.c.l.b16 %v3234
        %v3421 = vunpack.c.l.b16 %v3235
        %v3422 = vunpack.c.l.b16 %v3236
        %v3423 = vunpack.c.l.b16 %v3237
        %v3424 = vunpack.c.l.b16 %v3238
        %v3425 = vunpack.c.l.b16 %v3239
        %v3426 = vunpack.c.l.b16 %v3240
        %v3427 = vunpack.c.l.b16 %v3241
        %v3428 = vunpack.c.l.b16 %v3242
        %v3429 = vunpack.c.l.b16 %v3243
        %v3430 = vunpack.c.l.b16 %v3244
        %v3431 = vunpack.c.l.b16 %v3245
        %v3432 = vunpack.c.l.b16 %v3246
        %v3433 = vunpack.c.l.b16 %v3247
        %v3434 = vunpack.c.l.b16 %v3248
        %v3435 = vunpack.c.l.b16 %v3249
        %v3436 = vunpack.c.l.b16 %v3250
        %v3437 = vunpack.c.l.b16 %v3251
        %v3438 = vunpack.c.l.b16 %v3252
        %v3439 = vunpack.c.l.b16 %v3253
        %v3440 = vunpack.c.l.b16 %v3254
        %v3441 = vpack.c.b16 %v3362, %v3361
        %v3442 = vpack.c.b16 %v3364, %v3363
        %v3443 = vpack.c.b16 %v3366, %v3365
        %v3444 = vpack.c.b16 %v3368, %v3367
        %v3445 = vpack.c.b16 %v3370, %v3369
        %v3446 = vpack.c.b16 %v3372, %v3371
        %v3447 = vpack.c.b16 %v3374, %v3373
        %v3448 = vpack.c.b16 %v3376, %v3375
        %v3449 = vpack.c.b16 %v3378, %v3377
        %v3450 = vpack.c.b16 %v3380, %v3379
        %v3451 = vpack.c.b16 %v3382, %v3381
        %v3452 = vpack.c.b16 %v3384, %v3383
        %v3453 = vpack.c.b16 %v3386, %v3385
        %v3454 = vpack.c.b16 %v3388, %v3387
        %v3455 = vpack.c.b16 %v3390, %v3389
        %v3456 = vpack.c.b16 %v3392, %v3391
        %v3457 = vpack.c.b16 %v3394, %v3393
        %v3458 = vpack.c.b16 %v3396, %v3395
        %v3459 = vpack.c.b16 %v3398, %v3397
        %v3460 = vpack.c.b16 %v3400, %v3399
        %v3461 = vpack.c.b16 %v3402, %v3401
        %v3462 = vpack.c.b16 %v3404, %v3403
        %v3463 = vpack.c.b16 %v3406, %v3405
        %v3464 = vpack.c.b16 %v3408, %v3407
        %v3465 = vpack.c.b16 %v3410, %v3409
        %v3466 = vpack.c.b16 %v3412, %v3411
        %v3467 = vpack.c.b16 %v3414, %v3413
        %v3468 = vpack.c.b16 %v3416, %v3415
        %v3469 = vpack.c.b16 %v3418, %v3417
        %v3470 = vpack.c.b16 %v3420, %v3419
        %v3471 = vpack.c.b16 %v3422, %v3421
        %v3472 = vpack.c.b16 %v3424, %v3423
        %v3473 = vpack.c.b16 %v3426, %v3425
        %v3474 = vpack.c.b16 %v3428, %v3427
        %v3475 = vpack.c.b16 %v3430, %v3429
        %v3476 = vpack.c.b16 %v3432, %v3431
        %v3477 = vpack.c.b16 %v3434, %v3433
        %v3478 = vpack.c.b16 %v3436, %v3435
        %v3479 = vpack.c.b16 %v3438, %v3437
        %v3480 = vpack.c.b16 %v3440, %v3439
        %3521 = vmatpush.bf16.msra.mxu0 %v3448
        %3522 = vmatpush.bf16.msra.mxu0 %v3447
        %3523 = vmatpush.bf16.msra.mxu0 %v3446
        %3524 = vmatpush.bf16.msra.mxu0 %v3445
        %3525 = vmatpush.bf16.msra.mxu0 %v3444
        %3526 = vmatpush.bf16.msra.mxu0 %v3443
        %3527 = vmatpush.bf16.msra.mxu0 %v3442
        %3528 = vmatpush.bf16.msra.mxu0 %v3441
        %3529 = vmatmul.bf16.gmra.mxu0 %v3170
        %v3530 = vpop.f32.mrf.mxu0
        %v3531 = vadd.f32 %v3279, %v3530
        %v3532 = vpop.f32.mrf.mxu0
        %3533 = vdwg.mxu0
        %3534 = vmatpush.bf16.msra.mxu0 %v3456
        %3535 = vmatpush.bf16.msra.mxu0 %v3455
        %3536 = vmatpush.bf16.msra.mxu0 %v3454
        %3537 = vmatpush.bf16.msra.mxu0 %v3453
        %3538 = vmatpush.bf16.msra.mxu0 %v3452
        %3539 = vmatpush.bf16.msra.mxu0 %v3451
        %3540 = vmatpush.bf16.msra.mxu0 %v3450
        %3541 = vmatpush.bf16.msra.mxu0 %v3449
        %3542 = vmatmul.bf16.gmra.mxu0 %v3171
        %v3543 = vpop.f32.mrf.mxu0
        %v3544 = vadd.f32 %v3531, %v3543
        %v3545 = vpop.f32.mrf.mxu0
        %3546 = vdwg.mxu0
        %3547 = vmatpush.bf16.msra.mxu0 %v3464
        %3548 = vmatpush.bf16.msra.mxu0 %v3463
        %3549 = vmatpush.bf16.msra.mxu0 %v3462
        %3550 = vmatpush.bf16.msra.mxu0 %v3461
        %3551 = vmatpush.bf16.msra.mxu0 %v3460
        %3552 = vmatpush.bf16.msra.mxu0 %v3459
        %3553 = vmatpush.bf16.msra.mxu0 %v3458
        %3554 = vmatpush.bf16.msra.mxu0 %v3457
        %3555 = vmatmul.bf16.gmra.mxu0 %v3172
        %v3556 = vpop.f32.mrf.mxu0
        %v3557 = vadd.f32 %v3544, %v3556
        %v3558 = vpop.f32.mrf.mxu0
        %3559 = vdwg.mxu0
        %3560 = vmatpush.bf16.msra.mxu0 %v3472
        %3561 = vmatpush.bf16.msra.mxu0 %v3471
        %3562 = vmatpush.bf16.msra.mxu0 %v3470
        %3563 = vmatpush.bf16.msra.mxu0 %v3469
        %3564 = vmatpush.bf16.msra.mxu0 %v3468
        %3565 = vmatpush.bf16.msra.mxu0 %v3467
        %3566 = vmatpush.bf16.msra.mxu0 %v3466
        %3567 = vmatpush.bf16.msra.mxu0 %v3465
        %3568 = vmatmul.bf16.gmra.mxu0 %v3173
        %v3569 = vpop.f32.mrf.mxu0
        %v3570 = vadd.f32 %v3557, %v3569
        %v3571 = vpop.f32.mrf.mxu0
        %3572 = vdwg.mxu0
        %3573 = vmatpush.bf16.msra.mxu0 %v3480
        %3574 = vmatpush.bf16.msra.mxu0 %v3479
        %3575 = vmatpush.bf16.msra.mxu0 %v3478
        %3576 = vmatpush.bf16.msra.mxu0 %v3477
        %3577 = vmatpush.bf16.msra.mxu0 %v3476
        %3578 = vmatpush.bf16.msra.mxu0 %v3475
        %3579 = vmatpush.bf16.msra.mxu0 %v3474
        %3580 = vmatpush.bf16.msra.mxu0 %v3473
        %3581 = vmatmul.bf16.gmra.mxu0 %v3174
        %v3582 = vpop.f32.mrf.mxu0
        %v3583 = vadd.f32 %v3570, %v3582
        %v3584 = vpop.f32.mrf.mxu0
        %3585 = vdwg.mxu0
        %v3586 = vld [vmem:[%s37] sm:$0x1]
        %v3588 = vperm.slane %v3586, 0
        %v3590 = vadd.f32 %v3583, %v3588
        %v3591 = vadd.f32 %v2882, %v3590
        %v3592 = vld [vmem:[%s7 + $0x6] sm:$0x1]
        %v3593 = vld [vmem:[%s7 + $0x7] sm:$0x1]
        %v3594 = vmul.f32 %v3591, %v3591
        %v3595 = vsel %vm1180, %v3594, 0.0
        %3596 = vadd.xlane.f32.xlu0 %v3595
        %v3597 = vpop.xlane.xlu0 %3596
        %v3598 = vmul.f32 %v3597, %v1190
        %v3599 = vadd.f32 %v3598, 1e-06
        %v3600 = vrsqrt.pop %v3599
        %v3601 = vmul.f32 %v3600, %v3599
        %v3602 = vmul.f32 %v3601, %v3600
        %v3603 = vmul.f32 0.5, %v3602
        %v3604 = vsub.f32 1.5, %v3603
        %v3605 = vmul.f32 %v3600, %v3604
        %vm3606 = vweird.f32 %v3599
        %vm3607 = vweird.f32 %v3600
        %vm3608 = vmor %vm3606, %vm3607
        %v3609 = vsel %vm3608, %v3600, %v3605
        %v3610 = vmul.f32 %v3591, %v3609
        %v3611 = vperm.slane %v3592, 0
        %v3612 = vmul.f32 %v3610, %v3611
        %v3613 = vpack.c.bf16 %v3612, %v3612
        %s3614 = scalar_lea.vmem %s9, 48
        %v3615 = vld [vmem:[%s3614] sm:$0xf]
        %v3616 = vld [vmem:[%s3614 + $0x4] sm:$0xf]
        %v3617 = vld [vmem:[%s3614 + $0x8] sm:$0xf]
        %v3618 = vld [vmem:[%s3614 + $0xc] sm:$0xf]
        %v3623 = vunpack.c.l.b16 %v3615
        %v3624 = vunpack.c.l.b16 %v3616
        %v3625 = vunpack.c.l.b16 %v3617
        %v3626 = vunpack.c.l.b16 %v3618
        %v3627 = vpack.c.b16 %v3624, %v3623
        %v3628 = vpack.c.b16 %v3626, %v3625
        %v3632 = vsel %vm1180, %v3613, 0
        %3634 = vmatpush.bf16.msra.mxu0 0
        %3635 = vmatpush.bf16.msra.mxu0 0
        %3636 = vmatpush.bf16.msra.mxu0 0
        %3637 = vmatpush.bf16.msra.mxu0 0
        %3638 = vmatpush.bf16.msra.mxu0 0
        %3639 = vmatpush.bf16.msra.mxu0 0
        %3640 = vmatpush.bf16.msra.mxu0 %v3628
        %3641 = vmatpush.bf16.msra.mxu0 %v3627
        %3642 = vmatmul.bf16.gmra.mxu0 %v3632
        %v3643 = vpop.f32.mrf.mxu0
        %v3644 = vadd.f32 0.0, %v3643
        %v3645 = vpop.f32.mrf.mxu0
        %3646 = vdwg.mxu0
        %v3647 = vpack.c.bf16 %v3644, %v3644
        %3649 = vrot.lane.b32.xlu0 %v3647, 96
        %v3650 = vpop.permute.xlu0 %3649
        %v3652 = vsel %vm1243, %v3647, 0
        %v3655 = vsel %vm1243, %v3650, 0
        %3657 = vmatpush.bf16.xpose.msra.mxu0 0
        %3658 = vmatpush.bf16.xpose.msra.mxu0 0
        %3659 = vmatpush.bf16.xpose.msra.mxu0 0
        %3660 = vmatpush.bf16.xpose.msra.mxu0 0
        %3661 = vmatpush.bf16.xpose.msra.mxu0 0
        %3662 = vmatpush.bf16.xpose.msra.mxu0 0
        %3663 = vmatpush.bf16.xpose.msra.mxu0 0
        %3664 = vmatpush.bf16.xpose.msra.mxu0 %v3655
        %3665 = vmatmul.bf16.gmra.mxu0 %v3652
        %v3666 = vpop.f32.mrf.mxu0
        %v3667 = vadd.f32 0.0, %v3666
        %v3668 = vpop.f32.mrf.mxu0
        %3669 = vdwg.mxu0
        %v3670 = vmul.f32 %v3667, 0.35355338
        %v3671 = vadd.f32 %v3670, %v1170
        %v3672 = vsel %vm1243, %v3671, -inf
        %3673 = vmax.xlane.f32.xlu0 %v3672
        %v3674 = vpop.xlane.xlu0 %3673
        %v3675 = vsub.f32 %v3671, %v3674
        %v3676 = vmul.f32 %v3675, 1.442695
        %v3677 = vpow.pop %v3676
        %v3678 = vsel %vm1243, %v3677, 0.0
        %3679 = vadd.xlane.f32.xlu0 %v3678
        %v3680 = vpop.xlane.xlu0 %3679
        %v3681 = vrcp.pop %v3680
        %v3682 = vmul.f32 %v3677, %v3681
        %v3683 = vpack.c.bf16 %v3682, %v3682
        %3684 = vrot.lane.b32.xlu0 %v3647, 64
        %v3685 = vpop.permute.xlu0 %3684
        %v3687 = vsel %vm1243, %v3683, 0
        %v3690 = vsel %vm1282, %v3685, 0
        %3692 = vmatpush.bf16.msra.mxu0 0
        %3693 = vmatpush.bf16.msra.mxu0 0
        %3694 = vmatpush.bf16.msra.mxu0 0
        %3695 = vmatpush.bf16.msra.mxu0 0
        %3696 = vmatpush.bf16.msra.mxu0 0
        %3697 = vmatpush.bf16.msra.mxu0 0
        %3698 = vmatpush.bf16.msra.mxu0 0
        %3699 = vmatpush.bf16.msra.mxu0 %v3690
        %3700 = vmatmul.bf16.gmra.mxu0 %v3687
        %v3701 = vpop.f32.mrf.mxu0
        %v3702 = vadd.f32 0.0, %v3701
        %v3703 = vpop.f32.mrf.mxu0
        %3704 = vdwg.mxu0
        %3705 = vrot.lane.b32.xlu0 %v3647, 120
        %v3706 = vpop.permute.xlu0 %3705
        %3707 = vrot.lane.b32.xlu0 %v3647, 88
        %v3708 = vpop.permute.xlu0 %3707
        %v3710 = vsel %vm1243, %v3706, 0
        %v3713 = vsel %vm1243, %v3708, 0
        %3715 = vmatpush.bf16.xpose.msra.mxu0 0
        %3716 = vmatpush.bf16.xpose.msra.mxu0 0
        %3717 = vmatpush.bf16.xpose.msra.mxu0 0
        %3718 = vmatpush.bf16.xpose.msra.mxu0 0
        %3719 = vmatpush.bf16.xpose.msra.mxu0 0
        %3720 = vmatpush.bf16.xpose.msra.mxu0 0
        %3721 = vmatpush.bf16.xpose.msra.mxu0 0
        %3722 = vmatpush.bf16.xpose.msra.mxu0 %v3713
        %3723 = vmatmul.bf16.gmra.mxu0 %v3710
        %v3724 = vpop.f32.mrf.mxu0
        %v3725 = vadd.f32 0.0, %v3724
        %v3726 = vpop.f32.mrf.mxu0
        %3727 = vdwg.mxu0
        %v3728 = vmul.f32 %v3725, 0.35355338
        %v3729 = vadd.f32 %v3728, %v1172
        %v3730 = vsel %vm1243, %v3729, -inf
        %3731 = vmax.xlane.f32.xlu0 %v3730
        %v3732 = vpop.xlane.xlu0 %3731
        %v3733 = vsub.f32 %v3729, %v3732
        %v3734 = vmul.f32 %v3733, 1.442695
        %v3735 = vpow.pop %v3734
        %v3736 = vsel %vm1243, %v3735, 0.0
        %3737 = vadd.xlane.f32.xlu0 %v3736
        %v3738 = vpop.xlane.xlu0 %3737
        %v3739 = vrcp.pop %v3738
        %v3740 = vmul.f32 %v3735, %v3739
        %v3741 = vpack.c.bf16 %v3740, %v3740
        %3742 = vrot.lane.b32.xlu0 %v3647, 56
        %v3743 = vpop.permute.xlu0 %3742
        %v3745 = vsel %vm1243, %v3741, 0
        %v3748 = vsel %vm1282, %v3743, 0
        %3750 = vmatpush.bf16.msra.mxu0 0
        %3751 = vmatpush.bf16.msra.mxu0 0
        %3752 = vmatpush.bf16.msra.mxu0 0
        %3753 = vmatpush.bf16.msra.mxu0 0
        %3754 = vmatpush.bf16.msra.mxu0 0
        %3755 = vmatpush.bf16.msra.mxu0 0
        %3756 = vmatpush.bf16.msra.mxu0 0
        %3757 = vmatpush.bf16.msra.mxu0 %v3748
        %3758 = vmatmul.bf16.gmra.mxu0 %v3745
        %v3759 = vpop.f32.mrf.mxu0
        %v3760 = vadd.f32 0.0, %v3759
        %v3761 = vpop.f32.mrf.mxu0
        %3762 = vdwg.mxu0
        %3763 = vrot.lane.b32.xlu0 %v3647, 112
        %v3764 = vpop.permute.xlu0 %3763
        %3765 = vrot.lane.b32.xlu0 %v3647, 80
        %v3766 = vpop.permute.xlu0 %3765
        %v3768 = vsel %vm1243, %v3764, 0
        %v3771 = vsel %vm1243, %v3766, 0
        %3773 = vmatpush.bf16.xpose.msra.mxu0 0
        %3774 = vmatpush.bf16.xpose.msra.mxu0 0
        %3775 = vmatpush.bf16.xpose.msra.mxu0 0
        %3776 = vmatpush.bf16.xpose.msra.mxu0 0
        %3777 = vmatpush.bf16.xpose.msra.mxu0 0
        %3778 = vmatpush.bf16.xpose.msra.mxu0 0
        %3779 = vmatpush.bf16.xpose.msra.mxu0 0
        %3780 = vmatpush.bf16.xpose.msra.mxu0 %v3771
        %3781 = vmatmul.bf16.gmra.mxu0 %v3768
        %v3782 = vpop.f32.mrf.mxu0
        %v3783 = vadd.f32 0.0, %v3782
        %v3784 = vpop.f32.mrf.mxu0
        %3785 = vdwg.mxu0
        %v3786 = vmul.f32 %v3783, 0.35355338
        %v3787 = vadd.f32 %v3786, %v1174
        %v3788 = vsel %vm1243, %v3787, -inf
        %3789 = vmax.xlane.f32.xlu0 %v3788
        %v3790 = vpop.xlane.xlu0 %3789
        %v3791 = vsub.f32 %v3787, %v3790
        %v3792 = vmul.f32 %v3791, 1.442695
        %v3793 = vpow.pop %v3792
        %v3794 = vsel %vm1243, %v3793, 0.0
        %3795 = vadd.xlane.f32.xlu0 %v3794
        %v3796 = vpop.xlane.xlu0 %3795
        %v3797 = vrcp.pop %v3796
        %v3798 = vmul.f32 %v3793, %v3797
        %v3799 = vpack.c.bf16 %v3798, %v3798
        %3800 = vrot.lane.b32.xlu0 %v3647, 48
        %v3801 = vpop.permute.xlu0 %3800
        %v3803 = vsel %vm1243, %v3799, 0
        %v3806 = vsel %vm1282, %v3801, 0
        %3808 = vmatpush.bf16.msra.mxu0 0
        %3809 = vmatpush.bf16.msra.mxu0 0
        %3810 = vmatpush.bf16.msra.mxu0 0
        %3811 = vmatpush.bf16.msra.mxu0 0
        %3812 = vmatpush.bf16.msra.mxu0 0
        %3813 = vmatpush.bf16.msra.mxu0 0
        %3814 = vmatpush.bf16.msra.mxu0 0
        %3815 = vmatpush.bf16.msra.mxu0 %v3806
        %3816 = vmatmul.bf16.gmra.mxu0 %v3803
        %v3817 = vpop.f32.mrf.mxu0
        %v3818 = vadd.f32 0.0, %v3817
        %v3819 = vpop.f32.mrf.mxu0
        %3820 = vdwg.mxu0
        %3821 = vrot.lane.b32.xlu0 %v3647, 104
        %v3822 = vpop.permute.xlu0 %3821
        %3823 = vrot.lane.b32.xlu0 %v3647, 72
        %v3824 = vpop.permute.xlu0 %3823
        %v3826 = vsel %vm1243, %v3822, 0
        %v3829 = vsel %vm1243, %v3824, 0
        %3831 = vmatpush.bf16.xpose.msra.mxu0 0
        %3832 = vmatpush.bf16.xpose.msra.mxu0 0
        %3833 = vmatpush.bf16.xpose.msra.mxu0 0
        %3834 = vmatpush.bf16.xpose.msra.mxu0 0
        %3835 = vmatpush.bf16.xpose.msra.mxu0 0
        %3836 = vmatpush.bf16.xpose.msra.mxu0 0
        %3837 = vmatpush.bf16.xpose.msra.mxu0 0
        %3838 = vmatpush.bf16.xpose.msra.mxu0 %v3829
        %3839 = vmatmul.bf16.gmra.mxu0 %v3826
        %v3840 = vpop.f32.mrf.mxu0
        %v3841 = vadd.f32 0.0, %v3840
        %v3842 = vpop.f32.mrf.mxu0
        %3843 = vdwg.mxu0
        %v3844 = vmul.f32 %v3841, 0.35355338
        %v3845 = vadd.f32 %v3844, %v1176
        %v3846 = vsel %vm1243, %v3845, -inf
        %3847 = vmax.xlane.f32.xlu0 %v3846
        %v3848 = vpop.xlane.xlu0 %3847
        %v3849 = vsub.f32 %v3845, %v3848
        %v3850 = vmul.f32 %v3849, 1.442695
        %v3851 = vpow.pop %v3850
        %v3852 = vsel %vm1243, %v3851, 0.0
        %3853 = vadd.xlane.f32.xlu0 %v3852
        %v3854 = vpop.xlane.xlu0 %3853
        %v3855 = vrcp.pop %v3854
        %v3856 = vmul.f32 %v3851, %v3855
        %v3857 = vpack.c.bf16 %v3856, %v3856
        %3858 = vrot.lane.b32.xlu0 %v3647, 40
        %v3859 = vpop.permute.xlu0 %3858
        %v3861 = vsel %vm1243, %v3857, 0
        %v3864 = vsel %vm1282, %v3859, 0
        %3866 = vmatpush.bf16.msra.mxu0 0
        %3867 = vmatpush.bf16.msra.mxu0 0
        %3868 = vmatpush.bf16.msra.mxu0 0
        %3869 = vmatpush.bf16.msra.mxu0 0
        %3870 = vmatpush.bf16.msra.mxu0 0
        %3871 = vmatpush.bf16.msra.mxu0 0
        %3872 = vmatpush.bf16.msra.mxu0 0
        %3873 = vmatpush.bf16.msra.mxu0 %v3864
        %3874 = vmatmul.bf16.gmra.mxu0 %v3861
        %v3875 = vpop.f32.mrf.mxu0
        %v3876 = vadd.f32 0.0, %v3875
        %v3877 = vpop.f32.mrf.mxu0
        %3878 = vdwg.mxu0
        %3880 = vrot.lane.b32.xlu0 %v3760, 8
        %v3881 = vpop.permute.xlu0 %3880
        %3884 = vrot.lane.b32.xlu0 %v3818, 16
        %v3885 = vpop.permute.xlu0 %3884
        %3888 = vrot.lane.b32.xlu0 %v3876, 24
        %v3889 = vpop.permute.xlu0 %3888
        %v3891 = vsel %vm1243, %v3702, %v3881
        %v3892 = vsel %vm1486, %v3891, %v3885
        %v3893 = vsel %vm1488, %v3892, %v3889
        %v3894 = vpack.c.bf16 %v3893, %v3893
        %s3895 = scalar_lea.vmem %s11, 48
        %v3896 = vld [vmem:[%s3895] sm:$0xf]
        %v3897 = vld [vmem:[%s3895 + $0x4] sm:$0xf]
        %v3898 = vld [vmem:[%s3895 + $0x8] sm:$0xf]
        %v3899 = vld [vmem:[%s3895 + $0xc] sm:$0xf]
        %v3904 = vunpack.c.l.b16 %v3896
        %v3905 = vunpack.c.l.b16 %v3897
        %v3906 = vunpack.c.l.b16 %v3898
        %v3907 = vunpack.c.l.b16 %v3899
        %v3908 = vpack.c.b16 %v3905, %v3904
        %v3909 = vpack.c.b16 %v3907, %v3906
        %v3913 = vsel %vm1180, %v3894, 0
        %3915 = vmatpush.bf16.msra.mxu0 0
        %3916 = vmatpush.bf16.msra.mxu0 0
        %3917 = vmatpush.bf16.msra.mxu0 0
        %3918 = vmatpush.bf16.msra.mxu0 0
        %3919 = vmatpush.bf16.msra.mxu0 0
        %3920 = vmatpush.bf16.msra.mxu0 0
        %3921 = vmatpush.bf16.msra.mxu0 %v3909
        %3922 = vmatpush.bf16.msra.mxu0 %v3908
        %3923 = vmatmul.bf16.gmra.mxu0 %v3913
        %v3924 = vpop.f32.mrf.mxu0
        %v3925 = vadd.f32 0.0, %v3924
        %v3926 = vpop.f32.mrf.mxu0
        %3927 = vdwg.mxu0
        %v3928 = vadd.f32 %v3591, %v3925
        %v3929 = vmul.f32 %v3928, %v3928
        %v3930 = vsel %vm1180, %v3929, 0.0
        %3931 = vadd.xlane.f32.xlu0 %v3930
        %v3932 = vpop.xlane.xlu0 %3931
        %v3933 = vmul.f32 %v3932, %v1190
        %v3934 = vadd.f32 %v3933, 1e-06
        %v3935 = vrsqrt.pop %v3934
        %v3936 = vmul.f32 %v3935, %v3934
        %v3937 = vmul.f32 %v3936, %v3935
        %v3938 = vmul.f32 0.5, %v3937
        %v3939 = vsub.f32 1.5, %v3938
        %v3940 = vmul.f32 %v3935, %v3939
        %vm3941 = vweird.f32 %v3934
        %vm3942 = vweird.f32 %v3935
        %vm3943 = vmor %vm3941, %vm3942
        %v3944 = vsel %vm3943, %v3935, %v3940
        %v3945 = vmul.f32 %v3928, %v3944
        %v3946 = vperm.slane %v3593, 0
        %v3947 = vmul.f32 %v3945, %v3946
        %v3948 = vpack.c.bf16 %v3947, %v3947
        %v3949 = vld [vmem:[%s39] sm:$0xf]
        %v3950 = vld [vmem:[%s39 + $0x4] sm:$0xf]
        %v3951 = vld [vmem:[%s39 + $0x8] sm:$0xf]
        %v3952 = vld [vmem:[%s39 + $0xc] sm:$0xf]
        %v3953 = vld [vmem:[%s41] sm:$0x1]
        %v3955 = vperm.slane %v3953, 0
        %v3961 = vunpack.c.l.b16 %v3949
        %v3962 = vunpack.c.l.b16 %v3950
        %v3963 = vunpack.c.l.b16 %v3951
        %v3964 = vunpack.c.l.b16 %v3952
        %v3965 = vpack.c.b16 %v3962, %v3961
        %v3966 = vpack.c.b16 %v3964, %v3963
        %v3970 = vsel %vm1180, %v3948, 0
        %3972 = vmatpush.bf16.msra.mxu0 0
        %3973 = vmatpush.bf16.msra.mxu0 0
        %3974 = vmatpush.bf16.msra.mxu0 0
        %3975 = vmatpush.bf16.msra.mxu0 0
        %3976 = vmatpush.bf16.msra.mxu0 0
        %3977 = vmatpush.bf16.msra.mxu0 0
        %3978 = vmatpush.bf16.msra.mxu0 %v3966
        %3979 = vmatpush.bf16.msra.mxu0 %v3965
        %3980 = vmatmul.bf16.gmra.mxu0 %v3970
        %v3981 = vpop.f32.mrf.mxu0
        %v3982 = vadd.f32 %v3955, %v3981
        %v3983 = vpop.f32.mrf.mxu0
        %3984 = vdwg.mxu0
        %v3985 = vmul.f32 %v3982, 0.5
        %v3986 = vmul.f32 %v3982, 0.044715
        %v3987 = vmul.f32 %v3986, %v3982
        %v3988 = vmul.f32 %v3987, %v3982
        %v3989 = vadd.f32 %v3982, %v3988
        %v3990 = vmul.f32 %v3989, 0.7978846
        %v3991 = vtanh.pop %v3990
        %v3992 = vadd.f32 %v3991, 1.0
        %v3993 = vmul.f32 %v3985, %v3992
        %v3994 = vpack.c.bf16 %v3993, %v3993
        %v3995 = vld [vmem:[%s43] sm:$0xf]
        %v3996 = vld [vmem:[%s43 + $0x4] sm:$0xf]
        %v3997 = vld [vmem:[%s43 + $0x8] sm:$0xf]
        %v3998 = vld [vmem:[%s43 + $0xc] sm:$0xf]
        %v3999 = vld [vmem:[%s43 + $0x10] sm:$0xf]
        %v4000 = vld [vmem:[%s43 + $0x14] sm:$0xf]
        %v4001 = vld [vmem:[%s43 + $0x18] sm:$0xf]
        %v4002 = vld [vmem:[%s43 + $0x1c] sm:$0xf]
        %v4003 = vld [vmem:[%s43 + $0x20] sm:$0xf]
        %v4004 = vld [vmem:[%s43 + $0x24] sm:$0xf]
        %v4005 = vld [vmem:[%s43 + $0x28] sm:$0xf]
        %v4006 = vld [vmem:[%s43 + $0x2c] sm:$0xf]
        %v4007 = vld [vmem:[%s43 + $0x30] sm:$0xf]
        %v4008 = vld [vmem:[%s43 + $0x34] sm:$0xf]
        %v4009 = vld [vmem:[%s43 + $0x38] sm:$0xf]
        %v4010 = vld [vmem:[%s43 + $0x3c] sm:$0xf]
        %v4011 = vld [vmem:[%s45] sm:$0x1]
        %v4013 = vperm.slane %v4011, 0
        %v4031 = vunpack.c.l.b16 %v3995
        %v4032 = vunpack.c.l.b16 %v3996
        %v4033 = vunpack.c.l.b16 %v3997
        %v4034 = vunpack.c.l.b16 %v3998
        %v4035 = vunpack.c.l.b16 %v3999
        %v4036 = vunpack.c.l.b16 %v4000
        %v4037 = vunpack.c.l.b16 %v4001
        %v4038 = vunpack.c.l.b16 %v4002
        %v4039 = vunpack.c.l.b16 %v4003
        %v4040 = vunpack.c.l.b16 %v4004
        %v4041 = vunpack.c.l.b16 %v4005
        %v4042 = vunpack.c.l.b16 %v4006
        %v4043 = vunpack.c.l.b16 %v4007
        %v4044 = vunpack.c.l.b16 %v4008
        %v4045 = vunpack.c.l.b16 %v4009
        %v4046 = vunpack.c.l.b16 %v4010
        %v4047 = vpack.c.b16 %v4032, %v4031
        %v4048 = vpack.c.b16 %v4034, %v4033
        %v4049 = vpack.c.b16 %v4036, %v4035
        %v4050 = vpack.c.b16 %v4038, %v4037
        %v4051 = vpack.c.b16 %v4040, %v4039
        %v4052 = vpack.c.b16 %v4042, %v4041
        %v4053 = vpack.c.b16 %v4044, %v4043
        %v4054 = vpack.c.b16 %v4046, %v4045
        %4063 = vmatpush.bf16.msra.mxu0 %v4054
        %4064 = vmatpush.bf16.msra.mxu0 %v4053
        %4065 = vmatpush.bf16.msra.mxu0 %v4052
        %4066 = vmatpush.bf16.msra.mxu0 %v4051
        %4067 = vmatpush.bf16.msra.mxu0 %v4050
        %4068 = vmatpush.bf16.msra.mxu0 %v4049
        %4069 = vmatpush.bf16.msra.mxu0 %v4048
        %4070 = vmatpush.bf16.msra.mxu0 %v4047
        %4071 = vmatmul.bf16.gmra.mxu0 %v3994
        %v4072 = vpop.f32.mrf.mxu0
        %v4073 = vadd.f32 %v4013, %v4072
        %v4074 = vpop.f32.mrf.mxu0
        %4075 = vdwg.mxu0
        %v4076 = vadd.f32 %v3928, %v4073
        %v4077 = vld [vmem:[%s7 + $0x8] sm:$0x1]
        %v4078 = vld [vmem:[%s7 + $0x9] sm:$0x1]
        %v4079 = vmul.f32 %v4076, %v4076
        %v4080 = vsel %vm1180, %v4079, 0.0
        %4081 = vadd.xlane.f32.xlu0 %v4080
        %v4082 = vpop.xlane.xlu0 %4081
        %v4083 = vmul.f32 %v4082, %v1190
        %v4084 = vadd.f32 %v4083, 1e-06
        %v4085 = vrsqrt.pop %v4084
        %v4086 = vmul.f32 %v4085, %v4084
        %v4087 = vmul.f32 %v4086, %v4085
        %v4088 = vmul.f32 0.5, %v4087
        %v4089 = vsub.f32 1.5, %v4088
        %v4090 = vmul.f32 %v4085, %v4089
        %vm4091 = vweird.f32 %v4084
        %vm4092 = vweird.f32 %v4085
        %vm4093 = vmor %vm4091, %vm4092
        %v4094 = vsel %vm4093, %v4085, %v4090
        %v4095 = vmul.f32 %v4076, %v4094
        %v4096 = vperm.slane %v4077, 0
        %v4097 = vmul.f32 %v4095, %v4096
        %v4098 = vpack.c.bf16 %v4097, %v4097
        %s4099 = scalar_lea.vmem %s9, 64
        %v4100 = vld [vmem:[%s4099] sm:$0xf]
        %v4101 = vld [vmem:[%s4099 + $0x4] sm:$0xf]
        %v4102 = vld [vmem:[%s4099 + $0x8] sm:$0xf]
        %v4103 = vld [vmem:[%s4099 + $0xc] sm:$0xf]
        %v4108 = vunpack.c.l.b16 %v4100
        %v4109 = vunpack.c.l.b16 %v4101
        %v4110 = vunpack.c.l.b16 %v4102
        %v4111 = vunpack.c.l.b16 %v4103
        %v4112 = vpack.c.b16 %v4109, %v4108
        %v4113 = vpack.c.b16 %v4111, %v4110
        %v4117 = vsel %vm1180, %v4098, 0
        %4119 = vmatpush.bf16.msra.mxu0 0
        %4120 = vmatpush.bf16.msra.mxu0 0
        %4121 = vmatpush.bf16.msra.mxu0 0
        %4122 = vmatpush.bf16.msra.mxu0 0
        %4123 = vmatpush.bf16.msra.mxu0 0
        %4124 = vmatpush.bf16.msra.mxu0 0
        %4125 = vmatpush.bf16.msra.mxu0 %v4113
        %4126 = vmatpush.bf16.msra.mxu0 %v4112
        %4127 = vmatmul.bf16.gmra.mxu0 %v4117
        %v4128 = vpop.f32.mrf.mxu0
        %v4129 = vadd.f32 0.0, %v4128
        %v4130 = vpop.f32.mrf.mxu0
        %4131 = vdwg.mxu0
        %v4132 = vpack.c.bf16 %v4129, %v4129
        %4134 = vrot.lane.b32.xlu0 %v4132, 96
        %v4135 = vpop.permute.xlu0 %4134
        %v4137 = vsel %vm1243, %v4132, 0
        %v4140 = vsel %vm1243, %v4135, 0
        %4142 = vmatpush.bf16.xpose.msra.mxu0 0
        %4143 = vmatpush.bf16.xpose.msra.mxu0 0
        %4144 = vmatpush.bf16.xpose.msra.mxu0 0
        %4145 = vmatpush.bf16.xpose.msra.mxu0 0
        %4146 = vmatpush.bf16.xpose.msra.mxu0 0
        %4147 = vmatpush.bf16.xpose.msra.mxu0 0
        %4148 = vmatpush.bf16.xpose.msra.mxu0 0
        %4149 = vmatpush.bf16.xpose.msra.mxu0 %v4140
        %4150 = vmatmul.bf16.gmra.mxu0 %v4137
        %v4151 = vpop.f32.mrf.mxu0
        %v4152 = vadd.f32 0.0, %v4151
        %v4153 = vpop.f32.mrf.mxu0
        %4154 = vdwg.mxu0
        %v4155 = vmul.f32 %v4152, 0.35355338
        %v4156 = vadd.f32 %v4155, %v1170
        %v4157 = vsel %vm1243, %v4156, -inf
        %4158 = vmax.xlane.f32.xlu0 %v4157
        %v4159 = vpop.xlane.xlu0 %4158
        %v4160 = vsub.f32 %v4156, %v4159
        %v4161 = vmul.f32 %v4160, 1.442695
        %v4162 = vpow.pop %v4161
        %v4163 = vsel %vm1243, %v4162, 0.0
        %4164 = vadd.xlane.f32.xlu0 %v4163
        %v4165 = vpop.xlane.xlu0 %4164
        %v4166 = vrcp.pop %v4165
        %v4167 = vmul.f32 %v4162, %v4166
        %v4168 = vpack.c.bf16 %v4167, %v4167
        %4169 = vrot.lane.b32.xlu0 %v4132, 64
        %v4170 = vpop.permute.xlu0 %4169
        %v4172 = vsel %vm1243, %v4168, 0
        %v4175 = vsel %vm1282, %v4170, 0
        %4177 = vmatpush.bf16.msra.mxu0 0
        %4178 = vmatpush.bf16.msra.mxu0 0
        %4179 = vmatpush.bf16.msra.mxu0 0
        %4180 = vmatpush.bf16.msra.mxu0 0
        %4181 = vmatpush.bf16.msra.mxu0 0
        %4182 = vmatpush.bf16.msra.mxu0 0
        %4183 = vmatpush.bf16.msra.mxu0 0
        %4184 = vmatpush.bf16.msra.mxu0 %v4175
        %4185 = vmatmul.bf16.gmra.mxu0 %v4172
        %v4186 = vpop.f32.mrf.mxu0
        %v4187 = vadd.f32 0.0, %v4186
        %v4188 = vpop.f32.mrf.mxu0
        %4189 = vdwg.mxu0
        %4190 = vrot.lane.b32.xlu0 %v4132, 120
        %v4191 = vpop.permute.xlu0 %4190
        %4192 = vrot.lane.b32.xlu0 %v4132, 88
        %v4193 = vpop.permute.xlu0 %4192
        %v4195 = vsel %vm1243, %v4191, 0
        %v4198 = vsel %vm1243, %v4193, 0
        %4200 = vmatpush.bf16.xpose.msra.mxu0 0
        %4201 = vmatpush.bf16.xpose.msra.mxu0 0
        %4202 = vmatpush.bf16.xpose.msra.mxu0 0
        %4203 = vmatpush.bf16.xpose.msra.mxu0 0
        %4204 = vmatpush.bf16.xpose.msra.mxu0 0
        %4205 = vmatpush.bf16.xpose.msra.mxu0 0
        %4206 = vmatpush.bf16.xpose.msra.mxu0 0
        %4207 = vmatpush.bf16.xpose.msra.mxu0 %v4198
        %4208 = vmatmul.bf16.gmra.mxu0 %v4195
        %v4209 = vpop.f32.mrf.mxu0
        %v4210 = vadd.f32 0.0, %v4209
        %v4211 = vpop.f32.mrf.mxu0
        %4212 = vdwg.mxu0
        %v4213 = vmul.f32 %v4210, 0.35355338
        %v4214 = vadd.f32 %v4213, %v1172
        %v4215 = vsel %vm1243, %v4214, -inf
        %4216 = vmax.xlane.f32.xlu0 %v4215
        %v4217 = vpop.xlane.xlu0 %4216
        %v4218 = vsub.f32 %v4214, %v4217
        %v4219 = vmul.f32 %v4218, 1.442695
        %v4220 = vpow.pop %v4219
        %v4221 = vsel %vm1243, %v4220, 0.0
        %4222 = vadd.xlane.f32.xlu0 %v4221
        %v4223 = vpop.xlane.xlu0 %4222
        %v4224 = vrcp.pop %v4223
        %v4225 = vmul.f32 %v4220, %v4224
        %v4226 = vpack.c.bf16 %v4225, %v4225
        %4227 = vrot.lane.b32.xlu0 %v4132, 56
        %v4228 = vpop.permute.xlu0 %4227
        %v4230 = vsel %vm1243, %v4226, 0
        %v4233 = vsel %vm1282, %v4228, 0
        %4235 = vmatpush.bf16.msra.mxu0 0
        %4236 = vmatpush.bf16.msra.mxu0 0
        %4237 = vmatpush.bf16.msra.mxu0 0
        %4238 = vmatpush.bf16.msra.mxu0 0
        %4239 = vmatpush.bf16.msra.mxu0 0
        %4240 = vmatpush.bf16.msra.mxu0 0
        %4241 = vmatpush.bf16.msra.mxu0 0
        %4242 = vmatpush.bf16.msra.mxu0 %v4233
        %4243 = vmatmul.bf16.gmra.mxu0 %v4230
        %v4244 = vpop.f32.mrf.mxu0
        %v4245 = vadd.f32 0.0, %v4244
        %v4246 = vpop.f32.mrf.mxu0
        %4247 = vdwg.mxu0
        %4248 = vrot.lane.b32.xlu0 %v4132, 112
        %v4249 = vpop.permute.xlu0 %4248
        %4250 = vrot.lane.b32.xlu0 %v4132, 80
        %v4251 = vpop.permute.xlu0 %4250
        %v4253 = vsel %vm1243, %v4249, 0
        %v4256 = vsel %vm1243, %v4251, 0
        %4258 = vmatpush.bf16.xpose.msra.mxu0 0
        %4259 = vmatpush.bf16.xpose.msra.mxu0 0
        %4260 = vmatpush.bf16.xpose.msra.mxu0 0
        %4261 = vmatpush.bf16.xpose.msra.mxu0 0
        %4262 = vmatpush.bf16.xpose.msra.mxu0 0
        %4263 = vmatpush.bf16.xpose.msra.mxu0 0
        %4264 = vmatpush.bf16.xpose.msra.mxu0 0
        %4265 = vmatpush.bf16.xpose.msra.mxu0 %v4256
        %4266 = vmatmul.bf16.gmra.mxu0 %v4253
        %v4267 = vpop.f32.mrf.mxu0
        %v4268 = vadd.f32 0.0, %v4267
        %v4269 = vpop.f32.mrf.mxu0
        %4270 = vdwg.mxu0
        %v4271 = vmul.f32 %v4268, 0.35355338
        %v4272 = vadd.f32 %v4271, %v1174
        %v4273 = vsel %vm1243, %v4272, -inf
        %4274 = vmax.xlane.f32.xlu0 %v4273
        %v4275 = vpop.xlane.xlu0 %4274
        %v4276 = vsub.f32 %v4272, %v4275
        %v4277 = vmul.f32 %v4276, 1.442695
        %v4278 = vpow.pop %v4277
        %v4279 = vsel %vm1243, %v4278, 0.0
        %4280 = vadd.xlane.f32.xlu0 %v4279
        %v4281 = vpop.xlane.xlu0 %4280
        %v4282 = vrcp.pop %v4281
        %v4283 = vmul.f32 %v4278, %v4282
        %v4284 = vpack.c.bf16 %v4283, %v4283
        %4285 = vrot.lane.b32.xlu0 %v4132, 48
        %v4286 = vpop.permute.xlu0 %4285
        %v4288 = vsel %vm1243, %v4284, 0
        %v4291 = vsel %vm1282, %v4286, 0
        %4293 = vmatpush.bf16.msra.mxu0 0
        %4294 = vmatpush.bf16.msra.mxu0 0
        %4295 = vmatpush.bf16.msra.mxu0 0
        %4296 = vmatpush.bf16.msra.mxu0 0
        %4297 = vmatpush.bf16.msra.mxu0 0
        %4298 = vmatpush.bf16.msra.mxu0 0
        %4299 = vmatpush.bf16.msra.mxu0 0
        %4300 = vmatpush.bf16.msra.mxu0 %v4291
        %4301 = vmatmul.bf16.gmra.mxu0 %v4288
        %v4302 = vpop.f32.mrf.mxu0
        %v4303 = vadd.f32 0.0, %v4302
        %v4304 = vpop.f32.mrf.mxu0
        %4305 = vdwg.mxu0
        %4306 = vrot.lane.b32.xlu0 %v4132, 104
        %v4307 = vpop.permute.xlu0 %4306
        %4308 = vrot.lane.b32.xlu0 %v4132, 72
        %v4309 = vpop.permute.xlu0 %4308
        %v4311 = vsel %vm1243, %v4307, 0
        %v4314 = vsel %vm1243, %v4309, 0
        %4316 = vmatpush.bf16.xpose.msra.mxu0 0
        %4317 = vmatpush.bf16.xpose.msra.mxu0 0
        %4318 = vmatpush.bf16.xpose.msra.mxu0 0
        %4319 = vmatpush.bf16.xpose.msra.mxu0 0
        %4320 = vmatpush.bf16.xpose.msra.mxu0 0
        %4321 = vmatpush.bf16.xpose.msra.mxu0 0
        %4322 = vmatpush.bf16.xpose.msra.mxu0 0
        %4323 = vmatpush.bf16.xpose.msra.mxu0 %v4314
        %4324 = vmatmul.bf16.gmra.mxu0 %v4311
        %v4325 = vpop.f32.mrf.mxu0
        %v4326 = vadd.f32 0.0, %v4325
        %v4327 = vpop.f32.mrf.mxu0
        %4328 = vdwg.mxu0
        %v4329 = vmul.f32 %v4326, 0.35355338
        %v4330 = vadd.f32 %v4329, %v1176
        %v4331 = vsel %vm1243, %v4330, -inf
        %4332 = vmax.xlane.f32.xlu0 %v4331
        %v4333 = vpop.xlane.xlu0 %4332
        %v4334 = vsub.f32 %v4330, %v4333
        %v4335 = vmul.f32 %v4334, 1.442695
        %v4336 = vpow.pop %v4335
        %v4337 = vsel %vm1243, %v4336, 0.0
        %4338 = vadd.xlane.f32.xlu0 %v4337
        %v4339 = vpop.xlane.xlu0 %4338
        %v4340 = vrcp.pop %v4339
        %v4341 = vmul.f32 %v4336, %v4340
        %v4342 = vpack.c.bf16 %v4341, %v4341
        %4343 = vrot.lane.b32.xlu0 %v4132, 40
        %v4344 = vpop.permute.xlu0 %4343
        %v4346 = vsel %vm1243, %v4342, 0
        %v4349 = vsel %vm1282, %v4344, 0
        %4351 = vmatpush.bf16.msra.mxu0 0
        %4352 = vmatpush.bf16.msra.mxu0 0
        %4353 = vmatpush.bf16.msra.mxu0 0
        %4354 = vmatpush.bf16.msra.mxu0 0
        %4355 = vmatpush.bf16.msra.mxu0 0
        %4356 = vmatpush.bf16.msra.mxu0 0
        %4357 = vmatpush.bf16.msra.mxu0 0
        %4358 = vmatpush.bf16.msra.mxu0 %v4349
        %4359 = vmatmul.bf16.gmra.mxu0 %v4346
        %v4360 = vpop.f32.mrf.mxu0
        %v4361 = vadd.f32 0.0, %v4360
        %v4362 = vpop.f32.mrf.mxu0
        %4363 = vdwg.mxu0
        %4365 = vrot.lane.b32.xlu0 %v4245, 8
        %v4366 = vpop.permute.xlu0 %4365
        %4369 = vrot.lane.b32.xlu0 %v4303, 16
        %v4370 = vpop.permute.xlu0 %4369
        %4373 = vrot.lane.b32.xlu0 %v4361, 24
        %v4374 = vpop.permute.xlu0 %4373
        %v4376 = vsel %vm1243, %v4187, %v4366
        %v4377 = vsel %vm1486, %v4376, %v4370
        %v4378 = vsel %vm1488, %v4377, %v4374
        %v4379 = vpack.c.bf16 %v4378, %v4378
        %s4380 = scalar_lea.vmem %s11, 64
        %v4381 = vld [vmem:[%s4380] sm:$0xf]
        %v4382 = vld [vmem:[%s4380 + $0x4] sm:$0xf]
        %v4383 = vld [vmem:[%s4380 + $0x8] sm:$0xf]
        %v4384 = vld [vmem:[%s4380 + $0xc] sm:$0xf]
        %v4389 = vunpack.c.l.b16 %v4381
        %v4390 = vunpack.c.l.b16 %v4382
        %v4391 = vunpack.c.l.b16 %v4383
        %v4392 = vunpack.c.l.b16 %v4384
        %v4393 = vpack.c.b16 %v4390, %v4389
        %v4394 = vpack.c.b16 %v4392, %v4391
        %v4398 = vsel %vm1180, %v4379, 0
        %4400 = vmatpush.bf16.msra.mxu0 0
        %4401 = vmatpush.bf16.msra.mxu0 0
        %4402 = vmatpush.bf16.msra.mxu0 0
        %4403 = vmatpush.bf16.msra.mxu0 0
        %4404 = vmatpush.bf16.msra.mxu0 0
        %4405 = vmatpush.bf16.msra.mxu0 0
        %4406 = vmatpush.bf16.msra.mxu0 %v4394
        %4407 = vmatpush.bf16.msra.mxu0 %v4393
        %4408 = vmatmul.bf16.gmra.mxu0 %v4398
        %v4409 = vpop.f32.mrf.mxu0
        %v4410 = vadd.f32 0.0, %v4409
        %v4411 = vpop.f32.mrf.mxu0
        %4412 = vdwg.mxu0
        %v4413 = vadd.f32 %v4076, %v4410
        %v4414 = vmul.f32 %v4413, %v4413
        %v4415 = vsel %vm1180, %v4414, 0.0
        %4416 = vadd.xlane.f32.xlu0 %v4415
        %v4417 = vpop.xlane.xlu0 %4416
        %v4418 = vmul.f32 %v4417, %v1190
        %v4419 = vadd.f32 %v4418, 1e-06
        %v4420 = vrsqrt.pop %v4419
        %v4421 = vmul.f32 %v4420, %v4419
        %v4422 = vmul.f32 %v4421, %v4420
        %v4423 = vmul.f32 0.5, %v4422
        %v4424 = vsub.f32 1.5, %v4423
        %v4425 = vmul.f32 %v4420, %v4424
        %vm4426 = vweird.f32 %v4419
        %vm4427 = vweird.f32 %v4420
        %vm4428 = vmor %vm4426, %vm4427
        %v4429 = vsel %vm4428, %v4420, %v4425
        %v4430 = vmul.f32 %v4413, %v4429
        %v4431 = vperm.slane %v4078, 0
        %v4432 = vmul.f32 %v4430, %v4431
        %v4433 = vpack.c.bf16 %v4432, %v4432
        %v4434 = vld [vmem:[%s47] sm:$0xff]
        %v4435 = vld [vmem:[%s47 + $0x8] sm:$0xf]
        %v4436 = vld [vmem:[%s47 + $0xc] sm:$0xff]
        %v4437 = vld [vmem:[%s47 + $0x14] sm:$0xf]
        %v4438 = vld [vmem:[%s47 + $0x18] sm:$0xff]
        %v4439 = vld [vmem:[%s47 + $0x20] sm:$0xf]
        %v4440 = vld [vmem:[%s47 + $0x24] sm:$0xff]
        %v4441 = vld [vmem:[%s47 + $0x2c] sm:$0xf]
        %v4442 = vld [vmem:[%s49] sm:$0x7]
        %v4444 = vperm.slane %v4442, 0
        %v4445 = vperm.slane %v4442, 1
        %v4446 = vperm.slane %v4442, 2
        %v4458 = vunpack.c.l.b16 %v4434
        %v4459 = vunpack.c.h.b16 %v4434
        %v4460 = vunpack.c.l.b16 %v4435
        %v4461 = vunpack.c.l.b16 %v4436
        %v4462 = vunpack.c.h.b16 %v4436
        %v4463 = vunpack.c.l.b16 %v4437
        %v4464 = vunpack.c.l.b16 %v4438
        %v4465 = vunpack.c.h.b16 %v4438
        %v4466 = vunpack.c.l.b16 %v4439
        %v4467 = vunpack.c.l.b16 %v4440
        %v4468 = vunpack.c.h.b16 %v4440
        %v4469 = vunpack.c.l.b16 %v4441
        %v4470 = vpack.c.b16 %v4461, %v4458
        %v4471 = vpack.c.b16 %v4462, %v4459
        %v4472 = vpack.c.b16 %v4463, %v4460
        %v4473 = vpack.c.b16 %v4467, %v4464
        %v4474 = vpack.c.b16 %v4468, %v4465
        %v4475 = vpack.c.b16 %v4469, %v4466
        %v4483 = vsel %vm1180, %v4433, 0
        %4485 = vmatpush.bf16.msra.mxu0 0
        %4486 = vmatpush.bf16.msra.mxu0 0
        %4487 = vmatpush.bf16.msra.mxu0 0
        %4488 = vmatpush.bf16.msra.mxu0 0
        %4489 = vmatpush.bf16.msra.mxu0 0
        %4490 = vmatpush.bf16.msra.mxu0 0
        %4491 = vmatpush.bf16.msra.mxu0 %v4473
        %4492 = vmatpush.bf16.msra.mxu0 %v4470
        %4493 = vmatmul.bf16.gmra.mxu0 %v4483
        %v4494 = vpop.f32.mrf.mxu0
        %v4495 = vadd.f32 %v4444, %v4494
        %v4496 = vpop.f32.mrf.mxu0
        %4497 = vdwg.mxu0
        %4498 = vmatpush.bf16.msra.mxu0 0
        %4499 = vmatpush.bf16.msra.mxu0 0
        %4500 = vmatpush.bf16.msra.mxu0 0
        %4501 = vmatpush.bf16.msra.mxu0 0
        %4502 = vmatpush.bf16.msra.mxu0 0
        %4503 = vmatpush.bf16.msra.mxu0 0
        %4504 = vmatpush.bf16.msra.mxu0 %v4474
        %4505 = vmatpush.bf16.msra.mxu0 %v4471
        %4506 = vmatmul.bf16.gmra.mxu0 %v4483
        %v4507 = vpop.f32.mrf.mxu0
        %v4508 = vadd.f32 %v4445, %v4507
        %v4509 = vpop.f32.mrf.mxu0
        %4510 = vdwg.mxu0
        %4511 = vmatpush.bf16.msra.mxu0 0
        %4512 = vmatpush.bf16.msra.mxu0 0
        %4513 = vmatpush.bf16.msra.mxu0 0
        %4514 = vmatpush.bf16.msra.mxu0 0
        %4515 = vmatpush.bf16.msra.mxu0 0
        %4516 = vmatpush.bf16.msra.mxu0 0
        %4517 = vmatpush.bf16.msra.mxu0 %v4475
        %4518 = vmatpush.bf16.msra.mxu0 %v4472
        %4519 = vmatmul.bf16.gmra.mxu0 %v4483
        %v4520 = vpop.f32.mrf.mxu0
        %v4521 = vadd.f32 %v4446, %v4520
        %v4522 = vpop.f32.mrf.mxu0
        %4523 = vdwg.mxu0
        %v4524 = vmul.f32 %v4495, 0.5
        %v4525 = vmul.f32 %v4508, 0.5
        %v4526 = vmul.f32 %v4495, 0.044715
        %v4527 = vmul.f32 %v4508, 0.044715
        %v4528 = vmul.f32 %v4526, %v4495
        %v4529 = vmul.f32 %v4527, %v4508
        %v4530 = vmul.f32 %v4528, %v4495
        %v4531 = vmul.f32 %v4529, %v4508
        %v4532 = vadd.f32 %v4495, %v4530
        %v4533 = vadd.f32 %v4508, %v4531
        %v4534 = vmul.f32 %v4532, 0.7978846
        %v4535 = vmul.f32 %v4533, 0.7978846
        %v4536 = vtanh.pop %v4534
        %v4537 = vtanh.pop %v4535
        %v4538 = vadd.f32 %v4536, 1.0
        %v4539 = vadd.f32 %v4537, 1.0
        %v4540 = vmul.f32 %v4524, %v4538
        %v4541 = vmul.f32 %v4525, %v4539
        %vm4542 = vcmask 15360
        %v4543 = vsel %vm4542, %v4521, -inf
        %4544 = vmax.xlane.f32.xlu0 %v4543
        %v4545 = vpop.xlane.xlu0 %4544
        %v4546 = vsub.f32 %v4521, %v4545
        %v4547 = vmul.f32 %v4546, 1.442695
        %v4548 = vpow.pop %v4547
        %v4549 = vsel %vm4542, %v4548, 0.0
        %4550 = vadd.xlane.f32.xlu0 %v4549
        %v4551 = vpop.xlane.xlu0 %4550
        %v4552 = vrcp.pop %v4551
        %v4553 = vmul.f32 %v4551, %v4552
        %v4554 = vsub.f32 1.0, %v4553
        %v4555 = vmul.f32 %v4552, %v4554
        %v4556 = vadd.f32 %v4552, %v4555
        %vm4557 = vweird.f32 %v4551
        %vm4558 = vweird.f32 %v4552
        %vm4559 = vmor %vm4557, %vm4558
        %v4560 = vsel %vm4559, %v4552, %v4556
        %v4561 = vand.u32 2147483647, %v4551
        %vm4562 = vcmp.eq.f32.partialorder %v4561, 8.507059e+37
        %v4563 = vand.u32 %v4551, 2147483648
        %v4564 = vor.u32 1.1754944e-38, %v4563
        %v4565 = vsel %vm4562, %v4564, %v4560
        %v4566 = vmul.f32 %v4548, %v4565
        %vm4567 = vcmp.eq.f32.partialorder %v4521, %v4545
        %v4568 = vsel %vm4567, %v3139, 2.0
        %v4569 = vsel %vm4542, %v4568, inf
        %4570 = vmin.xlane.f32.xlu0 %v4569
        %v4571 = vpop.xlane.xlu0 %4570
        %vm4572 = vcmp.eq.f32.partialorder %v3139, %v4571
        %v4573 = vsel %vm4572, 1, 0
        %v4574 = vcvt.s32.f32 %v4573
        %v4575 = vmul.f32 %v4574, %v4566
        %4577 = vset.pattern.permute.xlu0 0
        %4578 = vperm.xlu0 %4577, %v4575
        %v4579 = vpop.permute.xlu0 %4578
        %v4581 = vmul.f32 %v4540, %v4579
        %4582 = vset.pattern.permute.xlu0 1
        %4583 = vperm.xlu0 %4582, %v4575
        %v4584 = vpop.permute.xlu0 %4583
        %v4586 = vmul.f32 %v4541, %v4584
        %v4587 = vpack.c.bf16 %v4581, %v4581
        %v4588 = vpack.c.bf16 %v4586, %v4586
        %v4589 = vld [vmem:[%s51] sm:$0xf]
        %v4590 = vld [vmem:[%s51 + $0x4] sm:$0xf]
        %v4591 = vld [vmem:[%s51 + $0x8] sm:$0xf]
        %v4592 = vld [vmem:[%s51 + $0xc] sm:$0xf]
        %v4593 = vld [vmem:[%s51 + $0x10] sm:$0xf]
        %v4594 = vld [vmem:[%s51 + $0x14] sm:$0xf]
        %v4595 = vld [vmem:[%s51 + $0x18] sm:$0xf]
        %v4596 = vld [vmem:[%s51 + $0x1c] sm:$0xf]
        %v4597 = vld [vmem:[%s51 + $0x20] sm:$0xf]
        %v4598 = vld [vmem:[%s51 + $0x24] sm:$0xf]
        %v4599 = vld [vmem:[%s51 + $0x28] sm:$0xf]
        %v4600 = vld [vmem:[%s51 + $0x2c] sm:$0xf]
        %v4601 = vld [vmem:[%s51 + $0x30] sm:$0xf]
        %v4602 = vld [vmem:[%s51 + $0x34] sm:$0xf]
        %v4603 = vld [vmem:[%s51 + $0x38] sm:$0xf]
        %v4604 = vld [vmem:[%s51 + $0x3c] sm:$0xf]
        %v4605 = vld [vmem:[%s51 + $0x40] sm:$0xf]
        %v4606 = vld [vmem:[%s51 + $0x44] sm:$0xf]
        %v4607 = vld [vmem:[%s51 + $0x48] sm:$0xf]
        %v4608 = vld [vmem:[%s51 + $0x4c] sm:$0xf]
        %v4609 = vld [vmem:[%s51 + $0x50] sm:$0xf]
        %v4610 = vld [vmem:[%s51 + $0x54] sm:$0xf]
        %v4611 = vld [vmem:[%s51 + $0x58] sm:$0xf]
        %v4612 = vld [vmem:[%s51 + $0x5c] sm:$0xf]
        %v4613 = vld [vmem:[%s51 + $0x60] sm:$0xf]
        %v4614 = vld [vmem:[%s51 + $0x64] sm:$0xf]
        %v4615 = vld [vmem:[%s51 + $0x68] sm:$0xf]
        %v4616 = vld [vmem:[%s51 + $0x6c] sm:$0xf]
        %v4617 = vld [vmem:[%s51 + $0x70] sm:$0xf]
        %v4618 = vld [vmem:[%s51 + $0x74] sm:$0xf]
        %v4619 = vld [vmem:[%s51 + $0x78] sm:$0xf]
        %v4620 = vld [vmem:[%s51 + $0x7c] sm:$0xf]
        %v4621 = vld [vmem:[%s53] sm:$0x3]
        %v4622 = vsel %vm4542, %v4575, 0
        %vm4624 = vcmask 1041408
        %v4626 = vsel %vm4624, %v4621, 0
        %4628 = vmatpush.msra.mxu0 0.0
        %4629 = vmatpush.msra.mxu0 0.0
        %4630 = vmatpush.msra.mxu0 0.0
        %4631 = vmatpush.msra.mxu0 0.0
        %4632 = vmatpush.msra.mxu0 0.0
        %4633 = vmatpush.msra.mxu0 0.0
        %4634 = vmatpush.msra.mxu0 0.0
        %4635 = vmatpush.msra.mxu0 0.0
        %4636 = vmatpush.msra.mxu0 0.0
        %4637 = vmatpush.msra.mxu0 0.0
        %4638 = vmatpush.msra.mxu0 0.0
        %4639 = vmatpush.msra.mxu0 0.0
        %4640 = vmatpush.msra.mxu0 0.0
        %4641 = vmatpush.msra.mxu0 0.0
        %4642 = vmatpush.msra.mxu0 0.0
        %4643 = vmatpush.msra.mxu0 %v4626
        %4644 = vmatmul.f32.gmra.mxu0 %v4622
        %v4645 = vpop.f32.mrf.mxu0
        %v4646 = vadd.f32 0.0, %v4645
        %4647 = vdwg.mxu0
        %v4680 = vunpack.c.l.b16 %v4589
        %v4681 = vunpack.c.l.b16 %v4590
        %v4682 = vunpack.c.l.b16 %v4591
        %v4683 = vunpack.c.l.b16 %v4592
        %v4684 = vunpack.c.l.b16 %v4593
        %v4685 = vunpack.c.l.b16 %v4594
        %v4686 = vunpack.c.l.b16 %v4595
        %v4687 = vunpack.c.l.b16 %v4596
        %v4688 = vunpack.c.l.b16 %v4597
        %v4689 = vunpack.c.l.b16 %v4598
        %v4690 = vunpack.c.l.b16 %v4599
        %v4691 = vunpack.c.l.b16 %v4600
        %v4692 = vunpack.c.l.b16 %v4601
        %v4693 = vunpack.c.l.b16 %v4602
        %v4694 = vunpack.c.l.b16 %v4603
        %v4695 = vunpack.c.l.b16 %v4604
        %v4696 = vunpack.c.l.b16 %v4605
        %v4697 = vunpack.c.l.b16 %v4606
        %v4698 = vunpack.c.l.b16 %v4607
        %v4699 = vunpack.c.l.b16 %v4608
        %v4700 = vunpack.c.l.b16 %v4609
        %v4701 = vunpack.c.l.b16 %v4610
        %v4702 = vunpack.c.l.b16 %v4611
        %v4703 = vunpack.c.l.b16 %v4612
        %v4704 = vunpack.c.l.b16 %v4613
        %v4705 = vunpack.c.l.b16 %v4614
        %v4706 = vunpack.c.l.b16 %v4615
        %v4707 = vunpack.c.l.b16 %v4616
        %v4708 = vunpack.c.l.b16 %v4617
        %v4709 = vunpack.c.l.b16 %v4618
        %v4710 = vunpack.c.l.b16 %v4619
        %v4711 = vunpack.c.l.b16 %v4620
        %v4712 = vpack.c.b16 %v4681, %v4680
        %v4713 = vpack.c.b16 %v4683, %v4682
        %v4714 = vpack.c.b16 %v4685, %v4684
        %v4715 = vpack.c.b16 %v4687, %v4686
        %v4716 = vpack.c.b16 %v4689, %v4688
        %v4717 = vpack.c.b16 %v4691, %v4690
        %v4718 = vpack.c.b16 %v4693, %v4692
        %v4719 = vpack.c.b16 %v4695, %v4694
        %v4720 = vpack.c.b16 %v4697, %v4696
        %v4721 = vpack.c.b16 %v4699, %v4698
        %v4722 = vpack.c.b16 %v4701, %v4700
        %v4723 = vpack.c.b16 %v4703, %v4702
        %v4724 = vpack.c.b16 %v4705, %v4704
        %v4725 = vpack.c.b16 %v4707, %v4706
        %v4726 = vpack.c.b16 %v4709, %v4708
        %v4727 = vpack.c.b16 %v4711, %v4710
        %4744 = vmatpush.bf16.msra.mxu0 %v4719
        %4745 = vmatpush.bf16.msra.mxu0 %v4718
        %4746 = vmatpush.bf16.msra.mxu0 %v4717
        %4747 = vmatpush.bf16.msra.mxu0 %v4716
        %4748 = vmatpush.bf16.msra.mxu0 %v4715
        %4749 = vmatpush.bf16.msra.mxu0 %v4714
        %4750 = vmatpush.bf16.msra.mxu0 %v4713
        %4751 = vmatpush.bf16.msra.mxu0 %v4712
        %4752 = vmatmul.bf16.gmra.mxu0 %v4587
        %v4753 = vpop.f32.mrf.mxu0
        %v4754 = vadd.f32 %v4646, %v4753
        %v4755 = vpop.f32.mrf.mxu0
        %4756 = vdwg.mxu0
        %4757 = vmatpush.bf16.msra.mxu0 %v4727
        %4758 = vmatpush.bf16.msra.mxu0 %v4726
        %4759 = vmatpush.bf16.msra.mxu0 %v4725
        %4760 = vmatpush.bf16.msra.mxu0 %v4724
        %4761 = vmatpush.bf16.msra.mxu0 %v4723
        %4762 = vmatpush.bf16.msra.mxu0 %v4722
        %4763 = vmatpush.bf16.msra.mxu0 %v4721
        %4764 = vmatpush.bf16.msra.mxu0 %v4720
        %4765 = vmatmul.bf16.gmra.mxu0 %v4588
        %v4766 = vpop.f32.mrf.mxu0
        %v4767 = vadd.f32 %v4754, %v4766
        %v4768 = vpop.f32.mrf.mxu0
        %4769 = vdwg.mxu0
        %v4770 = vadd.f32 %v4413, %v4767
        %v4771 = vld [vmem:[%s7 + $0xa] sm:$0x1]
        %v4772 = vld [vmem:[%s7 + $0xb] sm:$0x1]
        %v4773 = vmul.f32 %v4770, %v4770
        %v4774 = vsel %vm1180, %v4773, 0.0
        %4775 = vadd.xlane.f32.xlu0 %v4774
        %v4776 = vpop.xlane.xlu0 %4775
        %v4777 = vmul.f32 %v4776, %v1190
        %v4778 = vadd.f32 %v4777, 1e-06
        %v4779 = vrsqrt.pop %v4778
        %v4780 = vmul.f32 %v4779, %v4778
        %v4781 = vmul.f32 %v4780, %v4779
        %v4782 = vmul.f32 0.5, %v4781
        %v4783 = vsub.f32 1.5, %v4782
        %v4784 = vmul.f32 %v4779, %v4783
        %vm4785 = vweird.f32 %v4778
        %vm4786 = vweird.f32 %v4779
        %vm4787 = vmor %vm4785, %vm4786
        %v4788 = vsel %vm4787, %v4779, %v4784
        %v4789 = vmul.f32 %v4770, %v4788
        %v4790 = vperm.slane %v4771, 0
        %v4791 = vmul.f32 %v4789, %v4790
        %v4792 = vpack.c.bf16 %v4791, %v4791
        %s4793 = scalar_lea.vmem %s9, 80
        %v4794 = vld [vmem:[%s4793] sm:$0xf]
        %v4795 = vld [vmem:[%s4793 + $0x4] sm:$0xf]
        %v4796 = vld [vmem:[%s4793 + $0x8] sm:$0xf]
        %v4797 = vld [vmem:[%s4793 + $0xc] sm:$0xf]
        %v4802 = vunpack.c.l.b16 %v4794
        %v4803 = vunpack.c.l.b16 %v4795
        %v4804 = vunpack.c.l.b16 %v4796
        %v4805 = vunpack.c.l.b16 %v4797
        %v4806 = vpack.c.b16 %v4803, %v4802
        %v4807 = vpack.c.b16 %v4805, %v4804
        %v4811 = vsel %vm1180, %v4792, 0
        %4813 = vmatpush.bf16.msra.mxu0 0
        %4814 = vmatpush.bf16.msra.mxu0 0
        %4815 = vmatpush.bf16.msra.mxu0 0
        %4816 = vmatpush.bf16.msra.mxu0 0
        %4817 = vmatpush.bf16.msra.mxu0 0
        %4818 = vmatpush.bf16.msra.mxu0 0
        %4819 = vmatpush.bf16.msra.mxu0 %v4807
        %4820 = vmatpush.bf16.msra.mxu0 %v4806
        %4821 = vmatmul.bf16.gmra.mxu0 %v4811
        %v4822 = vpop.f32.mrf.mxu0
        %v4823 = vadd.f32 0.0, %v4822
        %v4824 = vpop.f32.mrf.mxu0
        %4825 = vdwg.mxu0
        %v4826 = vpack.c.bf16 %v4823, %v4823
        %4828 = vrot.lane.b32.xlu0 %v4826, 96
        %v4829 = vpop.permute.xlu0 %4828
        %v4831 = vsel %vm1243, %v4826, 0
        %v4834 = vsel %vm1243, %v4829, 0
        %4836 = vmatpush.bf16.xpose.msra.mxu0 0
        %4837 = vmatpush.bf16.xpose.msra.mxu0 0
        %4838 = vmatpush.bf16.xpose.msra.mxu0 0
        %4839 = vmatpush.bf16.xpose.msra.mxu0 0
        %4840 = vmatpush.bf16.xpose.msra.mxu0 0
        %4841 = vmatpush.bf16.xpose.msra.mxu0 0
        %4842 = vmatpush.bf16.xpose.msra.mxu0 0
        %4843 = vmatpush.bf16.xpose.msra.mxu0 %v4834
        %4844 = vmatmul.bf16.gmra.mxu0 %v4831
        %v4845 = vpop.f32.mrf.mxu0
        %v4846 = vadd.f32 0.0, %v4845
        %v4847 = vpop.f32.mrf.mxu0
        %4848 = vdwg.mxu0
        %v4849 = vmul.f32 %v4846, 0.35355338
        %v4850 = vadd.f32 %v4849, %v1170
        %v4851 = vsel %vm1243, %v4850, -inf
        %4852 = vmax.xlane.f32.xlu0 %v4851
        %v4853 = vpop.xlane.xlu0 %4852
        %v4854 = vsub.f32 %v4850, %v4853
        %v4855 = vmul.f32 %v4854, 1.442695
        %v4856 = vpow.pop %v4855
        %v4857 = vsel %vm1243, %v4856, 0.0
        %4858 = vadd.xlane.f32.xlu0 %v4857
        %v4859 = vpop.xlane.xlu0 %4858
        %v4860 = vrcp.pop %v4859
        %v4861 = vmul.f32 %v4856, %v4860
        %v4862 = vpack.c.bf16 %v4861, %v4861
        %4863 = vrot.lane.b32.xlu0 %v4826, 64
        %v4864 = vpop.permute.xlu0 %4863
        %v4866 = vsel %vm1243, %v4862, 0
        %v4869 = vsel %vm1282, %v4864, 0
        %4871 = vmatpush.bf16.msra.mxu0 0
        %4872 = vmatpush.bf16.msra.mxu0 0
        %4873 = vmatpush.bf16.msra.mxu0 0
        %4874 = vmatpush.bf16.msra.mxu0 0
        %4875 = vmatpush.bf16.msra.mxu0 0
        %4876 = vmatpush.bf16.msra.mxu0 0
        %4877 = vmatpush.bf16.msra.mxu0 0
        %4878 = vmatpush.bf16.msra.mxu0 %v4869
        %4879 = vmatmul.bf16.gmra.mxu0 %v4866
        %v4880 = vpop.f32.mrf.mxu0
        %v4881 = vadd.f32 0.0, %v4880
        %v4882 = vpop.f32.mrf.mxu0
        %4883 = vdwg.mxu0
        %4884 = vrot.lane.b32.xlu0 %v4826, 120
        %v4885 = vpop.permute.xlu0 %4884
        %4886 = vrot.lane.b32.xlu0 %v4826, 88
        %v4887 = vpop.permute.xlu0 %4886
        %v4889 = vsel %vm1243, %v4885, 0
        %v4892 = vsel %vm1243, %v4887, 0
        %4894 = vmatpush.bf16.xpose.msra.mxu0 0
        %4895 = vmatpush.bf16.xpose.msra.mxu0 0
        %4896 = vmatpush.bf16.xpose.msra.mxu0 0
        %4897 = vmatpush.bf16.xpose.msra.mxu0 0
        %4898 = vmatpush.bf16.xpose.msra.mxu0 0
        %4899 = vmatpush.bf16.xpose.msra.mxu0 0
        %4900 = vmatpush.bf16.xpose.msra.mxu0 0
        %4901 = vmatpush.bf16.xpose.msra.mxu0 %v4892
        %4902 = vmatmul.bf16.gmra.mxu0 %v4889
        %v4903 = vpop.f32.mrf.mxu0
        %v4904 = vadd.f32 0.0, %v4903
        %v4905 = vpop.f32.mrf.mxu0
        %4906 = vdwg.mxu0
        %v4907 = vmul.f32 %v4904, 0.35355338
        %v4908 = vadd.f32 %v4907, %v1172
        %v4909 = vsel %vm1243, %v4908, -inf
        %4910 = vmax.xlane.f32.xlu0 %v4909
        %v4911 = vpop.xlane.xlu0 %4910
        %v4912 = vsub.f32 %v4908, %v4911
        %v4913 = vmul.f32 %v4912, 1.442695
        %v4914 = vpow.pop %v4913
        %v4915 = vsel %vm1243, %v4914, 0.0
        %4916 = vadd.xlane.f32.xlu0 %v4915
        %v4917 = vpop.xlane.xlu0 %4916
        %v4918 = vrcp.pop %v4917
        %v4919 = vmul.f32 %v4914, %v4918
        %v4920 = vpack.c.bf16 %v4919, %v4919
        %4921 = vrot.lane.b32.xlu0 %v4826, 56
        %v4922 = vpop.permute.xlu0 %4921
        %v4924 = vsel %vm1243, %v4920, 0
        %v4927 = vsel %vm1282, %v4922, 0
        %4929 = vmatpush.bf16.msra.mxu0 0
        %4930 = vmatpush.bf16.msra.mxu0 0
        %4931 = vmatpush.bf16.msra.mxu0 0
        %4932 = vmatpush.bf16.msra.mxu0 0
        %4933 = vmatpush.bf16.msra.mxu0 0
        %4934 = vmatpush.bf16.msra.mxu0 0
        %4935 = vmatpush.bf16.msra.mxu0 0
        %4936 = vmatpush.bf16.msra.mxu0 %v4927
        %4937 = vmatmul.bf16.gmra.mxu0 %v4924
        %v4938 = vpop.f32.mrf.mxu0
        %v4939 = vadd.f32 0.0, %v4938
        %v4940 = vpop.f32.mrf.mxu0
        %4941 = vdwg.mxu0
        %4942 = vrot.lane.b32.xlu0 %v4826, 112
        %v4943 = vpop.permute.xlu0 %4942
        %4944 = vrot.lane.b32.xlu0 %v4826, 80
        %v4945 = vpop.permute.xlu0 %4944
        %v4947 = vsel %vm1243, %v4943, 0
        %v4950 = vsel %vm1243, %v4945, 0
        %4952 = vmatpush.bf16.xpose.msra.mxu0 0
        %4953 = vmatpush.bf16.xpose.msra.mxu0 0
        %4954 = vmatpush.bf16.xpose.msra.mxu0 0
        %4955 = vmatpush.bf16.xpose.msra.mxu0 0
        %4956 = vmatpush.bf16.xpose.msra.mxu0 0
        %4957 = vmatpush.bf16.xpose.msra.mxu0 0
        %4958 = vmatpush.bf16.xpose.msra.mxu0 0
        %4959 = vmatpush.bf16.xpose.msra.mxu0 %v4950
        %4960 = vmatmul.bf16.gmra.mxu0 %v4947
        %v4961 = vpop.f32.mrf.mxu0
        %v4962 = vadd.f32 0.0, %v4961
        %v4963 = vpop.f32.mrf.mxu0
        %4964 = vdwg.mxu0
        %v4965 = vmul.f32 %v4962, 0.35355338
        %v4966 = vadd.f32 %v4965, %v1174
        %v4967 = vsel %vm1243, %v4966, -inf
        %4968 = vmax.xlane.f32.xlu0 %v4967
        %v4969 = vpop.xlane.xlu0 %4968
        %v4970 = vsub.f32 %v4966, %v4969
        %v4971 = vmul.f32 %v4970, 1.442695
        %v4972 = vpow.pop %v4971
        %v4973 = vsel %vm1243, %v4972, 0.0
        %4974 = vadd.xlane.f32.xlu0 %v4973
        %v4975 = vpop.xlane.xlu0 %4974
        %v4976 = vrcp.pop %v4975
        %v4977 = vmul.f32 %v4972, %v4976
        %v4978 = vpack.c.bf16 %v4977, %v4977
        %4979 = vrot.lane.b32.xlu0 %v4826, 48
        %v4980 = vpop.permute.xlu0 %4979
        %v4982 = vsel %vm1243, %v4978, 0
        %v4985 = vsel %vm1282, %v4980, 0
        %4987 = vmatpush.bf16.msra.mxu0 0
        %4988 = vmatpush.bf16.msra.mxu0 0
        %4989 = vmatpush.bf16.msra.mxu0 0
        %4990 = vmatpush.bf16.msra.mxu0 0
        %4991 = vmatpush.bf16.msra.mxu0 0
        %4992 = vmatpush.bf16.msra.mxu0 0
        %4993 = vmatpush.bf16.msra.mxu0 0
        %4994 = vmatpush.bf16.msra.mxu0 %v4985
        %4995 = vmatmul.bf16.gmra.mxu0 %v4982
        %v4996 = vpop.f32.mrf.mxu0
        %v4997 = vadd.f32 0.0, %v4996
        %v4998 = vpop.f32.mrf.mxu0
        %4999 = vdwg.mxu0
        %5000 = vrot.lane.b32.xlu0 %v4826, 104
        %v5001 = vpop.permute.xlu0 %5000
        %5002 = vrot.lane.b32.xlu0 %v4826, 72
        %v5003 = vpop.permute.xlu0 %5002
        %v5005 = vsel %vm1243, %v5001, 0
        %v5008 = vsel %vm1243, %v5003, 0
        %5010 = vmatpush.bf16.xpose.msra.mxu0 0
        %5011 = vmatpush.bf16.xpose.msra.mxu0 0
        %5012 = vmatpush.bf16.xpose.msra.mxu0 0
        %5013 = vmatpush.bf16.xpose.msra.mxu0 0
        %5014 = vmatpush.bf16.xpose.msra.mxu0 0
        %5015 = vmatpush.bf16.xpose.msra.mxu0 0
        %5016 = vmatpush.bf16.xpose.msra.mxu0 0
        %5017 = vmatpush.bf16.xpose.msra.mxu0 %v5008
        %5018 = vmatmul.bf16.gmra.mxu0 %v5005
        %v5019 = vpop.f32.mrf.mxu0
        %v5020 = vadd.f32 0.0, %v5019
        %v5021 = vpop.f32.mrf.mxu0
        %5022 = vdwg.mxu0
        %v5023 = vmul.f32 %v5020, 0.35355338
        %v5024 = vadd.f32 %v5023, %v1176
        %v5025 = vsel %vm1243, %v5024, -inf
        %5026 = vmax.xlane.f32.xlu0 %v5025
        %v5027 = vpop.xlane.xlu0 %5026
        %v5028 = vsub.f32 %v5024, %v5027
        %v5029 = vmul.f32 %v5028, 1.442695
        %v5030 = vpow.pop %v5029
        %v5031 = vsel %vm1243, %v5030, 0.0
        %5032 = vadd.xlane.f32.xlu0 %v5031
        %v5033 = vpop.xlane.xlu0 %5032
        %v5034 = vrcp.pop %v5033
        %v5035 = vmul.f32 %v5030, %v5034
        %v5036 = vpack.c.bf16 %v5035, %v5035
        %5037 = vrot.lane.b32.xlu0 %v4826, 40
        %v5038 = vpop.permute.xlu0 %5037
        %v5040 = vsel %vm1243, %v5036, 0
        %v5043 = vsel %vm1282, %v5038, 0
        %5045 = vmatpush.bf16.msra.mxu0 0
        %5046 = vmatpush.bf16.msra.mxu0 0
        %5047 = vmatpush.bf16.msra.mxu0 0
        %5048 = vmatpush.bf16.msra.mxu0 0
        %5049 = vmatpush.bf16.msra.mxu0 0
        %5050 = vmatpush.bf16.msra.mxu0 0
        %5051 = vmatpush.bf16.msra.mxu0 0
        %5052 = vmatpush.bf16.msra.mxu0 %v5043
        %5053 = vmatmul.bf16.gmra.mxu0 %v5040
        %v5054 = vpop.f32.mrf.mxu0
        %v5055 = vadd.f32 0.0, %v5054
        %v5056 = vpop.f32.mrf.mxu0
        %5057 = vdwg.mxu0
        %5059 = vrot.lane.b32.xlu0 %v4939, 8
        %v5060 = vpop.permute.xlu0 %5059
        %5063 = vrot.lane.b32.xlu0 %v4997, 16
        %v5064 = vpop.permute.xlu0 %5063
        %5067 = vrot.lane.b32.xlu0 %v5055, 24
        %v5068 = vpop.permute.xlu0 %5067
        %v5070 = vsel %vm1243, %v4881, %v5060
        %v5071 = vsel %vm1486, %v5070, %v5064
        %v5072 = vsel %vm1488, %v5071, %v5068
        %v5073 = vpack.c.bf16 %v5072, %v5072
        %s5074 = scalar_lea.vmem %s11, 80
        %v5075 = vld [vmem:[%s5074] sm:$0xf]
        %v5076 = vld [vmem:[%s5074 + $0x4] sm:$0xf]
        %v5077 = vld [vmem:[%s5074 + $0x8] sm:$0xf]
        %v5078 = vld [vmem:[%s5074 + $0xc] sm:$0xf]
        %v5083 = vunpack.c.l.b16 %v5075
        %v5084 = vunpack.c.l.b16 %v5076
        %v5085 = vunpack.c.l.b16 %v5077
        %v5086 = vunpack.c.l.b16 %v5078
        %v5087 = vpack.c.b16 %v5084, %v5083
        %v5088 = vpack.c.b16 %v5086, %v5085
        %v5092 = vsel %vm1180, %v5073, 0
        %5094 = vmatpush.bf16.msra.mxu0 0
        %5095 = vmatpush.bf16.msra.mxu0 0
        %5096 = vmatpush.bf16.msra.mxu0 0
        %5097 = vmatpush.bf16.msra.mxu0 0
        %5098 = vmatpush.bf16.msra.mxu0 0
        %5099 = vmatpush.bf16.msra.mxu0 0
        %5100 = vmatpush.bf16.msra.mxu0 %v5088
        %5101 = vmatpush.bf16.msra.mxu0 %v5087
        %5102 = vmatmul.bf16.gmra.mxu0 %v5092
        %v5103 = vpop.f32.mrf.mxu0
        %v5104 = vadd.f32 0.0, %v5103
        %v5105 = vpop.f32.mrf.mxu0
        %5106 = vdwg.mxu0
        %v5107 = vadd.f32 %v4770, %v5104
        %v5108 = vmul.f32 %v5107, %v5107
        %v5109 = vsel %vm1180, %v5108, 0.0
        %5110 = vadd.xlane.f32.xlu0 %v5109
        %v5111 = vpop.xlane.xlu0 %5110
        %v5112 = vmul.f32 %v5111, %v1190
        %v5113 = vadd.f32 %v5112, 1e-06
        %v5114 = vrsqrt.pop %v5113
        %v5115 = vmul.f32 %v5114, %v5113
        %v5116 = vmul.f32 %v5115, %v5114
        %v5117 = vmul.f32 0.5, %v5116
        %v5118 = vsub.f32 1.5, %v5117
        %v5119 = vmul.f32 %v5114, %v5118
        %vm5120 = vweird.f32 %v5113
        %vm5121 = vweird.f32 %v5114
        %vm5122 = vmor %vm5120, %vm5121
        %v5123 = vsel %vm5122, %v5114, %v5119
        %v5124 = vmul.f32 %v5107, %v5123
        %v5125 = vperm.slane %v4772, 0
        %v5126 = vmul.f32 %v5124, %v5125
        %v5127 = vpack.c.bf16 %v5126, %v5126
        %v5128 = vld [vmem:[%s55] sm:$0xf]
        %v5129 = vld [vmem:[%s55 + $0x4] sm:$0xf]
        %v5130 = vld [vmem:[%s55 + $0x8] sm:$0xf]
        %v5131 = vld [vmem:[%s55 + $0xc] sm:$0xf]
        %v5132 = vld [vmem:[%s57] sm:$0x1]
        %v5134 = vperm.slane %v5132, 0
        %v5140 = vunpack.c.l.b16 %v5128
        %v5141 = vunpack.c.l.b16 %v5129
        %v5142 = vunpack.c.l.b16 %v5130
        %v5143 = vunpack.c.l.b16 %v5131
        %v5144 = vpack.c.b16 %v5141, %v5140
        %v5145 = vpack.c.b16 %v5143, %v5142
        %v5149 = vsel %vm1180, %v5127, 0
        %5151 = vmatpush.bf16.msra.mxu0 0
        %5152 = vmatpush.bf16.msra.mxu0 0
        %5153 = vmatpush.bf16.msra.mxu0 0
        %5154 = vmatpush.bf16.msra.mxu0 0
        %5155 = vmatpush.bf16.msra.mxu0 0
        %5156 = vmatpush.bf16.msra.mxu0 0
        %5157 = vmatpush.bf16.msra.mxu0 %v5145
        %5158 = vmatpush.bf16.msra.mxu0 %v5144
        %5159 = vmatmul.bf16.gmra.mxu0 %v5149
        %v5160 = vpop.f32.mrf.mxu0
        %v5161 = vadd.f32 %v5134, %v5160
        %v5162 = vpop.f32.mrf.mxu0
        %5163 = vdwg.mxu0
        %v5164 = vmul.f32 %v5161, 0.5
        %v5165 = vmul.f32 %v5161, 0.044715
        %v5166 = vmul.f32 %v5165, %v5161
        %v5167 = vmul.f32 %v5166, %v5161
        %v5168 = vadd.f32 %v5161, %v5167
        %v5169 = vmul.f32 %v5168, 0.7978846
        %v5170 = vtanh.pop %v5169
        %v5171 = vadd.f32 %v5170, 1.0
        %v5172 = vmul.f32 %v5164, %v5171
        %v5173 = vpack.c.bf16 %v5172, %v5172
        %v5174 = vld [vmem:[%s59] sm:$0xf]
        %v5175 = vld [vmem:[%s59 + $0x4] sm:$0xf]
        %v5176 = vld [vmem:[%s59 + $0x8] sm:$0xf]
        %v5177 = vld [vmem:[%s59 + $0xc] sm:$0xf]
        %v5178 = vld [vmem:[%s59 + $0x10] sm:$0xf]
        %v5179 = vld [vmem:[%s59 + $0x14] sm:$0xf]
        %v5180 = vld [vmem:[%s59 + $0x18] sm:$0xf]
        %v5181 = vld [vmem:[%s59 + $0x1c] sm:$0xf]
        %v5182 = vld [vmem:[%s59 + $0x20] sm:$0xf]
        %v5183 = vld [vmem:[%s59 + $0x24] sm:$0xf]
        %v5184 = vld [vmem:[%s59 + $0x28] sm:$0xf]
        %v5185 = vld [vmem:[%s59 + $0x2c] sm:$0xf]
        %v5186 = vld [vmem:[%s59 + $0x30] sm:$0xf]
        %v5187 = vld [vmem:[%s59 + $0x34] sm:$0xf]
        %v5188 = vld [vmem:[%s59 + $0x38] sm:$0xf]
        %v5189 = vld [vmem:[%s59 + $0x3c] sm:$0xf]
        %v5190 = vld [vmem:[%s61] sm:$0x1]
        %v5192 = vperm.slane %v5190, 0
        %v5210 = vunpack.c.l.b16 %v5174
        %v5211 = vunpack.c.l.b16 %v5175
        %v5212 = vunpack.c.l.b16 %v5176
        %v5213 = vunpack.c.l.b16 %v5177
        %v5214 = vunpack.c.l.b16 %v5178
        %v5215 = vunpack.c.l.b16 %v5179
        %v5216 = vunpack.c.l.b16 %v5180
        %v5217 = vunpack.c.l.b16 %v5181
        %v5218 = vunpack.c.l.b16 %v5182
        %v5219 = vunpack.c.l.b16 %v5183
        %v5220 = vunpack.c.l.b16 %v5184
        %v5221 = vunpack.c.l.b16 %v5185
        %v5222 = vunpack.c.l.b16 %v5186
        %v5223 = vunpack.c.l.b16 %v5187
        %v5224 = vunpack.c.l.b16 %v5188
        %v5225 = vunpack.c.l.b16 %v5189
        %v5226 = vpack.c.b16 %v5211, %v5210
        %v5227 = vpack.c.b16 %v5213, %v5212
        %v5228 = vpack.c.b16 %v5215, %v5214
        %v5229 = vpack.c.b16 %v5217, %v5216
        %v5230 = vpack.c.b16 %v5219, %v5218
        %v5231 = vpack.c.b16 %v5221, %v5220
        %v5232 = vpack.c.b16 %v5223, %v5222
        %v5233 = vpack.c.b16 %v5225, %v5224
        %5242 = vmatpush.bf16.msra.mxu0 %v5233
        %5243 = vmatpush.bf16.msra.mxu0 %v5232
        %5244 = vmatpush.bf16.msra.mxu0 %v5231
        %5245 = vmatpush.bf16.msra.mxu0 %v5230
        %5246 = vmatpush.bf16.msra.mxu0 %v5229
        %5247 = vmatpush.bf16.msra.mxu0 %v5228
        %5248 = vmatpush.bf16.msra.mxu0 %v5227
        %5249 = vmatpush.bf16.msra.mxu0 %v5226
        %5250 = vmatmul.bf16.gmra.mxu0 %v5173
        %v5251 = vpop.f32.mrf.mxu0
        %v5252 = vadd.f32 %v5192, %v5251
        %v5253 = vpop.f32.mrf.mxu0
        %5254 = vdwg.mxu0
        %v5255 = vadd.f32 %v5107, %v5252
        %v5256 = vmul.f32 %v5255, %v5255
        %v5257 = vsel %vm1180, %v5256, 0.0
        %5258 = vadd.xlane.f32.xlu0 %v5257
        %v5259 = vpop.xlane.xlu0 %5258
        %v5260 = vmul.f32 %v5259, %v1190
        %v5261 = vadd.f32 %v5260, 1e-06
        %v5262 = vrsqrt.pop %v5261
        %v5263 = vmul.f32 %v5262, %v5261
        %v5264 = vmul.f32 %v5263, %v5262
        %v5265 = vmul.f32 0.5, %v5264
        %v5266 = vsub.f32 1.5, %v5265
        %v5267 = vmul.f32 %v5262, %v5266
        %vm5268 = vweird.f32 %v5261
        %vm5269 = vweird.f32 %v5262
        %vm5270 = vmor %vm5268, %vm5269
        %v5271 = vsel %vm5270, %v5262, %v5267
        %v5272 = vmul.f32 %v5255, %v5271
        %v5273 = vld [vmem:[%s7 + $0xc] sm:$0x1]
        %v5274 = vperm.slane %v5273, 0
        %v5275 = vmul.f32 %v5272, %v5274
        %v5276 = vpack.c.bf16 %v5275, %v5275
        %v5277 = vld [vmem:[%s5] sm:$0xff]
        %v5278 = vld [vmem:[%s5 + $0x8] sm:$0xff]
        %v5279 = vld [vmem:[%s5 + $0x10] sm:$0xff]
        %v5280 = vld [vmem:[%s5 + $0x18] sm:$0xff]
        %v5285 = vunpack.c.l.b16 %v5277
        %v5286 = vunpack.c.h.b16 %v5277
        %v5287 = vunpack.c.l.b16 %v5278
        %v5288 = vunpack.c.h.b16 %v5278
        %v5289 = vunpack.c.l.b16 %v5279
        %v5290 = vunpack.c.h.b16 %v5279
        %v5291 = vunpack.c.l.b16 %v5280
        %v5292 = vunpack.c.h.b16 %v5280
        %v5293 = vpack.c.b16 %v5287, %v5285
        %v5294 = vpack.c.b16 %v5288, %v5286
        %v5295 = vpack.c.b16 %v5291, %v5289
        %v5296 = vpack.c.b16 %v5292, %v5290
        %v5302 = vsel %vm1180, %v5276, 0
        %5304 = vmatpush.bf16.msra.mxu0 0
        %5305 = vmatpush.bf16.msra.mxu0 0
        %5306 = vmatpush.bf16.msra.mxu0 0
        %5307 = vmatpush.bf16.msra.mxu0 0
        %5308 = vmatpush.bf16.msra.mxu0 0
        %5309 = vmatpush.bf16.msra.mxu0 0
        %5310 = vmatpush.bf16.msra.mxu0 %v5295
        %5311 = vmatpush.bf16.msra.mxu0 %v5293
        %5312 = vmatmul.bf16.gmra.mxu0 %v5302
        %v5313 = vpop.f32.mrf.mxu0
        %v5314 = vadd.f32 0.0, %v5313
        %v5315 = vpop.f32.mrf.mxu0
        %5316 = vdwg.mxu0
        %5317 = vmatpush.bf16.msra.mxu0 0
        %5318 = vmatpush.bf16.msra.mxu0 0
        %5319 = vmatpush.bf16.msra.mxu0 0
        %5320 = vmatpush.bf16.msra.mxu0 0
        %5321 = vmatpush.bf16.msra.mxu0 0
        %5322 = vmatpush.bf16.msra.mxu0 0
        %5323 = vmatpush.bf16.msra.mxu0 %v5296
        %5324 = vmatpush.bf16.msra.mxu0 %v5294
        %5325 = vmatmul.bf16.gmra.mxu0 %v5302
        %v5326 = vpop.f32.mrf.mxu0
        %v5327 = vadd.f32 0.0, %v5326
        %v5328 = vpop.f32.mrf.mxu0
        %5329 = vdwg.mxu0
        %5330 = vst [vmem:[%s981] sm:$0xff] %v5314
        %5331 = vst [vmem:[%s981 + $0x8] sm:$0xff] %v5327
        %5332 = vrot.lane.b32.xlu0 %v4575, 4
        %v5333 = vpop.permute.xlu0 %5332
        %v5335 = vsel %vm1790, %v3148, %v5333
        %vm5336 = vcmask 48128
        %v5337 = vsel %vm5336, %v5335, 0.0
        %5338 = vst [vmem:[%s988] sm:$0xff] %v5337
        %s5339 = sand.u32 %s747, 1
        %s5340 = scalar_lea.sflag [#allocation3], %s5339
        %s5341 = sand.u32 %s747, 1
        %s5342 = smul.addr %s5341, 16
        %s5343 = scalar_lea.vmem [#allocation2], %s5342
        %s5344 = sand.u32 %s773, 1
        %s5345 = scalar_lea.sflag [#allocation5], %s5344
        %s5346 = sand.u32 %s773, 1
        %s5347 = smul.addr %s5346, 8
        %s5348 = scalar_lea.vmem [#allocation4], %s5347
        // Predicated region
        $region145: #{tpu_custom_call.1} parent=143 // pred_check
          %p5349 = pneg %p757
        $region146: #{tpu_custom_call.1} parent=143 // pred_check_branch
          %5351 = sbr.rel (%p5349) target = $region148
        $region147: #{tpu_custom_call.1} parent=143 // pred_region
          %5353 = vsyncadd %s5340, 0
          %s5354 = smul.addr %s83, 2
          %s5355 = smul.addr %s5354, 8
          %s5356 = scalar_lea.hbm %s63, %s5355
          %s5358 = sshll.u32 %s5343, 4
          %s5359 = int_to_ptr.vmem [resolvable:$true] %s5358
          %s5360 = sshll.u32 %s5356, 4
          %s5361 = int_to_ptr.hbm [resolvable:$true] %s5360
          %5363 = dma.vmem_to_hbm [thread:$0]  %s5359, 256, %s5361, %s5340
        $region148: #{tpu_custom_call.1} parent=143 // pred_fallthru
          _
        // Predicated region
        $region149: #{tpu_custom_call.1} parent=143 // pred_check
          %p5364 = pneg %p783
        $region150: #{tpu_custom_call.1} parent=143 // pred_check_branch
          %5366 = sbr.rel (%p5364) target = $region152
        $region151: #{tpu_custom_call.1} parent=143 // pred_region
          %5368 = vsyncadd %s5345, 0
          %s5369 = smul.addr %s83, 8
          %s5370 = scalar_lea.hbm %s65, %s5369
          %s5372 = sshll.u32 %s5348, 4
          %s5373 = int_to_ptr.vmem [resolvable:$true] %s5372
          %s5374 = sshll.u32 %s5370, 4
          %s5375 = int_to_ptr.hbm [resolvable:$true] %s5374
          %5377 = dma.vmem_to_hbm [thread:$0]  %s5373, 128, %s5375, %s5345
        $region152: #{tpu_custom_call.1} parent=143 // pred_fallthru
          _
      $region144: #{tpu_custom_call.1} parent=5 // pred_fallthru
        _
      %p5378 = scmp.le.s32.totalorder 2, %s78
      // Predicated region
      $region153: #{tpu_custom_call.1} parent=5 // pred_check
        %p5379 = pneg %p5378
      $region154: #{tpu_custom_call.1} parent=5 // pred_check_branch
        %5381 = sbr.rel (%p5379) target = $region156
      $region155: #{tpu_custom_call.1} parent=5 // pred_region
        %s5382 = ssub.s32 %s78, 2
        // Predicated region
        $region157: #{tpu_custom_call.1} parent=155 // pred_check
          %p5383 = pneg %p763
        $region158: #{tpu_custom_call.1} parent=155 // pred_check_branch
          %5385 = sbr.rel (%p5383) target = $region160
        $region159: #{tpu_custom_call.1} parent=155 // pred_region
          %s5386 = sand.u32 %s748, 1
          %s5387 = scalar_lea.sflag [#allocation3], %s5386
          %s5388 = sand.u32 %s748, 1
          %s5389 = smul.addr %s5388, 16
          %s5390 = scalar_lea.vmem [#allocation2], %s5389
          %5392 = dma.done %s5387, 256
        $region160: #{tpu_custom_call.1} parent=155 // pred_fallthru
          _
        // Predicated region
        $region161: #{tpu_custom_call.1} parent=155 // pred_check
          %p5393 = pneg %p789
        $region162: #{tpu_custom_call.1} parent=155 // pred_check_branch
          %5395 = sbr.rel (%p5393) target = $region164
        $region163: #{tpu_custom_call.1} parent=155 // pred_region
          %s5396 = sand.u32 %s774, 1
          %s5397 = scalar_lea.sflag [#allocation5], %s5396
          %s5398 = sand.u32 %s774, 1
          %s5399 = smul.addr %s5398, 8
          %s5400 = scalar_lea.vmem [#allocation4], %s5399
          %5402 = dma.done %s5397, 128
        $region164: #{tpu_custom_call.1} parent=155 // pred_fallthru
          _
      $region156: #{tpu_custom_call.1} parent=5 // pred_fallthru
        _
    $region6: #{tpu_custom_call.1} parent=1 // loop_footer
      %s82 = sadd.s32 1, %s78
    $region7: #{tpu_custom_call.1} parent=1 // loop_footer_branch
      %77 = sbr.rel target = $region3
    $region8: #{tpu_custom_call.1} parent=1 // loop_exit
      _
    %5403 = vsyncpa [#allocation3], 1
    %s5404 = scalar_lea.sflag [#allocation3], 1
    %5405 = vsyncpa %s5404, 1
    %5406 = vsyncpa [#allocation5], 1
    %s5407 = scalar_lea.sflag [#allocation5], 1
    %5408 = vsyncpa %s5407, 1

</llo_original>
